<compile_context>
chip_gen: v6e
topology: v6e:2x2x1
jax: 0.10.0
libtpu: 0.0.40
codegen_flags: <defaults>
</compile_context>

<pallas_src>
import functools
import math

import jax
import jax.numpy as jnp
from jax.experimental import pallas as pl
from jax.experimental.pallas import tpu as pltpu


# ---------------------------------------------------------------------------
# Fused multi-head attention kernel
# ---------------------------------------------------------------------------
def mha_fused_kernel(xq_ref, xk_ref, xv_ref, w_ref, b_ref,   # inputs
                     ctx_ref, attn_ref,                      # outputs
                     q_scr, k_scr, v_scr,                    # VMEM scratch
                     *, num_heads, d_head, scale):
    """One grid step = one batch element; all heads processed in-kernel.

    xq_ref : (1, Sq, D)   xk_ref/xv_ref : (1, Sk, D)
    w_ref  : (D, 3D) = [Wq | Wk | Wv]   b_ref : (1, 3D)
    ctx_ref: (1, Sq, D)   attn_ref: (H, 1, Sq, Sk)
    q_scr  : (Sq, D)      k_scr/v_scr : (Sk, D)
    """
    d_model = num_heads * d_head

    # Fused Q/K/V projections: three MXU matmuls over the concatenated weight,
    # results stay in VMEM scratch (never written back to HBM).
    q_scr[...] = (jnp.dot(xq_ref[0], w_ref[:, 0:d_model],
                          preferred_element_type=jnp.float32)
                  + b_ref[:, 0:d_model])
    k_scr[...] = (jnp.dot(xk_ref[0], w_ref[:, d_model:2 * d_model],
                          preferred_element_type=jnp.float32)
                  + b_ref[:, d_model:2 * d_model])
    v_scr[...] = (jnp.dot(xv_ref[0], w_ref[:, 2 * d_model:3 * d_model],
                          preferred_element_type=jnp.float32)
                  + b_ref[:, 2 * d_model:3 * d_model])

    # Per-head scaled dot-product attention (static unroll; H is small).
    for h in range(num_heads):
        sl = slice(h * d_head, (h + 1) * d_head)
        q_h = q_scr[:, sl]                      # (Sq, dh)
        k_h = k_scr[:, sl]                      # (Sk, dh)
        v_h = v_scr[:, sl]                      # (Sk, dh)

        # scores = q k^T / sqrt(d_head); contract last dims of both operands
        # (no explicit transpose -> no XLU relayout).
        s = jax.lax.dot_general(q_h, k_h, (((1,), (1,)), ((), ())),
                                preferred_element_type=jnp.float32) * scale
        s = s - jnp.max(s, axis=-1, keepdims=True)
        p = jnp.exp(s)
        # Row-sum reciprocal on the EUP (approx) + VPU multiply instead of an
        # (Sq, Sk)-sized divide.
        p = p * pl.reciprocal(jnp.sum(p, axis=-1, keepdims=True), approx=True)

        attn_ref[h, 0] = p.astype(attn_ref.dtype)          # lane-dense store
        ctx_ref[0, :, sl] = jnp.dot(
            p, v_h, preferred_element_type=jnp.float32).astype(ctx_ref.dtype)


def multi_head_attention(params, query, key, value, num_heads, mask=None):
    """Pallas forward of MultiHeadAttention. Returns (context, attn).

    query: (B, Sq, D); key/value: (B, Sk, D).
    context: (B, Sq, D); attn: (num_heads * B, Sq, Sk) (head-major, like torch).
    """
    if mask is not None:
        # TODO(synk): optional mask (masked_fill with -inf) not implemented.
        raise NotImplementedError("mask is not supported by this kernel")

    B, Sq, D = query.shape
    Sk = key.shape[1]
    assert D % num_heads == 0, "d_model % num_heads should be zero."
    d_head = D // num_heads
    scale = 1.0 / math.sqrt(d_head)

    w_qkv = params["w_qkv"]       # (D, 3D) = [Wq^T | Wk^T | Wv^T]
    b_qkv = params["b_qkv"]       # (1, 3D)

    ctx, attn = pl.pallas_call(
        functools.partial(mha_fused_kernel, num_heads=num_heads,
                          d_head=d_head, scale=scale),
        out_shape=(jax.ShapeDtypeStruct((B, Sq, D), jnp.float32),
                   jax.ShapeDtypeStruct((num_heads, B, Sq, Sk), jnp.float32)),
        grid=(B,),
        in_specs=[
            pl.BlockSpec((1, Sq, D), lambda b: (b, 0, 0)),        # query
            pl.BlockSpec((1, Sk, D), lambda b: (b, 0, 0)),        # key
            pl.BlockSpec((1, Sk, D), lambda b: (b, 0, 0)),        # value
            pl.BlockSpec((D, 3 * D), lambda b: (0, 0)),           # W_qkv (DMA'd once)
            pl.BlockSpec((1, 3 * D), lambda b: (0, 0)),           # b_qkv
        ],
        out_specs=(
            pl.BlockSpec((1, Sq, D), lambda b: (b, 0, 0)),                 # context
            pl.BlockSpec((num_heads, 1, Sq, Sk), lambda b: (0, b, 0, 0)),  # attn
        ),
        scratch_shapes=[
            pltpu.VMEM((Sq, D), jnp.float32),   # q
            pltpu.VMEM((Sk, D), jnp.float32),   # k
            pltpu.VMEM((Sk, D), jnp.float32),   # v
        ],
        compiler_params=pltpu.CompilerParams(
            dimension_semantics=("parallel",)),
    )(query, key, value, w_qkv, b_qkv)

    # (H, B, Sq, Sk) -> (H*B, Sq, Sk): matches torch's head-major flattening.
    attn = attn.reshape(num_heads * B, Sq, Sk)
    return ctx, attn


# ---------------------------------------------------------------------------
# Pure-JAX reference (mirrors the PyTorch module) for a sanity check
# ---------------------------------------------------------------------------
def mha_reference(params, query, key, value, num_heads):
    B, Sq, D = query.shape
    Sk = key.shape[1]
    dh = D // num_heads
    w, b = params["w_qkv"], params["b_qkv"]
    hp = jax.lax.Precision.HIGHEST
    q = jnp.dot(query, w[:, 0:D], precision=hp) + b[:, 0:D]
    k = jnp.dot(key, w[:, D:2 * D], precision=hp) + b[:, D:2 * D]
    v = jnp.dot(value, w[:, 2 * D:3 * D], precision=hp) + b[:, 2 * D:3 * D]
    q = q.reshape(B, Sq, num_heads, dh).transpose(2, 0, 1, 3).reshape(num_heads * B, Sq, dh)
    k = k.reshape(B, Sk, num_heads, dh).transpose(2, 0, 1, 3).reshape(num_heads * B, Sk, dh)
    v = v.reshape(B, Sk, num_heads, dh).transpose(2, 0, 1, 3).reshape(num_heads * B, Sk, dh)
    score = jnp.einsum("bqd,bkd->bqk", q, k, precision=hp) / math.sqrt(dh)
    attn = jax.nn.softmax(score, axis=-1)
    ctx = jnp.einsum("bqk,bkd->bqd", attn, v, precision=hp)
    ctx = ctx.reshape(num_heads, B, Sq, dh).transpose(1, 2, 0, 3).reshape(B, Sq, D)
    return ctx, attn


# ---------------------------------------------------------------------------
# Deterministic parameter init (matches nn.Linear default init, stored as
# (in, out) and concatenated along the output dim: [Wq | Wk | Wv]).
# ---------------------------------------------------------------------------
def init_params(key, d_model):
    ks = jax.random.split(key, 6)
    bound = 1.0 / math.sqrt(d_model)
    ws, bs = [], []
    for i in range(3):
        ws.append(jax.random.uniform(ks[2 * i], (d_model, d_model),
                                     jnp.float32, -bound, bound))
        bs.append(jax.random.uniform(ks[2 * i + 1], (1, d_model),
                                     jnp.float32, -bound, bound))
    return {"w_qkv": jnp.concatenate(ws, axis=1),
            "b_qkv": jnp.concatenate(bs, axis=1)}


if __name__ == "__main__":
    # Module defaults: d_model=512, num_heads=8 (d_head=64). Small, lane-dense
    # problem: batch=2, seq=128 (one 128x128 score tile per head).
    B, S, d_model, num_heads = 2, 128, 512, 8

    root = jax.random.PRNGKey(0)
    k_params, k_x = jax.random.split(root)
    params = init_params(k_params, d_model)
    x = jax.random.normal(k_x, (B, S, d_model), jnp.float32)

    # Self-attention call (query = key = value), as the parent CLUM model uses it.
    ctx, attn = multi_head_attention(params, x, x, x, num_heads)
    jax.block_until_ready(ctx)
    jax.block_until_ready(attn)

    # Sanity check against the pure-JAX reference (generous tolerance: the
    # kernel uses an EUP approximate reciprocal for the softmax denominator).
    ctx_ref, attn_ref = mha_reference(params, x, x, x, num_heads)
    assert ctx.shape == (B, S, d_model) and attn.shape == (num_heads * B, S, S)
    assert float(jnp.max(jnp.abs(attn - attn_ref))) < 5e-3
    assert float(jnp.max(jnp.abs(ctx - ctx_ref))) < 2e-2

    print("KERNEL_OK")
</pallas_src>

<mosaic_0001>
module attributes {stable_mosaic.version = 11 : i64} {
  func.func @mha_fused_kernel(%arg0: i32, %arg1: memref<1x128x512xf32, #tpu.memory_space<vmem>>, %arg2: memref<1x128x512xf32, #tpu.memory_space<vmem>>, %arg3: memref<1x128x512xf32, #tpu.memory_space<vmem>>, %arg4: memref<512x1536xf32, #tpu.memory_space<vmem>>, %arg5: memref<1x1536xf32, #tpu.memory_space<vmem>>, %arg6: memref<1x128x512xf32, #tpu.memory_space<vmem>>, %arg7: memref<8x1x128x128xf32, #tpu.memory_space<vmem>>, %arg8: memref<128x512xf32, #tpu.memory_space<vmem>>, %arg9: memref<128x512xf32, #tpu.memory_space<vmem>>, %arg10: memref<128x512xf32, #tpu.memory_space<vmem>>) attributes {dimension_semantics = [#tpu.dimension_semantics<parallel>], iteration_bounds = array<i64: 2>, scalar_prefetch = 0 : i64, scratch_operands = 3 : i64, tpu.core_type = #tpu.core_type<tc>, window_params = [{transform_indices = @transform_0, window_bounds = array<i64: 1, 128, 512>}, {transform_indices = @transform_1, window_bounds = array<i64: 1, 128, 512>}, {transform_indices = @transform_2, window_bounds = array<i64: 1, 128, 512>}, {pipeline_mode = #tpu.pipeline_mode<synchronous>, transform_indices = @transform_3, window_bounds = array<i64: 512, 1536>}, {pipeline_mode = #tpu.pipeline_mode<synchronous>, transform_indices = @transform_4, window_bounds = array<i64: 1, 1536>}, {transform_indices = @transform_5, window_bounds = array<i64: 1, 128, 512>}, {transform_indices = @transform_6, window_bounds = array<i64: 8, 1, 128, 128>}]} {
    %c0 = arith.constant 0 : index
    %c0_0 = arith.constant 0 : index
    %c0_1 = arith.constant 0 : index
    %0 = vector.load %arg1[%c0, %c0_0, %c0_1] : memref<1x128x512xf32, #tpu.memory_space<vmem>>, vector<1x128x512xf32>
    %1 = vector.shape_cast %0 : vector<1x128x512xf32> to vector<128x512xf32>
    %c0_2 = arith.constant 0 : index
    %c0_3 = arith.constant 0 : index
    %2 = vector.load %arg4[%c0_2, %c0_3] : memref<512x1536xf32, #tpu.memory_space<vmem>>, vector<512x512xf32>
    %cst = arith.constant dense<0.000000e+00> : vector<128x512xf32>
    %3 = tpu.matmul %1, %2, %cst {dimension_numbers = #tpu.dot_dimension_numbers<[1], [0], [0], [1], [0, 0, 1, 1], [], []>} : vector<128x512xf32>, vector<512x512xf32>, vector<128x512xf32> -> vector<128x512xf32>
    %c0_4 = arith.constant 0 : index
    %c0_5 = arith.constant 0 : index
    %4 = vector.load %arg5[%c0_4, %c0_5] : memref<1x1536xf32, #tpu.memory_space<vmem>>, vector<1x512xf32>
    %5 = vector.broadcast %4 : vector<1x512xf32> to vector<128x512xf32>
    %6 = arith.addf %3, %5 : vector<128x512xf32>
    %c0_6 = arith.constant 0 : index
    %c0_7 = arith.constant 0 : index
    %7 = vector.load %arg8[%c0_6, %c0_7] : memref<128x512xf32, #tpu.memory_space<vmem>>, vector<128x512xf32>
    tpu.vector_store %arg8[%c0_6, %c0_7], %6 {strides = array<i32>} : memref<128x512xf32, #tpu.memory_space<vmem>>, vector<128x512xf32>,
    %c0_8 = arith.constant 0 : index
    %c0_9 = arith.constant 0 : index
    %c0_10 = arith.constant 0 : index
    %8 = vector.load %arg2[%c0_8, %c0_9, %c0_10] : memref<1x128x512xf32, #tpu.memory_space<vmem>>, vector<1x128x512xf32>
    %9 = vector.shape_cast %8 : vector<1x128x512xf32> to vector<128x512xf32>
    %c0_11 = arith.constant 0 : index
    %c512 = arith.constant 512 : index
    %10 = vector.load %arg4[%c0_11, %c512] : memref<512x1536xf32, #tpu.memory_space<vmem>>, vector<512x512xf32>
    %cst_12 = arith.constant dense<0.000000e+00> : vector<128x512xf32>
    %11 = tpu.matmul %9, %10, %cst_12 {dimension_numbers = #tpu.dot_dimension_numbers<[1], [0], [0], [1], [0, 0, 1, 1], [], []>} : vector<128x512xf32>, vector<512x512xf32>, vector<128x512xf32> -> vector<128x512xf32>
    %c0_13 = arith.constant 0 : index
    %c512_14 = arith.constant 512 : index
    %12 = vector.load %arg5[%c0_13, %c512_14] : memref<1x1536xf32, #tpu.memory_space<vmem>>, vector<1x512xf32>
    %13 = vector.broadcast %12 : vector<1x512xf32> to vector<128x512xf32>
    %14 = arith.addf %11, %13 : vector<128x512xf32>
    %c0_15 = arith.constant 0 : index
    %c0_16 = arith.constant 0 : index
    %15 = vector.load %arg9[%c0_15, %c0_16] : memref<128x512xf32, #tpu.memory_space<vmem>>, vector<128x512xf32>
    tpu.vector_store %arg9[%c0_15, %c0_16], %14 {strides = array<i32>} : memref<128x512xf32, #tpu.memory_space<vmem>>, vector<128x512xf32>,
    %c0_17 = arith.constant 0 : index
    %c0_18 = arith.constant 0 : index
    %c0_19 = arith.constant 0 : index
    %16 = vector.load %arg3[%c0_17, %c0_18, %c0_19] : memref<1x128x512xf32, #tpu.memory_space<vmem>>, vector<1x128x512xf32>
    %17 = vector.shape_cast %16 : vector<1x128x512xf32> to vector<128x512xf32>
    %c0_20 = arith.constant 0 : index
    %c1024 = arith.constant 1024 : index
    %18 = vector.load %arg4[%c0_20, %c1024] : memref<512x1536xf32, #tpu.memory_space<vmem>>, vector<512x512xf32>
    %cst_21 = arith.constant dense<0.000000e+00> : vector<128x512xf32>
    %19 = tpu.matmul %17, %18, %cst_21 {dimension_numbers = #tpu.dot_dimension_numbers<[1], [0], [0], [1], [0, 0, 1, 1], [], []>} : vector<128x512xf32>, vector<512x512xf32>, vector<128x512xf32> -> vector<128x512xf32>
    %c0_22 = arith.constant 0 : index
    %c1024_23 = arith.constant 1024 : index
    %20 = vector.load %arg5[%c0_22, %c1024_23] : memref<1x1536xf32, #tpu.memory_space<vmem>>, vector<1x512xf32>
    %21 = vector.broadcast %20 : vector<1x512xf32> to vector<128x512xf32>
    %22 = arith.addf %19, %21 : vector<128x512xf32>
    %c0_24 = arith.constant 0 : index
    %c0_25 = arith.constant 0 : index
    %23 = vector.load %arg10[%c0_24, %c0_25] : memref<128x512xf32, #tpu.memory_space<vmem>>, vector<128x512xf32>
    tpu.vector_store %arg10[%c0_24, %c0_25], %22 {strides = array<i32>} : memref<128x512xf32, #tpu.memory_space<vmem>>, vector<128x512xf32>,
    %c0_26 = arith.constant 0 : index
    %c0_27 = arith.constant 0 : index
    %24 = vector.load %arg8[%c0_26, %c0_27] : memref<128x512xf32, #tpu.memory_space<vmem>>, vector<128x64xf32>
    %c0_28 = arith.constant 0 : index
    %c0_29 = arith.constant 0 : index
    %25 = vector.load %arg9[%c0_28, %c0_29] : memref<128x512xf32, #tpu.memory_space<vmem>>, vector<128x64xf32>
    %c0_30 = arith.constant 0 : index
    %c0_31 = arith.constant 0 : index
    %26 = vector.load %arg10[%c0_30, %c0_31] : memref<128x512xf32, #tpu.memory_space<vmem>>, vector<128x64xf32>
    %cst_32 = arith.constant dense<0.000000e+00> : vector<128x128xf32>
    %27 = tpu.matmul %24, %25, %cst_32 {dimension_numbers = #tpu.dot_dimension_numbers<[1], [1], [0], [0], [0, 0, 1, 0], [], []>} : vector<128x64xf32>, vector<128x64xf32>, vector<128x128xf32> -> vector<128x128xf32>
    %cst_33 = arith.constant 1.250000e-01 : f32
    %28 = vector.broadcast %cst_33 : f32 to vector<128x128xf32>
    %29 = arith.mulf %27, %28 : vector<128x128xf32>
    %cst_34 = arith.constant dense<0xFF800000> : vector<128xf32>
    %30 = vector.multi_reduction <maximumf>, %29, %cst_34 [1] : vector<128x128xf32> to vector<128xf32>
    %31 = vector.shape_cast %30 : vector<128xf32> to vector<128x1xf32>
    %32 = vector.broadcast %31 : vector<128x1xf32> to vector<128x128xf32>
    %33 = arith.subf %29, %32 : vector<128x128xf32>
    %34 = math.exp %33 : vector<128x128xf32>
    %cst_35 = arith.constant dense<0.000000e+00> : vector<128xf32>
    %35 = vector.multi_reduction <add>, %34, %cst_35 [1] : vector<128x128xf32> to vector<128xf32>
    %36 = vector.shape_cast %35 : vector<128xf32> to vector<128x1xf32>
    %37 = tpu.reciprocal %36 {approx = true} : vector<128x1xf32> -> vector<128x1xf32>
    %38 = vector.broadcast %37 : vector<128x1xf32> to vector<128x128xf32>
    %39 = arith.mulf %34, %38 : vector<128x128xf32>
    %c0_36 = arith.constant 0 : index
    %c0_37 = arith.constant 0 : index
    %c0_38 = arith.constant 0 : index
    %c0_39 = arith.constant 0 : index
    %40 = vector.load %arg7[%c0_36, %c0_37, %c0_38, %c0_39] : memref<8x1x128x128xf32, #tpu.memory_space<vmem>>, vector<1x1x128x128xf32>
    %41 = vector.shape_cast %40 : vector<1x1x128x128xf32> to vector<128x128xf32>
    %42 = vector.shape_cast %39 : vector<128x128xf32> to vector<1x1x128x128xf32>
    tpu.vector_store %arg7[%c0_36, %c0_37, %c0_38, %c0_39], %42 {strides = array<i32>} : memref<8x1x128x128xf32, #tpu.memory_space<vmem>>, vector<1x1x128x128xf32>,
    %cst_40 = arith.constant dense<0.000000e+00> : vector<128x64xf32>
    %43 = tpu.matmul %39, %26, %cst_40 {dimension_numbers = #tpu.dot_dimension_numbers<[1], [0], [0], [1], [0, 0, 1, 1], [], []>} : vector<128x128xf32>, vector<128x64xf32>, vector<128x64xf32> -> vector<128x64xf32>
    %c0_41 = arith.constant 0 : index
    %c0_42 = arith.constant 0 : index
    %c0_43 = arith.constant 0 : index
    %44 = vector.load %arg6[%c0_41, %c0_42, %c0_43] : memref<1x128x512xf32, #tpu.memory_space<vmem>>, vector<1x128x64xf32>
    %45 = vector.shape_cast %44 : vector<1x128x64xf32> to vector<128x64xf32>
    %46 = vector.shape_cast %43 : vector<128x64xf32> to vector<1x128x64xf32>
    tpu.vector_store %arg6[%c0_41, %c0_42, %c0_43], %46 {strides = array<i32>} : memref<1x128x512xf32, #tpu.memory_space<vmem>>, vector<1x128x64xf32>,
    %c0_44 = arith.constant 0 : index
    %c64 = arith.constant 64 : index
    %47 = vector.load %arg8[%c0_44, %c64] : memref<128x512xf32, #tpu.memory_space<vmem>>, vector<128x64xf32>
    %c0_45 = arith.constant 0 : index
    %c64_46 = arith.constant 64 : index
    %48 = vector.load %arg9[%c0_45, %c64_46] : memref<128x512xf32, #tpu.memory_space<vmem>>, vector<128x64xf32>
    %c0_47 = arith.constant 0 : index
    %c64_48 = arith.constant 64 : index
    %49 = vector.load %arg10[%c0_47, %c64_48] : memref<128x512xf32, #tpu.memory_space<vmem>>, vector<128x64xf32>
    %cst_49 = arith.constant dense<0.000000e+00> : vector<128x128xf32>
    %50 = tpu.matmul %47, %48, %cst_49 {dimension_numbers = #tpu.dot_dimension_numbers<[1], [1], [0], [0], [0, 0, 1, 0], [], []>} : vector<128x64xf32>, vector<128x64xf32>, vector<128x128xf32> -> vector<128x128xf32>
    %cst_50 = arith.constant 1.250000e-01 : f32
    %51 = vector.broadcast %cst_50 : f32 to vector<128x128xf32>
    %52 = arith.mulf %50, %51 : vector<128x128xf32>
    %cst_51 = arith.constant dense<0xFF800000> : vector<128xf32>
    %53 = vector.multi_reduction <maximumf>, %52, %cst_51 [1] : vector<128x128xf32> to vector<128xf32>
    %54 = vector.shape_cast %53 : vector<128xf32> to vector<128x1xf32>
    %55 = vector.broadcast %54 : vector<128x1xf32> to vector<128x128xf32>
    %56 = arith.subf %52, %55 : vector<128x128xf32>
    %57 = math.exp %56 : vector<128x128xf32>
    %cst_52 = arith.constant dense<0.000000e+00> : vector<128xf32>
    %58 = vector.multi_reduction <add>, %57, %cst_52 [1] : vector<128x128xf32> to vector<128xf32>
    %59 = vector.shape_cast %58 : vector<128xf32> to vector<128x1xf32>
    %60 = tpu.reciprocal %59 {approx = true} : vector<128x1xf32> -> vector<128x1xf32>
    %61 = vector.broadcast %60 : vector<128x1xf32> to vector<128x128xf32>
    %62 = arith.mulf %57, %61 : vector<128x128xf32>
    %c1 = arith.constant 1 : index
    %c0_53 = arith.constant 0 : index
    %c0_54 = arith.constant 0 : index
    %c0_55 = arith.constant 0 : index
    %63 = vector.load %arg7[%c1, %c0_53, %c0_54, %c0_55] : memref<8x1x128x128xf32, #tpu.memory_space<vmem>>, vector<1x1x128x128xf32>
    %64 = vector.shape_cast %63 : vector<1x1x128x128xf32> to vector<128x128xf32>
    %65 = vector.shape_cast %62 : vector<128x128xf32> to vector<1x1x128x128xf32>
    tpu.vector_store %arg7[%c1, %c0_53, %c0_54, %c0_55], %65 {strides = array<i32>} : memref<8x1x128x128xf32, #tpu.memory_space<vmem>>, vector<1x1x128x128xf32>,
    %cst_56 = arith.constant dense<0.000000e+00> : vector<128x64xf32>
    %66 = tpu.matmul %62, %49, %cst_56 {dimension_numbers = #tpu.dot_dimension_numbers<[1], [0], [0], [1], [0, 0, 1, 1], [], []>} : vector<128x128xf32>, vector<128x64xf32>, vector<128x64xf32> -> vector<128x64xf32>
    %c0_57 = arith.constant 0 : index
    %c0_58 = arith.constant 0 : index
    %c64_59 = arith.constant 64 : index
    %67 = vector.load %arg6[%c0_57, %c0_58, %c64_59] : memref<1x128x512xf32, #tpu.memory_space<vmem>>, vector<1x128x64xf32>
    %68 = vector.shape_cast %67 : vector<1x128x64xf32> to vector<128x64xf32>
    %69 = vector.shape_cast %66 : vector<128x64xf32> to vector<1x128x64xf32>
    tpu.vector_store %arg6[%c0_57, %c0_58, %c64_59], %69 {strides = array<i32>} : memref<1x128x512xf32, #tpu.memory_space<vmem>>, vector<1x128x64xf32>,
    %c0_60 = arith.constant 0 : index
    %c128 = arith.constant 128 : index
    %70 = vector.load %arg8[%c0_60, %c128] : memref<128x512xf32, #tpu.memory_space<vmem>>, vector<128x64xf32>
    %c0_61 = arith.constant 0 : index
    %c128_62 = arith.constant 128 : index
    %71 = vector.load %arg9[%c0_61, %c128_62] : memref<128x512xf32, #tpu.memory_space<vmem>>, vector<128x64xf32>
    %c0_63 = arith.constant 0 : index
    %c128_64 = arith.constant 128 : index
    %72 = vector.load %arg10[%c0_63, %c128_64] : memref<128x512xf32, #tpu.memory_space<vmem>>, vector<128x64xf32>
    %cst_65 = arith.constant dense<0.000000e+00> : vector<128x128xf32>
    %73 = tpu.matmul %70, %71, %cst_65 {dimension_numbers = #tpu.dot_dimension_numbers<[1], [1], [0], [0], [0, 0, 1, 0], [], []>} : vector<128x64xf32>, vector<128x64xf32>, vector<128x128xf32> -> vector<128x128xf32>
    %cst_66 = arith.constant 1.250000e-01 : f32
    %74 = vector.broadcast %cst_66 : f32 to vector<128x128xf32>
    %75 = arith.mulf %73, %74 : vector<128x128xf32>
    %cst_67 = arith.constant dense<0xFF800000> : vector<128xf32>
    %76 = vector.multi_reduction <maximumf>, %75, %cst_67 [1] : vector<128x128xf32> to vector<128xf32>
    %77 = vector.shape_cast %76 : vector<128xf32> to vector<128x1xf32>
    %78 = vector.broadcast %77 : vector<128x1xf32> to vector<128x128xf32>
    %79 = arith.subf %75, %78 : vector<128x128xf32>
    %80 = math.exp %79 : vector<128x128xf32>
    %cst_68 = arith.constant dense<0.000000e+00> : vector<128xf32>
    %81 = vector.multi_reduction <add>, %80, %cst_68 [1] : vector<128x128xf32> to vector<128xf32>
    %82 = vector.shape_cast %81 : vector<128xf32> to vector<128x1xf32>
    %83 = tpu.reciprocal %82 {approx = true} : vector<128x1xf32> -> vector<128x1xf32>
    %84 = vector.broadcast %83 : vector<128x1xf32> to vector<128x128xf32>
    %85 = arith.mulf %80, %84 : vector<128x128xf32>
    %c2 = arith.constant 2 : index
    %c0_69 = arith.constant 0 : index
    %c0_70 = arith.constant 0 : index
    %c0_71 = arith.constant 0 : index
    %86 = vector.load %arg7[%c2, %c0_69, %c0_70, %c0_71] : memref<8x1x128x128xf32, #tpu.memory_space<vmem>>, vector<1x1x128x128xf32>
    %87 = vector.shape_cast %86 : vector<1x1x128x128xf32> to vector<128x128xf32>
    %88 = vector.shape_cast %85 : vector<128x128xf32> to vector<1x1x128x128xf32>
    tpu.vector_store %arg7[%c2, %c0_69, %c0_70, %c0_71], %88 {strides = array<i32>} : memref<8x1x128x128xf32, #tpu.memory_space<vmem>>, vector<1x1x128x128xf32>,
    %cst_72 = arith.constant dense<0.000000e+00> : vector<128x64xf32>
    %89 = tpu.matmul %85, %72, %cst_72 {dimension_numbers = #tpu.dot_dimension_numbers<[1], [0], [0], [1], [0, 0, 1, 1], [], []>} : vector<128x128xf32>, vector<128x64xf32>, vector<128x64xf32> -> vector<128x64xf32>
    %c0_73 = arith.constant 0 : index
    %c0_74 = arith.constant 0 : index
    %c128_75 = arith.constant 128 : index
    %90 = vector.load %arg6[%c0_73, %c0_74, %c128_75] : memref<1x128x512xf32, #tpu.memory_space<vmem>>, vector<1x128x64xf32>
    %91 = vector.shape_cast %90 : vector<1x128x64xf32> to vector<128x64xf32>
    %92 = vector.shape_cast %89 : vector<128x64xf32> to vector<1x128x64xf32>
    tpu.vector_store %arg6[%c0_73, %c0_74, %c128_75], %92 {strides = array<i32>} : memref<1x128x512xf32, #tpu.memory_space<vmem>>, vector<1x128x64xf32>,
    %c0_76 = arith.constant 0 : index
    %c192 = arith.constant 192 : index
    %93 = vector.load %arg8[%c0_76, %c192] : memref<128x512xf32, #tpu.memory_space<vmem>>, vector<128x64xf32>
    %c0_77 = arith.constant 0 : index
    %c192_78 = arith.constant 192 : index
    %94 = vector.load %arg9[%c0_77, %c192_78] : memref<128x512xf32, #tpu.memory_space<vmem>>, vector<128x64xf32>
    %c0_79 = arith.constant 0 : index
    %c192_80 = arith.constant 192 : index
    %95 = vector.load %arg10[%c0_79, %c192_80] : memref<128x512xf32, #tpu.memory_space<vmem>>, vector<128x64xf32>
    %cst_81 = arith.constant dense<0.000000e+00> : vector<128x128xf32>
    %96 = tpu.matmul %93, %94, %cst_81 {dimension_numbers = #tpu.dot_dimension_numbers<[1], [1], [0], [0], [0, 0, 1, 0], [], []>} : vector<128x64xf32>, vector<128x64xf32>, vector<128x128xf32> -> vector<128x128xf32>
    %cst_82 = arith.constant 1.250000e-01 : f32
    %97 = vector.broadcast %cst_82 : f32 to vector<128x128xf32>
    %98 = arith.mulf %96, %97 : vector<128x128xf32>
    %cst_83 = arith.constant dense<0xFF800000> : vector<128xf32>
    %99 = vector.multi_reduction <maximumf>, %98, %cst_83 [1] : vector<128x128xf32> to vector<128xf32>
    %100 = vector.shape_cast %99 : vector<128xf32> to vector<128x1xf32>
    %101 = vector.broadcast %100 : vector<128x1xf32> to vector<128x128xf32>
    %102 = arith.subf %98, %101 : vector<128x128xf32>
    %103 = math.exp %102 : vector<128x128xf32>
    %cst_84 = arith.constant dense<0.000000e+00> : vector<128xf32>
    %104 = vector.multi_reduction <add>, %103, %cst_84 [1] : vector<128x128xf32> to vector<128xf32>
    %105 = vector.shape_cast %104 : vector<128xf32> to vector<128x1xf32>
    %106 = tpu.reciprocal %105 {approx = true} : vector<128x1xf32> -> vector<128x1xf32>
    %107 = vector.broadcast %106 : vector<128x1xf32> to vector<128x128xf32>
    %108 = arith.mulf %103, %107 : vector<128x128xf32>
    %c3 = arith.constant 3 : index
    %c0_85 = arith.constant 0 : index
    %c0_86 = arith.constant 0 : index
    %c0_87 = arith.constant 0 : index
    %109 = vector.load %arg7[%c3, %c0_85, %c0_86, %c0_87] : memref<8x1x128x128xf32, #tpu.memory_space<vmem>>, vector<1x1x128x128xf32>
    %110 = vector.shape_cast %109 : vector<1x1x128x128xf32> to vector<128x128xf32>
    %111 = vector.shape_cast %108 : vector<128x128xf32> to vector<1x1x128x128xf32>
    tpu.vector_store %arg7[%c3, %c0_85, %c0_86, %c0_87], %111 {strides = array<i32>} : memref<8x1x128x128xf32, #tpu.memory_space<vmem>>, vector<1x1x128x128xf32>,
    %cst_88 = arith.constant dense<0.000000e+00> : vector<128x64xf32>
    %112 = tpu.matmul %108, %95, %cst_88 {dimension_numbers = #tpu.dot_dimension_numbers<[1], [0], [0], [1], [0, 0, 1, 1], [], []>} : vector<128x128xf32>, vector<128x64xf32>, vector<128x64xf32> -> vector<128x64xf32>
    %c0_89 = arith.constant 0 : index
    %c0_90 = arith.constant 0 : index
    %c192_91 = arith.constant 192 : index
    %113 = vector.load %arg6[%c0_89, %c0_90, %c192_91] : memref<1x128x512xf32, #tpu.memory_space<vmem>>, vector<1x128x64xf32>
    %114 = vector.shape_cast %113 : vector<1x128x64xf32> to vector<128x64xf32>
    %115 = vector.shape_cast %112 : vector<128x64xf32> to vector<1x128x64xf32>
    tpu.vector_store %arg6[%c0_89, %c0_90, %c192_91], %115 {strides = array<i32>} : memref<1x128x512xf32, #tpu.memory_space<vmem>>, vector<1x128x64xf32>,
    %c0_92 = arith.constant 0 : index
    %c256 = arith.constant 256 : index
    %116 = vector.load %arg8[%c0_92, %c256] : memref<128x512xf32, #tpu.memory_space<vmem>>, vector<128x64xf32>
    %c0_93 = arith.constant 0 : index
    %c256_94 = arith.constant 256 : index
    %117 = vector.load %arg9[%c0_93, %c256_94] : memref<128x512xf32, #tpu.memory_space<vmem>>, vector<128x64xf32>
    %c0_95 = arith.constant 0 : index
    %c256_96 = arith.constant 256 : index
    %118 = vector.load %arg10[%c0_95, %c256_96] : memref<128x512xf32, #tpu.memory_space<vmem>>, vector<128x64xf32>
    %cst_97 = arith.constant dense<0.000000e+00> : vector<128x128xf32>
    %119 = tpu.matmul %116, %117, %cst_97 {dimension_numbers = #tpu.dot_dimension_numbers<[1], [1], [0], [0], [0, 0, 1, 0], [], []>} : vector<128x64xf32>, vector<128x64xf32>, vector<128x128xf32> -> vector<128x128xf32>
    %cst_98 = arith.constant 1.250000e-01 : f32
    %120 = vector.broadcast %cst_98 : f32 to vector<128x128xf32>
    %121 = arith.mulf %119, %120 : vector<128x128xf32>
    %cst_99 = arith.constant dense<0xFF800000> : vector<128xf32>
    %122 = vector.multi_reduction <maximumf>, %121, %cst_99 [1] : vector<128x128xf32> to vector<128xf32>
    %123 = vector.shape_cast %122 : vector<128xf32> to vector<128x1xf32>
    %124 = vector.broadcast %123 : vector<128x1xf32> to vector<128x128xf32>
    %125 = arith.subf %121, %124 : vector<128x128xf32>
    %126 = math.exp %125 : vector<128x128xf32>
    %cst_100 = arith.constant dense<0.000000e+00> : vector<128xf32>
    %127 = vector.multi_reduction <add>, %126, %cst_100 [1] : vector<128x128xf32> to vector<128xf32>
    %128 = vector.shape_cast %127 : vector<128xf32> to vector<128x1xf32>
    %129 = tpu.reciprocal %128 {approx = true} : vector<128x1xf32> -> vector<128x1xf32>
    %130 = vector.broadcast %129 : vector<128x1xf32> to vector<128x128xf32>
    %131 = arith.mulf %126, %130 : vector<128x128xf32>
    %c4 = arith.constant 4 : index
    %c0_101 = arith.constant 0 : index
    %c0_102 = arith.constant 0 : index
    %c0_103 = arith.constant 0 : index
    %132 = vector.load %arg7[%c4, %c0_101, %c0_102, %c0_103] : memref<8x1x128x128xf32, #tpu.memory_space<vmem>>, vector<1x1x128x128xf32>
    %133 = vector.shape_cast %132 : vector<1x1x128x128xf32> to vector<128x128xf32>
    %134 = vector.shape_cast %131 : vector<128x128xf32> to vector<1x1x128x128xf32>
    tpu.vector_store %arg7[%c4, %c0_101, %c0_102, %c0_103], %134 {strides = array<i32>} : memref<8x1x128x128xf32, #tpu.memory_space<vmem>>, vector<1x1x128x128xf32>,
    %cst_104 = arith.constant dense<0.000000e+00> : vector<128x64xf32>
    %135 = tpu.matmul %131, %118, %cst_104 {dimension_numbers = #tpu.dot_dimension_numbers<[1], [0], [0], [1], [0, 0, 1, 1], [], []>} : vector<128x128xf32>, vector<128x64xf32>, vector<128x64xf32> -> vector<128x64xf32>
    %c0_105 = arith.constant 0 : index
    %c0_106 = arith.constant 0 : index
    %c256_107 = arith.constant 256 : index
    %136 = vector.load %arg6[%c0_105, %c0_106, %c256_107] : memref<1x128x512xf32, #tpu.memory_space<vmem>>, vector<1x128x64xf32>
    %137 = vector.shape_cast %136 : vector<1x128x64xf32> to vector<128x64xf32>
    %138 = vector.shape_cast %135 : vector<128x64xf32> to vector<1x128x64xf32>
    tpu.vector_store %arg6[%c0_105, %c0_106, %c256_107], %138 {strides = array<i32>} : memref<1x128x512xf32, #tpu.memory_space<vmem>>, vector<1x128x64xf32>,
    %c0_108 = arith.constant 0 : index
    %c320 = arith.constant 320 : index
    %139 = vector.load %arg8[%c0_108, %c320] : memref<128x512xf32, #tpu.memory_space<vmem>>, vector<128x64xf32>
    %c0_109 = arith.constant 0 : index
    %c320_110 = arith.constant 320 : index
    %140 = vector.load %arg9[%c0_109, %c320_110] : memref<128x512xf32, #tpu.memory_space<vmem>>, vector<128x64xf32>
    %c0_111 = arith.constant 0 : index
    %c320_112 = arith.constant 320 : index
    %141 = vector.load %arg10[%c0_111, %c320_112] : memref<128x512xf32, #tpu.memory_space<vmem>>, vector<128x64xf32>
    %cst_113 = arith.constant dense<0.000000e+00> : vector<128x128xf32>
    %142 = tpu.matmul %139, %140, %cst_113 {dimension_numbers = #tpu.dot_dimension_numbers<[1], [1], [0], [0], [0, 0, 1, 0], [], []>} : vector<128x64xf32>, vector<128x64xf32>, vector<128x128xf32> -> vector<128x128xf32>
    %cst_114 = arith.constant 1.250000e-01 : f32
    %143 = vector.broadcast %cst_114 : f32 to vector<128x128xf32>
    %144 = arith.mulf %142, %143 : vector<128x128xf32>
    %cst_115 = arith.constant dense<0xFF800000> : vector<128xf32>
    %145 = vector.multi_reduction <maximumf>, %144, %cst_115 [1] : vector<128x128xf32> to vector<128xf32>
    %146 = vector.shape_cast %145 : vector<128xf32> to vector<128x1xf32>
    %147 = vector.broadcast %146 : vector<128x1xf32> to vector<128x128xf32>
    %148 = arith.subf %144, %147 : vector<128x128xf32>
    %149 = math.exp %148 : vector<128x128xf32>
    %cst_116 = arith.constant dense<0.000000e+00> : vector<128xf32>
    %150 = vector.multi_reduction <add>, %149, %cst_116 [1] : vector<128x128xf32> to vector<128xf32>
    %151 = vector.shape_cast %150 : vector<128xf32> to vector<128x1xf32>
    %152 = tpu.reciprocal %151 {approx = true} : vector<128x1xf32> -> vector<128x1xf32>
    %153 = vector.broadcast %152 : vector<128x1xf32> to vector<128x128xf32>
    %154 = arith.mulf %149, %153 : vector<128x128xf32>
    %c5 = arith.constant 5 : index
    %c0_117 = arith.constant 0 : index
    %c0_118 = arith.constant 0 : index
    %c0_119 = arith.constant 0 : index
    %155 = vector.load %arg7[%c5, %c0_117, %c0_118, %c0_119] : memref<8x1x128x128xf32, #tpu.memory_space<vmem>>, vector<1x1x128x128xf32>
    %156 = vector.shape_cast %155 : vector<1x1x128x128xf32> to vector<128x128xf32>
    %157 = vector.shape_cast %154 : vector<128x128xf32> to vector<1x1x128x128xf32>
    tpu.vector_store %arg7[%c5, %c0_117, %c0_118, %c0_119], %157 {strides = array<i32>} : memref<8x1x128x128xf32, #tpu.memory_space<vmem>>, vector<1x1x128x128xf32>,
    %cst_120 = arith.constant dense<0.000000e+00> : vector<128x64xf32>
    %158 = tpu.matmul %154, %141, %cst_120 {dimension_numbers = #tpu.dot_dimension_numbers<[1], [0], [0], [1], [0, 0, 1, 1], [], []>} : vector<128x128xf32>, vector<128x64xf32>, vector<128x64xf32> -> vector<128x64xf32>
    %c0_121 = arith.constant 0 : index
    %c0_122 = arith.constant 0 : index
    %c320_123 = arith.constant 320 : index
    %159 = vector.load %arg6[%c0_121, %c0_122, %c320_123] : memref<1x128x512xf32, #tpu.memory_space<vmem>>, vector<1x128x64xf32>
    %160 = vector.shape_cast %159 : vector<1x128x64xf32> to vector<128x64xf32>
    %161 = vector.shape_cast %158 : vector<128x64xf32> to vector<1x128x64xf32>
    tpu.vector_store %arg6[%c0_121, %c0_122, %c320_123], %161 {strides = array<i32>} : memref<1x128x512xf32, #tpu.memory_space<vmem>>, vector<1x128x64xf32>,
    %c0_124 = arith.constant 0 : index
    %c384 = arith.constant 384 : index
    %162 = vector.load %arg8[%c0_124, %c384] : memref<128x512xf32, #tpu.memory_space<vmem>>, vector<128x64xf32>
    %c0_125 = arith.constant 0 : index
    %c384_126 = arith.constant 384 : index
    %163 = vector.load %arg9[%c0_125, %c384_126] : memref<128x512xf32, #tpu.memory_space<vmem>>, vector<128x64xf32>
    %c0_127 = arith.constant 0 : index
    %c384_128 = arith.constant 384 : index
    %164 = vector.load %arg10[%c0_127, %c384_128] : memref<128x512xf32, #tpu.memory_space<vmem>>, vector<128x64xf32>
    %cst_129 = arith.constant dense<0.000000e+00> : vector<128x128xf32>
    %165 = tpu.matmul %162, %163, %cst_129 {dimension_numbers = #tpu.dot_dimension_numbers<[1], [1], [0], [0], [0, 0, 1, 0], [], []>} : vector<128x64xf32>, vector<128x64xf32>, vector<128x128xf32> -> vector<128x128xf32>
    %cst_130 = arith.constant 1.250000e-01 : f32
    %166 = vector.broadcast %cst_130 : f32 to vector<128x128xf32>
    %167 = arith.mulf %165, %166 : vector<128x128xf32>
    %cst_131 = arith.constant dense<0xFF800000> : vector<128xf32>
    %168 = vector.multi_reduction <maximumf>, %167, %cst_131 [1] : vector<128x128xf32> to vector<128xf32>
    %169 = vector.shape_cast %168 : vector<128xf32> to vector<128x1xf32>
    %170 = vector.broadcast %169 : vector<128x1xf32> to vector<128x128xf32>
    %171 = arith.subf %167, %170 : vector<128x128xf32>
    %172 = math.exp %171 : vector<128x128xf32>
    %cst_132 = arith.constant dense<0.000000e+00> : vector<128xf32>
    %173 = vector.multi_reduction <add>, %172, %cst_132 [1] : vector<128x128xf32> to vector<128xf32>
    %174 = vector.shape_cast %173 : vector<128xf32> to vector<128x1xf32>
    %175 = tpu.reciprocal %174 {approx = true} : vector<128x1xf32> -> vector<128x1xf32>
    %176 = vector.broadcast %175 : vector<128x1xf32> to vector<128x128xf32>
    %177 = arith.mulf %172, %176 : vector<128x128xf32>
    %c6 = arith.constant 6 : index
    %c0_133 = arith.constant 0 : index
    %c0_134 = arith.constant 0 : index
    %c0_135 = arith.constant 0 : index
    %178 = vector.load %arg7[%c6, %c0_133, %c0_134, %c0_135] : memref<8x1x128x128xf32, #tpu.memory_space<vmem>>, vector<1x1x128x128xf32>
    %179 = vector.shape_cast %178 : vector<1x1x128x128xf32> to vector<128x128xf32>
    %180 = vector.shape_cast %177 : vector<128x128xf32> to vector<1x1x128x128xf32>
    tpu.vector_store %arg7[%c6, %c0_133, %c0_134, %c0_135], %180 {strides = array<i32>} : memref<8x1x128x128xf32, #tpu.memory_space<vmem>>, vector<1x1x128x128xf32>,
    %cst_136 = arith.constant dense<0.000000e+00> : vector<128x64xf32>
    %181 = tpu.matmul %177, %164, %cst_136 {dimension_numbers = #tpu.dot_dimension_numbers<[1], [0], [0], [1], [0, 0, 1, 1], [], []>} : vector<128x128xf32>, vector<128x64xf32>, vector<128x64xf32> -> vector<128x64xf32>
    %c0_137 = arith.constant 0 : index
    %c0_138 = arith.constant 0 : index
    %c384_139 = arith.constant 384 : index
    %182 = vector.load %arg6[%c0_137, %c0_138, %c384_139] : memref<1x128x512xf32, #tpu.memory_space<vmem>>, vector<1x128x64xf32>
    %183 = vector.shape_cast %182 : vector<1x128x64xf32> to vector<128x64xf32>
    %184 = vector.shape_cast %181 : vector<128x64xf32> to vector<1x128x64xf32>
    tpu.vector_store %arg6[%c0_137, %c0_138, %c384_139], %184 {strides = array<i32>} : memref<1x128x512xf32, #tpu.memory_space<vmem>>, vector<1x128x64xf32>,
    %c0_140 = arith.constant 0 : index
    %c448 = arith.constant 448 : index
    %185 = vector.load %arg8[%c0_140, %c448] : memref<128x512xf32, #tpu.memory_space<vmem>>, vector<128x64xf32>
    %c0_141 = arith.constant 0 : index
    %c448_142 = arith.constant 448 : index
    %186 = vector.load %arg9[%c0_141, %c448_142] : memref<128x512xf32, #tpu.memory_space<vmem>>, vector<128x64xf32>
    %c0_143 = arith.constant 0 : index
    %c448_144 = arith.constant 448 : index
    %187 = vector.load %arg10[%c0_143, %c448_144] : memref<128x512xf32, #tpu.memory_space<vmem>>, vector<128x64xf32>
    %cst_145 = arith.constant dense<0.000000e+00> : vector<128x128xf32>
    %188 = tpu.matmul %185, %186, %cst_145 {dimension_numbers = #tpu.dot_dimension_numbers<[1], [1], [0], [0], [0, 0, 1, 0], [], []>} : vector<128x64xf32>, vector<128x64xf32>, vector<128x128xf32> -> vector<128x128xf32>
    %cst_146 = arith.constant 1.250000e-01 : f32
    %189 = vector.broadcast %cst_146 : f32 to vector<128x128xf32>
    %190 = arith.mulf %188, %189 : vector<128x128xf32>
    %cst_147 = arith.constant dense<0xFF800000> : vector<128xf32>
    %191 = vector.multi_reduction <maximumf>, %190, %cst_147 [1] : vector<128x128xf32> to vector<128xf32>
    %192 = vector.shape_cast %191 : vector<128xf32> to vector<128x1xf32>
    %193 = vector.broadcast %192 : vector<128x1xf32> to vector<128x128xf32>
    %194 = arith.subf %190, %193 : vector<128x128xf32>
    %195 = math.exp %194 : vector<128x128xf32>
    %cst_148 = arith.constant dense<0.000000e+00> : vector<128xf32>
    %196 = vector.multi_reduction <add>, %195, %cst_148 [1] : vector<128x128xf32> to vector<128xf32>
    %197 = vector.shape_cast %196 : vector<128xf32> to vector<128x1xf32>
    %198 = tpu.reciprocal %197 {approx = true} : vector<128x1xf32> -> vector<128x1xf32>
    %199 = vector.broadcast %198 : vector<128x1xf32> to vector<128x128xf32>
    %200 = arith.mulf %195, %199 : vector<128x128xf32>
    %c7 = arith.constant 7 : index
    %c0_149 = arith.constant 0 : index
    %c0_150 = arith.constant 0 : index
    %c0_151 = arith.constant 0 : index
    %201 = vector.load %arg7[%c7, %c0_149, %c0_150, %c0_151] : memref<8x1x128x128xf32, #tpu.memory_space<vmem>>, vector<1x1x128x128xf32>
    %202 = vector.shape_cast %201 : vector<1x1x128x128xf32> to vector<128x128xf32>
    %203 = vector.shape_cast %200 : vector<128x128xf32> to vector<1x1x128x128xf32>
    tpu.vector_store %arg7[%c7, %c0_149, %c0_150, %c0_151], %203 {strides = array<i32>} : memref<8x1x128x128xf32, #tpu.memory_space<vmem>>, vector<1x1x128x128xf32>,
    %cst_152 = arith.constant dense<0.000000e+00> : vector<128x64xf32>
    %204 = tpu.matmul %200, %187, %cst_152 {dimension_numbers = #tpu.dot_dimension_numbers<[1], [0], [0], [1], [0, 0, 1, 1], [], []>} : vector<128x128xf32>, vector<128x64xf32>, vector<128x64xf32> -> vector<128x64xf32>
    %c0_153 = arith.constant 0 : index
    %c0_154 = arith.constant 0 : index
    %c448_155 = arith.constant 448 : index
    %205 = vector.load %arg6[%c0_153, %c0_154, %c448_155] : memref<1x128x512xf32, #tpu.memory_space<vmem>>, vector<1x128x64xf32>
    %206 = vector.shape_cast %205 : vector<1x128x64xf32> to vector<128x64xf32>
    %207 = vector.shape_cast %204 : vector<128x64xf32> to vector<1x128x64xf32>
    tpu.vector_store %arg6[%c0_153, %c0_154, %c448_155], %207 {strides = array<i32>} : memref<1x128x512xf32, #tpu.memory_space<vmem>>, vector<1x128x64xf32>,
    return
  }
  func.func @transform_0(%arg0: i32) -> (i32, i32, i32) {
    %c0_i32 = arith.constant 0 : i32
    %c0_i32_0 = arith.constant 0 : i32
    %c0_i32_1 = arith.constant 0 : i32
    return %arg0, %c0_i32, %c0_i32_0 : i32, i32, i32
  }
  func.func @transform_1(%arg0: i32) -> (i32, i32, i32) {
    %c0_i32 = arith.constant 0 : i32
    %c0_i32_0 = arith.constant 0 : i32
    %c0_i32_1 = arith.constant 0 : i32
    return %arg0, %c0_i32, %c0_i32_0 : i32, i32, i32
  }
  func.func @transform_2(%arg0: i32) -> (i32, i32, i32) {
    %c0_i32 = arith.constant 0 : i32
    %c0_i32_0 = arith.constant 0 : i32
    %c0_i32_1 = arith.constant 0 : i32
    return %arg0, %c0_i32, %c0_i32_0 : i32, i32, i32
  }
  func.func @transform_3(%arg0: i32) -> (i32, i32) {
    %c0_i32 = arith.constant 0 : i32
    %c0_i32_0 = arith.constant 0 : i32
    %c0_i32_1 = arith.constant 0 : i32
    return %c0_i32, %c0_i32_0 : i32, i32
  }
  func.func @transform_4(%arg0: i32) -> (i32, i32) {
    %c0_i32 = arith.constant 0 : i32
    %c0_i32_0 = arith.constant 0 : i32
    %c0_i32_1 = arith.constant 0 : i32
    return %c0_i32, %c0_i32_0 : i32, i32
  }
  func.func @transform_5(%arg0: i32) -> (i32, i32, i32) {
    %c0_i32 = arith.constant 0 : i32
    %c0_i32_0 = arith.constant 0 : i32
    %c0_i32_1 = arith.constant 0 : i32
    return %arg0, %c0_i32, %c0_i32_0 : i32, i32, i32
  }
  func.func @transform_6(%arg0: i32) -> (i32, i32, i32, i32) {
    %c0_i32 = arith.constant 0 : i32
    %c0_i32_0 = arith.constant 0 : i32
    %c0_i32_1 = arith.constant 0 : i32
    %c0_i32_2 = arith.constant 0 : i32
    return %c0_i32, %arg0, %c0_i32_0, %c0_i32_1 : i32, i32, i32, i32
  }
}

</mosaic_0001>

<llo_original>
// kernel: tpu_custom_call.1
$region0: #{tpu_custom_call.1}
  #allocation0 [shape = 'u32[]', space=smem, size = 0x4, offset = 0x4, fixed_abs, tag = 'smem constant byte address 0x4 - core index']
  #allocation1 [shape = 'u32[144,128]{1,0:T(1,128)}', space=vmem, size = 0x12000, scoped, tag = 'internal scratch']
  #allocation2 [shape = 'f32[128,512]{1,0:T(8,128)}', space=vmem, size = 0x40000, scoped, tag = 'scratch operand']
  #allocation3 [shape = 'f32[128,512]{1,0:T(8,128)}', space=vmem, size = 0x40000, scoped, tag = 'scratch operand']
  #allocation4 [shape = 'f32[128,512]{1,0:T(8,128)}', space=vmem, size = 0x40000, scoped, tag = 'scratch operand']
  #allocation17 [shape = 's32[]', space=sflag, size = 0x4, offset = 0, fixed_abs, tag = 'sflag constant byte address 0x0 - dummy sync flag']
  %s0 = inlined_call_operand.hbm [shape: f32[2,128,512], index: 0, kind: input, shape index: {}]
  %s1 = inlined_call_operand.hbm [shape: f32[2,128,512], index: 1, kind: input, shape index: {}]
  %s2 = inlined_call_operand.hbm [shape: f32[2,128,512], index: 2, kind: input, shape index: {}]
  %s3 = inlined_call_operand.hbm [shape: f32[512,1536], index: 3, kind: input, shape index: {}]
  %s4 = inlined_call_operand.hbm [shape: f32[1,1536], index: 4, kind: input, shape index: {}]
  %s5 = inlined_call_operand.hbm [shape: f32[2,128,512], index: 5, kind: output, shape index: {0}]
  %s6 = inlined_call_operand.hbm [shape: f32[8,2,128,128], index: 6, kind: output, shape index: {1}]
  %7 = xla_tuple %s5, %s6
  %s8 = sld [smem:[#allocation0]]
  $region81: #{tpu_custom_call.1} parent=0
    _
  %s10 = ssub.s32 1, %s8
  %s11 = scalar_select 0, %s10, %s8
  $region1: #{tpu_custom_call.1} parent=0
    #allocation5 [shape = 'u8[524288]{0}', space=vmem, size = 0x80000, scoped, tag = 'input window, operand 0']
    #allocation6 [shape = 's32[2]{0}', space=sflag, size = 0x8, scoped, tag = 'scoped memory for tpu_custom_call.1']
    #allocation7 [shape = 's32[2]{0}', space=sflag, size = 0x8, scoped, tag = 'scoped memory for tpu_custom_call.1']
    #allocation8 [shape = 'u8[524288]{0}', space=vmem, size = 0x80000, scoped, tag = 'input window, operand 1']
    #allocation9 [shape = 's32[2]{0}', space=sflag, size = 0x8, scoped, tag = 'scoped memory for tpu_custom_call.1']
    #allocation10 [shape = 'u8[524288]{0}', space=vmem, size = 0x80000, scoped, tag = 'input window, operand 2']
    #allocation11 [shape = 'u8[3145728]{0}', space=vmem, size = 0x300000, scoped, tag = 'input window, operand 3, single buffered']
    #allocation12 [shape = 's32[1]{0}', space=sflag, size = 0x4, scoped, tag = 'scoped memory for tpu_custom_call.1']
    #allocation13 [shape = 'u8[6144]{0}', space=vmem, size = 0x1800, scoped, tag = 'input window, operand 4, single buffered']
    #allocation14 [shape = 'u8[524288]{0}', space=vmem, size = 0x80000, scoped, tag = 'output window, operand 0']
    #allocation15 [shape = 'u8[1048576]{0}', space=vmem, size = 0x100000, scoped, tag = 'output window, operand 1']
    #allocation16 [shape = 's32[2]{0}', space=sflag, size = 0x8, scoped, tag = 'scoped memory for tpu_custom_call.1']
    %12 = vsyncpa [#allocation6], 0
    %s13 = scalar_lea.sflag [#allocation6], 1
    %14 = vsyncpa %s13, 0
    %15 = vsyncpa [#allocation9], 0
    %s16 = scalar_lea.sflag [#allocation9], 1
    %17 = vsyncpa %s16, 0
    %18 = vsyncpa [#allocation12], 0
    %19 = vsyncpa [#allocation7], 0
    %s20 = scalar_lea.sflag [#allocation7], 1
    %21 = vsyncpa %s20, 0
    %22 = vsyncpa [#allocation16], 0
    %s23 = scalar_lea.sflag [#allocation16], 1
    %24 = vsyncpa %s23, 0
    loop: start=0, step=1, limit=4
    $region2: #{tpu_custom_call.1} parent=1 // loop_pre_header
      _
    $region3: #{tpu_custom_call.1} parent=1 // loop_header
      %s26 = sphi 0, %s30
      %p27 = scmp.ge.s32.totalorder %s26, 4
      %s36 = sphi 0, %s38
      %s39 = sphi 0, %s36
      %s40 = sphi 0, %s39
      %s56 = sphi 0, %s40
      %s62 = sphi 0, %s64
      %s65 = sphi 0, %s62
      %s66 = sphi 0, %s65
      %s82 = sphi 0, %s66
      %s88 = sphi 0, %s90
      %s91 = sphi 0, %s88
      %s92 = sphi 0, %s91
      %s108 = sphi 0, %s92
      %s112 = sphi 0, %s112
      %s114 = sphi 0, %s112
      %s115 = sphi 0, %s114
      %s129 = sphi 0, %s115
      %s133 = sphi 0, %s133
      %s135 = sphi 0, %s133
      %s136 = sphi 0, %s135
      %s150 = sphi 0, %s136
      %s156 = sphi 0, %s158
      %s159 = sphi 0, %s156
      %s160 = sphi 0, %s159
      %s176 = sphi 0, %s160
      %s182 = sphi 0, %s184
      %s185 = sphi 0, %s182
      %s186 = sphi 0, %s185
      %s202 = sphi 0, %s186
    $region4: #{tpu_custom_call.1} parent=1 // loop_header_branch
      %29 = sbr.rel (%p27) target = $region8
    $region5: #{tpu_custom_call.1} parent=1 // loop_body
      %s31 = ssub.s32 %s26, 1
      %s32 = ssub.s32 %s26, 2
      %s33 = sadd.s32 %s26, 1
      %s34 = ssub.s32 %s26, %s33
      %p35 = scmp.eq.s32.totalorder %s34, 0
      %s37 = sadd.s32 %s36, 1
      %s38 = scalar_select %p35, %s36, %s37
      %p41 = pneg %p35
      %p42 = scmp.eq.s32.totalorder %s26, 1
      %p43 = por %p41, %p42
      %p44 = scmp.ne.s32.totalorder %s36, %s39
      %p45 = scmp.eq.s32.totalorder %s26, 0
      %p46 = por %p44, %p45
      %p47 = scmp.ne.s32.totalorder %s36, %s39
      %p48 = scmp.eq.s32.totalorder %s31, 1
      %p49 = por %p47, %p48
      %p50 = scmp.ne.s32.totalorder %s39, %s40
      %p51 = scmp.eq.s32.totalorder %s31, 0
      %p52 = por %p50, %p51
      %p53 = scmp.ne.s32.totalorder %s39, %s40
      %p54 = scmp.eq.s32.totalorder %s32, 1
      %p55 = por %p53, %p54
      %p57 = scmp.ne.s32.totalorder %s40, %s56
      %p58 = scmp.eq.s32.totalorder %s32, 0
      %p59 = por %p57, %p58
      %s60 = ssub.s32 %s26, %s33
      %p61 = scmp.eq.s32.totalorder %s60, 0
      %s63 = sadd.s32 %s62, 1
      %s64 = scalar_select %p61, %s62, %s63
      %p67 = pneg %p61
      %p68 = scmp.eq.s32.totalorder %s26, 1
      %p69 = por %p67, %p68
      %p70 = scmp.ne.s32.totalorder %s62, %s65
      %p71 = scmp.eq.s32.totalorder %s26, 0
      %p72 = por %p70, %p71
      %p73 = scmp.ne.s32.totalorder %s62, %s65
      %p74 = scmp.eq.s32.totalorder %s31, 1
      %p75 = por %p73, %p74
      %p76 = scmp.ne.s32.totalorder %s65, %s66
      %p77 = scmp.eq.s32.totalorder %s31, 0
      %p78 = por %p76, %p77
      %p79 = scmp.ne.s32.totalorder %s65, %s66
      %p80 = scmp.eq.s32.totalorder %s32, 1
      %p81 = por %p79, %p80
      %p83 = scmp.ne.s32.totalorder %s66, %s82
      %p84 = scmp.eq.s32.totalorder %s32, 0
      %p85 = por %p83, %p84
      %s86 = ssub.s32 %s26, %s33
      %p87 = scmp.eq.s32.totalorder %s86, 0
      %s89 = sadd.s32 %s88, 1
      %s90 = scalar_select %p87, %s88, %s89
      %p93 = pneg %p87
      %p94 = scmp.eq.s32.totalorder %s26, 1
      %p95 = por %p93, %p94
      %p96 = scmp.ne.s32.totalorder %s88, %s91
      %p97 = scmp.eq.s32.totalorder %s26, 0
      %p98 = por %p96, %p97
      %p99 = scmp.ne.s32.totalorder %s88, %s91
      %p100 = scmp.eq.s32.totalorder %s31, 1
      %p101 = por %p99, %p100
      %p102 = scmp.ne.s32.totalorder %s91, %s92
      %p103 = scmp.eq.s32.totalorder %s31, 0
      %p104 = por %p102, %p103
      %p105 = scmp.ne.s32.totalorder %s91, %s92
      %p106 = scmp.eq.s32.totalorder %s32, 1
      %p107 = por %p105, %p106
      %p109 = scmp.ne.s32.totalorder %s92, %s108
      %p110 = scmp.eq.s32.totalorder %s32, 0
      %p111 = por %p109, %p110
      %s113 = sadd.s32 %s112, 1
      %p116 = scmp.eq.s32.totalorder %s26, 1
      %p117 = scmp.ne.s32.totalorder %s112, %s114
      %p118 = scmp.eq.s32.totalorder %s26, 0
      %p119 = por %p117, %p118
      %p120 = scmp.ne.s32.totalorder %s112, %s114
      %p121 = scmp.eq.s32.totalorder %s31, 1
      %p122 = por %p120, %p121
      %p123 = scmp.ne.s32.totalorder %s114, %s115
      %p124 = scmp.eq.s32.totalorder %s31, 0
      %p125 = por %p123, %p124
      %p126 = scmp.ne.s32.totalorder %s114, %s115
      %p127 = scmp.eq.s32.totalorder %s32, 1
      %p128 = por %p126, %p127
      %p130 = scmp.ne.s32.totalorder %s115, %s129
      %p131 = scmp.eq.s32.totalorder %s32, 0
      %p132 = por %p130, %p131
      %s134 = sadd.s32 %s133, 1
      %p137 = scmp.eq.s32.totalorder %s26, 1
      %p138 = scmp.ne.s32.totalorder %s133, %s135
      %p139 = scmp.eq.s32.totalorder %s26, 0
      %p140 = por %p138, %p139
      %p141 = scmp.ne.s32.totalorder %s133, %s135
      %p142 = scmp.eq.s32.totalorder %s31, 1
      %p143 = por %p141, %p142
      %p144 = scmp.ne.s32.totalorder %s135, %s136
      %p145 = scmp.eq.s32.totalorder %s31, 0
      %p146 = por %p144, %p145
      %p147 = scmp.ne.s32.totalorder %s135, %s136
      %p148 = scmp.eq.s32.totalorder %s32, 1
      %p149 = por %p147, %p148
      %p151 = scmp.ne.s32.totalorder %s136, %s150
      %p152 = scmp.eq.s32.totalorder %s32, 0
      %p153 = por %p151, %p152
      %s154 = ssub.s32 %s26, %s33
      %p155 = scmp.eq.s32.totalorder %s154, 0
      %s157 = sadd.s32 %s156, 1
      %s158 = scalar_select %p155, %s156, %s157
      %p161 = pneg %p155
      %p162 = scmp.eq.s32.totalorder %s26, 1
      %p163 = por %p161, %p162
      %p164 = scmp.ne.s32.totalorder %s156, %s159
      %p165 = scmp.eq.s32.totalorder %s26, 0
      %p166 = por %p164, %p165
      %p167 = scmp.ne.s32.totalorder %s156, %s159
      %p168 = scmp.eq.s32.totalorder %s31, 1
      %p169 = por %p167, %p168
      %p170 = scmp.ne.s32.totalorder %s159, %s160
      %p171 = scmp.eq.s32.totalorder %s31, 0
      %p172 = por %p170, %p171
      %p173 = scmp.ne.s32.totalorder %s159, %s160
      %p174 = scmp.eq.s32.totalorder %s32, 1
      %p175 = por %p173, %p174
      %p177 = scmp.ne.s32.totalorder %s160, %s176
      %p178 = scmp.eq.s32.totalorder %s32, 0
      %p179 = por %p177, %p178
      %s180 = ssub.s32 %s26, %s33
      %p181 = scmp.eq.s32.totalorder %s180, 0
      %s183 = sadd.s32 %s182, 1
      %s184 = scalar_select %p181, %s182, %s183
      %p187 = pneg %p181
      %p188 = scmp.eq.s32.totalorder %s26, 1
      %p189 = por %p187, %p188
      %p190 = scmp.ne.s32.totalorder %s182, %s185
      %p191 = scmp.eq.s32.totalorder %s26, 0
      %p192 = por %p190, %p191
      %p193 = scmp.ne.s32.totalorder %s182, %s185
      %p194 = scmp.eq.s32.totalorder %s31, 1
      %p195 = por %p193, %p194
      %p196 = scmp.ne.s32.totalorder %s185, %s186
      %p197 = scmp.eq.s32.totalorder %s31, 0
      %p198 = por %p196, %p197
      %p199 = scmp.ne.s32.totalorder %s185, %s186
      %p200 = scmp.eq.s32.totalorder %s32, 1
      %p201 = por %p199, %p200
      %p203 = scmp.ne.s32.totalorder %s186, %s202
      %p204 = scmp.eq.s32.totalorder %s32, 0
      %p205 = por %p203, %p204
      %p206 = scmp.le.s32.totalorder 1, %s26
      %p207 = scmp.lt.s32.totalorder %s26, 3
      %p208 = pnand %p206, %p207
      %p209 = pneg %p208
      // Predicated region
      $region9: #{tpu_custom_call.1} parent=5 // pred_check
        _
      $region10: #{tpu_custom_call.1} parent=5 // pred_check_branch
        %211 = sbr.rel (%p208) target = $region12
      $region11: #{tpu_custom_call.1} parent=5 // pred_region
        %s212 = ssub.s32 %s26, 1
        // Predicated region
        $region13: #{tpu_custom_call.1} parent=11 // pred_check
          %p213 = pneg %p125
        $region14: #{tpu_custom_call.1} parent=11 // pred_check_branch
          %215 = sbr.rel (%p213) target = $region16
        $region15: #{tpu_custom_call.1} parent=11 // pred_region
          %s217 = ssub.s32 98304, 98304
          %218 = vsyncadd [#allocation12], %s217
          %s219 = sshll.u32 [#allocation11], 4
          %s220 = int_to_ptr.vmem [resolvable:$true] %s219
          %225 = dma.hbm_to_vmem [thread:$0]  %s3, 98304, %s220, [#allocation12], 1536, 1536, 96
        $region16: #{tpu_custom_call.1} parent=11 // pred_fallthru
          _
        // Predicated region
        $region17: #{tpu_custom_call.1} parent=11 // pred_check
          %p226 = pneg %p146
        $region18: #{tpu_custom_call.1} parent=11 // pred_check_branch
          %228 = sbr.rel (%p226) target = $region20
        $region19: #{tpu_custom_call.1} parent=11 // pred_region
          %s230 = ssub.s32 192, 192
          %231 = vsyncadd [#allocation12], %s230
          %s233 = sshll.u32 [#allocation13], 4
          %s234 = int_to_ptr.vmem [resolvable:$true] %s233
          %236 = dma.hbm_to_vmem [thread:$0]  %s4, 192, %s234, [#allocation12]
        $region20: #{tpu_custom_call.1} parent=11 // pred_fallthru
          _
      $region12: #{tpu_custom_call.1} parent=5 // pred_fallthru
        _
      %p237 = scmp.lt.s32.totalorder %s26, 2
      // Predicated region
      $region21: #{tpu_custom_call.1} parent=5 // pred_check
        %p238 = pneg %p237
      $region22: #{tpu_custom_call.1} parent=5 // pred_check_branch
        %240 = sbr.rel (%p238) target = $region24
      $region23: #{tpu_custom_call.1} parent=5 // pred_region
        // Predicated region
        $region25: #{tpu_custom_call.1} parent=23 // pred_check
          %p241 = pneg %p46
        $region26: #{tpu_custom_call.1} parent=23 // pred_check_branch
          %243 = sbr.rel (%p241) target = $region28
        $region27: #{tpu_custom_call.1} parent=23 // pred_region
          %s244 = sand.u32 %s36, 1
          %s245 = scalar_lea.sflag [#allocation6], %s244
          %s246 = sand.u32 %s36, 1
          %s247 = smul.addr %s246, 512
          %s248 = scalar_lea.vmem [#allocation5], %s247
          %s250 = ssub.s32 8192, 8192
          %251 = vsyncadd %s245, %s250
          %s252 = smul.addr %s26, 64
          %s253 = smul.addr %s252, 128
          %s254 = scalar_lea.hbm %s0, %s253
          %s255 = sshll.u32 %s248, 4
          %s256 = int_to_ptr.vmem [resolvable:$true] %s255
          %261 = dma.hbm_to_vmem [thread:$0]  %s254, 8192, %s256, %s245, 512, 512, 32
        $region28: #{tpu_custom_call.1} parent=23 // pred_fallthru
          _
        // Predicated region
        $region29: #{tpu_custom_call.1} parent=23 // pred_check
          %p262 = pneg %p72
        $region30: #{tpu_custom_call.1} parent=23 // pred_check_branch
          %264 = sbr.rel (%p262) target = $region32
        $region31: #{tpu_custom_call.1} parent=23 // pred_region
          %s265 = sand.u32 %s26, 1
          %s266 = scalar_lea.sflag [#allocation9], %s265
          %s267 = sand.u32 %s62, 1
          %s268 = smul.addr %s267, 512
          %s269 = scalar_lea.vmem [#allocation8], %s268
          %s271 = ssub.s32 8192, 8192
          %272 = vsyncadd %s266, %s271
          %s273 = smul.addr %s26, 64
          %s274 = smul.addr %s273, 128
          %s275 = scalar_lea.hbm %s1, %s274
          %s276 = sshll.u32 %s269, 4
          %s277 = int_to_ptr.vmem [resolvable:$true] %s276
          %282 = dma.hbm_to_vmem [thread:$0]  %s275, 8192, %s277, %s266, 512, 512, 32
        $region32: #{tpu_custom_call.1} parent=23 // pred_fallthru
          _
        // Predicated region
        $region33: #{tpu_custom_call.1} parent=23 // pred_check
          %p283 = pneg %p98
        $region34: #{tpu_custom_call.1} parent=23 // pred_check_branch
          %285 = sbr.rel (%p283) target = $region36
        $region35: #{tpu_custom_call.1} parent=23 // pred_region
          %s286 = sand.u32 %s26, 1
          %s287 = scalar_lea.sflag [#allocation9], %s286
          %s288 = sand.u32 %s88, 1
          %s289 = smul.addr %s288, 512
          %s290 = scalar_lea.vmem [#allocation10], %s289
          %s292 = ssub.s32 8192, 8192
          %293 = vsyncadd %s287, %s292
          %s294 = smul.addr %s26, 64
          %s295 = smul.addr %s294, 128
          %s296 = scalar_lea.hbm %s2, %s295
          %s297 = sshll.u32 %s290, 4
          %s298 = int_to_ptr.vmem [resolvable:$true] %s297
          %303 = dma.hbm_to_vmem [thread:$0]  %s296, 8192, %s298, %s287, 512, 512, 32
        $region36: #{tpu_custom_call.1} parent=23 // pred_fallthru
          _
      $region24: #{tpu_custom_call.1} parent=5 // pred_fallthru
        _
      %p304 = scmp.le.s32.totalorder 1, %s26
      %p305 = scmp.lt.s32.totalorder %s26, 3
      %p306 = pnand %p304, %p305
      %p307 = pneg %p306
      // Predicated region
      $region37: #{tpu_custom_call.1} parent=5 // pred_check
        _
      $region38: #{tpu_custom_call.1} parent=5 // pred_check_branch
        %309 = sbr.rel (%p306) target = $region40
      $region39: #{tpu_custom_call.1} parent=5 // pred_region
        %s310 = ssub.s32 %s26, 1
        %s311 = sand.u32 %s39, 1
        %s312 = scalar_lea.sflag [#allocation6], %s311
        %s313 = sand.u32 %s39, 1
        %s314 = smul.addr %s313, 512
        %s315 = scalar_lea.vmem [#allocation5], %s314
        // Predicated region
        $region41: #{tpu_custom_call.1} parent=39 // pred_check
          %p316 = pneg %p52
        $region42: #{tpu_custom_call.1} parent=39 // pred_check_branch
          %318 = sbr.rel (%p316) target = $region44
        $region43: #{tpu_custom_call.1} parent=39 // pred_region
          %319 = dma.done %s312, 8192
        $region44: #{tpu_custom_call.1} parent=39 // pred_fallthru
          _
        %s320 = sand.u32 %s31, 1
        %s321 = scalar_lea.sflag [#allocation9], %s320
        %s322 = sand.u32 %s65, 1
        %s323 = smul.addr %s322, 512
        %s324 = scalar_lea.vmem [#allocation8], %s323
        // Predicated region
        $region45: #{tpu_custom_call.1} parent=39 // pred_check
          %p325 = pneg %p78
        $region46: #{tpu_custom_call.1} parent=39 // pred_check_branch
          %327 = sbr.rel (%p325) target = $region48
        $region47: #{tpu_custom_call.1} parent=39 // pred_region
          %328 = dma.done %s321, 8192
        $region48: #{tpu_custom_call.1} parent=39 // pred_fallthru
          _
        %s329 = sand.u32 %s31, 1
        %s330 = scalar_lea.sflag [#allocation9], %s329
        %s331 = sand.u32 %s91, 1
        %s332 = smul.addr %s331, 512
        %s333 = scalar_lea.vmem [#allocation10], %s332
        // Predicated region
        $region49: #{tpu_custom_call.1} parent=39 // pred_check
          %p334 = pneg %p104
        $region50: #{tpu_custom_call.1} parent=39 // pred_check_branch
          %336 = sbr.rel (%p334) target = $region52
        $region51: #{tpu_custom_call.1} parent=39 // pred_region
          %337 = dma.done %s330, 8192
        $region52: #{tpu_custom_call.1} parent=39 // pred_fallthru
          _
        // Predicated region
        $region53: #{tpu_custom_call.1} parent=39 // pred_check
          %p338 = pneg %p125
        $region54: #{tpu_custom_call.1} parent=39 // pred_check_branch
          %340 = sbr.rel (%p338) target = $region56
        $region55: #{tpu_custom_call.1} parent=39 // pred_region
          %341 = dma.done [#allocation12], 98304
        $region56: #{tpu_custom_call.1} parent=39 // pred_fallthru
          _
        // Predicated region
        $region57: #{tpu_custom_call.1} parent=39 // pred_check
          %p342 = pneg %p146
        $region58: #{tpu_custom_call.1} parent=39 // pred_check_branch
          %344 = sbr.rel (%p342) target = $region60
        $region59: #{tpu_custom_call.1} parent=39 // pred_region
          %345 = dma.done [#allocation12], 192
        $region60: #{tpu_custom_call.1} parent=39 // pred_fallthru
          _
        %s346 = sand.u32 %s39, 1
        %s347 = scalar_lea.sflag [#allocation6], %s346
        %s348 = sand.u32 %s39, 1
        %s349 = smul.addr %s348, 512
        %s350 = scalar_lea.vmem [#allocation5], %s349
        %p351 = pneg %p52
        %p352 = pneg %p49
        %s353 = sand.u32 %s31, 1
        %s354 = scalar_lea.sflag [#allocation9], %s353
        %s355 = sand.u32 %s65, 1
        %s356 = smul.addr %s355, 512
        %s357 = scalar_lea.vmem [#allocation8], %s356
        %p358 = pneg %p78
        %p359 = pneg %p75
        %s360 = sand.u32 %s31, 1
        %s361 = scalar_lea.sflag [#allocation9], %s360
        %s362 = sand.u32 %s91, 1
        %s363 = smul.addr %s362, 512
        %s364 = scalar_lea.vmem [#allocation10], %s363
        %p365 = pneg %p104
        %p366 = pneg %p101
        %p367 = pneg %p125
        %p368 = pneg %p122
        %p369 = pneg %p146
        %p370 = pneg %p143
        %p371 = pneg %p172
        %p372 = pneg %p169
        %s373 = sand.u32 %s159, 1
        %s374 = scalar_lea.sflag [#allocation7], %s373
        %s375 = sand.u32 %s159, 1
        %s376 = smul.addr %s375, 512
        %s377 = scalar_lea.vmem [#allocation14], %s376
        %p378 = pneg %p198
        %p379 = pneg %p195
        %s380 = sand.u32 %s185, 1
        %s381 = scalar_lea.sflag [#allocation16], %s380
        %s382 = sand.u32 %s185, 1
        %s383 = smul.addr %s382, 1024
        %s384 = scalar_lea.vmem [#allocation15], %s383
        %v385 = vld [vmem:[%s315] sm:$0xff]
        %v386 = vld [vmem:[%s315 + $0x8] sm:$0xff]
        %v387 = vld [vmem:[%s315 + $0x10] sm:$0xff]
        %v388 = vld [vmem:[%s315 + $0x18] sm:$0xff]
        %v389 = vld [vmem:[%s315 + $0x20] sm:$0xff]
        %v390 = vld [vmem:[%s315 + $0x28] sm:$0xff]
        %v391 = vld [vmem:[%s315 + $0x30] sm:$0xff]
        %v392 = vld [vmem:[%s315 + $0x38] sm:$0xff]
        %v393 = vld [vmem:[%s315 + $0x40] sm:$0xff]
        %v394 = vld [vmem:[%s315 + $0x48] sm:$0xff]
        %v395 = vld [vmem:[%s315 + $0x50] sm:$0xff]
        %v396 = vld [vmem:[%s315 + $0x58] sm:$0xff]
        %v397 = vld [vmem:[%s315 + $0x60] sm:$0xff]
        %v398 = vld [vmem:[%s315 + $0x68] sm:$0xff]
        %v399 = vld [vmem:[%s315 + $0x70] sm:$0xff]
        %v400 = vld [vmem:[%s315 + $0x78] sm:$0xff]
        %v401 = vld [vmem:[%s315 + $0x80] sm:$0xff]
        %v402 = vld [vmem:[%s315 + $0x88] sm:$0xff]
        %v403 = vld [vmem:[%s315 + $0x90] sm:$0xff]
        %v404 = vld [vmem:[%s315 + $0x98] sm:$0xff]
        %v405 = vld [vmem:[%s315 + $0xa0] sm:$0xff]
        %v406 = vld [vmem:[%s315 + $0xa8] sm:$0xff]
        %v407 = vld [vmem:[%s315 + $0xb0] sm:$0xff]
        %v408 = vld [vmem:[%s315 + $0xb8] sm:$0xff]
        %v409 = vld [vmem:[%s315 + $0xc0] sm:$0xff]
        %v410 = vld [vmem:[%s315 + $0xc8] sm:$0xff]
        %v411 = vld [vmem:[%s315 + $0xd0] sm:$0xff]
        %v412 = vld [vmem:[%s315 + $0xd8] sm:$0xff]
        %v413 = vld [vmem:[%s315 + $0xe0] sm:$0xff]
        %v414 = vld [vmem:[%s315 + $0xe8] sm:$0xff]
        %v415 = vld [vmem:[%s315 + $0xf0] sm:$0xff]
        %v416 = vld [vmem:[%s315 + $0xf8] sm:$0xff]
        %v417 = vld [vmem:[%s315 + $0x100] sm:$0xff]
        %v418 = vld [vmem:[%s315 + $0x108] sm:$0xff]
        %v419 = vld [vmem:[%s315 + $0x110] sm:$0xff]
        %v420 = vld [vmem:[%s315 + $0x118] sm:$0xff]
        %v421 = vld [vmem:[%s315 + $0x120] sm:$0xff]
        %v422 = vld [vmem:[%s315 + $0x128] sm:$0xff]
        %v423 = vld [vmem:[%s315 + $0x130] sm:$0xff]
        %v424 = vld [vmem:[%s315 + $0x138] sm:$0xff]
        %v425 = vld [vmem:[%s315 + $0x140] sm:$0xff]
        %v426 = vld [vmem:[%s315 + $0x148] sm:$0xff]
        %v427 = vld [vmem:[%s315 + $0x150] sm:$0xff]
        %v428 = vld [vmem:[%s315 + $0x158] sm:$0xff]
        %v429 = vld [vmem:[%s315 + $0x160] sm:$0xff]
        %v430 = vld [vmem:[%s315 + $0x168] sm:$0xff]
        %v431 = vld [vmem:[%s315 + $0x170] sm:$0xff]
        %v432 = vld [vmem:[%s315 + $0x178] sm:$0xff]
        %v433 = vld [vmem:[%s315 + $0x180] sm:$0xff]
        %v434 = vld [vmem:[%s315 + $0x188] sm:$0xff]
        %v435 = vld [vmem:[%s315 + $0x190] sm:$0xff]
        %v436 = vld [vmem:[%s315 + $0x198] sm:$0xff]
        %v437 = vld [vmem:[%s315 + $0x1a0] sm:$0xff]
        %v438 = vld [vmem:[%s315 + $0x1a8] sm:$0xff]
        %v439 = vld [vmem:[%s315 + $0x1b0] sm:$0xff]
        %v440 = vld [vmem:[%s315 + $0x1b8] sm:$0xff]
        %v441 = vld [vmem:[%s315 + $0x1c0] sm:$0xff]
        %v442 = vld [vmem:[%s315 + $0x1c8] sm:$0xff]
        %v443 = vld [vmem:[%s315 + $0x1d0] sm:$0xff]
        %v444 = vld [vmem:[%s315 + $0x1d8] sm:$0xff]
        %v445 = vld [vmem:[%s315 + $0x1e0] sm:$0xff]
        %v446 = vld [vmem:[%s315 + $0x1e8] sm:$0xff]
        %v447 = vld [vmem:[%s315 + $0x1f0] sm:$0xff]
        %v448 = vld [vmem:[%s315 + $0x1f8] sm:$0xff]
        %v449 = vld [vmem:[#allocation11] sm:$0xff]
        %v450 = vld [vmem:[#allocation11 + $0x8] sm:$0xff]
        %v451 = vld [vmem:[#allocation11 + $0x10] sm:$0xff]
        %v452 = vld [vmem:[#allocation11 + $0x18] sm:$0xff]
        %v453 = vld [vmem:[#allocation11 + $0x60] sm:$0xff]
        %v454 = vld [vmem:[#allocation11 + $0x68] sm:$0xff]
        %v455 = vld [vmem:[#allocation11 + $0x70] sm:$0xff]
        %v456 = vld [vmem:[#allocation11 + $0x78] sm:$0xff]
        %v457 = vld [vmem:[#allocation11 + $0xc0] sm:$0xff]
        %v458 = vld [vmem:[#allocation11 + $0xc8] sm:$0xff]
        %v459 = vld [vmem:[#allocation11 + $0xd0] sm:$0xff]
        %v460 = vld [vmem:[#allocation11 + $0xd8] sm:$0xff]
        %v461 = vld [vmem:[#allocation11 + $0x120] sm:$0xff]
        %v462 = vld [vmem:[#allocation11 + $0x128] sm:$0xff]
        %v463 = vld [vmem:[#allocation11 + $0x130] sm:$0xff]
        %v464 = vld [vmem:[#allocation11 + $0x138] sm:$0xff]
        %v465 = vld [vmem:[#allocation11 + $0x180] sm:$0xff]
        %v466 = vld [vmem:[#allocation11 + $0x188] sm:$0xff]
        %v467 = vld [vmem:[#allocation11 + $0x190] sm:$0xff]
        %v468 = vld [vmem:[#allocation11 + $0x198] sm:$0xff]
        %v469 = vld [vmem:[#allocation11 + $0x1e0] sm:$0xff]
        %v470 = vld [vmem:[#allocation11 + $0x1e8] sm:$0xff]
        %v471 = vld [vmem:[#allocation11 + $0x1f0] sm:$0xff]
        %v472 = vld [vmem:[#allocation11 + $0x1f8] sm:$0xff]
        %v473 = vld [vmem:[#allocation11 + $0x240] sm:$0xff]
        %v474 = vld [vmem:[#allocation11 + $0x248] sm:$0xff]
        %v475 = vld [vmem:[#allocation11 + $0x250] sm:$0xff]
        %v476 = vld [vmem:[#allocation11 + $0x258] sm:$0xff]
        %v477 = vld [vmem:[#allocation11 + $0x2a0] sm:$0xff]
        %v478 = vld [vmem:[#allocation11 + $0x2a8] sm:$0xff]
        %v479 = vld [vmem:[#allocation11 + $0x2b0] sm:$0xff]
        %v480 = vld [vmem:[#allocation11 + $0x2b8] sm:$0xff]
        %v481 = vld [vmem:[#allocation11 + $0x300] sm:$0xff]
        %v482 = vld [vmem:[#allocation11 + $0x308] sm:$0xff]
        %v483 = vld [vmem:[#allocation11 + $0x310] sm:$0xff]
        %v484 = vld [vmem:[#allocation11 + $0x318] sm:$0xff]
        %v485 = vld [vmem:[#allocation11 + $0x360] sm:$0xff]
        %v486 = vld [vmem:[#allocation11 + $0x368] sm:$0xff]
        %v487 = vld [vmem:[#allocation11 + $0x370] sm:$0xff]
        %v488 = vld [vmem:[#allocation11 + $0x378] sm:$0xff]
        %v489 = vld [vmem:[#allocation11 + $0x3c0] sm:$0xff]
        %v490 = vld [vmem:[#allocation11 + $0x3c8] sm:$0xff]
        %v491 = vld [vmem:[#allocation11 + $0x3d0] sm:$0xff]
        %v492 = vld [vmem:[#allocation11 + $0x3d8] sm:$0xff]
        %v493 = vld [vmem:[#allocation11 + $0x420] sm:$0xff]
        %v494 = vld [vmem:[#allocation11 + $0x428] sm:$0xff]
        %v495 = vld [vmem:[#allocation11 + $0x430] sm:$0xff]
        %v496 = vld [vmem:[#allocation11 + $0x438] sm:$0xff]
        %v497 = vld [vmem:[#allocation11 + $0x480] sm:$0xff]
        %v498 = vld [vmem:[#allocation11 + $0x488] sm:$0xff]
        %v499 = vld [vmem:[#allocation11 + $0x490] sm:$0xff]
        %v500 = vld [vmem:[#allocation11 + $0x498] sm:$0xff]
        %v501 = vld [vmem:[#allocation11 + $0x4e0] sm:$0xff]
        %v502 = vld [vmem:[#allocation11 + $0x4e8] sm:$0xff]
        %v503 = vld [vmem:[#allocation11 + $0x4f0] sm:$0xff]
        %v504 = vld [vmem:[#allocation11 + $0x4f8] sm:$0xff]
        %v505 = vld [vmem:[#allocation11 + $0x540] sm:$0xff]
        %v506 = vld [vmem:[#allocation11 + $0x548] sm:$0xff]
        %v507 = vld [vmem:[#allocation11 + $0x550] sm:$0xff]
        %v508 = vld [vmem:[#allocation11 + $0x558] sm:$0xff]
        %v509 = vld [vmem:[#allocation11 + $0x5a0] sm:$0xff]
        %v510 = vld [vmem:[#allocation11 + $0x5a8] sm:$0xff]
        %v511 = vld [vmem:[#allocation11 + $0x5b0] sm:$0xff]
        %v512 = vld [vmem:[#allocation11 + $0x5b8] sm:$0xff]
        %v513 = vld [vmem:[#allocation11 + $0x600] sm:$0xff]
        %v514 = vld [vmem:[#allocation11 + $0x608] sm:$0xff]
        %v515 = vld [vmem:[#allocation11 + $0x610] sm:$0xff]
        %v516 = vld [vmem:[#allocation11 + $0x618] sm:$0xff]
        %v517 = vld [vmem:[#allocation11 + $0x660] sm:$0xff]
        %v518 = vld [vmem:[#allocation11 + $0x668] sm:$0xff]
        %v519 = vld [vmem:[#allocation11 + $0x670] sm:$0xff]
        %v520 = vld [vmem:[#allocation11 + $0x678] sm:$0xff]
        %v521 = vld [vmem:[#allocation11 + $0x6c0] sm:$0xff]
        %v522 = vld [vmem:[#allocation11 + $0x6c8] sm:$0xff]
        %v523 = vld [vmem:[#allocation11 + $0x6d0] sm:$0xff]
        %v524 = vld [vmem:[#allocation11 + $0x6d8] sm:$0xff]
        %v525 = vld [vmem:[#allocation11 + $0x720] sm:$0xff]
        %v526 = vld [vmem:[#allocation11 + $0x728] sm:$0xff]
        %v527 = vld [vmem:[#allocation11 + $0x730] sm:$0xff]
        %v528 = vld [vmem:[#allocation11 + $0x738] sm:$0xff]
        %v529 = vld [vmem:[#allocation11 + $0x780] sm:$0xff]
        %v530 = vld [vmem:[#allocation11 + $0x788] sm:$0xff]
        %v531 = vld [vmem:[#allocation11 + $0x790] sm:$0xff]
        %v532 = vld [vmem:[#allocation11 + $0x798] sm:$0xff]
        %v533 = vld [vmem:[#allocation11 + $0x7e0] sm:$0xff]
        %v534 = vld [vmem:[#allocation11 + $0x7e8] sm:$0xff]
        %v535 = vld [vmem:[#allocation11 + $0x7f0] sm:$0xff]
        %v536 = vld [vmem:[#allocation11 + $0x7f8] sm:$0xff]
        %v537 = vld [vmem:[#allocation11 + $0x840] sm:$0xff]
        %v538 = vld [vmem:[#allocation11 + $0x848] sm:$0xff]
        %v539 = vld [vmem:[#allocation11 + $0x850] sm:$0xff]
        %v540 = vld [vmem:[#allocation11 + $0x858] sm:$0xff]
        %v541 = vld [vmem:[#allocation11 + $0x8a0] sm:$0xff]
        %v542 = vld [vmem:[#allocation11 + $0x8a8] sm:$0xff]
        %v543 = vld [vmem:[#allocation11 + $0x8b0] sm:$0xff]
        %v544 = vld [vmem:[#allocation11 + $0x8b8] sm:$0xff]
        %v545 = vld [vmem:[#allocation11 + $0x900] sm:$0xff]
        %v546 = vld [vmem:[#allocation11 + $0x908] sm:$0xff]
        %v547 = vld [vmem:[#allocation11 + $0x910] sm:$0xff]
        %v548 = vld [vmem:[#allocation11 + $0x918] sm:$0xff]
        %v549 = vld [vmem:[#allocation11 + $0x960] sm:$0xff]
        %v550 = vld [vmem:[#allocation11 + $0x968] sm:$0xff]
        %v551 = vld [vmem:[#allocation11 + $0x970] sm:$0xff]
        %v552 = vld [vmem:[#allocation11 + $0x978] sm:$0xff]
        %v553 = vld [vmem:[#allocation11 + $0x9c0] sm:$0xff]
        %v554 = vld [vmem:[#allocation11 + $0x9c8] sm:$0xff]
        %v555 = vld [vmem:[#allocation11 + $0x9d0] sm:$0xff]
        %v556 = vld [vmem:[#allocation11 + $0x9d8] sm:$0xff]
        %v557 = vld [vmem:[#allocation11 + $0xa20] sm:$0xff]
        %v558 = vld [vmem:[#allocation11 + $0xa28] sm:$0xff]
        %v559 = vld [vmem:[#allocation11 + $0xa30] sm:$0xff]
        %v560 = vld [vmem:[#allocation11 + $0xa38] sm:$0xff]
        %v561 = vld [vmem:[#allocation11 + $0xa80] sm:$0xff]
        %v562 = vld [vmem:[#allocation11 + $0xa88] sm:$0xff]
        %v563 = vld [vmem:[#allocation11 + $0xa90] sm:$0xff]
        %v564 = vld [vmem:[#allocation11 + $0xa98] sm:$0xff]
        %v565 = vld [vmem:[#allocation11 + $0xae0] sm:$0xff]
        %v566 = vld [vmem:[#allocation11 + $0xae8] sm:$0xff]
        %v567 = vld [vmem:[#allocation11 + $0xaf0] sm:$0xff]
        %v568 = vld [vmem:[#allocation11 + $0xaf8] sm:$0xff]
        %v569 = vld [vmem:[#allocation11 + $0xb40] sm:$0xff]
        %v570 = vld [vmem:[#allocation11 + $0xb48] sm:$0xff]
        %v571 = vld [vmem:[#allocation11 + $0xb50] sm:$0xff]
        %v572 = vld [vmem:[#allocation11 + $0xb58] sm:$0xff]
        %v573 = vld [vmem:[#allocation11 + $0xba0] sm:$0xff]
        %v574 = vld [vmem:[#allocation11 + $0xba8] sm:$0xff]
        %v575 = vld [vmem:[#allocation11 + $0xbb0] sm:$0xff]
        %v576 = vld [vmem:[#allocation11 + $0xbb8] sm:$0xff]
        %v577 = vld [vmem:[#allocation11 + $0xc00] sm:$0xff]
        %v578 = vld [vmem:[#allocation11 + $0xc08] sm:$0xff]
        %v579 = vld [vmem:[#allocation11 + $0xc10] sm:$0xff]
        %v580 = vld [vmem:[#allocation11 + $0xc18] sm:$0xff]
        %v581 = vld [vmem:[#allocation11 + $0xc60] sm:$0xff]
        %v582 = vld [vmem:[#allocation11 + $0xc68] sm:$0xff]
        %v583 = vld [vmem:[#allocation11 + $0xc70] sm:$0xff]
        %v584 = vld [vmem:[#allocation11 + $0xc78] sm:$0xff]
        %v585 = vld [vmem:[#allocation11 + $0xcc0] sm:$0xff]
        %v586 = vld [vmem:[#allocation11 + $0xcc8] sm:$0xff]
        %v587 = vld [vmem:[#allocation11 + $0xcd0] sm:$0xff]
        %v588 = vld [vmem:[#allocation11 + $0xcd8] sm:$0xff]
        %v589 = vld [vmem:[#allocation11 + $0xd20] sm:$0xff]
        %v590 = vld [vmem:[#allocation11 + $0xd28] sm:$0xff]
        %v591 = vld [vmem:[#allocation11 + $0xd30] sm:$0xff]
        %v592 = vld [vmem:[#allocation11 + $0xd38] sm:$0xff]
        %v593 = vld [vmem:[#allocation11 + $0xd80] sm:$0xff]
        %v594 = vld [vmem:[#allocation11 + $0xd88] sm:$0xff]
        %v595 = vld [vmem:[#allocation11 + $0xd90] sm:$0xff]
        %v596 = vld [vmem:[#allocation11 + $0xd98] sm:$0xff]
        %v597 = vld [vmem:[#allocation11 + $0xde0] sm:$0xff]
        %v598 = vld [vmem:[#allocation11 + $0xde8] sm:$0xff]
        %v599 = vld [vmem:[#allocation11 + $0xdf0] sm:$0xff]
        %v600 = vld [vmem:[#allocation11 + $0xdf8] sm:$0xff]
        %v601 = vld [vmem:[#allocation11 + $0xe40] sm:$0xff]
        %v602 = vld [vmem:[#allocation11 + $0xe48] sm:$0xff]
        %v603 = vld [vmem:[#allocation11 + $0xe50] sm:$0xff]
        %v604 = vld [vmem:[#allocation11 + $0xe58] sm:$0xff]
        %v605 = vld [vmem:[#allocation11 + $0xea0] sm:$0xff]
        %v606 = vld [vmem:[#allocation11 + $0xea8] sm:$0xff]
        %v607 = vld [vmem:[#allocation11 + $0xeb0] sm:$0xff]
        %v608 = vld [vmem:[#allocation11 + $0xeb8] sm:$0xff]
        %v609 = vld [vmem:[#allocation11 + $0xf00] sm:$0xff]
        %v610 = vld [vmem:[#allocation11 + $0xf08] sm:$0xff]
        %v611 = vld [vmem:[#allocation11 + $0xf10] sm:$0xff]
        %v612 = vld [vmem:[#allocation11 + $0xf18] sm:$0xff]
        %v613 = vld [vmem:[#allocation11 + $0xf60] sm:$0xff]
        %v614 = vld [vmem:[#allocation11 + $0xf68] sm:$0xff]
        %v615 = vld [vmem:[#allocation11 + $0xf70] sm:$0xff]
        %v616 = vld [vmem:[#allocation11 + $0xf78] sm:$0xff]
        %v617 = vld [vmem:[#allocation11 + $0xfc0] sm:$0xff]
        %v618 = vld [vmem:[#allocation11 + $0xfc8] sm:$0xff]
        %v619 = vld [vmem:[#allocation11 + $0xfd0] sm:$0xff]
        %v620 = vld [vmem:[#allocation11 + $0xfd8] sm:$0xff]
        %v621 = vld [vmem:[#allocation11 + $0x1020] sm:$0xff]
        %v622 = vld [vmem:[#allocation11 + $0x1028] sm:$0xff]
        %v623 = vld [vmem:[#allocation11 + $0x1030] sm:$0xff]
        %v624 = vld [vmem:[#allocation11 + $0x1038] sm:$0xff]
        %v625 = vld [vmem:[#allocation11 + $0x1080] sm:$0xff]
        %v626 = vld [vmem:[#allocation11 + $0x1088] sm:$0xff]
        %v627 = vld [vmem:[#allocation11 + $0x1090] sm:$0xff]
        %v628 = vld [vmem:[#allocation11 + $0x1098] sm:$0xff]
        %v629 = vld [vmem:[#allocation11 + $0x10e0] sm:$0xff]
        %v630 = vld [vmem:[#allocation11 + $0x10e8] sm:$0xff]
        %v631 = vld [vmem:[#allocation11 + $0x10f0] sm:$0xff]
        %v632 = vld [vmem:[#allocation11 + $0x10f8] sm:$0xff]
        %v633 = vld [vmem:[#allocation11 + $0x1140] sm:$0xff]
        %v634 = vld [vmem:[#allocation11 + $0x1148] sm:$0xff]
        %v635 = vld [vmem:[#allocation11 + $0x1150] sm:$0xff]
        %v636 = vld [vmem:[#allocation11 + $0x1158] sm:$0xff]
        %v637 = vld [vmem:[#allocation11 + $0x11a0] sm:$0xff]
        %v638 = vld [vmem:[#allocation11 + $0x11a8] sm:$0xff]
        %v639 = vld [vmem:[#allocation11 + $0x11b0] sm:$0xff]
        %v640 = vld [vmem:[#allocation11 + $0x11b8] sm:$0xff]
        %v641 = vld [vmem:[#allocation11 + $0x1200] sm:$0xff]
        %v642 = vld [vmem:[#allocation11 + $0x1208] sm:$0xff]
        %v643 = vld [vmem:[#allocation11 + $0x1210] sm:$0xff]
        %v644 = vld [vmem:[#allocation11 + $0x1218] sm:$0xff]
        %v645 = vld [vmem:[#allocation11 + $0x1260] sm:$0xff]
        %v646 = vld [vmem:[#allocation11 + $0x1268] sm:$0xff]
        %v647 = vld [vmem:[#allocation11 + $0x1270] sm:$0xff]
        %v648 = vld [vmem:[#allocation11 + $0x1278] sm:$0xff]
        %v649 = vld [vmem:[#allocation11 + $0x12c0] sm:$0xff]
        %v650 = vld [vmem:[#allocation11 + $0x12c8] sm:$0xff]
        %v651 = vld [vmem:[#allocation11 + $0x12d0] sm:$0xff]
        %v652 = vld [vmem:[#allocation11 + $0x12d8] sm:$0xff]
        %v653 = vld [vmem:[#allocation11 + $0x1320] sm:$0xff]
        %v654 = vld [vmem:[#allocation11 + $0x1328] sm:$0xff]
        %v655 = vld [vmem:[#allocation11 + $0x1330] sm:$0xff]
        %v656 = vld [vmem:[#allocation11 + $0x1338] sm:$0xff]
        %v657 = vld [vmem:[#allocation11 + $0x1380] sm:$0xff]
        %v658 = vld [vmem:[#allocation11 + $0x1388] sm:$0xff]
        %v659 = vld [vmem:[#allocation11 + $0x1390] sm:$0xff]
        %v660 = vld [vmem:[#allocation11 + $0x1398] sm:$0xff]
        %v661 = vld [vmem:[#allocation11 + $0x13e0] sm:$0xff]
        %v662 = vld [vmem:[#allocation11 + $0x13e8] sm:$0xff]
        %v663 = vld [vmem:[#allocation11 + $0x13f0] sm:$0xff]
        %v664 = vld [vmem:[#allocation11 + $0x13f8] sm:$0xff]
        %v665 = vld [vmem:[#allocation11 + $0x1440] sm:$0xff]
        %v666 = vld [vmem:[#allocation11 + $0x1448] sm:$0xff]
        %v667 = vld [vmem:[#allocation11 + $0x1450] sm:$0xff]
        %v668 = vld [vmem:[#allocation11 + $0x1458] sm:$0xff]
        %v669 = vld [vmem:[#allocation11 + $0x14a0] sm:$0xff]
        %v670 = vld [vmem:[#allocation11 + $0x14a8] sm:$0xff]
        %v671 = vld [vmem:[#allocation11 + $0x14b0] sm:$0xff]
        %v672 = vld [vmem:[#allocation11 + $0x14b8] sm:$0xff]
        %v673 = vld [vmem:[#allocation11 + $0x1500] sm:$0xff]
        %v674 = vld [vmem:[#allocation11 + $0x1508] sm:$0xff]
        %v675 = vld [vmem:[#allocation11 + $0x1510] sm:$0xff]
        %v676 = vld [vmem:[#allocation11 + $0x1518] sm:$0xff]
        %v677 = vld [vmem:[#allocation11 + $0x1560] sm:$0xff]
        %v678 = vld [vmem:[#allocation11 + $0x1568] sm:$0xff]
        %v679 = vld [vmem:[#allocation11 + $0x1570] sm:$0xff]
        %v680 = vld [vmem:[#allocation11 + $0x1578] sm:$0xff]
        %v681 = vld [vmem:[#allocation11 + $0x15c0] sm:$0xff]
        %v682 = vld [vmem:[#allocation11 + $0x15c8] sm:$0xff]
        %v683 = vld [vmem:[#allocation11 + $0x15d0] sm:$0xff]
        %v684 = vld [vmem:[#allocation11 + $0x15d8] sm:$0xff]
        %v685 = vld [vmem:[#allocation11 + $0x1620] sm:$0xff]
        %v686 = vld [vmem:[#allocation11 + $0x1628] sm:$0xff]
        %v687 = vld [vmem:[#allocation11 + $0x1630] sm:$0xff]
        %v688 = vld [vmem:[#allocation11 + $0x1638] sm:$0xff]
        %v689 = vld [vmem:[#allocation11 + $0x1680] sm:$0xff]
        %v690 = vld [vmem:[#allocation11 + $0x1688] sm:$0xff]
        %v691 = vld [vmem:[#allocation11 + $0x1690] sm:$0xff]
        %v692 = vld [vmem:[#allocation11 + $0x1698] sm:$0xff]
        %v693 = vld [vmem:[#allocation11 + $0x16e0] sm:$0xff]
        %v694 = vld [vmem:[#allocation11 + $0x16e8] sm:$0xff]
        %v695 = vld [vmem:[#allocation11 + $0x16f0] sm:$0xff]
        %v696 = vld [vmem:[#allocation11 + $0x16f8] sm:$0xff]
        %v697 = vld [vmem:[#allocation11 + $0x1740] sm:$0xff]
        %v698 = vld [vmem:[#allocation11 + $0x1748] sm:$0xff]
        %v699 = vld [vmem:[#allocation11 + $0x1750] sm:$0xff]
        %v700 = vld [vmem:[#allocation11 + $0x1758] sm:$0xff]
        %v701 = vld [vmem:[#allocation11 + $0x17a0] sm:$0xff]
        %v702 = vld [vmem:[#allocation11 + $0x17a8] sm:$0xff]
        %v703 = vld [vmem:[#allocation11 + $0x17b0] sm:$0xff]
        %v704 = vld [vmem:[#allocation11 + $0x17b8] sm:$0xff]
        %v705 = vld [vmem:[#allocation13] sm:$0xf]
        %v707 = vlaneseq
        %v708 = vshrl.u32 %v707, 7
        %v709 = vsub.s32 0, %v708
        %v710 = vrot.slane %v705, %v709
        %v711 = vlaneseq
        %v712 = vshrl.u32 %v711, 7
        %v713 = vsub.s32 1, %v712
        %v714 = vrot.slane %v705, %v713
        %v715 = vlaneseq
        %v716 = vshrl.u32 %v715, 7
        %v717 = vsub.s32 2, %v716
        %v718 = vrot.slane %v705, %v717
        %v719 = vlaneseq
        %v720 = vshrl.u32 %v719, 7
        %v721 = vsub.s32 3, %v720
        %v722 = vrot.slane %v705, %v721
        %727 = vmatprep.subr.mxu0 %v510
        %728 = vmatpush1.msra.mxu0 %v509
        %729 = vmatprep.subr.mxu0 %v506
        %730 = vmatpush1.msra.mxu0 %v505
        %731 = vmatprep.subr.mxu0 %v502
        %732 = vmatpush1.msra.mxu0 %v501
        %733 = vmatprep.subr.mxu0 %v498
        %734 = vmatpush1.msra.mxu0 %v497
        %735 = vmatprep.subr.mxu0 %v494
        %736 = vmatpush1.msra.mxu0 %v493
        %737 = vmatprep.subr.mxu0 %v490
        %738 = vmatpush1.msra.mxu0 %v489
        %739 = vmatprep.subr.mxu0 %v486
        %740 = vmatpush1.msra.mxu0 %v485
        %741 = vmatprep.subr.mxu0 %v482
        %742 = vmatpush1.msra.mxu0 %v481
        %743 = vmatprep.subr.mxu0 %v478
        %744 = vmatpush1.msra.mxu0 %v477
        %745 = vmatprep.subr.mxu0 %v474
        %746 = vmatpush1.msra.mxu0 %v473
        %747 = vmatprep.subr.mxu0 %v470
        %748 = vmatpush1.msra.mxu0 %v469
        %749 = vmatprep.subr.mxu0 %v466
        %750 = vmatpush1.msra.mxu0 %v465
        %751 = vmatprep.subr.mxu0 %v462
        %752 = vmatpush1.msra.mxu0 %v461
        %753 = vmatprep.subr.mxu0 %v458
        %754 = vmatpush1.msra.mxu0 %v457
        %755 = vmatprep.subr.mxu0 %v454
        %756 = vmatpush1.msra.mxu0 %v453
        %757 = vmatprep.subr.mxu0 %v450
        %758 = vmatpush1.msra.mxu0 %v449
        %759 = vmatprep.subr.mxu0 %v574
        %760 = vmatpush2.msra.mxu0 %v573
        %761 = vmatprep.subr.mxu0 %v570
        %762 = vmatpush2.msra.mxu0 %v569
        %763 = vmatprep.subr.mxu0 %v566
        %764 = vmatpush2.msra.mxu0 %v565
        %765 = vmatprep.subr.mxu0 %v562
        %766 = vmatpush2.msra.mxu0 %v561
        %767 = vmatprep.subr.mxu0 %v558
        %768 = vmatpush2.msra.mxu0 %v557
        %769 = vmatprep.subr.mxu0 %v554
        %770 = vmatpush2.msra.mxu0 %v553
        %771 = vmatprep.subr.mxu0 %v550
        %772 = vmatpush2.msra.mxu0 %v549
        %773 = vmatprep.subr.mxu0 %v546
        %774 = vmatpush2.msra.mxu0 %v545
        %775 = vmatprep.subr.mxu0 %v542
        %776 = vmatpush2.msra.mxu0 %v541
        %777 = vmatprep.subr.mxu0 %v538
        %778 = vmatpush2.msra.mxu0 %v537
        %779 = vmatprep.subr.mxu0 %v534
        %780 = vmatpush2.msra.mxu0 %v533
        %781 = vmatprep.subr.mxu0 %v530
        %782 = vmatpush2.msra.mxu0 %v529
        %783 = vmatprep.subr.mxu0 %v526
        %784 = vmatpush2.msra.mxu0 %v525
        %785 = vmatprep.subr.mxu0 %v522
        %786 = vmatpush2.msra.mxu0 %v521
        %787 = vmatprep.subr.mxu0 %v518
        %788 = vmatpush2.msra.mxu0 %v517
        %789 = vmatprep.subr.mxu0 %v514
        %790 = vmatpush2.msra.mxu0 %v513
        %791 = vmatprep.mubr.f32.mxu0 %v386
        %792 = vmatmul.mubr.f32.gmra.mxu0 %v385
        %v793 = vpop.f32.mrf.mxu0
        %v794 = vadd.f32 %v710, %v793
        %v795 = vpop.f32.mrf.mxu0
        %v796 = vadd.f32 %v714, %v795
        %797 = vmatprep.mubr.f32.mxu0 %v390
        %798 = vmatmul.mubr.f32.gmra.mxu0 %v389
        %v799 = vpop.f32.mrf.mxu0
        %v800 = vadd.f32 %v710, %v799
        %v801 = vpop.f32.mrf.mxu0
        %v802 = vadd.f32 %v714, %v801
        %803 = vmatprep.mubr.f32.mxu0 %v394
        %804 = vmatmul.mubr.f32.gmra.mxu0 %v393
        %v805 = vpop.f32.mrf.mxu0
        %v806 = vadd.f32 %v710, %v805
        %v807 = vpop.f32.mrf.mxu0
        %v808 = vadd.f32 %v714, %v807
        %809 = vmatprep.mubr.f32.mxu0 %v398
        %810 = vmatmul.mubr.f32.gmra.mxu0 %v397
        %v811 = vpop.f32.mrf.mxu0
        %v812 = vadd.f32 %v710, %v811
        %v813 = vpop.f32.mrf.mxu0
        %v814 = vadd.f32 %v714, %v813
        %815 = vmatprep.mubr.f32.mxu0 %v402
        %816 = vmatmul.mubr.f32.gmra.mxu0 %v401
        %v817 = vpop.f32.mrf.mxu0
        %v818 = vadd.f32 %v710, %v817
        %v819 = vpop.f32.mrf.mxu0
        %v820 = vadd.f32 %v714, %v819
        %821 = vmatprep.mubr.f32.mxu0 %v406
        %822 = vmatmul.mubr.f32.gmra.mxu0 %v405
        %v823 = vpop.f32.mrf.mxu0
        %v824 = vadd.f32 %v710, %v823
        %v825 = vpop.f32.mrf.mxu0
        %v826 = vadd.f32 %v714, %v825
        %827 = vmatprep.mubr.f32.mxu0 %v410
        %828 = vmatmul.mubr.f32.gmra.mxu0 %v409
        %v829 = vpop.f32.mrf.mxu0
        %v830 = vadd.f32 %v710, %v829
        %v831 = vpop.f32.mrf.mxu0
        %v832 = vadd.f32 %v714, %v831
        %833 = vmatprep.mubr.f32.mxu0 %v414
        %834 = vmatmul.mubr.f32.gmra.mxu0 %v413
        %v835 = vpop.f32.mrf.mxu0
        %v836 = vadd.f32 %v710, %v835
        %v837 = vpop.f32.mrf.mxu0
        %v838 = vadd.f32 %v714, %v837
        %839 = vmatprep.mubr.f32.mxu0 %v418
        %840 = vmatmul.mubr.f32.gmra.mxu0 %v417
        %v841 = vpop.f32.mrf.mxu0
        %v842 = vadd.f32 %v710, %v841
        %v843 = vpop.f32.mrf.mxu0
        %v844 = vadd.f32 %v714, %v843
        %845 = vmatprep.mubr.f32.mxu0 %v422
        %846 = vmatmul.mubr.f32.gmra.mxu0 %v421
        %v847 = vpop.f32.mrf.mxu0
        %v848 = vadd.f32 %v710, %v847
        %v849 = vpop.f32.mrf.mxu0
        %v850 = vadd.f32 %v714, %v849
        %851 = vmatprep.mubr.f32.mxu0 %v426
        %852 = vmatmul.mubr.f32.gmra.mxu0 %v425
        %v853 = vpop.f32.mrf.mxu0
        %v854 = vadd.f32 %v710, %v853
        %v855 = vpop.f32.mrf.mxu0
        %v856 = vadd.f32 %v714, %v855
        %857 = vmatprep.mubr.f32.mxu0 %v430
        %858 = vmatmul.mubr.f32.gmra.mxu0 %v429
        %v859 = vpop.f32.mrf.mxu0
        %v860 = vadd.f32 %v710, %v859
        %v861 = vpop.f32.mrf.mxu0
        %v862 = vadd.f32 %v714, %v861
        %863 = vmatprep.mubr.f32.mxu0 %v434
        %864 = vmatmul.mubr.f32.gmra.mxu0 %v433
        %v865 = vpop.f32.mrf.mxu0
        %v866 = vadd.f32 %v710, %v865
        %v867 = vpop.f32.mrf.mxu0
        %v868 = vadd.f32 %v714, %v867
        %869 = vmatprep.mubr.f32.mxu0 %v438
        %870 = vmatmul.mubr.f32.gmra.mxu0 %v437
        %v871 = vpop.f32.mrf.mxu0
        %v872 = vadd.f32 %v710, %v871
        %v873 = vpop.f32.mrf.mxu0
        %v874 = vadd.f32 %v714, %v873
        %875 = vmatprep.mubr.f32.mxu0 %v442
        %876 = vmatmul.mubr.f32.gmra.mxu0 %v441
        %v877 = vpop.f32.mrf.mxu0
        %v878 = vadd.f32 %v710, %v877
        %v879 = vpop.f32.mrf.mxu0
        %v880 = vadd.f32 %v714, %v879
        %881 = vmatprep.mubr.f32.mxu0 %v446
        %882 = vmatmul.mubr.f32.gmra.mxu0 %v445
        %v883 = vpop.f32.mrf.mxu0
        %v884 = vadd.f32 %v710, %v883
        %v885 = vpop.f32.mrf.mxu0
        %v886 = vadd.f32 %v714, %v885
        %887 = vdwg.mxu0
        %888 = vmatprep.subr.mxu0 %v638
        %889 = vmatpush1.msra.mxu0 %v637
        %890 = vmatprep.subr.mxu0 %v634
        %891 = vmatpush1.msra.mxu0 %v633
        %892 = vmatprep.subr.mxu0 %v630
        %893 = vmatpush1.msra.mxu0 %v629
        %894 = vmatprep.subr.mxu0 %v626
        %895 = vmatpush1.msra.mxu0 %v625
        %896 = vmatprep.subr.mxu0 %v622
        %897 = vmatpush1.msra.mxu0 %v621
        %898 = vmatprep.subr.mxu0 %v618
        %899 = vmatpush1.msra.mxu0 %v617
        %900 = vmatprep.subr.mxu0 %v614
        %901 = vmatpush1.msra.mxu0 %v613
        %902 = vmatprep.subr.mxu0 %v610
        %903 = vmatpush1.msra.mxu0 %v609
        %904 = vmatprep.subr.mxu0 %v606
        %905 = vmatpush1.msra.mxu0 %v605
        %906 = vmatprep.subr.mxu0 %v602
        %907 = vmatpush1.msra.mxu0 %v601
        %908 = vmatprep.subr.mxu0 %v598
        %909 = vmatpush1.msra.mxu0 %v597
        %910 = vmatprep.subr.mxu0 %v594
        %911 = vmatpush1.msra.mxu0 %v593
        %912 = vmatprep.subr.mxu0 %v590
        %913 = vmatpush1.msra.mxu0 %v589
        %914 = vmatprep.subr.mxu0 %v586
        %915 = vmatpush1.msra.mxu0 %v585
        %916 = vmatprep.subr.mxu0 %v582
        %917 = vmatpush1.msra.mxu0 %v581
        %918 = vmatprep.subr.mxu0 %v578
        %919 = vmatpush1.msra.mxu0 %v577
        %920 = vmatprep.subr.mxu0 %v702
        %921 = vmatpush2.msra.mxu0 %v701
        %922 = vmatprep.subr.mxu0 %v698
        %923 = vmatpush2.msra.mxu0 %v697
        %924 = vmatprep.subr.mxu0 %v694
        %925 = vmatpush2.msra.mxu0 %v693
        %926 = vmatprep.subr.mxu0 %v690
        %927 = vmatpush2.msra.mxu0 %v689
        %928 = vmatprep.subr.mxu0 %v686
        %929 = vmatpush2.msra.mxu0 %v685
        %930 = vmatprep.subr.mxu0 %v682
        %931 = vmatpush2.msra.mxu0 %v681
        %932 = vmatprep.subr.mxu0 %v678
        %933 = vmatpush2.msra.mxu0 %v677
        %934 = vmatprep.subr.mxu0 %v674
        %935 = vmatpush2.msra.mxu0 %v673
        %936 = vmatprep.subr.mxu0 %v670
        %937 = vmatpush2.msra.mxu0 %v669
        %938 = vmatprep.subr.mxu0 %v666
        %939 = vmatpush2.msra.mxu0 %v665
        %940 = vmatprep.subr.mxu0 %v662
        %941 = vmatpush2.msra.mxu0 %v661
        %942 = vmatprep.subr.mxu0 %v658
        %943 = vmatpush2.msra.mxu0 %v657
        %944 = vmatprep.subr.mxu0 %v654
        %945 = vmatpush2.msra.mxu0 %v653
        %946 = vmatprep.subr.mxu0 %v650
        %947 = vmatpush2.msra.mxu0 %v649
        %948 = vmatprep.subr.mxu0 %v646
        %949 = vmatpush2.msra.mxu0 %v645
        %950 = vmatprep.subr.mxu0 %v642
        %951 = vmatpush2.msra.mxu0 %v641
        %952 = vmatprep.mubr.f32.mxu0 %v388
        %953 = vmatmul.mubr.f32.gmra.mxu0 %v387
        %v954 = vpop.f32.mrf.mxu0
        %v955 = vadd.f32 %v794, %v954
        %v956 = vpop.f32.mrf.mxu0
        %v957 = vadd.f32 %v796, %v956
        %958 = vmatprep.mubr.f32.mxu0 %v392
        %959 = vmatmul.mubr.f32.gmra.mxu0 %v391
        %v960 = vpop.f32.mrf.mxu0
        %v961 = vadd.f32 %v800, %v960
        %v962 = vpop.f32.mrf.mxu0
        %v963 = vadd.f32 %v802, %v962
        %964 = vmatprep.mubr.f32.mxu0 %v396
        %965 = vmatmul.mubr.f32.gmra.mxu0 %v395
        %v966 = vpop.f32.mrf.mxu0
        %v967 = vadd.f32 %v806, %v966
        %v968 = vpop.f32.mrf.mxu0
        %v969 = vadd.f32 %v808, %v968
        %970 = vmatprep.mubr.f32.mxu0 %v400
        %971 = vmatmul.mubr.f32.gmra.mxu0 %v399
        %v972 = vpop.f32.mrf.mxu0
        %v973 = vadd.f32 %v812, %v972
        %v974 = vpop.f32.mrf.mxu0
        %v975 = vadd.f32 %v814, %v974
        %976 = vmatprep.mubr.f32.mxu0 %v404
        %977 = vmatmul.mubr.f32.gmra.mxu0 %v403
        %v978 = vpop.f32.mrf.mxu0
        %v979 = vadd.f32 %v818, %v978
        %v980 = vpop.f32.mrf.mxu0
        %v981 = vadd.f32 %v820, %v980
        %982 = vmatprep.mubr.f32.mxu0 %v408
        %983 = vmatmul.mubr.f32.gmra.mxu0 %v407
        %v984 = vpop.f32.mrf.mxu0
        %v985 = vadd.f32 %v824, %v984
        %v986 = vpop.f32.mrf.mxu0
        %v987 = vadd.f32 %v826, %v986
        %988 = vmatprep.mubr.f32.mxu0 %v412
        %989 = vmatmul.mubr.f32.gmra.mxu0 %v411
        %v990 = vpop.f32.mrf.mxu0
        %v991 = vadd.f32 %v830, %v990
        %v992 = vpop.f32.mrf.mxu0
        %v993 = vadd.f32 %v832, %v992
        %994 = vmatprep.mubr.f32.mxu0 %v416
        %995 = vmatmul.mubr.f32.gmra.mxu0 %v415
        %v996 = vpop.f32.mrf.mxu0
        %v997 = vadd.f32 %v836, %v996
        %v998 = vpop.f32.mrf.mxu0
        %v999 = vadd.f32 %v838, %v998
        %1000 = vmatprep.mubr.f32.mxu0 %v420
        %1001 = vmatmul.mubr.f32.gmra.mxu0 %v419
        %v1002 = vpop.f32.mrf.mxu0
        %v1003 = vadd.f32 %v842, %v1002
        %v1004 = vpop.f32.mrf.mxu0
        %v1005 = vadd.f32 %v844, %v1004
        %1006 = vmatprep.mubr.f32.mxu0 %v424
        %1007 = vmatmul.mubr.f32.gmra.mxu0 %v423
        %v1008 = vpop.f32.mrf.mxu0
        %v1009 = vadd.f32 %v848, %v1008
        %v1010 = vpop.f32.mrf.mxu0
        %v1011 = vadd.f32 %v850, %v1010
        %1012 = vmatprep.mubr.f32.mxu0 %v428
        %1013 = vmatmul.mubr.f32.gmra.mxu0 %v427
        %v1014 = vpop.f32.mrf.mxu0
        %v1015 = vadd.f32 %v854, %v1014
        %v1016 = vpop.f32.mrf.mxu0
        %v1017 = vadd.f32 %v856, %v1016
        %1018 = vmatprep.mubr.f32.mxu0 %v432
        %1019 = vmatmul.mubr.f32.gmra.mxu0 %v431
        %v1020 = vpop.f32.mrf.mxu0
        %v1021 = vadd.f32 %v860, %v1020
        %v1022 = vpop.f32.mrf.mxu0
        %v1023 = vadd.f32 %v862, %v1022
        %1024 = vmatprep.mubr.f32.mxu0 %v436
        %1025 = vmatmul.mubr.f32.gmra.mxu0 %v435
        %v1026 = vpop.f32.mrf.mxu0
        %v1027 = vadd.f32 %v866, %v1026
        %v1028 = vpop.f32.mrf.mxu0
        %v1029 = vadd.f32 %v868, %v1028
        %1030 = vmatprep.mubr.f32.mxu0 %v440
        %1031 = vmatmul.mubr.f32.gmra.mxu0 %v439
        %v1032 = vpop.f32.mrf.mxu0
        %v1033 = vadd.f32 %v872, %v1032
        %v1034 = vpop.f32.mrf.mxu0
        %v1035 = vadd.f32 %v874, %v1034
        %1036 = vmatprep.mubr.f32.mxu0 %v444
        %1037 = vmatmul.mubr.f32.gmra.mxu0 %v443
        %v1038 = vpop.f32.mrf.mxu0
        %v1039 = vadd.f32 %v878, %v1038
        %v1040 = vpop.f32.mrf.mxu0
        %v1041 = vadd.f32 %v880, %v1040
        %1042 = vmatprep.mubr.f32.mxu0 %v448
        %1043 = vmatmul.mubr.f32.gmra.mxu0 %v447
        %v1044 = vpop.f32.mrf.mxu0
        %v1045 = vadd.f32 %v884, %v1044
        %v1046 = vpop.f32.mrf.mxu0
        %v1047 = vadd.f32 %v886, %v1046
        %1048 = vdwg.mxu0
        %1049 = vmatprep.subr.mxu0 %v512
        %1050 = vmatpush1.msra.mxu0 %v511
        %1051 = vmatprep.subr.mxu0 %v508
        %1052 = vmatpush1.msra.mxu0 %v507
        %1053 = vmatprep.subr.mxu0 %v504
        %1054 = vmatpush1.msra.mxu0 %v503
        %1055 = vmatprep.subr.mxu0 %v500
        %1056 = vmatpush1.msra.mxu0 %v499
        %1057 = vmatprep.subr.mxu0 %v496
        %1058 = vmatpush1.msra.mxu0 %v495
        %1059 = vmatprep.subr.mxu0 %v492
        %1060 = vmatpush1.msra.mxu0 %v491
        %1061 = vmatprep.subr.mxu0 %v488
        %1062 = vmatpush1.msra.mxu0 %v487
        %1063 = vmatprep.subr.mxu0 %v484
        %1064 = vmatpush1.msra.mxu0 %v483
        %1065 = vmatprep.subr.mxu0 %v480
        %1066 = vmatpush1.msra.mxu0 %v479
        %1067 = vmatprep.subr.mxu0 %v476
        %1068 = vmatpush1.msra.mxu0 %v475
        %1069 = vmatprep.subr.mxu0 %v472
        %1070 = vmatpush1.msra.mxu0 %v471
        %1071 = vmatprep.subr.mxu0 %v468
        %1072 = vmatpush1.msra.mxu0 %v467
        %1073 = vmatprep.subr.mxu0 %v464
        %1074 = vmatpush1.msra.mxu0 %v463
        %1075 = vmatprep.subr.mxu0 %v460
        %1076 = vmatpush1.msra.mxu0 %v459
        %1077 = vmatprep.subr.mxu0 %v456
        %1078 = vmatpush1.msra.mxu0 %v455
        %1079 = vmatprep.subr.mxu0 %v452
        %1080 = vmatpush1.msra.mxu0 %v451
        %1081 = vmatprep.subr.mxu0 %v576
        %1082 = vmatpush2.msra.mxu0 %v575
        %1083 = vmatprep.subr.mxu0 %v572
        %1084 = vmatpush2.msra.mxu0 %v571
        %1085 = vmatprep.subr.mxu0 %v568
        %1086 = vmatpush2.msra.mxu0 %v567
        %1087 = vmatprep.subr.mxu0 %v564
        %1088 = vmatpush2.msra.mxu0 %v563
        %1089 = vmatprep.subr.mxu0 %v560
        %1090 = vmatpush2.msra.mxu0 %v559
        %1091 = vmatprep.subr.mxu0 %v556
        %1092 = vmatpush2.msra.mxu0 %v555
        %1093 = vmatprep.subr.mxu0 %v552
        %1094 = vmatpush2.msra.mxu0 %v551
        %1095 = vmatprep.subr.mxu0 %v548
        %1096 = vmatpush2.msra.mxu0 %v547
        %1097 = vmatprep.subr.mxu0 %v544
        %1098 = vmatpush2.msra.mxu0 %v543
        %1099 = vmatprep.subr.mxu0 %v540
        %1100 = vmatpush2.msra.mxu0 %v539
        %1101 = vmatprep.subr.mxu0 %v536
        %1102 = vmatpush2.msra.mxu0 %v535
        %1103 = vmatprep.subr.mxu0 %v532
        %1104 = vmatpush2.msra.mxu0 %v531
        %1105 = vmatprep.subr.mxu0 %v528
        %1106 = vmatpush2.msra.mxu0 %v527
        %1107 = vmatprep.subr.mxu0 %v524
        %1108 = vmatpush2.msra.mxu0 %v523
        %1109 = vmatprep.subr.mxu0 %v520
        %1110 = vmatpush2.msra.mxu0 %v519
        %1111 = vmatprep.subr.mxu0 %v516
        %1112 = vmatpush2.msra.mxu0 %v515
        %1113 = vmatprep.mubr.f32.mxu0 %v386
        %1114 = vmatmul.mubr.f32.gmra.mxu0 %v385
        %v1115 = vpop.f32.mrf.mxu0
        %v1116 = vadd.f32 %v718, %v1115
        %v1117 = vpop.f32.mrf.mxu0
        %v1118 = vadd.f32 %v722, %v1117
        %1119 = vmatprep.mubr.f32.mxu0 %v390
        %1120 = vmatmul.mubr.f32.gmra.mxu0 %v389
        %v1121 = vpop.f32.mrf.mxu0
        %v1122 = vadd.f32 %v718, %v1121
        %v1123 = vpop.f32.mrf.mxu0
        %v1124 = vadd.f32 %v722, %v1123
        %1125 = vmatprep.mubr.f32.mxu0 %v394
        %1126 = vmatmul.mubr.f32.gmra.mxu0 %v393
        %v1127 = vpop.f32.mrf.mxu0
        %v1128 = vadd.f32 %v718, %v1127
        %v1129 = vpop.f32.mrf.mxu0
        %v1130 = vadd.f32 %v722, %v1129
        %1131 = vmatprep.mubr.f32.mxu0 %v398
        %1132 = vmatmul.mubr.f32.gmra.mxu0 %v397
        %v1133 = vpop.f32.mrf.mxu0
        %v1134 = vadd.f32 %v718, %v1133
        %v1135 = vpop.f32.mrf.mxu0
        %v1136 = vadd.f32 %v722, %v1135
        %1137 = vmatprep.mubr.f32.mxu0 %v402
        %1138 = vmatmul.mubr.f32.gmra.mxu0 %v401
        %v1139 = vpop.f32.mrf.mxu0
        %v1140 = vadd.f32 %v718, %v1139
        %v1141 = vpop.f32.mrf.mxu0
        %v1142 = vadd.f32 %v722, %v1141
        %1143 = vmatprep.mubr.f32.mxu0 %v406
        %1144 = vmatmul.mubr.f32.gmra.mxu0 %v405
        %v1145 = vpop.f32.mrf.mxu0
        %v1146 = vadd.f32 %v718, %v1145
        %v1147 = vpop.f32.mrf.mxu0
        %v1148 = vadd.f32 %v722, %v1147
        %1149 = vmatprep.mubr.f32.mxu0 %v410
        %1150 = vmatmul.mubr.f32.gmra.mxu0 %v409
        %v1151 = vpop.f32.mrf.mxu0
        %v1152 = vadd.f32 %v718, %v1151
        %v1153 = vpop.f32.mrf.mxu0
        %v1154 = vadd.f32 %v722, %v1153
        %1155 = vmatprep.mubr.f32.mxu0 %v414
        %1156 = vmatmul.mubr.f32.gmra.mxu0 %v413
        %v1157 = vpop.f32.mrf.mxu0
        %v1158 = vadd.f32 %v718, %v1157
        %v1159 = vpop.f32.mrf.mxu0
        %v1160 = vadd.f32 %v722, %v1159
        %1161 = vmatprep.mubr.f32.mxu0 %v418
        %1162 = vmatmul.mubr.f32.gmra.mxu0 %v417
        %v1163 = vpop.f32.mrf.mxu0
        %v1164 = vadd.f32 %v718, %v1163
        %v1165 = vpop.f32.mrf.mxu0
        %v1166 = vadd.f32 %v722, %v1165
        %1167 = vmatprep.mubr.f32.mxu0 %v422
        %1168 = vmatmul.mubr.f32.gmra.mxu0 %v421
        %v1169 = vpop.f32.mrf.mxu0
        %v1170 = vadd.f32 %v718, %v1169
        %v1171 = vpop.f32.mrf.mxu0
        %v1172 = vadd.f32 %v722, %v1171
        %1173 = vmatprep.mubr.f32.mxu0 %v426
        %1174 = vmatmul.mubr.f32.gmra.mxu0 %v425
        %v1175 = vpop.f32.mrf.mxu0
        %v1176 = vadd.f32 %v718, %v1175
        %v1177 = vpop.f32.mrf.mxu0
        %v1178 = vadd.f32 %v722, %v1177
        %1179 = vmatprep.mubr.f32.mxu0 %v430
        %1180 = vmatmul.mubr.f32.gmra.mxu0 %v429
        %v1181 = vpop.f32.mrf.mxu0
        %v1182 = vadd.f32 %v718, %v1181
        %v1183 = vpop.f32.mrf.mxu0
        %v1184 = vadd.f32 %v722, %v1183
        %1185 = vmatprep.mubr.f32.mxu0 %v434
        %1186 = vmatmul.mubr.f32.gmra.mxu0 %v433
        %v1187 = vpop.f32.mrf.mxu0
        %v1188 = vadd.f32 %v718, %v1187
        %v1189 = vpop.f32.mrf.mxu0
        %v1190 = vadd.f32 %v722, %v1189
        %1191 = vmatprep.mubr.f32.mxu0 %v438
        %1192 = vmatmul.mubr.f32.gmra.mxu0 %v437
        %v1193 = vpop.f32.mrf.mxu0
        %v1194 = vadd.f32 %v718, %v1193
        %v1195 = vpop.f32.mrf.mxu0
        %v1196 = vadd.f32 %v722, %v1195
        %1197 = vmatprep.mubr.f32.mxu0 %v442
        %1198 = vmatmul.mubr.f32.gmra.mxu0 %v441
        %v1199 = vpop.f32.mrf.mxu0
        %v1200 = vadd.f32 %v718, %v1199
        %v1201 = vpop.f32.mrf.mxu0
        %v1202 = vadd.f32 %v722, %v1201
        %1203 = vmatprep.mubr.f32.mxu0 %v446
        %1204 = vmatmul.mubr.f32.gmra.mxu0 %v445
        %v1205 = vpop.f32.mrf.mxu0
        %v1206 = vadd.f32 %v718, %v1205
        %v1207 = vpop.f32.mrf.mxu0
        %v1208 = vadd.f32 %v722, %v1207
        %1209 = vdwg.mxu0
        %1210 = vmatprep.subr.mxu0 %v640
        %1211 = vmatpush1.msra.mxu0 %v639
        %1212 = vmatprep.subr.mxu0 %v636
        %1213 = vmatpush1.msra.mxu0 %v635
        %1214 = vmatprep.subr.mxu0 %v632
        %1215 = vmatpush1.msra.mxu0 %v631
        %1216 = vmatprep.subr.mxu0 %v628
        %1217 = vmatpush1.msra.mxu0 %v627
        %1218 = vmatprep.subr.mxu0 %v624
        %1219 = vmatpush1.msra.mxu0 %v623
        %1220 = vmatprep.subr.mxu0 %v620
        %1221 = vmatpush1.msra.mxu0 %v619
        %1222 = vmatprep.subr.mxu0 %v616
        %1223 = vmatpush1.msra.mxu0 %v615
        %1224 = vmatprep.subr.mxu0 %v612
        %1225 = vmatpush1.msra.mxu0 %v611
        %1226 = vmatprep.subr.mxu0 %v608
        %1227 = vmatpush1.msra.mxu0 %v607
        %1228 = vmatprep.subr.mxu0 %v604
        %1229 = vmatpush1.msra.mxu0 %v603
        %1230 = vmatprep.subr.mxu0 %v600
        %1231 = vmatpush1.msra.mxu0 %v599
        %1232 = vmatprep.subr.mxu0 %v596
        %1233 = vmatpush1.msra.mxu0 %v595
        %1234 = vmatprep.subr.mxu0 %v592
        %1235 = vmatpush1.msra.mxu0 %v591
        %1236 = vmatprep.subr.mxu0 %v588
        %1237 = vmatpush1.msra.mxu0 %v587
        %1238 = vmatprep.subr.mxu0 %v584
        %1239 = vmatpush1.msra.mxu0 %v583
        %1240 = vmatprep.subr.mxu0 %v580
        %1241 = vmatpush1.msra.mxu0 %v579
        %1242 = vmatprep.subr.mxu0 %v704
        %1243 = vmatpush2.msra.mxu0 %v703
        %1244 = vmatprep.subr.mxu0 %v700
        %1245 = vmatpush2.msra.mxu0 %v699
        %1246 = vmatprep.subr.mxu0 %v696
        %1247 = vmatpush2.msra.mxu0 %v695
        %1248 = vmatprep.subr.mxu0 %v692
        %1249 = vmatpush2.msra.mxu0 %v691
        %1250 = vmatprep.subr.mxu0 %v688
        %1251 = vmatpush2.msra.mxu0 %v687
        %1252 = vmatprep.subr.mxu0 %v684
        %1253 = vmatpush2.msra.mxu0 %v683
        %1254 = vmatprep.subr.mxu0 %v680
        %1255 = vmatpush2.msra.mxu0 %v679
        %1256 = vmatprep.subr.mxu0 %v676
        %1257 = vmatpush2.msra.mxu0 %v675
        %1258 = vmatprep.subr.mxu0 %v672
        %1259 = vmatpush2.msra.mxu0 %v671
        %1260 = vmatprep.subr.mxu0 %v668
        %1261 = vmatpush2.msra.mxu0 %v667
        %1262 = vmatprep.subr.mxu0 %v664
        %1263 = vmatpush2.msra.mxu0 %v663
        %1264 = vmatprep.subr.mxu0 %v660
        %1265 = vmatpush2.msra.mxu0 %v659
        %1266 = vmatprep.subr.mxu0 %v656
        %1267 = vmatpush2.msra.mxu0 %v655
        %1268 = vmatprep.subr.mxu0 %v652
        %1269 = vmatpush2.msra.mxu0 %v651
        %1270 = vmatprep.subr.mxu0 %v648
        %1271 = vmatpush2.msra.mxu0 %v647
        %1272 = vmatprep.subr.mxu0 %v644
        %1273 = vmatpush2.msra.mxu0 %v643
        %1274 = vmatprep.mubr.f32.mxu0 %v388
        %1275 = vmatmul.mubr.f32.gmra.mxu0 %v387
        %v1276 = vpop.f32.mrf.mxu0
        %v1277 = vadd.f32 %v1116, %v1276
        %v1278 = vpop.f32.mrf.mxu0
        %v1279 = vadd.f32 %v1118, %v1278
        %1280 = vmatprep.mubr.f32.mxu0 %v392
        %1281 = vmatmul.mubr.f32.gmra.mxu0 %v391
        %v1282 = vpop.f32.mrf.mxu0
        %v1283 = vadd.f32 %v1122, %v1282
        %v1284 = vpop.f32.mrf.mxu0
        %v1285 = vadd.f32 %v1124, %v1284
        %1286 = vmatprep.mubr.f32.mxu0 %v396
        %1287 = vmatmul.mubr.f32.gmra.mxu0 %v395
        %v1288 = vpop.f32.mrf.mxu0
        %v1289 = vadd.f32 %v1128, %v1288
        %v1290 = vpop.f32.mrf.mxu0
        %v1291 = vadd.f32 %v1130, %v1290
        %1292 = vmatprep.mubr.f32.mxu0 %v400
        %1293 = vmatmul.mubr.f32.gmra.mxu0 %v399
        %v1294 = vpop.f32.mrf.mxu0
        %v1295 = vadd.f32 %v1134, %v1294
        %v1296 = vpop.f32.mrf.mxu0
        %v1297 = vadd.f32 %v1136, %v1296
        %1298 = vmatprep.mubr.f32.mxu0 %v404
        %1299 = vmatmul.mubr.f32.gmra.mxu0 %v403
        %v1300 = vpop.f32.mrf.mxu0
        %v1301 = vadd.f32 %v1140, %v1300
        %v1302 = vpop.f32.mrf.mxu0
        %v1303 = vadd.f32 %v1142, %v1302
        %1304 = vmatprep.mubr.f32.mxu0 %v408
        %1305 = vmatmul.mubr.f32.gmra.mxu0 %v407
        %v1306 = vpop.f32.mrf.mxu0
        %v1307 = vadd.f32 %v1146, %v1306
        %v1308 = vpop.f32.mrf.mxu0
        %v1309 = vadd.f32 %v1148, %v1308
        %1310 = vmatprep.mubr.f32.mxu0 %v412
        %1311 = vmatmul.mubr.f32.gmra.mxu0 %v411
        %v1312 = vpop.f32.mrf.mxu0
        %v1313 = vadd.f32 %v1152, %v1312
        %v1314 = vpop.f32.mrf.mxu0
        %v1315 = vadd.f32 %v1154, %v1314
        %1316 = vmatprep.mubr.f32.mxu0 %v416
        %1317 = vmatmul.mubr.f32.gmra.mxu0 %v415
        %v1318 = vpop.f32.mrf.mxu0
        %v1319 = vadd.f32 %v1158, %v1318
        %v1320 = vpop.f32.mrf.mxu0
        %v1321 = vadd.f32 %v1160, %v1320
        %1322 = vmatprep.mubr.f32.mxu0 %v420
        %1323 = vmatmul.mubr.f32.gmra.mxu0 %v419
        %v1324 = vpop.f32.mrf.mxu0
        %v1325 = vadd.f32 %v1164, %v1324
        %v1326 = vpop.f32.mrf.mxu0
        %v1327 = vadd.f32 %v1166, %v1326
        %1328 = vmatprep.mubr.f32.mxu0 %v424
        %1329 = vmatmul.mubr.f32.gmra.mxu0 %v423
        %v1330 = vpop.f32.mrf.mxu0
        %v1331 = vadd.f32 %v1170, %v1330
        %v1332 = vpop.f32.mrf.mxu0
        %v1333 = vadd.f32 %v1172, %v1332
        %1334 = vmatprep.mubr.f32.mxu0 %v428
        %1335 = vmatmul.mubr.f32.gmra.mxu0 %v427
        %v1336 = vpop.f32.mrf.mxu0
        %v1337 = vadd.f32 %v1176, %v1336
        %v1338 = vpop.f32.mrf.mxu0
        %v1339 = vadd.f32 %v1178, %v1338
        %1340 = vmatprep.mubr.f32.mxu0 %v432
        %1341 = vmatmul.mubr.f32.gmra.mxu0 %v431
        %v1342 = vpop.f32.mrf.mxu0
        %v1343 = vadd.f32 %v1182, %v1342
        %v1344 = vpop.f32.mrf.mxu0
        %v1345 = vadd.f32 %v1184, %v1344
        %1346 = vmatprep.mubr.f32.mxu0 %v436
        %1347 = vmatmul.mubr.f32.gmra.mxu0 %v435
        %v1348 = vpop.f32.mrf.mxu0
        %v1349 = vadd.f32 %v1188, %v1348
        %v1350 = vpop.f32.mrf.mxu0
        %v1351 = vadd.f32 %v1190, %v1350
        %1352 = vmatprep.mubr.f32.mxu0 %v440
        %1353 = vmatmul.mubr.f32.gmra.mxu0 %v439
        %v1354 = vpop.f32.mrf.mxu0
        %v1355 = vadd.f32 %v1194, %v1354
        %v1356 = vpop.f32.mrf.mxu0
        %v1357 = vadd.f32 %v1196, %v1356
        %1358 = vmatprep.mubr.f32.mxu0 %v444
        %1359 = vmatmul.mubr.f32.gmra.mxu0 %v443
        %v1360 = vpop.f32.mrf.mxu0
        %v1361 = vadd.f32 %v1200, %v1360
        %v1362 = vpop.f32.mrf.mxu0
        %v1363 = vadd.f32 %v1202, %v1362
        %1364 = vmatprep.mubr.f32.mxu0 %v448
        %1365 = vmatmul.mubr.f32.gmra.mxu0 %v447
        %v1366 = vpop.f32.mrf.mxu0
        %v1367 = vadd.f32 %v1206, %v1366
        %v1368 = vpop.f32.mrf.mxu0
        %v1369 = vadd.f32 %v1208, %v1368
        %1370 = vdwg.mxu0
        %1371 = vst [vmem:[#allocation2] sm:$0xff] %v955
        %1372 = vst [vmem:[#allocation2 + $0x8] sm:$0xff] %v957
        %1373 = vst [vmem:[#allocation2 + $0x10] sm:$0xff] %v1277
        %1374 = vst [vmem:[#allocation2 + $0x18] sm:$0xff] %v1279
        %1375 = vst [vmem:[#allocation2 + $0x20] sm:$0xff] %v961
        %1376 = vst [vmem:[#allocation2 + $0x28] sm:$0xff] %v963
        %1377 = vst [vmem:[#allocation2 + $0x30] sm:$0xff] %v1283
        %1378 = vst [vmem:[#allocation2 + $0x38] sm:$0xff] %v1285
        %1379 = vst [vmem:[#allocation2 + $0x40] sm:$0xff] %v967
        %1380 = vst [vmem:[#allocation2 + $0x48] sm:$0xff] %v969
        %1381 = vst [vmem:[#allocation2 + $0x50] sm:$0xff] %v1289
        %1382 = vst [vmem:[#allocation2 + $0x58] sm:$0xff] %v1291
        %1383 = vst [vmem:[#allocation2 + $0x60] sm:$0xff] %v973
        %1384 = vst [vmem:[#allocation2 + $0x68] sm:$0xff] %v975
        %1385 = vst [vmem:[#allocation2 + $0x70] sm:$0xff] %v1295
        %1386 = vst [vmem:[#allocation2 + $0x78] sm:$0xff] %v1297
        %1387 = vst [vmem:[#allocation2 + $0x80] sm:$0xff] %v979
        %1388 = vst [vmem:[#allocation2 + $0x88] sm:$0xff] %v981
        %1389 = vst [vmem:[#allocation2 + $0x90] sm:$0xff] %v1301
        %1390 = vst [vmem:[#allocation2 + $0x98] sm:$0xff] %v1303
        %1391 = vst [vmem:[#allocation2 + $0xa0] sm:$0xff] %v985
        %1392 = vst [vmem:[#allocation2 + $0xa8] sm:$0xff] %v987
        %1393 = vst [vmem:[#allocation2 + $0xb0] sm:$0xff] %v1307
        %1394 = vst [vmem:[#allocation2 + $0xb8] sm:$0xff] %v1309
        %1395 = vst [vmem:[#allocation2 + $0xc0] sm:$0xff] %v991
        %1396 = vst [vmem:[#allocation2 + $0xc8] sm:$0xff] %v993
        %1397 = vst [vmem:[#allocation2 + $0xd0] sm:$0xff] %v1313
        %1398 = vst [vmem:[#allocation2 + $0xd8] sm:$0xff] %v1315
        %1399 = vst [vmem:[#allocation2 + $0xe0] sm:$0xff] %v997
        %1400 = vst [vmem:[#allocation2 + $0xe8] sm:$0xff] %v999
        %1401 = vst [vmem:[#allocation2 + $0xf0] sm:$0xff] %v1319
        %1402 = vst [vmem:[#allocation2 + $0xf8] sm:$0xff] %v1321
        %1403 = vst [vmem:[#allocation2 + $0x100] sm:$0xff] %v1003
        %1404 = vst [vmem:[#allocation2 + $0x108] sm:$0xff] %v1005
        %1405 = vst [vmem:[#allocation2 + $0x110] sm:$0xff] %v1325
        %1406 = vst [vmem:[#allocation2 + $0x118] sm:$0xff] %v1327
        %1407 = vst [vmem:[#allocation2 + $0x120] sm:$0xff] %v1009
        %1408 = vst [vmem:[#allocation2 + $0x128] sm:$0xff] %v1011
        %1409 = vst [vmem:[#allocation2 + $0x130] sm:$0xff] %v1331
        %1410 = vst [vmem:[#allocation2 + $0x138] sm:$0xff] %v1333
        %1411 = vst [vmem:[#allocation2 + $0x140] sm:$0xff] %v1015
        %1412 = vst [vmem:[#allocation2 + $0x148] sm:$0xff] %v1017
        %1413 = vst [vmem:[#allocation2 + $0x150] sm:$0xff] %v1337
        %1414 = vst [vmem:[#allocation2 + $0x158] sm:$0xff] %v1339
        %1415 = vst [vmem:[#allocation2 + $0x160] sm:$0xff] %v1021
        %1416 = vst [vmem:[#allocation2 + $0x168] sm:$0xff] %v1023
        %1417 = vst [vmem:[#allocation2 + $0x170] sm:$0xff] %v1343
        %1418 = vst [vmem:[#allocation2 + $0x178] sm:$0xff] %v1345
        %1419 = vst [vmem:[#allocation2 + $0x180] sm:$0xff] %v1027
        %1420 = vst [vmem:[#allocation2 + $0x188] sm:$0xff] %v1029
        %1421 = vst [vmem:[#allocation2 + $0x190] sm:$0xff] %v1349
        %1422 = vst [vmem:[#allocation2 + $0x198] sm:$0xff] %v1351
        %1423 = vst [vmem:[#allocation2 + $0x1a0] sm:$0xff] %v1033
        %1424 = vst [vmem:[#allocation2 + $0x1a8] sm:$0xff] %v1035
        %1425 = vst [vmem:[#allocation2 + $0x1b0] sm:$0xff] %v1355
        %1426 = vst [vmem:[#allocation2 + $0x1b8] sm:$0xff] %v1357
        %1427 = vst [vmem:[#allocation2 + $0x1c0] sm:$0xff] %v1039
        %1428 = vst [vmem:[#allocation2 + $0x1c8] sm:$0xff] %v1041
        %1429 = vst [vmem:[#allocation2 + $0x1d0] sm:$0xff] %v1361
        %1430 = vst [vmem:[#allocation2 + $0x1d8] sm:$0xff] %v1363
        %1431 = vst [vmem:[#allocation2 + $0x1e0] sm:$0xff] %v1045
        %1432 = vst [vmem:[#allocation2 + $0x1e8] sm:$0xff] %v1047
        %1433 = vst [vmem:[#allocation2 + $0x1f0] sm:$0xff] %v1367
        %1434 = vst [vmem:[#allocation2 + $0x1f8] sm:$0xff] %v1369
        %v1435 = vld [vmem:[%s324] sm:$0xff]
        %v1436 = vld [vmem:[%s324 + $0x8] sm:$0xff]
        %v1437 = vld [vmem:[%s324 + $0x10] sm:$0xff]
        %v1438 = vld [vmem:[%s324 + $0x18] sm:$0xff]
        %v1439 = vld [vmem:[%s324 + $0x20] sm:$0xff]
        %v1440 = vld [vmem:[%s324 + $0x28] sm:$0xff]
        %v1441 = vld [vmem:[%s324 + $0x30] sm:$0xff]
        %v1442 = vld [vmem:[%s324 + $0x38] sm:$0xff]
        %v1443 = vld [vmem:[%s324 + $0x40] sm:$0xff]
        %v1444 = vld [vmem:[%s324 + $0x48] sm:$0xff]
        %v1445 = vld [vmem:[%s324 + $0x50] sm:$0xff]
        %v1446 = vld [vmem:[%s324 + $0x58] sm:$0xff]
        %v1447 = vld [vmem:[%s324 + $0x60] sm:$0xff]
        %v1448 = vld [vmem:[%s324 + $0x68] sm:$0xff]
        %v1449 = vld [vmem:[%s324 + $0x70] sm:$0xff]
        %v1450 = vld [vmem:[%s324 + $0x78] sm:$0xff]
        %v1451 = vld [vmem:[%s324 + $0x80] sm:$0xff]
        %v1452 = vld [vmem:[%s324 + $0x88] sm:$0xff]
        %v1453 = vld [vmem:[%s324 + $0x90] sm:$0xff]
        %v1454 = vld [vmem:[%s324 + $0x98] sm:$0xff]
        %v1455 = vld [vmem:[%s324 + $0xa0] sm:$0xff]
        %v1456 = vld [vmem:[%s324 + $0xa8] sm:$0xff]
        %v1457 = vld [vmem:[%s324 + $0xb0] sm:$0xff]
        %v1458 = vld [vmem:[%s324 + $0xb8] sm:$0xff]
        %v1459 = vld [vmem:[%s324 + $0xc0] sm:$0xff]
        %v1460 = vld [vmem:[%s324 + $0xc8] sm:$0xff]
        %v1461 = vld [vmem:[%s324 + $0xd0] sm:$0xff]
        %v1462 = vld [vmem:[%s324 + $0xd8] sm:$0xff]
        %v1463 = vld [vmem:[%s324 + $0xe0] sm:$0xff]
        %v1464 = vld [vmem:[%s324 + $0xe8] sm:$0xff]
        %v1465 = vld [vmem:[%s324 + $0xf0] sm:$0xff]
        %v1466 = vld [vmem:[%s324 + $0xf8] sm:$0xff]
        %v1467 = vld [vmem:[%s324 + $0x100] sm:$0xff]
        %v1468 = vld [vmem:[%s324 + $0x108] sm:$0xff]
        %v1469 = vld [vmem:[%s324 + $0x110] sm:$0xff]
        %v1470 = vld [vmem:[%s324 + $0x118] sm:$0xff]
        %v1471 = vld [vmem:[%s324 + $0x120] sm:$0xff]
        %v1472 = vld [vmem:[%s324 + $0x128] sm:$0xff]
        %v1473 = vld [vmem:[%s324 + $0x130] sm:$0xff]
        %v1474 = vld [vmem:[%s324 + $0x138] sm:$0xff]
        %v1475 = vld [vmem:[%s324 + $0x140] sm:$0xff]
        %v1476 = vld [vmem:[%s324 + $0x148] sm:$0xff]
        %v1477 = vld [vmem:[%s324 + $0x150] sm:$0xff]
        %v1478 = vld [vmem:[%s324 + $0x158] sm:$0xff]
        %v1479 = vld [vmem:[%s324 + $0x160] sm:$0xff]
        %v1480 = vld [vmem:[%s324 + $0x168] sm:$0xff]
        %v1481 = vld [vmem:[%s324 + $0x170] sm:$0xff]
        %v1482 = vld [vmem:[%s324 + $0x178] sm:$0xff]
        %v1483 = vld [vmem:[%s324 + $0x180] sm:$0xff]
        %v1484 = vld [vmem:[%s324 + $0x188] sm:$0xff]
        %v1485 = vld [vmem:[%s324 + $0x190] sm:$0xff]
        %v1486 = vld [vmem:[%s324 + $0x198] sm:$0xff]
        %v1487 = vld [vmem:[%s324 + $0x1a0] sm:$0xff]
        %v1488 = vld [vmem:[%s324 + $0x1a8] sm:$0xff]
        %v1489 = vld [vmem:[%s324 + $0x1b0] sm:$0xff]
        %v1490 = vld [vmem:[%s324 + $0x1b8] sm:$0xff]
        %v1491 = vld [vmem:[%s324 + $0x1c0] sm:$0xff]
        %v1492 = vld [vmem:[%s324 + $0x1c8] sm:$0xff]
        %v1493 = vld [vmem:[%s324 + $0x1d0] sm:$0xff]
        %v1494 = vld [vmem:[%s324 + $0x1d8] sm:$0xff]
        %v1495 = vld [vmem:[%s324 + $0x1e0] sm:$0xff]
        %v1496 = vld [vmem:[%s324 + $0x1e8] sm:$0xff]
        %v1497 = vld [vmem:[%s324 + $0x1f0] sm:$0xff]
        %v1498 = vld [vmem:[%s324 + $0x1f8] sm:$0xff]
        %v1499 = vld [vmem:[#allocation11 + $0x20] sm:$0xff]
        %v1500 = vld [vmem:[#allocation11 + $0x28] sm:$0xff]
        %v1501 = vld [vmem:[#allocation11 + $0x30] sm:$0xff]
        %v1502 = vld [vmem:[#allocation11 + $0x38] sm:$0xff]
        %v1503 = vld [vmem:[#allocation11 + $0x80] sm:$0xff]
        %v1504 = vld [vmem:[#allocation11 + $0x88] sm:$0xff]
        %v1505 = vld [vmem:[#allocation11 + $0x90] sm:$0xff]
        %v1506 = vld [vmem:[#allocation11 + $0x98] sm:$0xff]
        %v1507 = vld [vmem:[#allocation11 + $0xe0] sm:$0xff]
        %v1508 = vld [vmem:[#allocation11 + $0xe8] sm:$0xff]
        %v1509 = vld [vmem:[#allocation11 + $0xf0] sm:$0xff]
        %v1510 = vld [vmem:[#allocation11 + $0xf8] sm:$0xff]
        %v1511 = vld [vmem:[#allocation11 + $0x140] sm:$0xff]
        %v1512 = vld [vmem:[#allocation11 + $0x148] sm:$0xff]
        %v1513 = vld [vmem:[#allocation11 + $0x150] sm:$0xff]
        %v1514 = vld [vmem:[#allocation11 + $0x158] sm:$0xff]
        %v1515 = vld [vmem:[#allocation11 + $0x1a0] sm:$0xff]
        %v1516 = vld [vmem:[#allocation11 + $0x1a8] sm:$0xff]
        %v1517 = vld [vmem:[#allocation11 + $0x1b0] sm:$0xff]
        %v1518 = vld [vmem:[#allocation11 + $0x1b8] sm:$0xff]
        %v1519 = vld [vmem:[#allocation11 + $0x200] sm:$0xff]
        %v1520 = vld [vmem:[#allocation11 + $0x208] sm:$0xff]
        %v1521 = vld [vmem:[#allocation11 + $0x210] sm:$0xff]
        %v1522 = vld [vmem:[#allocation11 + $0x218] sm:$0xff]
        %v1523 = vld [vmem:[#allocation11 + $0x260] sm:$0xff]
        %v1524 = vld [vmem:[#allocation11 + $0x268] sm:$0xff]
        %v1525 = vld [vmem:[#allocation11 + $0x270] sm:$0xff]
        %v1526 = vld [vmem:[#allocation11 + $0x278] sm:$0xff]
        %v1527 = vld [vmem:[#allocation11 + $0x2c0] sm:$0xff]
        %v1528 = vld [vmem:[#allocation11 + $0x2c8] sm:$0xff]
        %v1529 = vld [vmem:[#allocation11 + $0x2d0] sm:$0xff]
        %v1530 = vld [vmem:[#allocation11 + $0x2d8] sm:$0xff]
        %v1531 = vld [vmem:[#allocation11 + $0x320] sm:$0xff]
        %v1532 = vld [vmem:[#allocation11 + $0x328] sm:$0xff]
        %v1533 = vld [vmem:[#allocation11 + $0x330] sm:$0xff]
        %v1534 = vld [vmem:[#allocation11 + $0x338] sm:$0xff]
        %v1535 = vld [vmem:[#allocation11 + $0x380] sm:$0xff]
        %v1536 = vld [vmem:[#allocation11 + $0x388] sm:$0xff]
        %v1537 = vld [vmem:[#allocation11 + $0x390] sm:$0xff]
        %v1538 = vld [vmem:[#allocation11 + $0x398] sm:$0xff]
        %v1539 = vld [vmem:[#allocation11 + $0x3e0] sm:$0xff]
        %v1540 = vld [vmem:[#allocation11 + $0x3e8] sm:$0xff]
        %v1541 = vld [vmem:[#allocation11 + $0x3f0] sm:$0xff]
        %v1542 = vld [vmem:[#allocation11 + $0x3f8] sm:$0xff]
        %v1543 = vld [vmem:[#allocation11 + $0x440] sm:$0xff]
        %v1544 = vld [vmem:[#allocation11 + $0x448] sm:$0xff]
        %v1545 = vld [vmem:[#allocation11 + $0x450] sm:$0xff]
        %v1546 = vld [vmem:[#allocation11 + $0x458] sm:$0xff]
        %v1547 = vld [vmem:[#allocation11 + $0x4a0] sm:$0xff]
        %v1548 = vld [vmem:[#allocation11 + $0x4a8] sm:$0xff]
        %v1549 = vld [vmem:[#allocation11 + $0x4b0] sm:$0xff]
        %v1550 = vld [vmem:[#allocation11 + $0x4b8] sm:$0xff]
        %v1551 = vld [vmem:[#allocation11 + $0x500] sm:$0xff]
        %v1552 = vld [vmem:[#allocation11 + $0x508] sm:$0xff]
        %v1553 = vld [vmem:[#allocation11 + $0x510] sm:$0xff]
        %v1554 = vld [vmem:[#allocation11 + $0x518] sm:$0xff]
        %v1555 = vld [vmem:[#allocation11 + $0x560] sm:$0xff]
        %v1556 = vld [vmem:[#allocation11 + $0x568] sm:$0xff]
        %v1557 = vld [vmem:[#allocation11 + $0x570] sm:$0xff]
        %v1558 = vld [vmem:[#allocation11 + $0x578] sm:$0xff]
        %v1559 = vld [vmem:[#allocation11 + $0x5c0] sm:$0xff]
        %v1560 = vld [vmem:[#allocation11 + $0x5c8] sm:$0xff]
        %v1561 = vld [vmem:[#allocation11 + $0x5d0] sm:$0xff]
        %v1562 = vld [vmem:[#allocation11 + $0x5d8] sm:$0xff]
        %v1563 = vld [vmem:[#allocation11 + $0x620] sm:$0xff]
        %v1564 = vld [vmem:[#allocation11 + $0x628] sm:$0xff]
        %v1565 = vld [vmem:[#allocation11 + $0x630] sm:$0xff]
        %v1566 = vld [vmem:[#allocation11 + $0x638] sm:$0xff]
        %v1567 = vld [vmem:[#allocation11 + $0x680] sm:$0xff]
        %v1568 = vld [vmem:[#allocation11 + $0x688] sm:$0xff]
        %v1569 = vld [vmem:[#allocation11 + $0x690] sm:$0xff]
        %v1570 = vld [vmem:[#allocation11 + $0x698] sm:$0xff]
        %v1571 = vld [vmem:[#allocation11 + $0x6e0] sm:$0xff]
        %v1572 = vld [vmem:[#allocation11 + $0x6e8] sm:$0xff]
        %v1573 = vld [vmem:[#allocation11 + $0x6f0] sm:$0xff]
        %v1574 = vld [vmem:[#allocation11 + $0x6f8] sm:$0xff]
        %v1575 = vld [vmem:[#allocation11 + $0x740] sm:$0xff]
        %v1576 = vld [vmem:[#allocation11 + $0x748] sm:$0xff]
        %v1577 = vld [vmem:[#allocation11 + $0x750] sm:$0xff]
        %v1578 = vld [vmem:[#allocation11 + $0x758] sm:$0xff]
        %v1579 = vld [vmem:[#allocation11 + $0x7a0] sm:$0xff]
        %v1580 = vld [vmem:[#allocation11 + $0x7a8] sm:$0xff]
        %v1581 = vld [vmem:[#allocation11 + $0x7b0] sm:$0xff]
        %v1582 = vld [vmem:[#allocation11 + $0x7b8] sm:$0xff]
        %v1583 = vld [vmem:[#allocation11 + $0x800] sm:$0xff]
        %v1584 = vld [vmem:[#allocation11 + $0x808] sm:$0xff]
        %v1585 = vld [vmem:[#allocation11 + $0x810] sm:$0xff]
        %v1586 = vld [vmem:[#allocation11 + $0x818] sm:$0xff]
        %v1587 = vld [vmem:[#allocation11 + $0x860] sm:$0xff]
        %v1588 = vld [vmem:[#allocation11 + $0x868] sm:$0xff]
        %v1589 = vld [vmem:[#allocation11 + $0x870] sm:$0xff]
        %v1590 = vld [vmem:[#allocation11 + $0x878] sm:$0xff]
        %v1591 = vld [vmem:[#allocation11 + $0x8c0] sm:$0xff]
        %v1592 = vld [vmem:[#allocation11 + $0x8c8] sm:$0xff]
        %v1593 = vld [vmem:[#allocation11 + $0x8d0] sm:$0xff]
        %v1594 = vld [vmem:[#allocation11 + $0x8d8] sm:$0xff]
        %v1595 = vld [vmem:[#allocation11 + $0x920] sm:$0xff]
        %v1596 = vld [vmem:[#allocation11 + $0x928] sm:$0xff]
        %v1597 = vld [vmem:[#allocation11 + $0x930] sm:$0xff]
        %v1598 = vld [vmem:[#allocation11 + $0x938] sm:$0xff]
        %v1599 = vld [vmem:[#allocation11 + $0x980] sm:$0xff]
        %v1600 = vld [vmem:[#allocation11 + $0x988] sm:$0xff]
        %v1601 = vld [vmem:[#allocation11 + $0x990] sm:$0xff]
        %v1602 = vld [vmem:[#allocation11 + $0x998] sm:$0xff]
        %v1603 = vld [vmem:[#allocation11 + $0x9e0] sm:$0xff]
        %v1604 = vld [vmem:[#allocation11 + $0x9e8] sm:$0xff]
        %v1605 = vld [vmem:[#allocation11 + $0x9f0] sm:$0xff]
        %v1606 = vld [vmem:[#allocation11 + $0x9f8] sm:$0xff]
        %v1607 = vld [vmem:[#allocation11 + $0xa40] sm:$0xff]
        %v1608 = vld [vmem:[#allocation11 + $0xa48] sm:$0xff]
        %v1609 = vld [vmem:[#allocation11 + $0xa50] sm:$0xff]
        %v1610 = vld [vmem:[#allocation11 + $0xa58] sm:$0xff]
        %v1611 = vld [vmem:[#allocation11 + $0xaa0] sm:$0xff]
        %v1612 = vld [vmem:[#allocation11 + $0xaa8] sm:$0xff]
        %v1613 = vld [vmem:[#allocation11 + $0xab0] sm:$0xff]
        %v1614 = vld [vmem:[#allocation11 + $0xab8] sm:$0xff]
        %v1615 = vld [vmem:[#allocation11 + $0xb00] sm:$0xff]
        %v1616 = vld [vmem:[#allocation11 + $0xb08] sm:$0xff]
        %v1617 = vld [vmem:[#allocation11 + $0xb10] sm:$0xff]
        %v1618 = vld [vmem:[#allocation11 + $0xb18] sm:$0xff]
        %v1619 = vld [vmem:[#allocation11 + $0xb60] sm:$0xff]
        %v1620 = vld [vmem:[#allocation11 + $0xb68] sm:$0xff]
        %v1621 = vld [vmem:[#allocation11 + $0xb70] sm:$0xff]
        %v1622 = vld [vmem:[#allocation11 + $0xb78] sm:$0xff]
        %v1623 = vld [vmem:[#allocation11 + $0xbc0] sm:$0xff]
        %v1624 = vld [vmem:[#allocation11 + $0xbc8] sm:$0xff]
        %v1625 = vld [vmem:[#allocation11 + $0xbd0] sm:$0xff]
        %v1626 = vld [vmem:[#allocation11 + $0xbd8] sm:$0xff]
        %v1627 = vld [vmem:[#allocation11 + $0xc20] sm:$0xff]
        %v1628 = vld [vmem:[#allocation11 + $0xc28] sm:$0xff]
        %v1629 = vld [vmem:[#allocation11 + $0xc30] sm:$0xff]
        %v1630 = vld [vmem:[#allocation11 + $0xc38] sm:$0xff]
        %v1631 = vld [vmem:[#allocation11 + $0xc80] sm:$0xff]
        %v1632 = vld [vmem:[#allocation11 + $0xc88] sm:$0xff]
        %v1633 = vld [vmem:[#allocation11 + $0xc90] sm:$0xff]
        %v1634 = vld [vmem:[#allocation11 + $0xc98] sm:$0xff]
        %v1635 = vld [vmem:[#allocation11 + $0xce0] sm:$0xff]
        %v1636 = vld [vmem:[#allocation11 + $0xce8] sm:$0xff]
        %v1637 = vld [vmem:[#allocation11 + $0xcf0] sm:$0xff]
        %v1638 = vld [vmem:[#allocation11 + $0xcf8] sm:$0xff]
        %v1639 = vld [vmem:[#allocation11 + $0xd40] sm:$0xff]
        %v1640 = vld [vmem:[#allocation11 + $0xd48] sm:$0xff]
        %v1641 = vld [vmem:[#allocation11 + $0xd50] sm:$0xff]
        %v1642 = vld [vmem:[#allocation11 + $0xd58] sm:$0xff]
        %v1643 = vld [vmem:[#allocation11 + $0xda0] sm:$0xff]
        %v1644 = vld [vmem:[#allocation11 + $0xda8] sm:$0xff]
        %v1645 = vld [vmem:[#allocation11 + $0xdb0] sm:$0xff]
        %v1646 = vld [vmem:[#allocation11 + $0xdb8] sm:$0xff]
        %v1647 = vld [vmem:[#allocation11 + $0xe00] sm:$0xff]
        %v1648 = vld [vmem:[#allocation11 + $0xe08] sm:$0xff]
        %v1649 = vld [vmem:[#allocation11 + $0xe10] sm:$0xff]
        %v1650 = vld [vmem:[#allocation11 + $0xe18] sm:$0xff]
        %v1651 = vld [vmem:[#allocation11 + $0xe60] sm:$0xff]
        %v1652 = vld [vmem:[#allocation11 + $0xe68] sm:$0xff]
        %v1653 = vld [vmem:[#allocation11 + $0xe70] sm:$0xff]
        %v1654 = vld [vmem:[#allocation11 + $0xe78] sm:$0xff]
        %v1655 = vld [vmem:[#allocation11 + $0xec0] sm:$0xff]
        %v1656 = vld [vmem:[#allocation11 + $0xec8] sm:$0xff]
        %v1657 = vld [vmem:[#allocation11 + $0xed0] sm:$0xff]
        %v1658 = vld [vmem:[#allocation11 + $0xed8] sm:$0xff]
        %v1659 = vld [vmem:[#allocation11 + $0xf20] sm:$0xff]
        %v1660 = vld [vmem:[#allocation11 + $0xf28] sm:$0xff]
        %v1661 = vld [vmem:[#allocation11 + $0xf30] sm:$0xff]
        %v1662 = vld [vmem:[#allocation11 + $0xf38] sm:$0xff]
        %v1663 = vld [vmem:[#allocation11 + $0xf80] sm:$0xff]
        %v1664 = vld [vmem:[#allocation11 + $0xf88] sm:$0xff]
        %v1665 = vld [vmem:[#allocation11 + $0xf90] sm:$0xff]
        %v1666 = vld [vmem:[#allocation11 + $0xf98] sm:$0xff]
        %v1667 = vld [vmem:[#allocation11 + $0xfe0] sm:$0xff]
        %v1668 = vld [vmem:[#allocation11 + $0xfe8] sm:$0xff]
        %v1669 = vld [vmem:[#allocation11 + $0xff0] sm:$0xff]
        %v1670 = vld [vmem:[#allocation11 + $0xff8] sm:$0xff]
        %v1671 = vld [vmem:[#allocation11 + $0x1040] sm:$0xff]
        %v1672 = vld [vmem:[#allocation11 + $0x1048] sm:$0xff]
        %v1673 = vld [vmem:[#allocation11 + $0x1050] sm:$0xff]
        %v1674 = vld [vmem:[#allocation11 + $0x1058] sm:$0xff]
        %v1675 = vld [vmem:[#allocation11 + $0x10a0] sm:$0xff]
        %v1676 = vld [vmem:[#allocation11 + $0x10a8] sm:$0xff]
        %v1677 = vld [vmem:[#allocation11 + $0x10b0] sm:$0xff]
        %v1678 = vld [vmem:[#allocation11 + $0x10b8] sm:$0xff]
        %v1679 = vld [vmem:[#allocation11 + $0x1100] sm:$0xff]
        %v1680 = vld [vmem:[#allocation11 + $0x1108] sm:$0xff]
        %v1681 = vld [vmem:[#allocation11 + $0x1110] sm:$0xff]
        %v1682 = vld [vmem:[#allocation11 + $0x1118] sm:$0xff]
        %v1683 = vld [vmem:[#allocation11 + $0x1160] sm:$0xff]
        %v1684 = vld [vmem:[#allocation11 + $0x1168] sm:$0xff]
        %v1685 = vld [vmem:[#allocation11 + $0x1170] sm:$0xff]
        %v1686 = vld [vmem:[#allocation11 + $0x1178] sm:$0xff]
        %v1687 = vld [vmem:[#allocation11 + $0x11c0] sm:$0xff]
        %v1688 = vld [vmem:[#allocation11 + $0x11c8] sm:$0xff]
        %v1689 = vld [vmem:[#allocation11 + $0x11d0] sm:$0xff]
        %v1690 = vld [vmem:[#allocation11 + $0x11d8] sm:$0xff]
        %v1691 = vld [vmem:[#allocation11 + $0x1220] sm:$0xff]
        %v1692 = vld [vmem:[#allocation11 + $0x1228] sm:$0xff]
        %v1693 = vld [vmem:[#allocation11 + $0x1230] sm:$0xff]
        %v1694 = vld [vmem:[#allocation11 + $0x1238] sm:$0xff]
        %v1695 = vld [vmem:[#allocation11 + $0x1280] sm:$0xff]
        %v1696 = vld [vmem:[#allocation11 + $0x1288] sm:$0xff]
        %v1697 = vld [vmem:[#allocation11 + $0x1290] sm:$0xff]
        %v1698 = vld [vmem:[#allocation11 + $0x1298] sm:$0xff]
        %v1699 = vld [vmem:[#allocation11 + $0x12e0] sm:$0xff]
        %v1700 = vld [vmem:[#allocation11 + $0x12e8] sm:$0xff]
        %v1701 = vld [vmem:[#allocation11 + $0x12f0] sm:$0xff]
        %v1702 = vld [vmem:[#allocation11 + $0x12f8] sm:$0xff]
        %v1703 = vld [vmem:[#allocation11 + $0x1340] sm:$0xff]
        %v1704 = vld [vmem:[#allocation11 + $0x1348] sm:$0xff]
        %v1705 = vld [vmem:[#allocation11 + $0x1350] sm:$0xff]
        %v1706 = vld [vmem:[#allocation11 + $0x1358] sm:$0xff]
        %v1707 = vld [vmem:[#allocation11 + $0x13a0] sm:$0xff]
        %v1708 = vld [vmem:[#allocation11 + $0x13a8] sm:$0xff]
        %v1709 = vld [vmem:[#allocation11 + $0x13b0] sm:$0xff]
        %v1710 = vld [vmem:[#allocation11 + $0x13b8] sm:$0xff]
        %v1711 = vld [vmem:[#allocation11 + $0x1400] sm:$0xff]
        %v1712 = vld [vmem:[#allocation11 + $0x1408] sm:$0xff]
        %v1713 = vld [vmem:[#allocation11 + $0x1410] sm:$0xff]
        %v1714 = vld [vmem:[#allocation11 + $0x1418] sm:$0xff]
        %v1715 = vld [vmem:[#allocation11 + $0x1460] sm:$0xff]
        %v1716 = vld [vmem:[#allocation11 + $0x1468] sm:$0xff]
        %v1717 = vld [vmem:[#allocation11 + $0x1470] sm:$0xff]
        %v1718 = vld [vmem:[#allocation11 + $0x1478] sm:$0xff]
        %v1719 = vld [vmem:[#allocation11 + $0x14c0] sm:$0xff]
        %v1720 = vld [vmem:[#allocation11 + $0x14c8] sm:$0xff]
        %v1721 = vld [vmem:[#allocation11 + $0x14d0] sm:$0xff]
        %v1722 = vld [vmem:[#allocation11 + $0x14d8] sm:$0xff]
        %v1723 = vld [vmem:[#allocation11 + $0x1520] sm:$0xff]
        %v1724 = vld [vmem:[#allocation11 + $0x1528] sm:$0xff]
        %v1725 = vld [vmem:[#allocation11 + $0x1530] sm:$0xff]
        %v1726 = vld [vmem:[#allocation11 + $0x1538] sm:$0xff]
        %v1727 = vld [vmem:[#allocation11 + $0x1580] sm:$0xff]
        %v1728 = vld [vmem:[#allocation11 + $0x1588] sm:$0xff]
        %v1729 = vld [vmem:[#allocation11 + $0x1590] sm:$0xff]
        %v1730 = vld [vmem:[#allocation11 + $0x1598] sm:$0xff]
        %v1731 = vld [vmem:[#allocation11 + $0x15e0] sm:$0xff]
        %v1732 = vld [vmem:[#allocation11 + $0x15e8] sm:$0xff]
        %v1733 = vld [vmem:[#allocation11 + $0x15f0] sm:$0xff]
        %v1734 = vld [vmem:[#allocation11 + $0x15f8] sm:$0xff]
        %v1735 = vld [vmem:[#allocation11 + $0x1640] sm:$0xff]
        %v1736 = vld [vmem:[#allocation11 + $0x1648] sm:$0xff]
        %v1737 = vld [vmem:[#allocation11 + $0x1650] sm:$0xff]
        %v1738 = vld [vmem:[#allocation11 + $0x1658] sm:$0xff]
        %v1739 = vld [vmem:[#allocation11 + $0x16a0] sm:$0xff]
        %v1740 = vld [vmem:[#allocation11 + $0x16a8] sm:$0xff]
        %v1741 = vld [vmem:[#allocation11 + $0x16b0] sm:$0xff]
        %v1742 = vld [vmem:[#allocation11 + $0x16b8] sm:$0xff]
        %v1743 = vld [vmem:[#allocation11 + $0x1700] sm:$0xff]
        %v1744 = vld [vmem:[#allocation11 + $0x1708] sm:$0xff]
        %v1745 = vld [vmem:[#allocation11 + $0x1710] sm:$0xff]
        %v1746 = vld [vmem:[#allocation11 + $0x1718] sm:$0xff]
        %v1747 = vld [vmem:[#allocation11 + $0x1760] sm:$0xff]
        %v1748 = vld [vmem:[#allocation11 + $0x1768] sm:$0xff]
        %v1749 = vld [vmem:[#allocation11 + $0x1770] sm:$0xff]
        %v1750 = vld [vmem:[#allocation11 + $0x1778] sm:$0xff]
        %v1751 = vld [vmem:[#allocation11 + $0x17c0] sm:$0xff]
        %v1752 = vld [vmem:[#allocation11 + $0x17c8] sm:$0xff]
        %v1753 = vld [vmem:[#allocation11 + $0x17d0] sm:$0xff]
        %v1754 = vld [vmem:[#allocation11 + $0x17d8] sm:$0xff]
        %v1755 = vld [vmem:[#allocation13 + $0x4] sm:$0xf]
        %v1757 = vlaneseq
        %v1758 = vshrl.u32 %v1757, 7
        %v1759 = vsub.s32 0, %v1758
        %v1760 = vrot.slane %v1755, %v1759
        %v1761 = vlaneseq
        %v1762 = vshrl.u32 %v1761, 7
        %v1763 = vsub.s32 1, %v1762
        %v1764 = vrot.slane %v1755, %v1763
        %v1765 = vlaneseq
        %v1766 = vshrl.u32 %v1765, 7
        %v1767 = vsub.s32 2, %v1766
        %v1768 = vrot.slane %v1755, %v1767
        %v1769 = vlaneseq
        %v1770 = vshrl.u32 %v1769, 7
        %v1771 = vsub.s32 3, %v1770
        %v1772 = vrot.slane %v1755, %v1771
        %1777 = vmatprep.subr.mxu0 %v1560
        %1778 = vmatpush1.msra.mxu0 %v1559
        %1779 = vmatprep.subr.mxu0 %v1556
        %1780 = vmatpush1.msra.mxu0 %v1555
        %1781 = vmatprep.subr.mxu0 %v1552
        %1782 = vmatpush1.msra.mxu0 %v1551
        %1783 = vmatprep.subr.mxu0 %v1548
        %1784 = vmatpush1.msra.mxu0 %v1547
        %1785 = vmatprep.subr.mxu0 %v1544
        %1786 = vmatpush1.msra.mxu0 %v1543
        %1787 = vmatprep.subr.mxu0 %v1540
        %1788 = vmatpush1.msra.mxu0 %v1539
        %1789 = vmatprep.subr.mxu0 %v1536
        %1790 = vmatpush1.msra.mxu0 %v1535
        %1791 = vmatprep.subr.mxu0 %v1532
        %1792 = vmatpush1.msra.mxu0 %v1531
        %1793 = vmatprep.subr.mxu0 %v1528
        %1794 = vmatpush1.msra.mxu0 %v1527
        %1795 = vmatprep.subr.mxu0 %v1524
        %1796 = vmatpush1.msra.mxu0 %v1523
        %1797 = vmatprep.subr.mxu0 %v1520
        %1798 = vmatpush1.msra.mxu0 %v1519
        %1799 = vmatprep.subr.mxu0 %v1516
        %1800 = vmatpush1.msra.mxu0 %v1515
        %1801 = vmatprep.subr.mxu0 %v1512
        %1802 = vmatpush1.msra.mxu0 %v1511
        %1803 = vmatprep.subr.mxu0 %v1508
        %1804 = vmatpush1.msra.mxu0 %v1507
        %1805 = vmatprep.subr.mxu0 %v1504
        %1806 = vmatpush1.msra.mxu0 %v1503
        %1807 = vmatprep.subr.mxu0 %v1500
        %1808 = vmatpush1.msra.mxu0 %v1499
        %1809 = vmatprep.subr.mxu0 %v1624
        %1810 = vmatpush2.msra.mxu0 %v1623
        %1811 = vmatprep.subr.mxu0 %v1620
        %1812 = vmatpush2.msra.mxu0 %v1619
        %1813 = vmatprep.subr.mxu0 %v1616
        %1814 = vmatpush2.msra.mxu0 %v1615
        %1815 = vmatprep.subr.mxu0 %v1612
        %1816 = vmatpush2.msra.mxu0 %v1611
        %1817 = vmatprep.subr.mxu0 %v1608
        %1818 = vmatpush2.msra.mxu0 %v1607
        %1819 = vmatprep.subr.mxu0 %v1604
        %1820 = vmatpush2.msra.mxu0 %v1603
        %1821 = vmatprep.subr.mxu0 %v1600
        %1822 = vmatpush2.msra.mxu0 %v1599
        %1823 = vmatprep.subr.mxu0 %v1596
        %1824 = vmatpush2.msra.mxu0 %v1595
        %1825 = vmatprep.subr.mxu0 %v1592
        %1826 = vmatpush2.msra.mxu0 %v1591
        %1827 = vmatprep.subr.mxu0 %v1588
        %1828 = vmatpush2.msra.mxu0 %v1587
        %1829 = vmatprep.subr.mxu0 %v1584
        %1830 = vmatpush2.msra.mxu0 %v1583
        %1831 = vmatprep.subr.mxu0 %v1580
        %1832 = vmatpush2.msra.mxu0 %v1579
        %1833 = vmatprep.subr.mxu0 %v1576
        %1834 = vmatpush2.msra.mxu0 %v1575
        %1835 = vmatprep.subr.mxu0 %v1572
        %1836 = vmatpush2.msra.mxu0 %v1571
        %1837 = vmatprep.subr.mxu0 %v1568
        %1838 = vmatpush2.msra.mxu0 %v1567
        %1839 = vmatprep.subr.mxu0 %v1564
        %1840 = vmatpush2.msra.mxu0 %v1563
        %1841 = vmatprep.mubr.f32.mxu0 %v1436
        %1842 = vmatmul.mubr.f32.gmra.mxu0 %v1435
        %v1843 = vpop.f32.mrf.mxu0
        %v1844 = vadd.f32 %v1760, %v1843
        %v1845 = vpop.f32.mrf.mxu0
        %v1846 = vadd.f32 %v1764, %v1845
        %1847 = vmatprep.mubr.f32.mxu0 %v1440
        %1848 = vmatmul.mubr.f32.gmra.mxu0 %v1439
        %v1849 = vpop.f32.mrf.mxu0
        %v1850 = vadd.f32 %v1760, %v1849
        %v1851 = vpop.f32.mrf.mxu0
        %v1852 = vadd.f32 %v1764, %v1851
        %1853 = vmatprep.mubr.f32.mxu0 %v1444
        %1854 = vmatmul.mubr.f32.gmra.mxu0 %v1443
        %v1855 = vpop.f32.mrf.mxu0
        %v1856 = vadd.f32 %v1760, %v1855
        %v1857 = vpop.f32.mrf.mxu0
        %v1858 = vadd.f32 %v1764, %v1857
        %1859 = vmatprep.mubr.f32.mxu0 %v1448
        %1860 = vmatmul.mubr.f32.gmra.mxu0 %v1447
        %v1861 = vpop.f32.mrf.mxu0
        %v1862 = vadd.f32 %v1760, %v1861
        %v1863 = vpop.f32.mrf.mxu0
        %v1864 = vadd.f32 %v1764, %v1863
        %1865 = vmatprep.mubr.f32.mxu0 %v1452
        %1866 = vmatmul.mubr.f32.gmra.mxu0 %v1451
        %v1867 = vpop.f32.mrf.mxu0
        %v1868 = vadd.f32 %v1760, %v1867
        %v1869 = vpop.f32.mrf.mxu0
        %v1870 = vadd.f32 %v1764, %v1869
        %1871 = vmatprep.mubr.f32.mxu0 %v1456
        %1872 = vmatmul.mubr.f32.gmra.mxu0 %v1455
        %v1873 = vpop.f32.mrf.mxu0
        %v1874 = vadd.f32 %v1760, %v1873
        %v1875 = vpop.f32.mrf.mxu0
        %v1876 = vadd.f32 %v1764, %v1875
        %1877 = vmatprep.mubr.f32.mxu0 %v1460
        %1878 = vmatmul.mubr.f32.gmra.mxu0 %v1459
        %v1879 = vpop.f32.mrf.mxu0
        %v1880 = vadd.f32 %v1760, %v1879
        %v1881 = vpop.f32.mrf.mxu0
        %v1882 = vadd.f32 %v1764, %v1881
        %1883 = vmatprep.mubr.f32.mxu0 %v1464
        %1884 = vmatmul.mubr.f32.gmra.mxu0 %v1463
        %v1885 = vpop.f32.mrf.mxu0
        %v1886 = vadd.f32 %v1760, %v1885
        %v1887 = vpop.f32.mrf.mxu0
        %v1888 = vadd.f32 %v1764, %v1887
        %1889 = vmatprep.mubr.f32.mxu0 %v1468
        %1890 = vmatmul.mubr.f32.gmra.mxu0 %v1467
        %v1891 = vpop.f32.mrf.mxu0
        %v1892 = vadd.f32 %v1760, %v1891
        %v1893 = vpop.f32.mrf.mxu0
        %v1894 = vadd.f32 %v1764, %v1893
        %1895 = vmatprep.mubr.f32.mxu0 %v1472
        %1896 = vmatmul.mubr.f32.gmra.mxu0 %v1471
        %v1897 = vpop.f32.mrf.mxu0
        %v1898 = vadd.f32 %v1760, %v1897
        %v1899 = vpop.f32.mrf.mxu0
        %v1900 = vadd.f32 %v1764, %v1899
        %1901 = vmatprep.mubr.f32.mxu0 %v1476
        %1902 = vmatmul.mubr.f32.gmra.mxu0 %v1475
        %v1903 = vpop.f32.mrf.mxu0
        %v1904 = vadd.f32 %v1760, %v1903
        %v1905 = vpop.f32.mrf.mxu0
        %v1906 = vadd.f32 %v1764, %v1905
        %1907 = vmatprep.mubr.f32.mxu0 %v1480
        %1908 = vmatmul.mubr.f32.gmra.mxu0 %v1479
        %v1909 = vpop.f32.mrf.mxu0
        %v1910 = vadd.f32 %v1760, %v1909
        %v1911 = vpop.f32.mrf.mxu0
        %v1912 = vadd.f32 %v1764, %v1911
        %1913 = vmatprep.mubr.f32.mxu0 %v1484
        %1914 = vmatmul.mubr.f32.gmra.mxu0 %v1483
        %v1915 = vpop.f32.mrf.mxu0
        %v1916 = vadd.f32 %v1760, %v1915
        %v1917 = vpop.f32.mrf.mxu0
        %v1918 = vadd.f32 %v1764, %v1917
        %1919 = vmatprep.mubr.f32.mxu0 %v1488
        %1920 = vmatmul.mubr.f32.gmra.mxu0 %v1487
        %v1921 = vpop.f32.mrf.mxu0
        %v1922 = vadd.f32 %v1760, %v1921
        %v1923 = vpop.f32.mrf.mxu0
        %v1924 = vadd.f32 %v1764, %v1923
        %1925 = vmatprep.mubr.f32.mxu0 %v1492
        %1926 = vmatmul.mubr.f32.gmra.mxu0 %v1491
        %v1927 = vpop.f32.mrf.mxu0
        %v1928 = vadd.f32 %v1760, %v1927
        %v1929 = vpop.f32.mrf.mxu0
        %v1930 = vadd.f32 %v1764, %v1929
        %1931 = vmatprep.mubr.f32.mxu0 %v1496
        %1932 = vmatmul.mubr.f32.gmra.mxu0 %v1495
        %v1933 = vpop.f32.mrf.mxu0
        %v1934 = vadd.f32 %v1760, %v1933
        %v1935 = vpop.f32.mrf.mxu0
        %v1936 = vadd.f32 %v1764, %v1935
        %1937 = vdwg.mxu0
        %1938 = vmatprep.subr.mxu0 %v1688
        %1939 = vmatpush1.msra.mxu0 %v1687
        %1940 = vmatprep.subr.mxu0 %v1684
        %1941 = vmatpush1.msra.mxu0 %v1683
        %1942 = vmatprep.subr.mxu0 %v1680
        %1943 = vmatpush1.msra.mxu0 %v1679
        %1944 = vmatprep.subr.mxu0 %v1676
        %1945 = vmatpush1.msra.mxu0 %v1675
        %1946 = vmatprep.subr.mxu0 %v1672
        %1947 = vmatpush1.msra.mxu0 %v1671
        %1948 = vmatprep.subr.mxu0 %v1668
        %1949 = vmatpush1.msra.mxu0 %v1667
        %1950 = vmatprep.subr.mxu0 %v1664
        %1951 = vmatpush1.msra.mxu0 %v1663
        %1952 = vmatprep.subr.mxu0 %v1660
        %1953 = vmatpush1.msra.mxu0 %v1659
        %1954 = vmatprep.subr.mxu0 %v1656
        %1955 = vmatpush1.msra.mxu0 %v1655
        %1956 = vmatprep.subr.mxu0 %v1652
        %1957 = vmatpush1.msra.mxu0 %v1651
        %1958 = vmatprep.subr.mxu0 %v1648
        %1959 = vmatpush1.msra.mxu0 %v1647
        %1960 = vmatprep.subr.mxu0 %v1644
        %1961 = vmatpush1.msra.mxu0 %v1643
        %1962 = vmatprep.subr.mxu0 %v1640
        %1963 = vmatpush1.msra.mxu0 %v1639
        %1964 = vmatprep.subr.mxu0 %v1636
        %1965 = vmatpush1.msra.mxu0 %v1635
        %1966 = vmatprep.subr.mxu0 %v1632
        %1967 = vmatpush1.msra.mxu0 %v1631
        %1968 = vmatprep.subr.mxu0 %v1628
        %1969 = vmatpush1.msra.mxu0 %v1627
        %1970 = vmatprep.subr.mxu0 %v1752
        %1971 = vmatpush2.msra.mxu0 %v1751
        %1972 = vmatprep.subr.mxu0 %v1748
        %1973 = vmatpush2.msra.mxu0 %v1747
        %1974 = vmatprep.subr.mxu0 %v1744
        %1975 = vmatpush2.msra.mxu0 %v1743
        %1976 = vmatprep.subr.mxu0 %v1740
        %1977 = vmatpush2.msra.mxu0 %v1739
        %1978 = vmatprep.subr.mxu0 %v1736
        %1979 = vmatpush2.msra.mxu0 %v1735
        %1980 = vmatprep.subr.mxu0 %v1732
        %1981 = vmatpush2.msra.mxu0 %v1731
        %1982 = vmatprep.subr.mxu0 %v1728
        %1983 = vmatpush2.msra.mxu0 %v1727
        %1984 = vmatprep.subr.mxu0 %v1724
        %1985 = vmatpush2.msra.mxu0 %v1723
        %1986 = vmatprep.subr.mxu0 %v1720
        %1987 = vmatpush2.msra.mxu0 %v1719
        %1988 = vmatprep.subr.mxu0 %v1716
        %1989 = vmatpush2.msra.mxu0 %v1715
        %1990 = vmatprep.subr.mxu0 %v1712
        %1991 = vmatpush2.msra.mxu0 %v1711
        %1992 = vmatprep.subr.mxu0 %v1708
        %1993 = vmatpush2.msra.mxu0 %v1707
        %1994 = vmatprep.subr.mxu0 %v1704
        %1995 = vmatpush2.msra.mxu0 %v1703
        %1996 = vmatprep.subr.mxu0 %v1700
        %1997 = vmatpush2.msra.mxu0 %v1699
        %1998 = vmatprep.subr.mxu0 %v1696
        %1999 = vmatpush2.msra.mxu0 %v1695
        %2000 = vmatprep.subr.mxu0 %v1692
        %2001 = vmatpush2.msra.mxu0 %v1691
        %2002 = vmatprep.mubr.f32.mxu0 %v1438
        %2003 = vmatmul.mubr.f32.gmra.mxu0 %v1437
        %v2004 = vpop.f32.mrf.mxu0
        %v2005 = vadd.f32 %v1844, %v2004
        %v2006 = vpop.f32.mrf.mxu0
        %v2007 = vadd.f32 %v1846, %v2006
        %2008 = vmatprep.mubr.f32.mxu0 %v1442
        %2009 = vmatmul.mubr.f32.gmra.mxu0 %v1441
        %v2010 = vpop.f32.mrf.mxu0
        %v2011 = vadd.f32 %v1850, %v2010
        %v2012 = vpop.f32.mrf.mxu0
        %v2013 = vadd.f32 %v1852, %v2012
        %2014 = vmatprep.mubr.f32.mxu0 %v1446
        %2015 = vmatmul.mubr.f32.gmra.mxu0 %v1445
        %v2016 = vpop.f32.mrf.mxu0
        %v2017 = vadd.f32 %v1856, %v2016
        %v2018 = vpop.f32.mrf.mxu0
        %v2019 = vadd.f32 %v1858, %v2018
        %2020 = vmatprep.mubr.f32.mxu0 %v1450
        %2021 = vmatmul.mubr.f32.gmra.mxu0 %v1449
        %v2022 = vpop.f32.mrf.mxu0
        %v2023 = vadd.f32 %v1862, %v2022
        %v2024 = vpop.f32.mrf.mxu0
        %v2025 = vadd.f32 %v1864, %v2024
        %2026 = vmatprep.mubr.f32.mxu0 %v1454
        %2027 = vmatmul.mubr.f32.gmra.mxu0 %v1453
        %v2028 = vpop.f32.mrf.mxu0
        %v2029 = vadd.f32 %v1868, %v2028
        %v2030 = vpop.f32.mrf.mxu0
        %v2031 = vadd.f32 %v1870, %v2030
        %2032 = vmatprep.mubr.f32.mxu0 %v1458
        %2033 = vmatmul.mubr.f32.gmra.mxu0 %v1457
        %v2034 = vpop.f32.mrf.mxu0
        %v2035 = vadd.f32 %v1874, %v2034
        %v2036 = vpop.f32.mrf.mxu0
        %v2037 = vadd.f32 %v1876, %v2036
        %2038 = vmatprep.mubr.f32.mxu0 %v1462
        %2039 = vmatmul.mubr.f32.gmra.mxu0 %v1461
        %v2040 = vpop.f32.mrf.mxu0
        %v2041 = vadd.f32 %v1880, %v2040
        %v2042 = vpop.f32.mrf.mxu0
        %v2043 = vadd.f32 %v1882, %v2042
        %2044 = vmatprep.mubr.f32.mxu0 %v1466
        %2045 = vmatmul.mubr.f32.gmra.mxu0 %v1465
        %v2046 = vpop.f32.mrf.mxu0
        %v2047 = vadd.f32 %v1886, %v2046
        %v2048 = vpop.f32.mrf.mxu0
        %v2049 = vadd.f32 %v1888, %v2048
        %2050 = vmatprep.mubr.f32.mxu0 %v1470
        %2051 = vmatmul.mubr.f32.gmra.mxu0 %v1469
        %v2052 = vpop.f32.mrf.mxu0
        %v2053 = vadd.f32 %v1892, %v2052
        %v2054 = vpop.f32.mrf.mxu0
        %v2055 = vadd.f32 %v1894, %v2054
        %2056 = vmatprep.mubr.f32.mxu0 %v1474
        %2057 = vmatmul.mubr.f32.gmra.mxu0 %v1473
        %v2058 = vpop.f32.mrf.mxu0
        %v2059 = vadd.f32 %v1898, %v2058
        %v2060 = vpop.f32.mrf.mxu0
        %v2061 = vadd.f32 %v1900, %v2060
        %2062 = vmatprep.mubr.f32.mxu0 %v1478
        %2063 = vmatmul.mubr.f32.gmra.mxu0 %v1477
        %v2064 = vpop.f32.mrf.mxu0
        %v2065 = vadd.f32 %v1904, %v2064
        %v2066 = vpop.f32.mrf.mxu0
        %v2067 = vadd.f32 %v1906, %v2066
        %2068 = vmatprep.mubr.f32.mxu0 %v1482
        %2069 = vmatmul.mubr.f32.gmra.mxu0 %v1481
        %v2070 = vpop.f32.mrf.mxu0
        %v2071 = vadd.f32 %v1910, %v2070
        %v2072 = vpop.f32.mrf.mxu0
        %v2073 = vadd.f32 %v1912, %v2072
        %2074 = vmatprep.mubr.f32.mxu0 %v1486
        %2075 = vmatmul.mubr.f32.gmra.mxu0 %v1485
        %v2076 = vpop.f32.mrf.mxu0
        %v2077 = vadd.f32 %v1916, %v2076
        %v2078 = vpop.f32.mrf.mxu0
        %v2079 = vadd.f32 %v1918, %v2078
        %2080 = vmatprep.mubr.f32.mxu0 %v1490
        %2081 = vmatmul.mubr.f32.gmra.mxu0 %v1489
        %v2082 = vpop.f32.mrf.mxu0
        %v2083 = vadd.f32 %v1922, %v2082
        %v2084 = vpop.f32.mrf.mxu0
        %v2085 = vadd.f32 %v1924, %v2084
        %2086 = vmatprep.mubr.f32.mxu0 %v1494
        %2087 = vmatmul.mubr.f32.gmra.mxu0 %v1493
        %v2088 = vpop.f32.mrf.mxu0
        %v2089 = vadd.f32 %v1928, %v2088
        %v2090 = vpop.f32.mrf.mxu0
        %v2091 = vadd.f32 %v1930, %v2090
        %2092 = vmatprep.mubr.f32.mxu0 %v1498
        %2093 = vmatmul.mubr.f32.gmra.mxu0 %v1497
        %v2094 = vpop.f32.mrf.mxu0
        %v2095 = vadd.f32 %v1934, %v2094
        %v2096 = vpop.f32.mrf.mxu0
        %v2097 = vadd.f32 %v1936, %v2096
        %2098 = vdwg.mxu0
        %2099 = vmatprep.subr.mxu0 %v1562
        %2100 = vmatpush1.msra.mxu0 %v1561
        %2101 = vmatprep.subr.mxu0 %v1558
        %2102 = vmatpush1.msra.mxu0 %v1557
        %2103 = vmatprep.subr.mxu0 %v1554
        %2104 = vmatpush1.msra.mxu0 %v1553
        %2105 = vmatprep.subr.mxu0 %v1550
        %2106 = vmatpush1.msra.mxu0 %v1549
        %2107 = vmatprep.subr.mxu0 %v1546
        %2108 = vmatpush1.msra.mxu0 %v1545
        %2109 = vmatprep.subr.mxu0 %v1542
        %2110 = vmatpush1.msra.mxu0 %v1541
        %2111 = vmatprep.subr.mxu0 %v1538
        %2112 = vmatpush1.msra.mxu0 %v1537
        %2113 = vmatprep.subr.mxu0 %v1534
        %2114 = vmatpush1.msra.mxu0 %v1533
        %2115 = vmatprep.subr.mxu0 %v1530
        %2116 = vmatpush1.msra.mxu0 %v1529
        %2117 = vmatprep.subr.mxu0 %v1526
        %2118 = vmatpush1.msra.mxu0 %v1525
        %2119 = vmatprep.subr.mxu0 %v1522
        %2120 = vmatpush1.msra.mxu0 %v1521
        %2121 = vmatprep.subr.mxu0 %v1518
        %2122 = vmatpush1.msra.mxu0 %v1517
        %2123 = vmatprep.subr.mxu0 %v1514
        %2124 = vmatpush1.msra.mxu0 %v1513
        %2125 = vmatprep.subr.mxu0 %v1510
        %2126 = vmatpush1.msra.mxu0 %v1509
        %2127 = vmatprep.subr.mxu0 %v1506
        %2128 = vmatpush1.msra.mxu0 %v1505
        %2129 = vmatprep.subr.mxu0 %v1502
        %2130 = vmatpush1.msra.mxu0 %v1501
        %2131 = vmatprep.subr.mxu0 %v1626
        %2132 = vmatpush2.msra.mxu0 %v1625
        %2133 = vmatprep.subr.mxu0 %v1622
        %2134 = vmatpush2.msra.mxu0 %v1621
        %2135 = vmatprep.subr.mxu0 %v1618
        %2136 = vmatpush2.msra.mxu0 %v1617
        %2137 = vmatprep.subr.mxu0 %v1614
        %2138 = vmatpush2.msra.mxu0 %v1613
        %2139 = vmatprep.subr.mxu0 %v1610
        %2140 = vmatpush2.msra.mxu0 %v1609
        %2141 = vmatprep.subr.mxu0 %v1606
        %2142 = vmatpush2.msra.mxu0 %v1605
        %2143 = vmatprep.subr.mxu0 %v1602
        %2144 = vmatpush2.msra.mxu0 %v1601
        %2145 = vmatprep.subr.mxu0 %v1598
        %2146 = vmatpush2.msra.mxu0 %v1597
        %2147 = vmatprep.subr.mxu0 %v1594
        %2148 = vmatpush2.msra.mxu0 %v1593
        %2149 = vmatprep.subr.mxu0 %v1590
        %2150 = vmatpush2.msra.mxu0 %v1589
        %2151 = vmatprep.subr.mxu0 %v1586
        %2152 = vmatpush2.msra.mxu0 %v1585
        %2153 = vmatprep.subr.mxu0 %v1582
        %2154 = vmatpush2.msra.mxu0 %v1581
        %2155 = vmatprep.subr.mxu0 %v1578
        %2156 = vmatpush2.msra.mxu0 %v1577
        %2157 = vmatprep.subr.mxu0 %v1574
        %2158 = vmatpush2.msra.mxu0 %v1573
        %2159 = vmatprep.subr.mxu0 %v1570
        %2160 = vmatpush2.msra.mxu0 %v1569
        %2161 = vmatprep.subr.mxu0 %v1566
        %2162 = vmatpush2.msra.mxu0 %v1565
        %2163 = vmatprep.mubr.f32.mxu0 %v1436
        %2164 = vmatmul.mubr.f32.gmra.mxu0 %v1435
        %v2165 = vpop.f32.mrf.mxu0
        %v2166 = vadd.f32 %v1768, %v2165
        %v2167 = vpop.f32.mrf.mxu0
        %v2168 = vadd.f32 %v1772, %v2167
        %2169 = vmatprep.mubr.f32.mxu0 %v1440
        %2170 = vmatmul.mubr.f32.gmra.mxu0 %v1439
        %v2171 = vpop.f32.mrf.mxu0
        %v2172 = vadd.f32 %v1768, %v2171
        %v2173 = vpop.f32.mrf.mxu0
        %v2174 = vadd.f32 %v1772, %v2173
        %2175 = vmatprep.mubr.f32.mxu0 %v1444
        %2176 = vmatmul.mubr.f32.gmra.mxu0 %v1443
        %v2177 = vpop.f32.mrf.mxu0
        %v2178 = vadd.f32 %v1768, %v2177
        %v2179 = vpop.f32.mrf.mxu0
        %v2180 = vadd.f32 %v1772, %v2179
        %2181 = vmatprep.mubr.f32.mxu0 %v1448
        %2182 = vmatmul.mubr.f32.gmra.mxu0 %v1447
        %v2183 = vpop.f32.mrf.mxu0
        %v2184 = vadd.f32 %v1768, %v2183
        %v2185 = vpop.f32.mrf.mxu0
        %v2186 = vadd.f32 %v1772, %v2185
        %2187 = vmatprep.mubr.f32.mxu0 %v1452
        %2188 = vmatmul.mubr.f32.gmra.mxu0 %v1451
        %v2189 = vpop.f32.mrf.mxu0
        %v2190 = vadd.f32 %v1768, %v2189
        %v2191 = vpop.f32.mrf.mxu0
        %v2192 = vadd.f32 %v1772, %v2191
        %2193 = vmatprep.mubr.f32.mxu0 %v1456
        %2194 = vmatmul.mubr.f32.gmra.mxu0 %v1455
        %v2195 = vpop.f32.mrf.mxu0
        %v2196 = vadd.f32 %v1768, %v2195
        %v2197 = vpop.f32.mrf.mxu0
        %v2198 = vadd.f32 %v1772, %v2197
        %2199 = vmatprep.mubr.f32.mxu0 %v1460
        %2200 = vmatmul.mubr.f32.gmra.mxu0 %v1459
        %v2201 = vpop.f32.mrf.mxu0
        %v2202 = vadd.f32 %v1768, %v2201
        %v2203 = vpop.f32.mrf.mxu0
        %v2204 = vadd.f32 %v1772, %v2203
        %2205 = vmatprep.mubr.f32.mxu0 %v1464
        %2206 = vmatmul.mubr.f32.gmra.mxu0 %v1463
        %v2207 = vpop.f32.mrf.mxu0
        %v2208 = vadd.f32 %v1768, %v2207
        %v2209 = vpop.f32.mrf.mxu0
        %v2210 = vadd.f32 %v1772, %v2209
        %2211 = vmatprep.mubr.f32.mxu0 %v1468
        %2212 = vmatmul.mubr.f32.gmra.mxu0 %v1467
        %v2213 = vpop.f32.mrf.mxu0
        %v2214 = vadd.f32 %v1768, %v2213
        %v2215 = vpop.f32.mrf.mxu0
        %v2216 = vadd.f32 %v1772, %v2215
        %2217 = vmatprep.mubr.f32.mxu0 %v1472
        %2218 = vmatmul.mubr.f32.gmra.mxu0 %v1471
        %v2219 = vpop.f32.mrf.mxu0
        %v2220 = vadd.f32 %v1768, %v2219
        %v2221 = vpop.f32.mrf.mxu0
        %v2222 = vadd.f32 %v1772, %v2221
        %2223 = vmatprep.mubr.f32.mxu0 %v1476
        %2224 = vmatmul.mubr.f32.gmra.mxu0 %v1475
        %v2225 = vpop.f32.mrf.mxu0
        %v2226 = vadd.f32 %v1768, %v2225
        %v2227 = vpop.f32.mrf.mxu0
        %v2228 = vadd.f32 %v1772, %v2227
        %2229 = vmatprep.mubr.f32.mxu0 %v1480
        %2230 = vmatmul.mubr.f32.gmra.mxu0 %v1479
        %v2231 = vpop.f32.mrf.mxu0
        %v2232 = vadd.f32 %v1768, %v2231
        %v2233 = vpop.f32.mrf.mxu0
        %v2234 = vadd.f32 %v1772, %v2233
        %2235 = vmatprep.mubr.f32.mxu0 %v1484
        %2236 = vmatmul.mubr.f32.gmra.mxu0 %v1483
        %v2237 = vpop.f32.mrf.mxu0
        %v2238 = vadd.f32 %v1768, %v2237
        %v2239 = vpop.f32.mrf.mxu0
        %v2240 = vadd.f32 %v1772, %v2239
        %2241 = vmatprep.mubr.f32.mxu0 %v1488
        %2242 = vmatmul.mubr.f32.gmra.mxu0 %v1487
        %v2243 = vpop.f32.mrf.mxu0
        %v2244 = vadd.f32 %v1768, %v2243
        %v2245 = vpop.f32.mrf.mxu0
        %v2246 = vadd.f32 %v1772, %v2245
        %2247 = vmatprep.mubr.f32.mxu0 %v1492
        %2248 = vmatmul.mubr.f32.gmra.mxu0 %v1491
        %v2249 = vpop.f32.mrf.mxu0
        %v2250 = vadd.f32 %v1768, %v2249
        %v2251 = vpop.f32.mrf.mxu0
        %v2252 = vadd.f32 %v1772, %v2251
        %2253 = vmatprep.mubr.f32.mxu0 %v1496
        %2254 = vmatmul.mubr.f32.gmra.mxu0 %v1495
        %v2255 = vpop.f32.mrf.mxu0
        %v2256 = vadd.f32 %v1768, %v2255
        %v2257 = vpop.f32.mrf.mxu0
        %v2258 = vadd.f32 %v1772, %v2257
        %2259 = vdwg.mxu0
        %2260 = vmatprep.subr.mxu0 %v1690
        %2261 = vmatpush1.msra.mxu0 %v1689
        %2262 = vmatprep.subr.mxu0 %v1686
        %2263 = vmatpush1.msra.mxu0 %v1685
        %2264 = vmatprep.subr.mxu0 %v1682
        %2265 = vmatpush1.msra.mxu0 %v1681
        %2266 = vmatprep.subr.mxu0 %v1678
        %2267 = vmatpush1.msra.mxu0 %v1677
        %2268 = vmatprep.subr.mxu0 %v1674
        %2269 = vmatpush1.msra.mxu0 %v1673
        %2270 = vmatprep.subr.mxu0 %v1670
        %2271 = vmatpush1.msra.mxu0 %v1669
        %2272 = vmatprep.subr.mxu0 %v1666
        %2273 = vmatpush1.msra.mxu0 %v1665
        %2274 = vmatprep.subr.mxu0 %v1662
        %2275 = vmatpush1.msra.mxu0 %v1661
        %2276 = vmatprep.subr.mxu0 %v1658
        %2277 = vmatpush1.msra.mxu0 %v1657
        %2278 = vmatprep.subr.mxu0 %v1654
        %2279 = vmatpush1.msra.mxu0 %v1653
        %2280 = vmatprep.subr.mxu0 %v1650
        %2281 = vmatpush1.msra.mxu0 %v1649
        %2282 = vmatprep.subr.mxu0 %v1646
        %2283 = vmatpush1.msra.mxu0 %v1645
        %2284 = vmatprep.subr.mxu0 %v1642
        %2285 = vmatpush1.msra.mxu0 %v1641
        %2286 = vmatprep.subr.mxu0 %v1638
        %2287 = vmatpush1.msra.mxu0 %v1637
        %2288 = vmatprep.subr.mxu0 %v1634
        %2289 = vmatpush1.msra.mxu0 %v1633
        %2290 = vmatprep.subr.mxu0 %v1630
        %2291 = vmatpush1.msra.mxu0 %v1629
        %2292 = vmatprep.subr.mxu0 %v1754
        %2293 = vmatpush2.msra.mxu0 %v1753
        %2294 = vmatprep.subr.mxu0 %v1750
        %2295 = vmatpush2.msra.mxu0 %v1749
        %2296 = vmatprep.subr.mxu0 %v1746
        %2297 = vmatpush2.msra.mxu0 %v1745
        %2298 = vmatprep.subr.mxu0 %v1742
        %2299 = vmatpush2.msra.mxu0 %v1741
        %2300 = vmatprep.subr.mxu0 %v1738
        %2301 = vmatpush2.msra.mxu0 %v1737
        %2302 = vmatprep.subr.mxu0 %v1734
        %2303 = vmatpush2.msra.mxu0 %v1733
        %2304 = vmatprep.subr.mxu0 %v1730
        %2305 = vmatpush2.msra.mxu0 %v1729
        %2306 = vmatprep.subr.mxu0 %v1726
        %2307 = vmatpush2.msra.mxu0 %v1725
        %2308 = vmatprep.subr.mxu0 %v1722
        %2309 = vmatpush2.msra.mxu0 %v1721
        %2310 = vmatprep.subr.mxu0 %v1718
        %2311 = vmatpush2.msra.mxu0 %v1717
        %2312 = vmatprep.subr.mxu0 %v1714
        %2313 = vmatpush2.msra.mxu0 %v1713
        %2314 = vmatprep.subr.mxu0 %v1710
        %2315 = vmatpush2.msra.mxu0 %v1709
        %2316 = vmatprep.subr.mxu0 %v1706
        %2317 = vmatpush2.msra.mxu0 %v1705
        %2318 = vmatprep.subr.mxu0 %v1702
        %2319 = vmatpush2.msra.mxu0 %v1701
        %2320 = vmatprep.subr.mxu0 %v1698
        %2321 = vmatpush2.msra.mxu0 %v1697
        %2322 = vmatprep.subr.mxu0 %v1694
        %2323 = vmatpush2.msra.mxu0 %v1693
        %2324 = vmatprep.mubr.f32.mxu0 %v1438
        %2325 = vmatmul.mubr.f32.gmra.mxu0 %v1437
        %v2326 = vpop.f32.mrf.mxu0
        %v2327 = vadd.f32 %v2166, %v2326
        %v2328 = vpop.f32.mrf.mxu0
        %v2329 = vadd.f32 %v2168, %v2328
        %2330 = vmatprep.mubr.f32.mxu0 %v1442
        %2331 = vmatmul.mubr.f32.gmra.mxu0 %v1441
        %v2332 = vpop.f32.mrf.mxu0
        %v2333 = vadd.f32 %v2172, %v2332
        %v2334 = vpop.f32.mrf.mxu0
        %v2335 = vadd.f32 %v2174, %v2334
        %2336 = vmatprep.mubr.f32.mxu0 %v1446
        %2337 = vmatmul.mubr.f32.gmra.mxu0 %v1445
        %v2338 = vpop.f32.mrf.mxu0
        %v2339 = vadd.f32 %v2178, %v2338
        %v2340 = vpop.f32.mrf.mxu0
        %v2341 = vadd.f32 %v2180, %v2340
        %2342 = vmatprep.mubr.f32.mxu0 %v1450
        %2343 = vmatmul.mubr.f32.gmra.mxu0 %v1449
        %v2344 = vpop.f32.mrf.mxu0
        %v2345 = vadd.f32 %v2184, %v2344
        %v2346 = vpop.f32.mrf.mxu0
        %v2347 = vadd.f32 %v2186, %v2346
        %2348 = vmatprep.mubr.f32.mxu0 %v1454
        %2349 = vmatmul.mubr.f32.gmra.mxu0 %v1453
        %v2350 = vpop.f32.mrf.mxu0
        %v2351 = vadd.f32 %v2190, %v2350
        %v2352 = vpop.f32.mrf.mxu0
        %v2353 = vadd.f32 %v2192, %v2352
        %2354 = vmatprep.mubr.f32.mxu0 %v1458
        %2355 = vmatmul.mubr.f32.gmra.mxu0 %v1457
        %v2356 = vpop.f32.mrf.mxu0
        %v2357 = vadd.f32 %v2196, %v2356
        %v2358 = vpop.f32.mrf.mxu0
        %v2359 = vadd.f32 %v2198, %v2358
        %2360 = vmatprep.mubr.f32.mxu0 %v1462
        %2361 = vmatmul.mubr.f32.gmra.mxu0 %v1461
        %v2362 = vpop.f32.mrf.mxu0
        %v2363 = vadd.f32 %v2202, %v2362
        %v2364 = vpop.f32.mrf.mxu0
        %v2365 = vadd.f32 %v2204, %v2364
        %2366 = vmatprep.mubr.f32.mxu0 %v1466
        %2367 = vmatmul.mubr.f32.gmra.mxu0 %v1465
        %v2368 = vpop.f32.mrf.mxu0
        %v2369 = vadd.f32 %v2208, %v2368
        %v2370 = vpop.f32.mrf.mxu0
        %v2371 = vadd.f32 %v2210, %v2370
        %2372 = vmatprep.mubr.f32.mxu0 %v1470
        %2373 = vmatmul.mubr.f32.gmra.mxu0 %v1469
        %v2374 = vpop.f32.mrf.mxu0
        %v2375 = vadd.f32 %v2214, %v2374
        %v2376 = vpop.f32.mrf.mxu0
        %v2377 = vadd.f32 %v2216, %v2376
        %2378 = vmatprep.mubr.f32.mxu0 %v1474
        %2379 = vmatmul.mubr.f32.gmra.mxu0 %v1473
        %v2380 = vpop.f32.mrf.mxu0
        %v2381 = vadd.f32 %v2220, %v2380
        %v2382 = vpop.f32.mrf.mxu0
        %v2383 = vadd.f32 %v2222, %v2382
        %2384 = vmatprep.mubr.f32.mxu0 %v1478
        %2385 = vmatmul.mubr.f32.gmra.mxu0 %v1477
        %v2386 = vpop.f32.mrf.mxu0
        %v2387 = vadd.f32 %v2226, %v2386
        %v2388 = vpop.f32.mrf.mxu0
        %v2389 = vadd.f32 %v2228, %v2388
        %2390 = vmatprep.mubr.f32.mxu0 %v1482
        %2391 = vmatmul.mubr.f32.gmra.mxu0 %v1481
        %v2392 = vpop.f32.mrf.mxu0
        %v2393 = vadd.f32 %v2232, %v2392
        %v2394 = vpop.f32.mrf.mxu0
        %v2395 = vadd.f32 %v2234, %v2394
        %2396 = vmatprep.mubr.f32.mxu0 %v1486
        %2397 = vmatmul.mubr.f32.gmra.mxu0 %v1485
        %v2398 = vpop.f32.mrf.mxu0
        %v2399 = vadd.f32 %v2238, %v2398
        %v2400 = vpop.f32.mrf.mxu0
        %v2401 = vadd.f32 %v2240, %v2400
        %2402 = vmatprep.mubr.f32.mxu0 %v1490
        %2403 = vmatmul.mubr.f32.gmra.mxu0 %v1489
        %v2404 = vpop.f32.mrf.mxu0
        %v2405 = vadd.f32 %v2244, %v2404
        %v2406 = vpop.f32.mrf.mxu0
        %v2407 = vadd.f32 %v2246, %v2406
        %2408 = vmatprep.mubr.f32.mxu0 %v1494
        %2409 = vmatmul.mubr.f32.gmra.mxu0 %v1493
        %v2410 = vpop.f32.mrf.mxu0
        %v2411 = vadd.f32 %v2250, %v2410
        %v2412 = vpop.f32.mrf.mxu0
        %v2413 = vadd.f32 %v2252, %v2412
        %2414 = vmatprep.mubr.f32.mxu0 %v1498
        %2415 = vmatmul.mubr.f32.gmra.mxu0 %v1497
        %v2416 = vpop.f32.mrf.mxu0
        %v2417 = vadd.f32 %v2256, %v2416
        %v2418 = vpop.f32.mrf.mxu0
        %v2419 = vadd.f32 %v2258, %v2418
        %2420 = vdwg.mxu0
        %2421 = vst [vmem:[#allocation3] sm:$0xff] %v2005
        %2422 = vst [vmem:[#allocation3 + $0x8] sm:$0xff] %v2007
        %2423 = vst [vmem:[#allocation3 + $0x10] sm:$0xff] %v2327
        %2424 = vst [vmem:[#allocation3 + $0x18] sm:$0xff] %v2329
        %2425 = vst [vmem:[#allocation3 + $0x20] sm:$0xff] %v2011
        %2426 = vst [vmem:[#allocation3 + $0x28] sm:$0xff] %v2013
        %2427 = vst [vmem:[#allocation3 + $0x30] sm:$0xff] %v2333
        %2428 = vst [vmem:[#allocation3 + $0x38] sm:$0xff] %v2335
        %2429 = vst [vmem:[#allocation3 + $0x40] sm:$0xff] %v2017
        %2430 = vst [vmem:[#allocation3 + $0x48] sm:$0xff] %v2019
        %2431 = vst [vmem:[#allocation3 + $0x50] sm:$0xff] %v2339
        %2432 = vst [vmem:[#allocation3 + $0x58] sm:$0xff] %v2341
        %2433 = vst [vmem:[#allocation3 + $0x60] sm:$0xff] %v2023
        %2434 = vst [vmem:[#allocation3 + $0x68] sm:$0xff] %v2025
        %2435 = vst [vmem:[#allocation3 + $0x70] sm:$0xff] %v2345
        %2436 = vst [vmem:[#allocation3 + $0x78] sm:$0xff] %v2347
        %2437 = vst [vmem:[#allocation3 + $0x80] sm:$0xff] %v2029
        %2438 = vst [vmem:[#allocation3 + $0x88] sm:$0xff] %v2031
        %2439 = vst [vmem:[#allocation3 + $0x90] sm:$0xff] %v2351
        %2440 = vst [vmem:[#allocation3 + $0x98] sm:$0xff] %v2353
        %2441 = vst [vmem:[#allocation3 + $0xa0] sm:$0xff] %v2035
        %2442 = vst [vmem:[#allocation3 + $0xa8] sm:$0xff] %v2037
        %2443 = vst [vmem:[#allocation3 + $0xb0] sm:$0xff] %v2357
        %2444 = vst [vmem:[#allocation3 + $0xb8] sm:$0xff] %v2359
        %2445 = vst [vmem:[#allocation3 + $0xc0] sm:$0xff] %v2041
        %2446 = vst [vmem:[#allocation3 + $0xc8] sm:$0xff] %v2043
        %2447 = vst [vmem:[#allocation3 + $0xd0] sm:$0xff] %v2363
        %2448 = vst [vmem:[#allocation3 + $0xd8] sm:$0xff] %v2365
        %2449 = vst [vmem:[#allocation3 + $0xe0] sm:$0xff] %v2047
        %2450 = vst [vmem:[#allocation3 + $0xe8] sm:$0xff] %v2049
        %2451 = vst [vmem:[#allocation3 + $0xf0] sm:$0xff] %v2369
        %2452 = vst [vmem:[#allocation3 + $0xf8] sm:$0xff] %v2371
        %2453 = vst [vmem:[#allocation3 + $0x100] sm:$0xff] %v2053
        %2454 = vst [vmem:[#allocation3 + $0x108] sm:$0xff] %v2055
        %2455 = vst [vmem:[#allocation3 + $0x110] sm:$0xff] %v2375
        %2456 = vst [vmem:[#allocation3 + $0x118] sm:$0xff] %v2377
        %2457 = vst [vmem:[#allocation3 + $0x120] sm:$0xff] %v2059
        %2458 = vst [vmem:[#allocation3 + $0x128] sm:$0xff] %v2061
        %2459 = vst [vmem:[#allocation3 + $0x130] sm:$0xff] %v2381
        %2460 = vst [vmem:[#allocation3 + $0x138] sm:$0xff] %v2383
        %2461 = vst [vmem:[#allocation3 + $0x140] sm:$0xff] %v2065
        %2462 = vst [vmem:[#allocation3 + $0x148] sm:$0xff] %v2067
        %2463 = vst [vmem:[#allocation3 + $0x150] sm:$0xff] %v2387
        %2464 = vst [vmem:[#allocation3 + $0x158] sm:$0xff] %v2389
        %2465 = vst [vmem:[#allocation3 + $0x160] sm:$0xff] %v2071
        %2466 = vst [vmem:[#allocation3 + $0x168] sm:$0xff] %v2073
        %2467 = vst [vmem:[#allocation3 + $0x170] sm:$0xff] %v2393
        %2468 = vst [vmem:[#allocation3 + $0x178] sm:$0xff] %v2395
        %2469 = vst [vmem:[#allocation3 + $0x180] sm:$0xff] %v2077
        %2470 = vst [vmem:[#allocation3 + $0x188] sm:$0xff] %v2079
        %2471 = vst [vmem:[#allocation3 + $0x190] sm:$0xff] %v2399
        %2472 = vst [vmem:[#allocation3 + $0x198] sm:$0xff] %v2401
        %2473 = vst [vmem:[#allocation3 + $0x1a0] sm:$0xff] %v2083
        %2474 = vst [vmem:[#allocation3 + $0x1a8] sm:$0xff] %v2085
        %2475 = vst [vmem:[#allocation3 + $0x1b0] sm:$0xff] %v2405
        %2476 = vst [vmem:[#allocation3 + $0x1b8] sm:$0xff] %v2407
        %2477 = vst [vmem:[#allocation3 + $0x1c0] sm:$0xff] %v2089
        %2478 = vst [vmem:[#allocation3 + $0x1c8] sm:$0xff] %v2091
        %2479 = vst [vmem:[#allocation3 + $0x1d0] sm:$0xff] %v2411
        %2480 = vst [vmem:[#allocation3 + $0x1d8] sm:$0xff] %v2413
        %2481 = vst [vmem:[#allocation3 + $0x1e0] sm:$0xff] %v2095
        %2482 = vst [vmem:[#allocation3 + $0x1e8] sm:$0xff] %v2097
        %2483 = vst [vmem:[#allocation3 + $0x1f0] sm:$0xff] %v2417
        %2484 = vst [vmem:[#allocation3 + $0x1f8] sm:$0xff] %v2419
        %v2485 = vld [vmem:[%s333] sm:$0xff]
        %v2486 = vld [vmem:[%s333 + $0x8] sm:$0xff]
        %v2487 = vld [vmem:[%s333 + $0x10] sm:$0xff]
        %v2488 = vld [vmem:[%s333 + $0x18] sm:$0xff]
        %v2489 = vld [vmem:[%s333 + $0x20] sm:$0xff]
        %v2490 = vld [vmem:[%s333 + $0x28] sm:$0xff]
        %v2491 = vld [vmem:[%s333 + $0x30] sm:$0xff]
        %v2492 = vld [vmem:[%s333 + $0x38] sm:$0xff]
        %v2493 = vld [vmem:[%s333 + $0x40] sm:$0xff]
        %v2494 = vld [vmem:[%s333 + $0x48] sm:$0xff]
        %v2495 = vld [vmem:[%s333 + $0x50] sm:$0xff]
        %v2496 = vld [vmem:[%s333 + $0x58] sm:$0xff]
        %v2497 = vld [vmem:[%s333 + $0x60] sm:$0xff]
        %v2498 = vld [vmem:[%s333 + $0x68] sm:$0xff]
        %v2499 = vld [vmem:[%s333 + $0x70] sm:$0xff]
        %v2500 = vld [vmem:[%s333 + $0x78] sm:$0xff]
        %v2501 = vld [vmem:[%s333 + $0x80] sm:$0xff]
        %v2502 = vld [vmem:[%s333 + $0x88] sm:$0xff]
        %v2503 = vld [vmem:[%s333 + $0x90] sm:$0xff]
        %v2504 = vld [vmem:[%s333 + $0x98] sm:$0xff]
        %v2505 = vld [vmem:[%s333 + $0xa0] sm:$0xff]
        %v2506 = vld [vmem:[%s333 + $0xa8] sm:$0xff]
        %v2507 = vld [vmem:[%s333 + $0xb0] sm:$0xff]
        %v2508 = vld [vmem:[%s333 + $0xb8] sm:$0xff]
        %v2509 = vld [vmem:[%s333 + $0xc0] sm:$0xff]
        %v2510 = vld [vmem:[%s333 + $0xc8] sm:$0xff]
        %v2511 = vld [vmem:[%s333 + $0xd0] sm:$0xff]
        %v2512 = vld [vmem:[%s333 + $0xd8] sm:$0xff]
        %v2513 = vld [vmem:[%s333 + $0xe0] sm:$0xff]
        %v2514 = vld [vmem:[%s333 + $0xe8] sm:$0xff]
        %v2515 = vld [vmem:[%s333 + $0xf0] sm:$0xff]
        %v2516 = vld [vmem:[%s333 + $0xf8] sm:$0xff]
        %v2517 = vld [vmem:[%s333 + $0x100] sm:$0xff]
        %v2518 = vld [vmem:[%s333 + $0x108] sm:$0xff]
        %v2519 = vld [vmem:[%s333 + $0x110] sm:$0xff]
        %v2520 = vld [vmem:[%s333 + $0x118] sm:$0xff]
        %v2521 = vld [vmem:[%s333 + $0x120] sm:$0xff]
        %v2522 = vld [vmem:[%s333 + $0x128] sm:$0xff]
        %v2523 = vld [vmem:[%s333 + $0x130] sm:$0xff]
        %v2524 = vld [vmem:[%s333 + $0x138] sm:$0xff]
        %v2525 = vld [vmem:[%s333 + $0x140] sm:$0xff]
        %v2526 = vld [vmem:[%s333 + $0x148] sm:$0xff]
        %v2527 = vld [vmem:[%s333 + $0x150] sm:$0xff]
        %v2528 = vld [vmem:[%s333 + $0x158] sm:$0xff]
        %v2529 = vld [vmem:[%s333 + $0x160] sm:$0xff]
        %v2530 = vld [vmem:[%s333 + $0x168] sm:$0xff]
        %v2531 = vld [vmem:[%s333 + $0x170] sm:$0xff]
        %v2532 = vld [vmem:[%s333 + $0x178] sm:$0xff]
        %v2533 = vld [vmem:[%s333 + $0x180] sm:$0xff]
        %v2534 = vld [vmem:[%s333 + $0x188] sm:$0xff]
        %v2535 = vld [vmem:[%s333 + $0x190] sm:$0xff]
        %v2536 = vld [vmem:[%s333 + $0x198] sm:$0xff]
        %v2537 = vld [vmem:[%s333 + $0x1a0] sm:$0xff]
        %v2538 = vld [vmem:[%s333 + $0x1a8] sm:$0xff]
        %v2539 = vld [vmem:[%s333 + $0x1b0] sm:$0xff]
        %v2540 = vld [vmem:[%s333 + $0x1b8] sm:$0xff]
        %v2541 = vld [vmem:[%s333 + $0x1c0] sm:$0xff]
        %v2542 = vld [vmem:[%s333 + $0x1c8] sm:$0xff]
        %v2543 = vld [vmem:[%s333 + $0x1d0] sm:$0xff]
        %v2544 = vld [vmem:[%s333 + $0x1d8] sm:$0xff]
        %v2545 = vld [vmem:[%s333 + $0x1e0] sm:$0xff]
        %v2546 = vld [vmem:[%s333 + $0x1e8] sm:$0xff]
        %v2547 = vld [vmem:[%s333 + $0x1f0] sm:$0xff]
        %v2548 = vld [vmem:[%s333 + $0x1f8] sm:$0xff]
        %v2549 = vld [vmem:[#allocation11 + $0x40] sm:$0xff]
        %v2550 = vld [vmem:[#allocation11 + $0x48] sm:$0xff]
        %v2551 = vld [vmem:[#allocation11 + $0x50] sm:$0xff]
        %v2552 = vld [vmem:[#allocation11 + $0x58] sm:$0xff]
        %v2553 = vld [vmem:[#allocation11 + $0xa0] sm:$0xff]
        %v2554 = vld [vmem:[#allocation11 + $0xa8] sm:$0xff]
        %v2555 = vld [vmem:[#allocation11 + $0xb0] sm:$0xff]
        %v2556 = vld [vmem:[#allocation11 + $0xb8] sm:$0xff]
        %v2557 = vld [vmem:[#allocation11 + $0x100] sm:$0xff]
        %v2558 = vld [vmem:[#allocation11 + $0x108] sm:$0xff]
        %v2559 = vld [vmem:[#allocation11 + $0x110] sm:$0xff]
        %v2560 = vld [vmem:[#allocation11 + $0x118] sm:$0xff]
        %v2561 = vld [vmem:[#allocation11 + $0x160] sm:$0xff]
        %v2562 = vld [vmem:[#allocation11 + $0x168] sm:$0xff]
        %v2563 = vld [vmem:[#allocation11 + $0x170] sm:$0xff]
        %v2564 = vld [vmem:[#allocation11 + $0x178] sm:$0xff]
        %v2565 = vld [vmem:[#allocation11 + $0x1c0] sm:$0xff]
        %v2566 = vld [vmem:[#allocation11 + $0x1c8] sm:$0xff]
        %v2567 = vld [vmem:[#allocation11 + $0x1d0] sm:$0xff]
        %v2568 = vld [vmem:[#allocation11 + $0x1d8] sm:$0xff]
        %v2569 = vld [vmem:[#allocation11 + $0x220] sm:$0xff]
        %v2570 = vld [vmem:[#allocation11 + $0x228] sm:$0xff]
        %v2571 = vld [vmem:[#allocation11 + $0x230] sm:$0xff]
        %v2572 = vld [vmem:[#allocation11 + $0x238] sm:$0xff]
        %v2573 = vld [vmem:[#allocation11 + $0x280] sm:$0xff]
        %v2574 = vld [vmem:[#allocation11 + $0x288] sm:$0xff]
        %v2575 = vld [vmem:[#allocation11 + $0x290] sm:$0xff]
        %v2576 = vld [vmem:[#allocation11 + $0x298] sm:$0xff]
        %v2577 = vld [vmem:[#allocation11 + $0x2e0] sm:$0xff]
        %v2578 = vld [vmem:[#allocation11 + $0x2e8] sm:$0xff]
        %v2579 = vld [vmem:[#allocation11 + $0x2f0] sm:$0xff]
        %v2580 = vld [vmem:[#allocation11 + $0x2f8] sm:$0xff]
        %v2581 = vld [vmem:[#allocation11 + $0x340] sm:$0xff]
        %v2582 = vld [vmem:[#allocation11 + $0x348] sm:$0xff]
        %v2583 = vld [vmem:[#allocation11 + $0x350] sm:$0xff]
        %v2584 = vld [vmem:[#allocation11 + $0x358] sm:$0xff]
        %v2585 = vld [vmem:[#allocation11 + $0x3a0] sm:$0xff]
        %v2586 = vld [vmem:[#allocation11 + $0x3a8] sm:$0xff]
        %v2587 = vld [vmem:[#allocation11 + $0x3b0] sm:$0xff]
        %v2588 = vld [vmem:[#allocation11 + $0x3b8] sm:$0xff]
        %v2589 = vld [vmem:[#allocation11 + $0x400] sm:$0xff]
        %v2590 = vld [vmem:[#allocation11 + $0x408] sm:$0xff]
        %v2591 = vld [vmem:[#allocation11 + $0x410] sm:$0xff]
        %v2592 = vld [vmem:[#allocation11 + $0x418] sm:$0xff]
        %v2593 = vld [vmem:[#allocation11 + $0x460] sm:$0xff]
        %v2594 = vld [vmem:[#allocation11 + $0x468] sm:$0xff]
        %v2595 = vld [vmem:[#allocation11 + $0x470] sm:$0xff]
        %v2596 = vld [vmem:[#allocation11 + $0x478] sm:$0xff]
        %v2597 = vld [vmem:[#allocation11 + $0x4c0] sm:$0xff]
        %v2598 = vld [vmem:[#allocation11 + $0x4c8] sm:$0xff]
        %v2599 = vld [vmem:[#allocation11 + $0x4d0] sm:$0xff]
        %v2600 = vld [vmem:[#allocation11 + $0x4d8] sm:$0xff]
        %v2601 = vld [vmem:[#allocation11 + $0x520] sm:$0xff]
        %v2602 = vld [vmem:[#allocation11 + $0x528] sm:$0xff]
        %v2603 = vld [vmem:[#allocation11 + $0x530] sm:$0xff]
        %v2604 = vld [vmem:[#allocation11 + $0x538] sm:$0xff]
        %v2605 = vld [vmem:[#allocation11 + $0x580] sm:$0xff]
        %v2606 = vld [vmem:[#allocation11 + $0x588] sm:$0xff]
        %v2607 = vld [vmem:[#allocation11 + $0x590] sm:$0xff]
        %v2608 = vld [vmem:[#allocation11 + $0x598] sm:$0xff]
        %v2609 = vld [vmem:[#allocation11 + $0x5e0] sm:$0xff]
        %v2610 = vld [vmem:[#allocation11 + $0x5e8] sm:$0xff]
        %v2611 = vld [vmem:[#allocation11 + $0x5f0] sm:$0xff]
        %v2612 = vld [vmem:[#allocation11 + $0x5f8] sm:$0xff]
        %v2613 = vld [vmem:[#allocation11 + $0x640] sm:$0xff]
        %v2614 = vld [vmem:[#allocation11 + $0x648] sm:$0xff]
        %v2615 = vld [vmem:[#allocation11 + $0x650] sm:$0xff]
        %v2616 = vld [vmem:[#allocation11 + $0x658] sm:$0xff]
        %v2617 = vld [vmem:[#allocation11 + $0x6a0] sm:$0xff]
        %v2618 = vld [vmem:[#allocation11 + $0x6a8] sm:$0xff]
        %v2619 = vld [vmem:[#allocation11 + $0x6b0] sm:$0xff]
        %v2620 = vld [vmem:[#allocation11 + $0x6b8] sm:$0xff]
        %v2621 = vld [vmem:[#allocation11 + $0x700] sm:$0xff]
        %v2622 = vld [vmem:[#allocation11 + $0x708] sm:$0xff]
        %v2623 = vld [vmem:[#allocation11 + $0x710] sm:$0xff]
        %v2624 = vld [vmem:[#allocation11 + $0x718] sm:$0xff]
        %v2625 = vld [vmem:[#allocation11 + $0x760] sm:$0xff]
        %v2626 = vld [vmem:[#allocation11 + $0x768] sm:$0xff]
        %v2627 = vld [vmem:[#allocation11 + $0x770] sm:$0xff]
        %v2628 = vld [vmem:[#allocation11 + $0x778] sm:$0xff]
        %v2629 = vld [vmem:[#allocation11 + $0x7c0] sm:$0xff]
        %v2630 = vld [vmem:[#allocation11 + $0x7c8] sm:$0xff]
        %v2631 = vld [vmem:[#allocation11 + $0x7d0] sm:$0xff]
        %v2632 = vld [vmem:[#allocation11 + $0x7d8] sm:$0xff]
        %v2633 = vld [vmem:[#allocation11 + $0x820] sm:$0xff]
        %v2634 = vld [vmem:[#allocation11 + $0x828] sm:$0xff]
        %v2635 = vld [vmem:[#allocation11 + $0x830] sm:$0xff]
        %v2636 = vld [vmem:[#allocation11 + $0x838] sm:$0xff]
        %v2637 = vld [vmem:[#allocation11 + $0x880] sm:$0xff]
        %v2638 = vld [vmem:[#allocation11 + $0x888] sm:$0xff]
        %v2639 = vld [vmem:[#allocation11 + $0x890] sm:$0xff]
        %v2640 = vld [vmem:[#allocation11 + $0x898] sm:$0xff]
        %v2641 = vld [vmem:[#allocation11 + $0x8e0] sm:$0xff]
        %v2642 = vld [vmem:[#allocation11 + $0x8e8] sm:$0xff]
        %v2643 = vld [vmem:[#allocation11 + $0x8f0] sm:$0xff]
        %v2644 = vld [vmem:[#allocation11 + $0x8f8] sm:$0xff]
        %v2645 = vld [vmem:[#allocation11 + $0x940] sm:$0xff]
        %v2646 = vld [vmem:[#allocation11 + $0x948] sm:$0xff]
        %v2647 = vld [vmem:[#allocation11 + $0x950] sm:$0xff]
        %v2648 = vld [vmem:[#allocation11 + $0x958] sm:$0xff]
        %v2649 = vld [vmem:[#allocation11 + $0x9a0] sm:$0xff]
        %v2650 = vld [vmem:[#allocation11 + $0x9a8] sm:$0xff]
        %v2651 = vld [vmem:[#allocation11 + $0x9b0] sm:$0xff]
        %v2652 = vld [vmem:[#allocation11 + $0x9b8] sm:$0xff]
        %v2653 = vld [vmem:[#allocation11 + $0xa00] sm:$0xff]
        %v2654 = vld [vmem:[#allocation11 + $0xa08] sm:$0xff]
        %v2655 = vld [vmem:[#allocation11 + $0xa10] sm:$0xff]
        %v2656 = vld [vmem:[#allocation11 + $0xa18] sm:$0xff]
        %v2657 = vld [vmem:[#allocation11 + $0xa60] sm:$0xff]
        %v2658 = vld [vmem:[#allocation11 + $0xa68] sm:$0xff]
        %v2659 = vld [vmem:[#allocation11 + $0xa70] sm:$0xff]
        %v2660 = vld [vmem:[#allocation11 + $0xa78] sm:$0xff]
        %v2661 = vld [vmem:[#allocation11 + $0xac0] sm:$0xff]
        %v2662 = vld [vmem:[#allocation11 + $0xac8] sm:$0xff]
        %v2663 = vld [vmem:[#allocation11 + $0xad0] sm:$0xff]
        %v2664 = vld [vmem:[#allocation11 + $0xad8] sm:$0xff]
        %v2665 = vld [vmem:[#allocation11 + $0xb20] sm:$0xff]
        %v2666 = vld [vmem:[#allocation11 + $0xb28] sm:$0xff]
        %v2667 = vld [vmem:[#allocation11 + $0xb30] sm:$0xff]
        %v2668 = vld [vmem:[#allocation11 + $0xb38] sm:$0xff]
        %v2669 = vld [vmem:[#allocation11 + $0xb80] sm:$0xff]
        %v2670 = vld [vmem:[#allocation11 + $0xb88] sm:$0xff]
        %v2671 = vld [vmem:[#allocation11 + $0xb90] sm:$0xff]
        %v2672 = vld [vmem:[#allocation11 + $0xb98] sm:$0xff]
        %v2673 = vld [vmem:[#allocation11 + $0xbe0] sm:$0xff]
        %v2674 = vld [vmem:[#allocation11 + $0xbe8] sm:$0xff]
        %v2675 = vld [vmem:[#allocation11 + $0xbf0] sm:$0xff]
        %v2676 = vld [vmem:[#allocation11 + $0xbf8] sm:$0xff]
        %v2677 = vld [vmem:[#allocation11 + $0xc40] sm:$0xff]
        %v2678 = vld [vmem:[#allocation11 + $0xc48] sm:$0xff]
        %v2679 = vld [vmem:[#allocation11 + $0xc50] sm:$0xff]
        %v2680 = vld [vmem:[#allocation11 + $0xc58] sm:$0xff]
        %v2681 = vld [vmem:[#allocation11 + $0xca0] sm:$0xff]
        %v2682 = vld [vmem:[#allocation11 + $0xca8] sm:$0xff]
        %v2683 = vld [vmem:[#allocation11 + $0xcb0] sm:$0xff]
        %v2684 = vld [vmem:[#allocation11 + $0xcb8] sm:$0xff]
        %v2685 = vld [vmem:[#allocation11 + $0xd00] sm:$0xff]
        %v2686 = vld [vmem:[#allocation11 + $0xd08] sm:$0xff]
        %v2687 = vld [vmem:[#allocation11 + $0xd10] sm:$0xff]
        %v2688 = vld [vmem:[#allocation11 + $0xd18] sm:$0xff]
        %v2689 = vld [vmem:[#allocation11 + $0xd60] sm:$0xff]
        %v2690 = vld [vmem:[#allocation11 + $0xd68] sm:$0xff]
        %v2691 = vld [vmem:[#allocation11 + $0xd70] sm:$0xff]
        %v2692 = vld [vmem:[#allocation11 + $0xd78] sm:$0xff]
        %v2693 = vld [vmem:[#allocation11 + $0xdc0] sm:$0xff]
        %v2694 = vld [vmem:[#allocation11 + $0xdc8] sm:$0xff]
        %v2695 = vld [vmem:[#allocation11 + $0xdd0] sm:$0xff]
        %v2696 = vld [vmem:[#allocation11 + $0xdd8] sm:$0xff]
        %v2697 = vld [vmem:[#allocation11 + $0xe20] sm:$0xff]
        %v2698 = vld [vmem:[#allocation11 + $0xe28] sm:$0xff]
        %v2699 = vld [vmem:[#allocation11 + $0xe30] sm:$0xff]
        %v2700 = vld [vmem:[#allocation11 + $0xe38] sm:$0xff]
        %v2701 = vld [vmem:[#allocation11 + $0xe80] sm:$0xff]
        %v2702 = vld [vmem:[#allocation11 + $0xe88] sm:$0xff]
        %v2703 = vld [vmem:[#allocation11 + $0xe90] sm:$0xff]
        %v2704 = vld [vmem:[#allocation11 + $0xe98] sm:$0xff]
        %v2705 = vld [vmem:[#allocation11 + $0xee0] sm:$0xff]
        %v2706 = vld [vmem:[#allocation11 + $0xee8] sm:$0xff]
        %v2707 = vld [vmem:[#allocation11 + $0xef0] sm:$0xff]
        %v2708 = vld [vmem:[#allocation11 + $0xef8] sm:$0xff]
        %v2709 = vld [vmem:[#allocation11 + $0xf40] sm:$0xff]
        %v2710 = vld [vmem:[#allocation11 + $0xf48] sm:$0xff]
        %v2711 = vld [vmem:[#allocation11 + $0xf50] sm:$0xff]
        %v2712 = vld [vmem:[#allocation11 + $0xf58] sm:$0xff]
        %v2713 = vld [vmem:[#allocation11 + $0xfa0] sm:$0xff]
        %v2714 = vld [vmem:[#allocation11 + $0xfa8] sm:$0xff]
        %v2715 = vld [vmem:[#allocation11 + $0xfb0] sm:$0xff]
        %v2716 = vld [vmem:[#allocation11 + $0xfb8] sm:$0xff]
        %v2717 = vld [vmem:[#allocation11 + $0x1000] sm:$0xff]
        %v2718 = vld [vmem:[#allocation11 + $0x1008] sm:$0xff]
        %v2719 = vld [vmem:[#allocation11 + $0x1010] sm:$0xff]
        %v2720 = vld [vmem:[#allocation11 + $0x1018] sm:$0xff]
        %v2721 = vld [vmem:[#allocation11 + $0x1060] sm:$0xff]
        %v2722 = vld [vmem:[#allocation11 + $0x1068] sm:$0xff]
        %v2723 = vld [vmem:[#allocation11 + $0x1070] sm:$0xff]
        %v2724 = vld [vmem:[#allocation11 + $0x1078] sm:$0xff]
        %v2725 = vld [vmem:[#allocation11 + $0x10c0] sm:$0xff]
        %v2726 = vld [vmem:[#allocation11 + $0x10c8] sm:$0xff]
        %v2727 = vld [vmem:[#allocation11 + $0x10d0] sm:$0xff]
        %v2728 = vld [vmem:[#allocation11 + $0x10d8] sm:$0xff]
        %v2729 = vld [vmem:[#allocation11 + $0x1120] sm:$0xff]
        %v2730 = vld [vmem:[#allocation11 + $0x1128] sm:$0xff]
        %v2731 = vld [vmem:[#allocation11 + $0x1130] sm:$0xff]
        %v2732 = vld [vmem:[#allocation11 + $0x1138] sm:$0xff]
        %v2733 = vld [vmem:[#allocation11 + $0x1180] sm:$0xff]
        %v2734 = vld [vmem:[#allocation11 + $0x1188] sm:$0xff]
        %v2735 = vld [vmem:[#allocation11 + $0x1190] sm:$0xff]
        %v2736 = vld [vmem:[#allocation11 + $0x1198] sm:$0xff]
        %v2737 = vld [vmem:[#allocation11 + $0x11e0] sm:$0xff]
        %v2738 = vld [vmem:[#allocation11 + $0x11e8] sm:$0xff]
        %v2739 = vld [vmem:[#allocation11 + $0x11f0] sm:$0xff]
        %v2740 = vld [vmem:[#allocation11 + $0x11f8] sm:$0xff]
        %v2741 = vld [vmem:[#allocation11 + $0x1240] sm:$0xff]
        %v2742 = vld [vmem:[#allocation11 + $0x1248] sm:$0xff]
        %v2743 = vld [vmem:[#allocation11 + $0x1250] sm:$0xff]
        %v2744 = vld [vmem:[#allocation11 + $0x1258] sm:$0xff]
        %v2745 = vld [vmem:[#allocation11 + $0x12a0] sm:$0xff]
        %v2746 = vld [vmem:[#allocation11 + $0x12a8] sm:$0xff]
        %v2747 = vld [vmem:[#allocation11 + $0x12b0] sm:$0xff]
        %v2748 = vld [vmem:[#allocation11 + $0x12b8] sm:$0xff]
        %v2749 = vld [vmem:[#allocation11 + $0x1300] sm:$0xff]
        %v2750 = vld [vmem:[#allocation11 + $0x1308] sm:$0xff]
        %v2751 = vld [vmem:[#allocation11 + $0x1310] sm:$0xff]
        %v2752 = vld [vmem:[#allocation11 + $0x1318] sm:$0xff]
        %v2753 = vld [vmem:[#allocation11 + $0x1360] sm:$0xff]
        %v2754 = vld [vmem:[#allocation11 + $0x1368] sm:$0xff]
        %v2755 = vld [vmem:[#allocation11 + $0x1370] sm:$0xff]
        %v2756 = vld [vmem:[#allocation11 + $0x1378] sm:$0xff]
        %v2757 = vld [vmem:[#allocation11 + $0x13c0] sm:$0xff]
        %v2758 = vld [vmem:[#allocation11 + $0x13c8] sm:$0xff]
        %v2759 = vld [vmem:[#allocation11 + $0x13d0] sm:$0xff]
        %v2760 = vld [vmem:[#allocation11 + $0x13d8] sm:$0xff]
        %v2761 = vld [vmem:[#allocation11 + $0x1420] sm:$0xff]
        %v2762 = vld [vmem:[#allocation11 + $0x1428] sm:$0xff]
        %v2763 = vld [vmem:[#allocation11 + $0x1430] sm:$0xff]
        %v2764 = vld [vmem:[#allocation11 + $0x1438] sm:$0xff]
        %v2765 = vld [vmem:[#allocation11 + $0x1480] sm:$0xff]
        %v2766 = vld [vmem:[#allocation11 + $0x1488] sm:$0xff]
        %v2767 = vld [vmem:[#allocation11 + $0x1490] sm:$0xff]
        %v2768 = vld [vmem:[#allocation11 + $0x1498] sm:$0xff]
        %v2769 = vld [vmem:[#allocation11 + $0x14e0] sm:$0xff]
        %v2770 = vld [vmem:[#allocation11 + $0x14e8] sm:$0xff]
        %v2771 = vld [vmem:[#allocation11 + $0x14f0] sm:$0xff]
        %v2772 = vld [vmem:[#allocation11 + $0x14f8] sm:$0xff]
        %v2773 = vld [vmem:[#allocation11 + $0x1540] sm:$0xff]
        %v2774 = vld [vmem:[#allocation11 + $0x1548] sm:$0xff]
        %v2775 = vld [vmem:[#allocation11 + $0x1550] sm:$0xff]
        %v2776 = vld [vmem:[#allocation11 + $0x1558] sm:$0xff]
        %v2777 = vld [vmem:[#allocation11 + $0x15a0] sm:$0xff]
        %v2778 = vld [vmem:[#allocation11 + $0x15a8] sm:$0xff]
        %v2779 = vld [vmem:[#allocation11 + $0x15b0] sm:$0xff]
        %v2780 = vld [vmem:[#allocation11 + $0x15b8] sm:$0xff]
        %v2781 = vld [vmem:[#allocation11 + $0x1600] sm:$0xff]
        %v2782 = vld [vmem:[#allocation11 + $0x1608] sm:$0xff]
        %v2783 = vld [vmem:[#allocation11 + $0x1610] sm:$0xff]
        %v2784 = vld [vmem:[#allocation11 + $0x1618] sm:$0xff]
        %v2785 = vld [vmem:[#allocation11 + $0x1660] sm:$0xff]
        %v2786 = vld [vmem:[#allocation11 + $0x1668] sm:$0xff]
        %v2787 = vld [vmem:[#allocation11 + $0x1670] sm:$0xff]
        %v2788 = vld [vmem:[#allocation11 + $0x1678] sm:$0xff]
        %v2789 = vld [vmem:[#allocation11 + $0x16c0] sm:$0xff]
        %v2790 = vld [vmem:[#allocation11 + $0x16c8] sm:$0xff]
        %v2791 = vld [vmem:[#allocation11 + $0x16d0] sm:$0xff]
        %v2792 = vld [vmem:[#allocation11 + $0x16d8] sm:$0xff]
        %v2793 = vld [vmem:[#allocation11 + $0x1720] sm:$0xff]
        %v2794 = vld [vmem:[#allocation11 + $0x1728] sm:$0xff]
        %v2795 = vld [vmem:[#allocation11 + $0x1730] sm:$0xff]
        %v2796 = vld [vmem:[#allocation11 + $0x1738] sm:$0xff]
        %v2797 = vld [vmem:[#allocation11 + $0x1780] sm:$0xff]
        %v2798 = vld [vmem:[#allocation11 + $0x1788] sm:$0xff]
        %v2799 = vld [vmem:[#allocation11 + $0x1790] sm:$0xff]
        %v2800 = vld [vmem:[#allocation11 + $0x1798] sm:$0xff]
        %v2801 = vld [vmem:[#allocation11 + $0x17e0] sm:$0xff]
        %v2802 = vld [vmem:[#allocation11 + $0x17e8] sm:$0xff]
        %v2803 = vld [vmem:[#allocation11 + $0x17f0] sm:$0xff]
        %v2804 = vld [vmem:[#allocation11 + $0x17f8] sm:$0xff]
        %v2805 = vld [vmem:[#allocation13 + $0x8] sm:$0xf]
        %v2807 = vlaneseq
        %v2808 = vshrl.u32 %v2807, 7
        %v2809 = vsub.s32 0, %v2808
        %v2810 = vrot.slane %v2805, %v2809
        %v2811 = vlaneseq
        %v2812 = vshrl.u32 %v2811, 7
        %v2813 = vsub.s32 1, %v2812
        %v2814 = vrot.slane %v2805, %v2813
        %v2815 = vlaneseq
        %v2816 = vshrl.u32 %v2815, 7
        %v2817 = vsub.s32 2, %v2816
        %v2818 = vrot.slane %v2805, %v2817
        %v2819 = vlaneseq
        %v2820 = vshrl.u32 %v2819, 7
        %v2821 = vsub.s32 3, %v2820
        %v2822 = vrot.slane %v2805, %v2821
        %2827 = vmatprep.subr.mxu0 %v2610
        %2828 = vmatpush1.msra.mxu0 %v2609
        %2829 = vmatprep.subr.mxu0 %v2606
        %2830 = vmatpush1.msra.mxu0 %v2605
        %2831 = vmatprep.subr.mxu0 %v2602
        %2832 = vmatpush1.msra.mxu0 %v2601
        %2833 = vmatprep.subr.mxu0 %v2598
        %2834 = vmatpush1.msra.mxu0 %v2597
        %2835 = vmatprep.subr.mxu0 %v2594
        %2836 = vmatpush1.msra.mxu0 %v2593
        %2837 = vmatprep.subr.mxu0 %v2590
        %2838 = vmatpush1.msra.mxu0 %v2589
        %2839 = vmatprep.subr.mxu0 %v2586
        %2840 = vmatpush1.msra.mxu0 %v2585
        %2841 = vmatprep.subr.mxu0 %v2582
        %2842 = vmatpush1.msra.mxu0 %v2581
        %2843 = vmatprep.subr.mxu0 %v2578
        %2844 = vmatpush1.msra.mxu0 %v2577
        %2845 = vmatprep.subr.mxu0 %v2574
        %2846 = vmatpush1.msra.mxu0 %v2573
        %2847 = vmatprep.subr.mxu0 %v2570
        %2848 = vmatpush1.msra.mxu0 %v2569
        %2849 = vmatprep.subr.mxu0 %v2566
        %2850 = vmatpush1.msra.mxu0 %v2565
        %2851 = vmatprep.subr.mxu0 %v2562
        %2852 = vmatpush1.msra.mxu0 %v2561
        %2853 = vmatprep.subr.mxu0 %v2558
        %2854 = vmatpush1.msra.mxu0 %v2557
        %2855 = vmatprep.subr.mxu0 %v2554
        %2856 = vmatpush1.msra.mxu0 %v2553
        %2857 = vmatprep.subr.mxu0 %v2550
        %2858 = vmatpush1.msra.mxu0 %v2549
        %2859 = vmatprep.subr.mxu0 %v2674
        %2860 = vmatpush2.msra.mxu0 %v2673
        %2861 = vmatprep.subr.mxu0 %v2670
        %2862 = vmatpush2.msra.mxu0 %v2669
        %2863 = vmatprep.subr.mxu0 %v2666
        %2864 = vmatpush2.msra.mxu0 %v2665
        %2865 = vmatprep.subr.mxu0 %v2662
        %2866 = vmatpush2.msra.mxu0 %v2661
        %2867 = vmatprep.subr.mxu0 %v2658
        %2868 = vmatpush2.msra.mxu0 %v2657
        %2869 = vmatprep.subr.mxu0 %v2654
        %2870 = vmatpush2.msra.mxu0 %v2653
        %2871 = vmatprep.subr.mxu0 %v2650
        %2872 = vmatpush2.msra.mxu0 %v2649
        %2873 = vmatprep.subr.mxu0 %v2646
        %2874 = vmatpush2.msra.mxu0 %v2645
        %2875 = vmatprep.subr.mxu0 %v2642
        %2876 = vmatpush2.msra.mxu0 %v2641
        %2877 = vmatprep.subr.mxu0 %v2638
        %2878 = vmatpush2.msra.mxu0 %v2637
        %2879 = vmatprep.subr.mxu0 %v2634
        %2880 = vmatpush2.msra.mxu0 %v2633
        %2881 = vmatprep.subr.mxu0 %v2630
        %2882 = vmatpush2.msra.mxu0 %v2629
        %2883 = vmatprep.subr.mxu0 %v2626
        %2884 = vmatpush2.msra.mxu0 %v2625
        %2885 = vmatprep.subr.mxu0 %v2622
        %2886 = vmatpush2.msra.mxu0 %v2621
        %2887 = vmatprep.subr.mxu0 %v2618
        %2888 = vmatpush2.msra.mxu0 %v2617
        %2889 = vmatprep.subr.mxu0 %v2614
        %2890 = vmatpush2.msra.mxu0 %v2613
        %2891 = vmatprep.mubr.f32.mxu0 %v2486
        %2892 = vmatmul.mubr.f32.gmra.mxu0 %v2485
        %v2893 = vpop.f32.mrf.mxu0
        %v2894 = vadd.f32 %v2810, %v2893
        %v2895 = vpop.f32.mrf.mxu0
        %v2896 = vadd.f32 %v2814, %v2895
        %2897 = vmatprep.mubr.f32.mxu0 %v2490
        %2898 = vmatmul.mubr.f32.gmra.mxu0 %v2489
        %v2899 = vpop.f32.mrf.mxu0
        %v2900 = vadd.f32 %v2810, %v2899
        %v2901 = vpop.f32.mrf.mxu0
        %v2902 = vadd.f32 %v2814, %v2901
        %2903 = vmatprep.mubr.f32.mxu0 %v2494
        %2904 = vmatmul.mubr.f32.gmra.mxu0 %v2493
        %v2905 = vpop.f32.mrf.mxu0
        %v2906 = vadd.f32 %v2810, %v2905
        %v2907 = vpop.f32.mrf.mxu0
        %v2908 = vadd.f32 %v2814, %v2907
        %2909 = vmatprep.mubr.f32.mxu0 %v2498
        %2910 = vmatmul.mubr.f32.gmra.mxu0 %v2497
        %v2911 = vpop.f32.mrf.mxu0
        %v2912 = vadd.f32 %v2810, %v2911
        %v2913 = vpop.f32.mrf.mxu0
        %v2914 = vadd.f32 %v2814, %v2913
        %2915 = vmatprep.mubr.f32.mxu0 %v2502
        %2916 = vmatmul.mubr.f32.gmra.mxu0 %v2501
        %v2917 = vpop.f32.mrf.mxu0
        %v2918 = vadd.f32 %v2810, %v2917
        %v2919 = vpop.f32.mrf.mxu0
        %v2920 = vadd.f32 %v2814, %v2919
        %2921 = vmatprep.mubr.f32.mxu0 %v2506
        %2922 = vmatmul.mubr.f32.gmra.mxu0 %v2505
        %v2923 = vpop.f32.mrf.mxu0
        %v2924 = vadd.f32 %v2810, %v2923
        %v2925 = vpop.f32.mrf.mxu0
        %v2926 = vadd.f32 %v2814, %v2925
        %2927 = vmatprep.mubr.f32.mxu0 %v2510
        %2928 = vmatmul.mubr.f32.gmra.mxu0 %v2509
        %v2929 = vpop.f32.mrf.mxu0
        %v2930 = vadd.f32 %v2810, %v2929
        %v2931 = vpop.f32.mrf.mxu0
        %v2932 = vadd.f32 %v2814, %v2931
        %2933 = vmatprep.mubr.f32.mxu0 %v2514
        %2934 = vmatmul.mubr.f32.gmra.mxu0 %v2513
        %v2935 = vpop.f32.mrf.mxu0
        %v2936 = vadd.f32 %v2810, %v2935
        %v2937 = vpop.f32.mrf.mxu0
        %v2938 = vadd.f32 %v2814, %v2937
        %2939 = vmatprep.mubr.f32.mxu0 %v2518
        %2940 = vmatmul.mubr.f32.gmra.mxu0 %v2517
        %v2941 = vpop.f32.mrf.mxu0
        %v2942 = vadd.f32 %v2810, %v2941
        %v2943 = vpop.f32.mrf.mxu0
        %v2944 = vadd.f32 %v2814, %v2943
        %2945 = vmatprep.mubr.f32.mxu0 %v2522
        %2946 = vmatmul.mubr.f32.gmra.mxu0 %v2521
        %v2947 = vpop.f32.mrf.mxu0
        %v2948 = vadd.f32 %v2810, %v2947
        %v2949 = vpop.f32.mrf.mxu0
        %v2950 = vadd.f32 %v2814, %v2949
        %2951 = vmatprep.mubr.f32.mxu0 %v2526
        %2952 = vmatmul.mubr.f32.gmra.mxu0 %v2525
        %v2953 = vpop.f32.mrf.mxu0
        %v2954 = vadd.f32 %v2810, %v2953
        %v2955 = vpop.f32.mrf.mxu0
        %v2956 = vadd.f32 %v2814, %v2955
        %2957 = vmatprep.mubr.f32.mxu0 %v2530
        %2958 = vmatmul.mubr.f32.gmra.mxu0 %v2529
        %v2959 = vpop.f32.mrf.mxu0
        %v2960 = vadd.f32 %v2810, %v2959
        %v2961 = vpop.f32.mrf.mxu0
        %v2962 = vadd.f32 %v2814, %v2961
        %2963 = vmatprep.mubr.f32.mxu0 %v2534
        %2964 = vmatmul.mubr.f32.gmra.mxu0 %v2533
        %v2965 = vpop.f32.mrf.mxu0
        %v2966 = vadd.f32 %v2810, %v2965
        %v2967 = vpop.f32.mrf.mxu0
        %v2968 = vadd.f32 %v2814, %v2967
        %2969 = vmatprep.mubr.f32.mxu0 %v2538
        %2970 = vmatmul.mubr.f32.gmra.mxu0 %v2537
        %v2971 = vpop.f32.mrf.mxu0
        %v2972 = vadd.f32 %v2810, %v2971
        %v2973 = vpop.f32.mrf.mxu0
        %v2974 = vadd.f32 %v2814, %v2973
        %2975 = vmatprep.mubr.f32.mxu0 %v2542
        %2976 = vmatmul.mubr.f32.gmra.mxu0 %v2541
        %v2977 = vpop.f32.mrf.mxu0
        %v2978 = vadd.f32 %v2810, %v2977
        %v2979 = vpop.f32.mrf.mxu0
        %v2980 = vadd.f32 %v2814, %v2979
        %2981 = vmatprep.mubr.f32.mxu0 %v2546
        %2982 = vmatmul.mubr.f32.gmra.mxu0 %v2545
        %v2983 = vpop.f32.mrf.mxu0
        %v2984 = vadd.f32 %v2810, %v2983
        %v2985 = vpop.f32.mrf.mxu0
        %v2986 = vadd.f32 %v2814, %v2985
        %2987 = vdwg.mxu0
        %2988 = vmatprep.subr.mxu0 %v2738
        %2989 = vmatpush1.msra.mxu0 %v2737
        %2990 = vmatprep.subr.mxu0 %v2734
        %2991 = vmatpush1.msra.mxu0 %v2733
        %2992 = vmatprep.subr.mxu0 %v2730
        %2993 = vmatpush1.msra.mxu0 %v2729
        %2994 = vmatprep.subr.mxu0 %v2726
        %2995 = vmatpush1.msra.mxu0 %v2725
        %2996 = vmatprep.subr.mxu0 %v2722
        %2997 = vmatpush1.msra.mxu0 %v2721
        %2998 = vmatprep.subr.mxu0 %v2718
        %2999 = vmatpush1.msra.mxu0 %v2717
        %3000 = vmatprep.subr.mxu0 %v2714
        %3001 = vmatpush1.msra.mxu0 %v2713
        %3002 = vmatprep.subr.mxu0 %v2710
        %3003 = vmatpush1.msra.mxu0 %v2709
        %3004 = vmatprep.subr.mxu0 %v2706
        %3005 = vmatpush1.msra.mxu0 %v2705
        %3006 = vmatprep.subr.mxu0 %v2702
        %3007 = vmatpush1.msra.mxu0 %v2701
        %3008 = vmatprep.subr.mxu0 %v2698
        %3009 = vmatpush1.msra.mxu0 %v2697
        %3010 = vmatprep.subr.mxu0 %v2694
        %3011 = vmatpush1.msra.mxu0 %v2693
        %3012 = vmatprep.subr.mxu0 %v2690
        %3013 = vmatpush1.msra.mxu0 %v2689
        %3014 = vmatprep.subr.mxu0 %v2686
        %3015 = vmatpush1.msra.mxu0 %v2685
        %3016 = vmatprep.subr.mxu0 %v2682
        %3017 = vmatpush1.msra.mxu0 %v2681
        %3018 = vmatprep.subr.mxu0 %v2678
        %3019 = vmatpush1.msra.mxu0 %v2677
        %3020 = vmatprep.subr.mxu0 %v2802
        %3021 = vmatpush2.msra.mxu0 %v2801
        %3022 = vmatprep.subr.mxu0 %v2798
        %3023 = vmatpush2.msra.mxu0 %v2797
        %3024 = vmatprep.subr.mxu0 %v2794
        %3025 = vmatpush2.msra.mxu0 %v2793
        %3026 = vmatprep.subr.mxu0 %v2790
        %3027 = vmatpush2.msra.mxu0 %v2789
        %3028 = vmatprep.subr.mxu0 %v2786
        %3029 = vmatpush2.msra.mxu0 %v2785
        %3030 = vmatprep.subr.mxu0 %v2782
        %3031 = vmatpush2.msra.mxu0 %v2781
        %3032 = vmatprep.subr.mxu0 %v2778
        %3033 = vmatpush2.msra.mxu0 %v2777
        %3034 = vmatprep.subr.mxu0 %v2774
        %3035 = vmatpush2.msra.mxu0 %v2773
        %3036 = vmatprep.subr.mxu0 %v2770
        %3037 = vmatpush2.msra.mxu0 %v2769
        %3038 = vmatprep.subr.mxu0 %v2766
        %3039 = vmatpush2.msra.mxu0 %v2765
        %3040 = vmatprep.subr.mxu0 %v2762
        %3041 = vmatpush2.msra.mxu0 %v2761
        %3042 = vmatprep.subr.mxu0 %v2758
        %3043 = vmatpush2.msra.mxu0 %v2757
        %3044 = vmatprep.subr.mxu0 %v2754
        %3045 = vmatpush2.msra.mxu0 %v2753
        %3046 = vmatprep.subr.mxu0 %v2750
        %3047 = vmatpush2.msra.mxu0 %v2749
        %3048 = vmatprep.subr.mxu0 %v2746
        %3049 = vmatpush2.msra.mxu0 %v2745
        %3050 = vmatprep.subr.mxu0 %v2742
        %3051 = vmatpush2.msra.mxu0 %v2741
        %3052 = vmatprep.mubr.f32.mxu0 %v2488
        %3053 = vmatmul.mubr.f32.gmra.mxu0 %v2487
        %v3054 = vpop.f32.mrf.mxu0
        %v3055 = vadd.f32 %v2894, %v3054
        %v3056 = vpop.f32.mrf.mxu0
        %v3057 = vadd.f32 %v2896, %v3056
        %3058 = vmatprep.mubr.f32.mxu0 %v2492
        %3059 = vmatmul.mubr.f32.gmra.mxu0 %v2491
        %v3060 = vpop.f32.mrf.mxu0
        %v3061 = vadd.f32 %v2900, %v3060
        %v3062 = vpop.f32.mrf.mxu0
        %v3063 = vadd.f32 %v2902, %v3062
        %3064 = vmatprep.mubr.f32.mxu0 %v2496
        %3065 = vmatmul.mubr.f32.gmra.mxu0 %v2495
        %v3066 = vpop.f32.mrf.mxu0
        %v3067 = vadd.f32 %v2906, %v3066
        %v3068 = vpop.f32.mrf.mxu0
        %v3069 = vadd.f32 %v2908, %v3068
        %3070 = vmatprep.mubr.f32.mxu0 %v2500
        %3071 = vmatmul.mubr.f32.gmra.mxu0 %v2499
        %v3072 = vpop.f32.mrf.mxu0
        %v3073 = vadd.f32 %v2912, %v3072
        %v3074 = vpop.f32.mrf.mxu0
        %v3075 = vadd.f32 %v2914, %v3074
        %3076 = vmatprep.mubr.f32.mxu0 %v2504
        %3077 = vmatmul.mubr.f32.gmra.mxu0 %v2503
        %v3078 = vpop.f32.mrf.mxu0
        %v3079 = vadd.f32 %v2918, %v3078
        %v3080 = vpop.f32.mrf.mxu0
        %v3081 = vadd.f32 %v2920, %v3080
        %3082 = vmatprep.mubr.f32.mxu0 %v2508
        %3083 = vmatmul.mubr.f32.gmra.mxu0 %v2507
        %v3084 = vpop.f32.mrf.mxu0
        %v3085 = vadd.f32 %v2924, %v3084
        %v3086 = vpop.f32.mrf.mxu0
        %v3087 = vadd.f32 %v2926, %v3086
        %3088 = vmatprep.mubr.f32.mxu0 %v2512
        %3089 = vmatmul.mubr.f32.gmra.mxu0 %v2511
        %v3090 = vpop.f32.mrf.mxu0
        %v3091 = vadd.f32 %v2930, %v3090
        %v3092 = vpop.f32.mrf.mxu0
        %v3093 = vadd.f32 %v2932, %v3092
        %3094 = vmatprep.mubr.f32.mxu0 %v2516
        %3095 = vmatmul.mubr.f32.gmra.mxu0 %v2515
        %v3096 = vpop.f32.mrf.mxu0
        %v3097 = vadd.f32 %v2936, %v3096
        %v3098 = vpop.f32.mrf.mxu0
        %v3099 = vadd.f32 %v2938, %v3098
        %3100 = vmatprep.mubr.f32.mxu0 %v2520
        %3101 = vmatmul.mubr.f32.gmra.mxu0 %v2519
        %v3102 = vpop.f32.mrf.mxu0
        %v3103 = vadd.f32 %v2942, %v3102
        %v3104 = vpop.f32.mrf.mxu0
        %v3105 = vadd.f32 %v2944, %v3104
        %3106 = vmatprep.mubr.f32.mxu0 %v2524
        %3107 = vmatmul.mubr.f32.gmra.mxu0 %v2523
        %v3108 = vpop.f32.mrf.mxu0
        %v3109 = vadd.f32 %v2948, %v3108
        %v3110 = vpop.f32.mrf.mxu0
        %v3111 = vadd.f32 %v2950, %v3110
        %3112 = vmatprep.mubr.f32.mxu0 %v2528
        %3113 = vmatmul.mubr.f32.gmra.mxu0 %v2527
        %v3114 = vpop.f32.mrf.mxu0
        %v3115 = vadd.f32 %v2954, %v3114
        %v3116 = vpop.f32.mrf.mxu0
        %v3117 = vadd.f32 %v2956, %v3116
        %3118 = vmatprep.mubr.f32.mxu0 %v2532
        %3119 = vmatmul.mubr.f32.gmra.mxu0 %v2531
        %v3120 = vpop.f32.mrf.mxu0
        %v3121 = vadd.f32 %v2960, %v3120
        %v3122 = vpop.f32.mrf.mxu0
        %v3123 = vadd.f32 %v2962, %v3122
        %3124 = vmatprep.mubr.f32.mxu0 %v2536
        %3125 = vmatmul.mubr.f32.gmra.mxu0 %v2535
        %v3126 = vpop.f32.mrf.mxu0
        %v3127 = vadd.f32 %v2966, %v3126
        %v3128 = vpop.f32.mrf.mxu0
        %v3129 = vadd.f32 %v2968, %v3128
        %3130 = vmatprep.mubr.f32.mxu0 %v2540
        %3131 = vmatmul.mubr.f32.gmra.mxu0 %v2539
        %v3132 = vpop.f32.mrf.mxu0
        %v3133 = vadd.f32 %v2972, %v3132
        %v3134 = vpop.f32.mrf.mxu0
        %v3135 = vadd.f32 %v2974, %v3134
        %3136 = vmatprep.mubr.f32.mxu0 %v2544
        %3137 = vmatmul.mubr.f32.gmra.mxu0 %v2543
        %v3138 = vpop.f32.mrf.mxu0
        %v3139 = vadd.f32 %v2978, %v3138
        %v3140 = vpop.f32.mrf.mxu0
        %v3141 = vadd.f32 %v2980, %v3140
        %3142 = vmatprep.mubr.f32.mxu0 %v2548
        %3143 = vmatmul.mubr.f32.gmra.mxu0 %v2547
        %v3144 = vpop.f32.mrf.mxu0
        %v3145 = vadd.f32 %v2984, %v3144
        %v3146 = vpop.f32.mrf.mxu0
        %v3147 = vadd.f32 %v2986, %v3146
        %3148 = vdwg.mxu0
        %3149 = vmatprep.subr.mxu0 %v2612
        %3150 = vmatpush1.msra.mxu0 %v2611
        %3151 = vmatprep.subr.mxu0 %v2608
        %3152 = vmatpush1.msra.mxu0 %v2607
        %3153 = vmatprep.subr.mxu0 %v2604
        %3154 = vmatpush1.msra.mxu0 %v2603
        %3155 = vmatprep.subr.mxu0 %v2600
        %3156 = vmatpush1.msra.mxu0 %v2599
        %3157 = vmatprep.subr.mxu0 %v2596
        %3158 = vmatpush1.msra.mxu0 %v2595
        %3159 = vmatprep.subr.mxu0 %v2592
        %3160 = vmatpush1.msra.mxu0 %v2591
        %3161 = vmatprep.subr.mxu0 %v2588
        %3162 = vmatpush1.msra.mxu0 %v2587
        %3163 = vmatprep.subr.mxu0 %v2584
        %3164 = vmatpush1.msra.mxu0 %v2583
        %3165 = vmatprep.subr.mxu0 %v2580
        %3166 = vmatpush1.msra.mxu0 %v2579
        %3167 = vmatprep.subr.mxu0 %v2576
        %3168 = vmatpush1.msra.mxu0 %v2575
        %3169 = vmatprep.subr.mxu0 %v2572
        %3170 = vmatpush1.msra.mxu0 %v2571
        %3171 = vmatprep.subr.mxu0 %v2568
        %3172 = vmatpush1.msra.mxu0 %v2567
        %3173 = vmatprep.subr.mxu0 %v2564
        %3174 = vmatpush1.msra.mxu0 %v2563
        %3175 = vmatprep.subr.mxu0 %v2560
        %3176 = vmatpush1.msra.mxu0 %v2559
        %3177 = vmatprep.subr.mxu0 %v2556
        %3178 = vmatpush1.msra.mxu0 %v2555
        %3179 = vmatprep.subr.mxu0 %v2552
        %3180 = vmatpush1.msra.mxu0 %v2551
        %3181 = vmatprep.subr.mxu0 %v2676
        %3182 = vmatpush2.msra.mxu0 %v2675
        %3183 = vmatprep.subr.mxu0 %v2672
        %3184 = vmatpush2.msra.mxu0 %v2671
        %3185 = vmatprep.subr.mxu0 %v2668
        %3186 = vmatpush2.msra.mxu0 %v2667
        %3187 = vmatprep.subr.mxu0 %v2664
        %3188 = vmatpush2.msra.mxu0 %v2663
        %3189 = vmatprep.subr.mxu0 %v2660
        %3190 = vmatpush2.msra.mxu0 %v2659
        %3191 = vmatprep.subr.mxu0 %v2656
        %3192 = vmatpush2.msra.mxu0 %v2655
        %3193 = vmatprep.subr.mxu0 %v2652
        %3194 = vmatpush2.msra.mxu0 %v2651
        %3195 = vmatprep.subr.mxu0 %v2648
        %3196 = vmatpush2.msra.mxu0 %v2647
        %3197 = vmatprep.subr.mxu0 %v2644
        %3198 = vmatpush2.msra.mxu0 %v2643
        %3199 = vmatprep.subr.mxu0 %v2640
        %3200 = vmatpush2.msra.mxu0 %v2639
        %3201 = vmatprep.subr.mxu0 %v2636
        %3202 = vmatpush2.msra.mxu0 %v2635
        %3203 = vmatprep.subr.mxu0 %v2632
        %3204 = vmatpush2.msra.mxu0 %v2631
        %3205 = vmatprep.subr.mxu0 %v2628
        %3206 = vmatpush2.msra.mxu0 %v2627
        %3207 = vmatprep.subr.mxu0 %v2624
        %3208 = vmatpush2.msra.mxu0 %v2623
        %3209 = vmatprep.subr.mxu0 %v2620
        %3210 = vmatpush2.msra.mxu0 %v2619
        %3211 = vmatprep.subr.mxu0 %v2616
        %3212 = vmatpush2.msra.mxu0 %v2615
        %3213 = vmatprep.mubr.f32.mxu0 %v2486
        %3214 = vmatmul.mubr.f32.gmra.mxu0 %v2485
        %v3215 = vpop.f32.mrf.mxu0
        %v3216 = vadd.f32 %v2818, %v3215
        %v3217 = vpop.f32.mrf.mxu0
        %v3218 = vadd.f32 %v2822, %v3217
        %3219 = vmatprep.mubr.f32.mxu0 %v2490
        %3220 = vmatmul.mubr.f32.gmra.mxu0 %v2489
        %v3221 = vpop.f32.mrf.mxu0
        %v3222 = vadd.f32 %v2818, %v3221
        %v3223 = vpop.f32.mrf.mxu0
        %v3224 = vadd.f32 %v2822, %v3223
        %3225 = vmatprep.mubr.f32.mxu0 %v2494
        %3226 = vmatmul.mubr.f32.gmra.mxu0 %v2493
        %v3227 = vpop.f32.mrf.mxu0
        %v3228 = vadd.f32 %v2818, %v3227
        %v3229 = vpop.f32.mrf.mxu0
        %v3230 = vadd.f32 %v2822, %v3229
        %3231 = vmatprep.mubr.f32.mxu0 %v2498
        %3232 = vmatmul.mubr.f32.gmra.mxu0 %v2497
        %v3233 = vpop.f32.mrf.mxu0
        %v3234 = vadd.f32 %v2818, %v3233
        %v3235 = vpop.f32.mrf.mxu0
        %v3236 = vadd.f32 %v2822, %v3235
        %3237 = vmatprep.mubr.f32.mxu0 %v2502
        %3238 = vmatmul.mubr.f32.gmra.mxu0 %v2501
        %v3239 = vpop.f32.mrf.mxu0
        %v3240 = vadd.f32 %v2818, %v3239
        %v3241 = vpop.f32.mrf.mxu0
        %v3242 = vadd.f32 %v2822, %v3241
        %3243 = vmatprep.mubr.f32.mxu0 %v2506
        %3244 = vmatmul.mubr.f32.gmra.mxu0 %v2505
        %v3245 = vpop.f32.mrf.mxu0
        %v3246 = vadd.f32 %v2818, %v3245
        %v3247 = vpop.f32.mrf.mxu0
        %v3248 = vadd.f32 %v2822, %v3247
        %3249 = vmatprep.mubr.f32.mxu0 %v2510
        %3250 = vmatmul.mubr.f32.gmra.mxu0 %v2509
        %v3251 = vpop.f32.mrf.mxu0
        %v3252 = vadd.f32 %v2818, %v3251
        %v3253 = vpop.f32.mrf.mxu0
        %v3254 = vadd.f32 %v2822, %v3253
        %3255 = vmatprep.mubr.f32.mxu0 %v2514
        %3256 = vmatmul.mubr.f32.gmra.mxu0 %v2513
        %v3257 = vpop.f32.mrf.mxu0
        %v3258 = vadd.f32 %v2818, %v3257
        %v3259 = vpop.f32.mrf.mxu0
        %v3260 = vadd.f32 %v2822, %v3259
        %3261 = vmatprep.mubr.f32.mxu0 %v2518
        %3262 = vmatmul.mubr.f32.gmra.mxu0 %v2517
        %v3263 = vpop.f32.mrf.mxu0
        %v3264 = vadd.f32 %v2818, %v3263
        %v3265 = vpop.f32.mrf.mxu0
        %v3266 = vadd.f32 %v2822, %v3265
        %3267 = vmatprep.mubr.f32.mxu0 %v2522
        %3268 = vmatmul.mubr.f32.gmra.mxu0 %v2521
        %v3269 = vpop.f32.mrf.mxu0
        %v3270 = vadd.f32 %v2818, %v3269
        %v3271 = vpop.f32.mrf.mxu0
        %v3272 = vadd.f32 %v2822, %v3271
        %3273 = vmatprep.mubr.f32.mxu0 %v2526
        %3274 = vmatmul.mubr.f32.gmra.mxu0 %v2525
        %v3275 = vpop.f32.mrf.mxu0
        %v3276 = vadd.f32 %v2818, %v3275
        %v3277 = vpop.f32.mrf.mxu0
        %v3278 = vadd.f32 %v2822, %v3277
        %3279 = vmatprep.mubr.f32.mxu0 %v2530
        %3280 = vmatmul.mubr.f32.gmra.mxu0 %v2529
        %v3281 = vpop.f32.mrf.mxu0
        %v3282 = vadd.f32 %v2818, %v3281
        %v3283 = vpop.f32.mrf.mxu0
        %v3284 = vadd.f32 %v2822, %v3283
        %3285 = vmatprep.mubr.f32.mxu0 %v2534
        %3286 = vmatmul.mubr.f32.gmra.mxu0 %v2533
        %v3287 = vpop.f32.mrf.mxu0
        %v3288 = vadd.f32 %v2818, %v3287
        %v3289 = vpop.f32.mrf.mxu0
        %v3290 = vadd.f32 %v2822, %v3289
        %3291 = vmatprep.mubr.f32.mxu0 %v2538
        %3292 = vmatmul.mubr.f32.gmra.mxu0 %v2537
        %v3293 = vpop.f32.mrf.mxu0
        %v3294 = vadd.f32 %v2818, %v3293
        %v3295 = vpop.f32.mrf.mxu0
        %v3296 = vadd.f32 %v2822, %v3295
        %3297 = vmatprep.mubr.f32.mxu0 %v2542
        %3298 = vmatmul.mubr.f32.gmra.mxu0 %v2541
        %v3299 = vpop.f32.mrf.mxu0
        %v3300 = vadd.f32 %v2818, %v3299
        %v3301 = vpop.f32.mrf.mxu0
        %v3302 = vadd.f32 %v2822, %v3301
        %3303 = vmatprep.mubr.f32.mxu0 %v2546
        %3304 = vmatmul.mubr.f32.gmra.mxu0 %v2545
        %v3305 = vpop.f32.mrf.mxu0
        %v3306 = vadd.f32 %v2818, %v3305
        %v3307 = vpop.f32.mrf.mxu0
        %v3308 = vadd.f32 %v2822, %v3307
        %3309 = vdwg.mxu0
        %3310 = vmatprep.subr.mxu0 %v2740
        %3311 = vmatpush1.msra.mxu0 %v2739
        %3312 = vmatprep.subr.mxu0 %v2736
        %3313 = vmatpush1.msra.mxu0 %v2735
        %3314 = vmatprep.subr.mxu0 %v2732
        %3315 = vmatpush1.msra.mxu0 %v2731
        %3316 = vmatprep.subr.mxu0 %v2728
        %3317 = vmatpush1.msra.mxu0 %v2727
        %3318 = vmatprep.subr.mxu0 %v2724
        %3319 = vmatpush1.msra.mxu0 %v2723
        %3320 = vmatprep.subr.mxu0 %v2720
        %3321 = vmatpush1.msra.mxu0 %v2719
        %3322 = vmatprep.subr.mxu0 %v2716
        %3323 = vmatpush1.msra.mxu0 %v2715
        %3324 = vmatprep.subr.mxu0 %v2712
        %3325 = vmatpush1.msra.mxu0 %v2711
        %3326 = vmatprep.subr.mxu0 %v2708
        %3327 = vmatpush1.msra.mxu0 %v2707
        %3328 = vmatprep.subr.mxu0 %v2704
        %3329 = vmatpush1.msra.mxu0 %v2703
        %3330 = vmatprep.subr.mxu0 %v2700
        %3331 = vmatpush1.msra.mxu0 %v2699
        %3332 = vmatprep.subr.mxu0 %v2696
        %3333 = vmatpush1.msra.mxu0 %v2695
        %3334 = vmatprep.subr.mxu0 %v2692
        %3335 = vmatpush1.msra.mxu0 %v2691
        %3336 = vmatprep.subr.mxu0 %v2688
        %3337 = vmatpush1.msra.mxu0 %v2687
        %3338 = vmatprep.subr.mxu0 %v2684
        %3339 = vmatpush1.msra.mxu0 %v2683
        %3340 = vmatprep.subr.mxu0 %v2680
        %3341 = vmatpush1.msra.mxu0 %v2679
        %3342 = vmatprep.subr.mxu0 %v2804
        %3343 = vmatpush2.msra.mxu0 %v2803
        %3344 = vmatprep.subr.mxu0 %v2800
        %3345 = vmatpush2.msra.mxu0 %v2799
        %3346 = vmatprep.subr.mxu0 %v2796
        %3347 = vmatpush2.msra.mxu0 %v2795
        %3348 = vmatprep.subr.mxu0 %v2792
        %3349 = vmatpush2.msra.mxu0 %v2791
        %3350 = vmatprep.subr.mxu0 %v2788
        %3351 = vmatpush2.msra.mxu0 %v2787
        %3352 = vmatprep.subr.mxu0 %v2784
        %3353 = vmatpush2.msra.mxu0 %v2783
        %3354 = vmatprep.subr.mxu0 %v2780
        %3355 = vmatpush2.msra.mxu0 %v2779
        %3356 = vmatprep.subr.mxu0 %v2776
        %3357 = vmatpush2.msra.mxu0 %v2775
        %3358 = vmatprep.subr.mxu0 %v2772
        %3359 = vmatpush2.msra.mxu0 %v2771
        %3360 = vmatprep.subr.mxu0 %v2768
        %3361 = vmatpush2.msra.mxu0 %v2767
        %3362 = vmatprep.subr.mxu0 %v2764
        %3363 = vmatpush2.msra.mxu0 %v2763
        %3364 = vmatprep.subr.mxu0 %v2760
        %3365 = vmatpush2.msra.mxu0 %v2759
        %3366 = vmatprep.subr.mxu0 %v2756
        %3367 = vmatpush2.msra.mxu0 %v2755
        %3368 = vmatprep.subr.mxu0 %v2752
        %3369 = vmatpush2.msra.mxu0 %v2751
        %3370 = vmatprep.subr.mxu0 %v2748
        %3371 = vmatpush2.msra.mxu0 %v2747
        %3372 = vmatprep.subr.mxu0 %v2744
        %3373 = vmatpush2.msra.mxu0 %v2743
        %3374 = vmatprep.mubr.f32.mxu0 %v2488
        %3375 = vmatmul.mubr.f32.gmra.mxu0 %v2487
        %v3376 = vpop.f32.mrf.mxu0
        %v3377 = vadd.f32 %v3216, %v3376
        %v3378 = vpop.f32.mrf.mxu0
        %v3379 = vadd.f32 %v3218, %v3378
        %3380 = vmatprep.mubr.f32.mxu0 %v2492
        %3381 = vmatmul.mubr.f32.gmra.mxu0 %v2491
        %v3382 = vpop.f32.mrf.mxu0
        %v3383 = vadd.f32 %v3222, %v3382
        %v3384 = vpop.f32.mrf.mxu0
        %v3385 = vadd.f32 %v3224, %v3384
        %3386 = vmatprep.mubr.f32.mxu0 %v2496
        %3387 = vmatmul.mubr.f32.gmra.mxu0 %v2495
        %v3388 = vpop.f32.mrf.mxu0
        %v3389 = vadd.f32 %v3228, %v3388
        %v3390 = vpop.f32.mrf.mxu0
        %v3391 = vadd.f32 %v3230, %v3390
        %3392 = vmatprep.mubr.f32.mxu0 %v2500
        %3393 = vmatmul.mubr.f32.gmra.mxu0 %v2499
        %v3394 = vpop.f32.mrf.mxu0
        %v3395 = vadd.f32 %v3234, %v3394
        %v3396 = vpop.f32.mrf.mxu0
        %v3397 = vadd.f32 %v3236, %v3396
        %3398 = vmatprep.mubr.f32.mxu0 %v2504
        %3399 = vmatmul.mubr.f32.gmra.mxu0 %v2503
        %v3400 = vpop.f32.mrf.mxu0
        %v3401 = vadd.f32 %v3240, %v3400
        %v3402 = vpop.f32.mrf.mxu0
        %v3403 = vadd.f32 %v3242, %v3402
        %3404 = vmatprep.mubr.f32.mxu0 %v2508
        %3405 = vmatmul.mubr.f32.gmra.mxu0 %v2507
        %v3406 = vpop.f32.mrf.mxu0
        %v3407 = vadd.f32 %v3246, %v3406
        %v3408 = vpop.f32.mrf.mxu0
        %v3409 = vadd.f32 %v3248, %v3408
        %3410 = vmatprep.mubr.f32.mxu0 %v2512
        %3411 = vmatmul.mubr.f32.gmra.mxu0 %v2511
        %v3412 = vpop.f32.mrf.mxu0
        %v3413 = vadd.f32 %v3252, %v3412
        %v3414 = vpop.f32.mrf.mxu0
        %v3415 = vadd.f32 %v3254, %v3414
        %3416 = vmatprep.mubr.f32.mxu0 %v2516
        %3417 = vmatmul.mubr.f32.gmra.mxu0 %v2515
        %v3418 = vpop.f32.mrf.mxu0
        %v3419 = vadd.f32 %v3258, %v3418
        %v3420 = vpop.f32.mrf.mxu0
        %v3421 = vadd.f32 %v3260, %v3420
        %3422 = vmatprep.mubr.f32.mxu0 %v2520
        %3423 = vmatmul.mubr.f32.gmra.mxu0 %v2519
        %v3424 = vpop.f32.mrf.mxu0
        %v3425 = vadd.f32 %v3264, %v3424
        %v3426 = vpop.f32.mrf.mxu0
        %v3427 = vadd.f32 %v3266, %v3426
        %3428 = vmatprep.mubr.f32.mxu0 %v2524
        %3429 = vmatmul.mubr.f32.gmra.mxu0 %v2523
        %v3430 = vpop.f32.mrf.mxu0
        %v3431 = vadd.f32 %v3270, %v3430
        %v3432 = vpop.f32.mrf.mxu0
        %v3433 = vadd.f32 %v3272, %v3432
        %3434 = vmatprep.mubr.f32.mxu0 %v2528
        %3435 = vmatmul.mubr.f32.gmra.mxu0 %v2527
        %v3436 = vpop.f32.mrf.mxu0
        %v3437 = vadd.f32 %v3276, %v3436
        %v3438 = vpop.f32.mrf.mxu0
        %v3439 = vadd.f32 %v3278, %v3438
        %3440 = vmatprep.mubr.f32.mxu0 %v2532
        %3441 = vmatmul.mubr.f32.gmra.mxu0 %v2531
        %v3442 = vpop.f32.mrf.mxu0
        %v3443 = vadd.f32 %v3282, %v3442
        %v3444 = vpop.f32.mrf.mxu0
        %v3445 = vadd.f32 %v3284, %v3444
        %3446 = vmatprep.mubr.f32.mxu0 %v2536
        %3447 = vmatmul.mubr.f32.gmra.mxu0 %v2535
        %v3448 = vpop.f32.mrf.mxu0
        %v3449 = vadd.f32 %v3288, %v3448
        %v3450 = vpop.f32.mrf.mxu0
        %v3451 = vadd.f32 %v3290, %v3450
        %3452 = vmatprep.mubr.f32.mxu0 %v2540
        %3453 = vmatmul.mubr.f32.gmra.mxu0 %v2539
        %v3454 = vpop.f32.mrf.mxu0
        %v3455 = vadd.f32 %v3294, %v3454
        %v3456 = vpop.f32.mrf.mxu0
        %v3457 = vadd.f32 %v3296, %v3456
        %3458 = vmatprep.mubr.f32.mxu0 %v2544
        %3459 = vmatmul.mubr.f32.gmra.mxu0 %v2543
        %v3460 = vpop.f32.mrf.mxu0
        %v3461 = vadd.f32 %v3300, %v3460
        %v3462 = vpop.f32.mrf.mxu0
        %v3463 = vadd.f32 %v3302, %v3462
        %3464 = vmatprep.mubr.f32.mxu0 %v2548
        %3465 = vmatmul.mubr.f32.gmra.mxu0 %v2547
        %v3466 = vpop.f32.mrf.mxu0
        %v3467 = vadd.f32 %v3306, %v3466
        %v3468 = vpop.f32.mrf.mxu0
        %v3469 = vadd.f32 %v3308, %v3468
        %3470 = vdwg.mxu0
        %3471 = vst [vmem:[#allocation4] sm:$0xff] %v3055
        %3472 = vst [vmem:[#allocation4 + $0x8] sm:$0xff] %v3057
        %3473 = vst [vmem:[#allocation4 + $0x10] sm:$0xff] %v3377
        %3474 = vst [vmem:[#allocation4 + $0x18] sm:$0xff] %v3379
        %3475 = vst [vmem:[#allocation4 + $0x20] sm:$0xff] %v3061
        %3476 = vst [vmem:[#allocation4 + $0x28] sm:$0xff] %v3063
        %3477 = vst [vmem:[#allocation4 + $0x30] sm:$0xff] %v3383
        %3478 = vst [vmem:[#allocation4 + $0x38] sm:$0xff] %v3385
        %3479 = vst [vmem:[#allocation4 + $0x40] sm:$0xff] %v3067
        %3480 = vst [vmem:[#allocation4 + $0x48] sm:$0xff] %v3069
        %3481 = vst [vmem:[#allocation4 + $0x50] sm:$0xff] %v3389
        %3482 = vst [vmem:[#allocation4 + $0x58] sm:$0xff] %v3391
        %3483 = vst [vmem:[#allocation4 + $0x60] sm:$0xff] %v3073
        %3484 = vst [vmem:[#allocation4 + $0x68] sm:$0xff] %v3075
        %3485 = vst [vmem:[#allocation4 + $0x70] sm:$0xff] %v3395
        %3486 = vst [vmem:[#allocation4 + $0x78] sm:$0xff] %v3397
        %3487 = vst [vmem:[#allocation4 + $0x80] sm:$0xff] %v3079
        %3488 = vst [vmem:[#allocation4 + $0x88] sm:$0xff] %v3081
        %3489 = vst [vmem:[#allocation4 + $0x90] sm:$0xff] %v3401
        %3490 = vst [vmem:[#allocation4 + $0x98] sm:$0xff] %v3403
        %3491 = vst [vmem:[#allocation4 + $0xa0] sm:$0xff] %v3085
        %3492 = vst [vmem:[#allocation4 + $0xa8] sm:$0xff] %v3087
        %3493 = vst [vmem:[#allocation4 + $0xb0] sm:$0xff] %v3407
        %3494 = vst [vmem:[#allocation4 + $0xb8] sm:$0xff] %v3409
        %3495 = vst [vmem:[#allocation4 + $0xc0] sm:$0xff] %v3091
        %3496 = vst [vmem:[#allocation4 + $0xc8] sm:$0xff] %v3093
        %3497 = vst [vmem:[#allocation4 + $0xd0] sm:$0xff] %v3413
        %3498 = vst [vmem:[#allocation4 + $0xd8] sm:$0xff] %v3415
        %3499 = vst [vmem:[#allocation4 + $0xe0] sm:$0xff] %v3097
        %3500 = vst [vmem:[#allocation4 + $0xe8] sm:$0xff] %v3099
        %3501 = vst [vmem:[#allocation4 + $0xf0] sm:$0xff] %v3419
        %3502 = vst [vmem:[#allocation4 + $0xf8] sm:$0xff] %v3421
        %3503 = vst [vmem:[#allocation4 + $0x100] sm:$0xff] %v3103
        %3504 = vst [vmem:[#allocation4 + $0x108] sm:$0xff] %v3105
        %3505 = vst [vmem:[#allocation4 + $0x110] sm:$0xff] %v3425
        %3506 = vst [vmem:[#allocation4 + $0x118] sm:$0xff] %v3427
        %3507 = vst [vmem:[#allocation4 + $0x120] sm:$0xff] %v3109
        %3508 = vst [vmem:[#allocation4 + $0x128] sm:$0xff] %v3111
        %3509 = vst [vmem:[#allocation4 + $0x130] sm:$0xff] %v3431
        %3510 = vst [vmem:[#allocation4 + $0x138] sm:$0xff] %v3433
        %3511 = vst [vmem:[#allocation4 + $0x140] sm:$0xff] %v3115
        %3512 = vst [vmem:[#allocation4 + $0x148] sm:$0xff] %v3117
        %3513 = vst [vmem:[#allocation4 + $0x150] sm:$0xff] %v3437
        %3514 = vst [vmem:[#allocation4 + $0x158] sm:$0xff] %v3439
        %3515 = vst [vmem:[#allocation4 + $0x160] sm:$0xff] %v3121
        %3516 = vst [vmem:[#allocation4 + $0x168] sm:$0xff] %v3123
        %3517 = vst [vmem:[#allocation4 + $0x170] sm:$0xff] %v3443
        %3518 = vst [vmem:[#allocation4 + $0x178] sm:$0xff] %v3445
        %3519 = vst [vmem:[#allocation4 + $0x180] sm:$0xff] %v3127
        %3520 = vst [vmem:[#allocation4 + $0x188] sm:$0xff] %v3129
        %3521 = vst [vmem:[#allocation4 + $0x190] sm:$0xff] %v3449
        %3522 = vst [vmem:[#allocation4 + $0x198] sm:$0xff] %v3451
        %3523 = vst [vmem:[#allocation4 + $0x1a0] sm:$0xff] %v3133
        %3524 = vst [vmem:[#allocation4 + $0x1a8] sm:$0xff] %v3135
        %3525 = vst [vmem:[#allocation4 + $0x1b0] sm:$0xff] %v3455
        %3526 = vst [vmem:[#allocation4 + $0x1b8] sm:$0xff] %v3457
        %3527 = vst [vmem:[#allocation4 + $0x1c0] sm:$0xff] %v3139
        %3528 = vst [vmem:[#allocation4 + $0x1c8] sm:$0xff] %v3141
        %3529 = vst [vmem:[#allocation4 + $0x1d0] sm:$0xff] %v3461
        %3530 = vst [vmem:[#allocation4 + $0x1d8] sm:$0xff] %v3463
        %3531 = vst [vmem:[#allocation4 + $0x1e0] sm:$0xff] %v3145
        %3532 = vst [vmem:[#allocation4 + $0x1e8] sm:$0xff] %v3147
        %3533 = vst [vmem:[#allocation4 + $0x1f0] sm:$0xff] %v3467
        %3534 = vst [vmem:[#allocation4 + $0x1f8] sm:$0xff] %v3469
        %v3535 = vld [vmem:[#allocation2] sm:$0xff]
        %v3536 = vld [vmem:[#allocation2 + $0x20] sm:$0xff]
        %v3537 = vld [vmem:[#allocation2 + $0x40] sm:$0xff]
        %v3538 = vld [vmem:[#allocation2 + $0x60] sm:$0xff]
        %v3539 = vld [vmem:[#allocation2 + $0x80] sm:$0xff]
        %v3540 = vld [vmem:[#allocation2 + $0xa0] sm:$0xff]
        %v3541 = vld [vmem:[#allocation2 + $0xc0] sm:$0xff]
        %v3542 = vld [vmem:[#allocation2 + $0xe0] sm:$0xff]
        %v3543 = vld [vmem:[#allocation2 + $0x100] sm:$0xff]
        %v3544 = vld [vmem:[#allocation2 + $0x120] sm:$0xff]
        %v3545 = vld [vmem:[#allocation2 + $0x140] sm:$0xff]
        %v3546 = vld [vmem:[#allocation2 + $0x160] sm:$0xff]
        %v3547 = vld [vmem:[#allocation2 + $0x180] sm:$0xff]
        %v3548 = vld [vmem:[#allocation2 + $0x1a0] sm:$0xff]
        %v3549 = vld [vmem:[#allocation2 + $0x1c0] sm:$0xff]
        %v3550 = vld [vmem:[#allocation2 + $0x1e0] sm:$0xff]
        %v3551 = vld [vmem:[#allocation3] sm:$0xff]
        %v3552 = vld [vmem:[#allocation3 + $0x20] sm:$0xff]
        %v3553 = vld [vmem:[#allocation3 + $0x40] sm:$0xff]
        %v3554 = vld [vmem:[#allocation3 + $0x60] sm:$0xff]
        %v3555 = vld [vmem:[#allocation3 + $0x80] sm:$0xff]
        %v3556 = vld [vmem:[#allocation3 + $0xa0] sm:$0xff]
        %v3557 = vld [vmem:[#allocation3 + $0xc0] sm:$0xff]
        %v3558 = vld [vmem:[#allocation3 + $0xe0] sm:$0xff]
        %v3559 = vld [vmem:[#allocation3 + $0x100] sm:$0xff]
        %v3560 = vld [vmem:[#allocation3 + $0x120] sm:$0xff]
        %v3561 = vld [vmem:[#allocation3 + $0x140] sm:$0xff]
        %v3562 = vld [vmem:[#allocation3 + $0x160] sm:$0xff]
        %v3563 = vld [vmem:[#allocation3 + $0x180] sm:$0xff]
        %v3564 = vld [vmem:[#allocation3 + $0x1a0] sm:$0xff]
        %v3565 = vld [vmem:[#allocation3 + $0x1c0] sm:$0xff]
        %v3566 = vld [vmem:[#allocation3 + $0x1e0] sm:$0xff]
        %v3567 = vld [vmem:[#allocation4] sm:$0xff]
        %v3568 = vld [vmem:[#allocation4 + $0x20] sm:$0xff]
        %v3569 = vld [vmem:[#allocation4 + $0x40] sm:$0xff]
        %v3570 = vld [vmem:[#allocation4 + $0x60] sm:$0xff]
        %v3571 = vld [vmem:[#allocation4 + $0x80] sm:$0xff]
        %v3572 = vld [vmem:[#allocation4 + $0xa0] sm:$0xff]
        %v3573 = vld [vmem:[#allocation4 + $0xc0] sm:$0xff]
        %v3574 = vld [vmem:[#allocation4 + $0xe0] sm:$0xff]
        %v3575 = vld [vmem:[#allocation4 + $0x100] sm:$0xff]
        %v3576 = vld [vmem:[#allocation4 + $0x120] sm:$0xff]
        %v3577 = vld [vmem:[#allocation4 + $0x140] sm:$0xff]
        %v3578 = vld [vmem:[#allocation4 + $0x160] sm:$0xff]
        %v3579 = vld [vmem:[#allocation4 + $0x180] sm:$0xff]
        %v3580 = vld [vmem:[#allocation4 + $0x1a0] sm:$0xff]
        %v3581 = vld [vmem:[#allocation4 + $0x1c0] sm:$0xff]
        %v3582 = vld [vmem:[#allocation4 + $0x1e0] sm:$0xff]
        %vm3583 = vcmask 523264
        %v3585 = vsel %vm3583, %v3535, 0
        %v3588 = vsel %vm3583, %v3536, 0
        %v3591 = vsel %vm3583, %v3537, 0
        %v3594 = vsel %vm3583, %v3538, 0
        %v3597 = vsel %vm3583, %v3539, 0
        %v3600 = vsel %vm3583, %v3540, 0
        %v3603 = vsel %vm3583, %v3541, 0
        %v3606 = vsel %vm3583, %v3542, 0
        %v3609 = vsel %vm3583, %v3543, 0
        %v3612 = vsel %vm3583, %v3544, 0
        %v3615 = vsel %vm3583, %v3545, 0
        %v3618 = vsel %vm3583, %v3546, 0
        %v3621 = vsel %vm3583, %v3547, 0
        %v3624 = vsel %vm3583, %v3548, 0
        %v3627 = vsel %vm3583, %v3549, 0
        %v3630 = vsel %vm3583, %v3550, 0
        %v3633 = vsel %vm3583, %v3551, 0
        %v3636 = vsel %vm3583, %v3552, 0
        %v3639 = vsel %vm3583, %v3553, 0
        %v3642 = vsel %vm3583, %v3554, 0
        %v3645 = vsel %vm3583, %v3555, 0
        %v3648 = vsel %vm3583, %v3556, 0
        %v3651 = vsel %vm3583, %v3557, 0
        %v3654 = vsel %vm3583, %v3558, 0
        %v3657 = vsel %vm3583, %v3559, 0
        %v3660 = vsel %vm3583, %v3560, 0
        %v3663 = vsel %vm3583, %v3561, 0
        %v3666 = vsel %vm3583, %v3562, 0
        %v3669 = vsel %vm3583, %v3563, 0
        %v3672 = vsel %vm3583, %v3564, 0
        %v3675 = vsel %vm3583, %v3565, 0
        %v3678 = vsel %vm3583, %v3566, 0
        %3680 = vmatprep.subr.mxu0 0.0
        %3681 = vmatpush1.xpose.msra.mxu0 %v3678
        %3682 = vmatprep.subr.mxu0 0.0
        %3683 = vmatpush1.xpose.msra.mxu0 %v3675
        %3684 = vmatprep.subr.mxu0 0.0
        %3685 = vmatpush1.xpose.msra.mxu0 %v3672
        %3686 = vmatprep.subr.mxu0 0.0
        %3687 = vmatpush1.xpose.msra.mxu0 %v3669
        %3688 = vmatprep.subr.mxu0 0.0
        %3689 = vmatpush1.xpose.msra.mxu0 %v3666
        %3690 = vmatprep.subr.mxu0 0.0
        %3691 = vmatpush1.xpose.msra.mxu0 %v3663
        %3692 = vmatprep.subr.mxu0 0.0
        %3693 = vmatpush1.xpose.msra.mxu0 %v3660
        %3694 = vmatprep.subr.mxu0 0.0
        %3695 = vmatpush1.xpose.msra.mxu0 %v3657
        %3696 = vmatprep.subr.mxu0 0.0
        %3697 = vmatpush1.xpose.msra.mxu0 %v3654
        %3698 = vmatprep.subr.mxu0 0.0
        %3699 = vmatpush1.xpose.msra.mxu0 %v3651
        %3700 = vmatprep.subr.mxu0 0.0
        %3701 = vmatpush1.xpose.msra.mxu0 %v3648
        %3702 = vmatprep.subr.mxu0 0.0
        %3703 = vmatpush1.xpose.msra.mxu0 %v3645
        %3704 = vmatprep.subr.mxu0 0.0
        %3705 = vmatpush1.xpose.msra.mxu0 %v3642
        %3706 = vmatprep.subr.mxu0 0.0
        %3707 = vmatpush1.xpose.msra.mxu0 %v3639
        %3708 = vmatprep.subr.mxu0 0.0
        %3709 = vmatpush1.xpose.msra.mxu0 %v3636
        %3710 = vmatprep.subr.mxu0 0.0
        %3711 = vmatpush1.xpose.msra.mxu0 %v3633
        %3712 = vmatprep.subr.mxu0 0.0
        %3713 = vmatpush2.xpose.msra.mxu0 0.0
        %3714 = vmatprep.subr.mxu0 0.0
        %3715 = vmatpush2.xpose.msra.mxu0 0.0
        %3716 = vmatprep.subr.mxu0 0.0
        %3717 = vmatpush2.xpose.msra.mxu0 0.0
        %3718 = vmatprep.subr.mxu0 0.0
        %3719 = vmatpush2.xpose.msra.mxu0 0.0
        %3720 = vmatprep.subr.mxu0 0.0
        %3721 = vmatpush2.xpose.msra.mxu0 0.0
        %3722 = vmatprep.subr.mxu0 0.0
        %3723 = vmatpush2.xpose.msra.mxu0 0.0
        %3724 = vmatprep.subr.mxu0 0.0
        %3725 = vmatpush2.xpose.msra.mxu0 0.0
        %3726 = vmatprep.subr.mxu0 0.0
        %3727 = vmatpush2.xpose.msra.mxu0 0.0
        %3728 = vmatprep.subr.mxu0 0.0
        %3729 = vmatpush2.xpose.msra.mxu0 0.0
        %3730 = vmatprep.subr.mxu0 0.0
        %3731 = vmatpush2.xpose.msra.mxu0 0.0
        %3732 = vmatprep.subr.mxu0 0.0
        %3733 = vmatpush2.xpose.msra.mxu0 0.0
        %3734 = vmatprep.subr.mxu0 0.0
        %3735 = vmatpush2.xpose.msra.mxu0 0.0
        %3736 = vmatprep.subr.mxu0 0.0
        %3737 = vmatpush2.xpose.msra.mxu0 0.0
        %3738 = vmatprep.subr.mxu0 0.0
        %3739 = vmatpush2.xpose.msra.mxu0 0.0
        %3740 = vmatprep.subr.mxu0 0.0
        %3741 = vmatpush2.xpose.msra.mxu0 0.0
        %3742 = vmatprep.subr.mxu0 0.0
        %3743 = vmatpush2.xpose.msra.mxu0 0.0
        %3744 = vmatprep.mubr.f32.mxu0 0.0
        %3745 = vmatmul.mubr.f32.gmra.mxu0 %v3585
        %v3746 = vpop.f32.mrf.mxu0
        %v3747 = vadd.f32 0.0, %v3746
        %v3748 = vpop.f32.mrf.mxu0
        %3749 = vmatprep.mubr.f32.mxu0 0.0
        %3750 = vmatmul.mubr.f32.gmra.mxu0 %v3588
        %v3751 = vpop.f32.mrf.mxu0
        %v3752 = vadd.f32 0.0, %v3751
        %v3753 = vpop.f32.mrf.mxu0
        %3754 = vmatprep.mubr.f32.mxu0 0.0
        %3755 = vmatmul.mubr.f32.gmra.mxu0 %v3591
        %v3756 = vpop.f32.mrf.mxu0
        %v3757 = vadd.f32 0.0, %v3756
        %v3758 = vpop.f32.mrf.mxu0
        %3759 = vmatprep.mubr.f32.mxu0 0.0
        %3760 = vmatmul.mubr.f32.gmra.mxu0 %v3594
        %v3761 = vpop.f32.mrf.mxu0
        %v3762 = vadd.f32 0.0, %v3761
        %v3763 = vpop.f32.mrf.mxu0
        %3764 = vmatprep.mubr.f32.mxu0 0.0
        %3765 = vmatmul.mubr.f32.gmra.mxu0 %v3597
        %v3766 = vpop.f32.mrf.mxu0
        %v3767 = vadd.f32 0.0, %v3766
        %v3768 = vpop.f32.mrf.mxu0
        %3769 = vmatprep.mubr.f32.mxu0 0.0
        %3770 = vmatmul.mubr.f32.gmra.mxu0 %v3600
        %v3771 = vpop.f32.mrf.mxu0
        %v3772 = vadd.f32 0.0, %v3771
        %v3773 = vpop.f32.mrf.mxu0
        %3774 = vmatprep.mubr.f32.mxu0 0.0
        %3775 = vmatmul.mubr.f32.gmra.mxu0 %v3603
        %v3776 = vpop.f32.mrf.mxu0
        %v3777 = vadd.f32 0.0, %v3776
        %v3778 = vpop.f32.mrf.mxu0
        %3779 = vmatprep.mubr.f32.mxu0 0.0
        %3780 = vmatmul.mubr.f32.gmra.mxu0 %v3606
        %v3781 = vpop.f32.mrf.mxu0
        %v3782 = vadd.f32 0.0, %v3781
        %v3783 = vpop.f32.mrf.mxu0
        %3784 = vmatprep.mubr.f32.mxu0 0.0
        %3785 = vmatmul.mubr.f32.gmra.mxu0 %v3609
        %v3786 = vpop.f32.mrf.mxu0
        %v3787 = vadd.f32 0.0, %v3786
        %v3788 = vpop.f32.mrf.mxu0
        %3789 = vmatprep.mubr.f32.mxu0 0.0
        %3790 = vmatmul.mubr.f32.gmra.mxu0 %v3612
        %v3791 = vpop.f32.mrf.mxu0
        %v3792 = vadd.f32 0.0, %v3791
        %v3793 = vpop.f32.mrf.mxu0
        %3794 = vmatprep.mubr.f32.mxu0 0.0
        %3795 = vmatmul.mubr.f32.gmra.mxu0 %v3615
        %v3796 = vpop.f32.mrf.mxu0
        %v3797 = vadd.f32 0.0, %v3796
        %v3798 = vpop.f32.mrf.mxu0
        %3799 = vmatprep.mubr.f32.mxu0 0.0
        %3800 = vmatmul.mubr.f32.gmra.mxu0 %v3618
        %v3801 = vpop.f32.mrf.mxu0
        %v3802 = vadd.f32 0.0, %v3801
        %v3803 = vpop.f32.mrf.mxu0
        %3804 = vmatprep.mubr.f32.mxu0 0.0
        %3805 = vmatmul.mubr.f32.gmra.mxu0 %v3621
        %v3806 = vpop.f32.mrf.mxu0
        %v3807 = vadd.f32 0.0, %v3806
        %v3808 = vpop.f32.mrf.mxu0
        %3809 = vmatprep.mubr.f32.mxu0 0.0
        %3810 = vmatmul.mubr.f32.gmra.mxu0 %v3624
        %v3811 = vpop.f32.mrf.mxu0
        %v3812 = vadd.f32 0.0, %v3811
        %v3813 = vpop.f32.mrf.mxu0
        %3814 = vmatprep.mubr.f32.mxu0 0.0
        %3815 = vmatmul.mubr.f32.gmra.mxu0 %v3627
        %v3816 = vpop.f32.mrf.mxu0
        %v3817 = vadd.f32 0.0, %v3816
        %v3818 = vpop.f32.mrf.mxu0
        %3819 = vmatprep.mubr.f32.mxu0 0.0
        %3820 = vmatmul.mubr.f32.gmra.mxu0 %v3630
        %v3821 = vpop.f32.mrf.mxu0
        %v3822 = vadd.f32 0.0, %v3821
        %v3823 = vpop.f32.mrf.mxu0
        %3824 = vdwg.mxu0
        %v3825 = vmul.f32 %v3747, 0.125
        %v3826 = vmul.f32 %v3752, 0.125
        %v3827 = vmul.f32 %v3757, 0.125
        %v3828 = vmul.f32 %v3762, 0.125
        %v3829 = vmul.f32 %v3767, 0.125
        %v3830 = vmul.f32 %v3772, 0.125
        %v3831 = vmul.f32 %v3777, 0.125
        %v3832 = vmul.f32 %v3782, 0.125
        %v3833 = vmul.f32 %v3787, 0.125
        %v3834 = vmul.f32 %v3792, 0.125
        %v3835 = vmul.f32 %v3797, 0.125
        %v3836 = vmul.f32 %v3802, 0.125
        %v3837 = vmul.f32 %v3807, 0.125
        %v3838 = vmul.f32 %v3812, 0.125
        %v3839 = vmul.f32 %v3817, 0.125
        %v3840 = vmul.f32 %v3822, 0.125
        %3841 = vmax.xlane.f32.xlu0 %v3825
        %v3842 = vpop.xlane.xlu0 %3841
        %3843 = vmax.xlane.f32.xlu0 %v3826
        %v3844 = vpop.xlane.xlu0 %3843
        %3845 = vmax.xlane.f32.xlu0 %v3827
        %v3846 = vpop.xlane.xlu0 %3845
        %3847 = vmax.xlane.f32.xlu0 %v3828
        %v3848 = vpop.xlane.xlu0 %3847
        %3849 = vmax.xlane.f32.xlu0 %v3829
        %v3850 = vpop.xlane.xlu0 %3849
        %3851 = vmax.xlane.f32.xlu0 %v3830
        %v3852 = vpop.xlane.xlu0 %3851
        %3853 = vmax.xlane.f32.xlu0 %v3831
        %v3854 = vpop.xlane.xlu0 %3853
        %3855 = vmax.xlane.f32.xlu0 %v3832
        %v3856 = vpop.xlane.xlu0 %3855
        %3857 = vmax.xlane.f32.xlu0 %v3833
        %v3858 = vpop.xlane.xlu0 %3857
        %3859 = vmax.xlane.f32.xlu0 %v3834
        %v3860 = vpop.xlane.xlu0 %3859
        %3861 = vmax.xlane.f32.xlu0 %v3835
        %v3862 = vpop.xlane.xlu0 %3861
        %3863 = vmax.xlane.f32.xlu0 %v3836
        %v3864 = vpop.xlane.xlu0 %3863
        %3865 = vmax.xlane.f32.xlu0 %v3837
        %v3866 = vpop.xlane.xlu0 %3865
        %3867 = vmax.xlane.f32.xlu0 %v3838
        %v3868 = vpop.xlane.xlu0 %3867
        %3869 = vmax.xlane.f32.xlu0 %v3839
        %v3870 = vpop.xlane.xlu0 %3869
        %3871 = vmax.xlane.f32.xlu0 %v3840
        %v3872 = vpop.xlane.xlu0 %3871
        %v3873 = vsub.f32 %v3825, %v3842
        %v3874 = vsub.f32 %v3826, %v3844
        %v3875 = vsub.f32 %v3827, %v3846
        %v3876 = vsub.f32 %v3828, %v3848
        %v3877 = vsub.f32 %v3829, %v3850
        %v3878 = vsub.f32 %v3830, %v3852
        %v3879 = vsub.f32 %v3831, %v3854
        %v3880 = vsub.f32 %v3832, %v3856
        %v3881 = vsub.f32 %v3833, %v3858
        %v3882 = vsub.f32 %v3834, %v3860
        %v3883 = vsub.f32 %v3835, %v3862
        %v3884 = vsub.f32 %v3836, %v3864
        %v3885 = vsub.f32 %v3837, %v3866
        %v3886 = vsub.f32 %v3838, %v3868
        %v3887 = vsub.f32 %v3839, %v3870
        %v3888 = vsub.f32 %v3840, %v3872
        %v3889 = vmul.f32 %v3873, 1.442695
        %v3890 = vpow.pop %v3889
        %v3891 = vmul.f32 %v3874, 1.442695
        %v3892 = vpow.pop %v3891
        %v3893 = vmul.f32 %v3875, 1.442695
        %v3894 = vpow.pop %v3893
        %v3895 = vmul.f32 %v3876, 1.442695
        %v3896 = vpow.pop %v3895
        %v3897 = vmul.f32 %v3877, 1.442695
        %v3898 = vpow.pop %v3897
        %v3899 = vmul.f32 %v3878, 1.442695
        %v3900 = vpow.pop %v3899
        %v3901 = vmul.f32 %v3879, 1.442695
        %v3902 = vpow.pop %v3901
        %v3903 = vmul.f32 %v3880, 1.442695
        %v3904 = vpow.pop %v3903
        %v3905 = vmul.f32 %v3881, 1.442695
        %v3906 = vpow.pop %v3905
        %v3907 = vmul.f32 %v3882, 1.442695
        %v3908 = vpow.pop %v3907
        %v3909 = vmul.f32 %v3883, 1.442695
        %v3910 = vpow.pop %v3909
        %v3911 = vmul.f32 %v3884, 1.442695
        %v3912 = vpow.pop %v3911
        %v3913 = vmul.f32 %v3885, 1.442695
        %v3914 = vpow.pop %v3913
        %v3915 = vmul.f32 %v3886, 1.442695
        %v3916 = vpow.pop %v3915
        %v3917 = vmul.f32 %v3887, 1.442695
        %v3918 = vpow.pop %v3917
        %v3919 = vmul.f32 %v3888, 1.442695
        %v3920 = vpow.pop %v3919
        %3921 = vadd.xlane.f32.xlu0 %v3890
        %v3922 = vpop.xlane.xlu0 %3921
        %3923 = vadd.xlane.f32.xlu0 %v3892
        %v3924 = vpop.xlane.xlu0 %3923
        %3925 = vadd.xlane.f32.xlu0 %v3894
        %v3926 = vpop.xlane.xlu0 %3925
        %3927 = vadd.xlane.f32.xlu0 %v3896
        %v3928 = vpop.xlane.xlu0 %3927
        %3929 = vadd.xlane.f32.xlu0 %v3898
        %v3930 = vpop.xlane.xlu0 %3929
        %3931 = vadd.xlane.f32.xlu0 %v3900
        %v3932 = vpop.xlane.xlu0 %3931
        %3933 = vadd.xlane.f32.xlu0 %v3902
        %v3934 = vpop.xlane.xlu0 %3933
        %3935 = vadd.xlane.f32.xlu0 %v3904
        %v3936 = vpop.xlane.xlu0 %3935
        %3937 = vadd.xlane.f32.xlu0 %v3906
        %v3938 = vpop.xlane.xlu0 %3937
        %3939 = vadd.xlane.f32.xlu0 %v3908
        %v3940 = vpop.xlane.xlu0 %3939
        %3941 = vadd.xlane.f32.xlu0 %v3910
        %v3942 = vpop.xlane.xlu0 %3941
        %3943 = vadd.xlane.f32.xlu0 %v3912
        %v3944 = vpop.xlane.xlu0 %3943
        %3945 = vadd.xlane.f32.xlu0 %v3914
        %v3946 = vpop.xlane.xlu0 %3945
        %3947 = vadd.xlane.f32.xlu0 %v3916
        %v3948 = vpop.xlane.xlu0 %3947
        %3949 = vadd.xlane.f32.xlu0 %v3918
        %v3950 = vpop.xlane.xlu0 %3949
        %3951 = vadd.xlane.f32.xlu0 %v3920
        %v3952 = vpop.xlane.xlu0 %3951
        %v3953 = vrcp.pop %v3922
        %v3954 = vrcp.pop %v3924
        %v3955 = vrcp.pop %v3926
        %v3956 = vrcp.pop %v3928
        %v3957 = vrcp.pop %v3930
        %v3958 = vrcp.pop %v3932
        %v3959 = vrcp.pop %v3934
        %v3960 = vrcp.pop %v3936
        %v3961 = vrcp.pop %v3938
        %v3962 = vrcp.pop %v3940
        %v3963 = vrcp.pop %v3942
        %v3964 = vrcp.pop %v3944
        %v3965 = vrcp.pop %v3946
        %v3966 = vrcp.pop %v3948
        %v3967 = vrcp.pop %v3950
        %v3968 = vrcp.pop %v3952
        %v3969 = vmul.f32 %v3890, %v3953
        %v3970 = vmul.f32 %v3892, %v3954
        %v3971 = vmul.f32 %v3894, %v3955
        %v3972 = vmul.f32 %v3896, %v3956
        %v3973 = vmul.f32 %v3898, %v3957
        %v3974 = vmul.f32 %v3900, %v3958
        %v3975 = vmul.f32 %v3902, %v3959
        %v3976 = vmul.f32 %v3904, %v3960
        %v3977 = vmul.f32 %v3906, %v3961
        %v3978 = vmul.f32 %v3908, %v3962
        %v3979 = vmul.f32 %v3910, %v3963
        %v3980 = vmul.f32 %v3912, %v3964
        %v3981 = vmul.f32 %v3914, %v3965
        %v3982 = vmul.f32 %v3916, %v3966
        %v3983 = vmul.f32 %v3918, %v3967
        %v3984 = vmul.f32 %v3920, %v3968
        %3985 = vst [vmem:[%s384] sm:$0xff] %v3969
        %3986 = vst [vmem:[%s384 + $0x8] sm:$0xff] %v3970
        %3987 = vst [vmem:[%s384 + $0x10] sm:$0xff] %v3971
        %3988 = vst [vmem:[%s384 + $0x18] sm:$0xff] %v3972
        %3989 = vst [vmem:[%s384 + $0x20] sm:$0xff] %v3973
        %3990 = vst [vmem:[%s384 + $0x28] sm:$0xff] %v3974
        %3991 = vst [vmem:[%s384 + $0x30] sm:$0xff] %v3975
        %3992 = vst [vmem:[%s384 + $0x38] sm:$0xff] %v3976
        %3993 = vst [vmem:[%s384 + $0x40] sm:$0xff] %v3977
        %3994 = vst [vmem:[%s384 + $0x48] sm:$0xff] %v3978
        %3995 = vst [vmem:[%s384 + $0x50] sm:$0xff] %v3979
        %3996 = vst [vmem:[%s384 + $0x58] sm:$0xff] %v3980
        %3997 = vst [vmem:[%s384 + $0x60] sm:$0xff] %v3981
        %3998 = vst [vmem:[%s384 + $0x68] sm:$0xff] %v3982
        %3999 = vst [vmem:[%s384 + $0x70] sm:$0xff] %v3983
        %4000 = vst [vmem:[%s384 + $0x78] sm:$0xff] %v3984
        %4001 = vmatprep.subr.mxu0 0.0
        %4002 = vmatpush1.msra.mxu0 %v3582
        %4003 = vmatprep.subr.mxu0 0.0
        %4004 = vmatpush1.msra.mxu0 %v3581
        %4005 = vmatprep.subr.mxu0 0.0
        %4006 = vmatpush1.msra.mxu0 %v3580
        %4007 = vmatprep.subr.mxu0 0.0
        %4008 = vmatpush1.msra.mxu0 %v3579
        %4009 = vmatprep.subr.mxu0 0.0
        %4010 = vmatpush1.msra.mxu0 %v3578
        %4011 = vmatprep.subr.mxu0 0.0
        %4012 = vmatpush1.msra.mxu0 %v3577
        %4013 = vmatprep.subr.mxu0 0.0
        %4014 = vmatpush1.msra.mxu0 %v3576
        %4015 = vmatprep.subr.mxu0 0.0
        %4016 = vmatpush1.msra.mxu0 %v3575
        %4017 = vmatprep.subr.mxu0 0.0
        %4018 = vmatpush1.msra.mxu0 %v3574
        %4019 = vmatprep.subr.mxu0 0.0
        %4020 = vmatpush1.msra.mxu0 %v3573
        %4021 = vmatprep.subr.mxu0 0.0
        %4022 = vmatpush1.msra.mxu0 %v3572
        %4023 = vmatprep.subr.mxu0 0.0
        %4024 = vmatpush1.msra.mxu0 %v3571
        %4025 = vmatprep.subr.mxu0 0.0
        %4026 = vmatpush1.msra.mxu0 %v3570
        %4027 = vmatprep.subr.mxu0 0.0
        %4028 = vmatpush1.msra.mxu0 %v3569
        %4029 = vmatprep.subr.mxu0 0.0
        %4030 = vmatpush1.msra.mxu0 %v3568
        %4031 = vmatprep.subr.mxu0 0.0
        %4032 = vmatpush1.msra.mxu0 %v3567
        %4033 = vmatprep.subr.mxu0 0.0
        %4034 = vmatpush2.msra.mxu0 0.0
        %4035 = vmatprep.subr.mxu0 0.0
        %4036 = vmatpush2.msra.mxu0 0.0
        %4037 = vmatprep.subr.mxu0 0.0
        %4038 = vmatpush2.msra.mxu0 0.0
        %4039 = vmatprep.subr.mxu0 0.0
        %4040 = vmatpush2.msra.mxu0 0.0
        %4041 = vmatprep.subr.mxu0 0.0
        %4042 = vmatpush2.msra.mxu0 0.0
        %4043 = vmatprep.subr.mxu0 0.0
        %4044 = vmatpush2.msra.mxu0 0.0
        %4045 = vmatprep.subr.mxu0 0.0
        %4046 = vmatpush2.msra.mxu0 0.0
        %4047 = vmatprep.subr.mxu0 0.0
        %4048 = vmatpush2.msra.mxu0 0.0
        %4049 = vmatprep.subr.mxu0 0.0
        %4050 = vmatpush2.msra.mxu0 0.0
        %4051 = vmatprep.subr.mxu0 0.0
        %4052 = vmatpush2.msra.mxu0 0.0
        %4053 = vmatprep.subr.mxu0 0.0
        %4054 = vmatpush2.msra.mxu0 0.0
        %4055 = vmatprep.subr.mxu0 0.0
        %4056 = vmatpush2.msra.mxu0 0.0
        %4057 = vmatprep.subr.mxu0 0.0
        %4058 = vmatpush2.msra.mxu0 0.0
        %4059 = vmatprep.subr.mxu0 0.0
        %4060 = vmatpush2.msra.mxu0 0.0
        %4061 = vmatprep.subr.mxu0 0.0
        %4062 = vmatpush2.msra.mxu0 0.0
        %4063 = vmatprep.subr.mxu0 0.0
        %4064 = vmatpush2.msra.mxu0 0.0
        %4065 = vmatprep.mubr.f32.mxu0 0.0
        %4066 = vmatmul.mubr.f32.gmra.mxu0 %v3969
        %v4067 = vpop.f32.mrf.mxu0
        %v4068 = vadd.f32 0.0, %v4067
        %v4069 = vpop.f32.mrf.mxu0
        %4070 = vmatprep.mubr.f32.mxu0 0.0
        %4071 = vmatmul.mubr.f32.gmra.mxu0 %v3970
        %v4072 = vpop.f32.mrf.mxu0
        %v4073 = vadd.f32 0.0, %v4072
        %v4074 = vpop.f32.mrf.mxu0
        %4075 = vmatprep.mubr.f32.mxu0 0.0
        %4076 = vmatmul.mubr.f32.gmra.mxu0 %v3971
        %v4077 = vpop.f32.mrf.mxu0
        %v4078 = vadd.f32 0.0, %v4077
        %v4079 = vpop.f32.mrf.mxu0
        %4080 = vmatprep.mubr.f32.mxu0 0.0
        %4081 = vmatmul.mubr.f32.gmra.mxu0 %v3972
        %v4082 = vpop.f32.mrf.mxu0
        %v4083 = vadd.f32 0.0, %v4082
        %v4084 = vpop.f32.mrf.mxu0
        %4085 = vmatprep.mubr.f32.mxu0 0.0
        %4086 = vmatmul.mubr.f32.gmra.mxu0 %v3973
        %v4087 = vpop.f32.mrf.mxu0
        %v4088 = vadd.f32 0.0, %v4087
        %v4089 = vpop.f32.mrf.mxu0
        %4090 = vmatprep.mubr.f32.mxu0 0.0
        %4091 = vmatmul.mubr.f32.gmra.mxu0 %v3974
        %v4092 = vpop.f32.mrf.mxu0
        %v4093 = vadd.f32 0.0, %v4092
        %v4094 = vpop.f32.mrf.mxu0
        %4095 = vmatprep.mubr.f32.mxu0 0.0
        %4096 = vmatmul.mubr.f32.gmra.mxu0 %v3975
        %v4097 = vpop.f32.mrf.mxu0
        %v4098 = vadd.f32 0.0, %v4097
        %v4099 = vpop.f32.mrf.mxu0
        %4100 = vmatprep.mubr.f32.mxu0 0.0
        %4101 = vmatmul.mubr.f32.gmra.mxu0 %v3976
        %v4102 = vpop.f32.mrf.mxu0
        %v4103 = vadd.f32 0.0, %v4102
        %v4104 = vpop.f32.mrf.mxu0
        %4105 = vmatprep.mubr.f32.mxu0 0.0
        %4106 = vmatmul.mubr.f32.gmra.mxu0 %v3977
        %v4107 = vpop.f32.mrf.mxu0
        %v4108 = vadd.f32 0.0, %v4107
        %v4109 = vpop.f32.mrf.mxu0
        %4110 = vmatprep.mubr.f32.mxu0 0.0
        %4111 = vmatmul.mubr.f32.gmra.mxu0 %v3978
        %v4112 = vpop.f32.mrf.mxu0
        %v4113 = vadd.f32 0.0, %v4112
        %v4114 = vpop.f32.mrf.mxu0
        %4115 = vmatprep.mubr.f32.mxu0 0.0
        %4116 = vmatmul.mubr.f32.gmra.mxu0 %v3979
        %v4117 = vpop.f32.mrf.mxu0
        %v4118 = vadd.f32 0.0, %v4117
        %v4119 = vpop.f32.mrf.mxu0
        %4120 = vmatprep.mubr.f32.mxu0 0.0
        %4121 = vmatmul.mubr.f32.gmra.mxu0 %v3980
        %v4122 = vpop.f32.mrf.mxu0
        %v4123 = vadd.f32 0.0, %v4122
        %v4124 = vpop.f32.mrf.mxu0
        %4125 = vmatprep.mubr.f32.mxu0 0.0
        %4126 = vmatmul.mubr.f32.gmra.mxu0 %v3981
        %v4127 = vpop.f32.mrf.mxu0
        %v4128 = vadd.f32 0.0, %v4127
        %v4129 = vpop.f32.mrf.mxu0
        %4130 = vmatprep.mubr.f32.mxu0 0.0
        %4131 = vmatmul.mubr.f32.gmra.mxu0 %v3982
        %v4132 = vpop.f32.mrf.mxu0
        %v4133 = vadd.f32 0.0, %v4132
        %v4134 = vpop.f32.mrf.mxu0
        %4135 = vmatprep.mubr.f32.mxu0 0.0
        %4136 = vmatmul.mubr.f32.gmra.mxu0 %v3983
        %v4137 = vpop.f32.mrf.mxu0
        %v4138 = vadd.f32 0.0, %v4137
        %v4139 = vpop.f32.mrf.mxu0
        %4140 = vmatprep.mubr.f32.mxu0 0.0
        %4141 = vmatmul.mubr.f32.gmra.mxu0 %v3984
        %v4142 = vpop.f32.mrf.mxu0
        %v4143 = vadd.f32 0.0, %v4142
        %v4144 = vpop.f32.mrf.mxu0
        %4145 = vdwg.mxu0
        %4146 = vst.msk [vmem:[%s377] sm:$0xff] %vm3583, %v4068
        %4147 = vst.msk [vmem:[%s377 + $0x20] sm:$0xff] %vm3583, %v4073
        %4148 = vst.msk [vmem:[%s377 + $0x40] sm:$0xff] %vm3583, %v4078
        %4149 = vst.msk [vmem:[%s377 + $0x60] sm:$0xff] %vm3583, %v4083
        %4150 = vst.msk [vmem:[%s377 + $0x80] sm:$0xff] %vm3583, %v4088
        %4151 = vst.msk [vmem:[%s377 + $0xa0] sm:$0xff] %vm3583, %v4093
        %4152 = vst.msk [vmem:[%s377 + $0xc0] sm:$0xff] %vm3583, %v4098
        %4153 = vst.msk [vmem:[%s377 + $0xe0] sm:$0xff] %vm3583, %v4103
        %4154 = vst.msk [vmem:[%s377 + $0x100] sm:$0xff] %vm3583, %v4108
        %4155 = vst.msk [vmem:[%s377 + $0x120] sm:$0xff] %vm3583, %v4113
        %4156 = vst.msk [vmem:[%s377 + $0x140] sm:$0xff] %vm3583, %v4118
        %4157 = vst.msk [vmem:[%s377 + $0x160] sm:$0xff] %vm3583, %v4123
        %4158 = vst.msk [vmem:[%s377 + $0x180] sm:$0xff] %vm3583, %v4128
        %4159 = vst.msk [vmem:[%s377 + $0x1a0] sm:$0xff] %vm3583, %v4133
        %4160 = vst.msk [vmem:[%s377 + $0x1c0] sm:$0xff] %vm3583, %v4138
        %4161 = vst.msk [vmem:[%s377 + $0x1e0] sm:$0xff] %vm3583, %v4143
        %v4162 = vld [vmem:[#allocation2] sm:$0xff]
        %v4163 = vld [vmem:[#allocation2 + $0x20] sm:$0xff]
        %v4164 = vld [vmem:[#allocation2 + $0x40] sm:$0xff]
        %v4165 = vld [vmem:[#allocation2 + $0x60] sm:$0xff]
        %v4166 = vld [vmem:[#allocation2 + $0x80] sm:$0xff]
        %v4167 = vld [vmem:[#allocation2 + $0xa0] sm:$0xff]
        %v4168 = vld [vmem:[#allocation2 + $0xc0] sm:$0xff]
        %v4169 = vld [vmem:[#allocation2 + $0xe0] sm:$0xff]
        %v4170 = vld [vmem:[#allocation2 + $0x100] sm:$0xff]
        %v4171 = vld [vmem:[#allocation2 + $0x120] sm:$0xff]
        %v4172 = vld [vmem:[#allocation2 + $0x140] sm:$0xff]
        %v4173 = vld [vmem:[#allocation2 + $0x160] sm:$0xff]
        %v4174 = vld [vmem:[#allocation2 + $0x180] sm:$0xff]
        %v4175 = vld [vmem:[#allocation2 + $0x1a0] sm:$0xff]
        %v4176 = vld [vmem:[#allocation2 + $0x1c0] sm:$0xff]
        %v4177 = vld [vmem:[#allocation2 + $0x1e0] sm:$0xff]
        %v4178 = vld [vmem:[#allocation3] sm:$0xff]
        %v4179 = vld [vmem:[#allocation3 + $0x20] sm:$0xff]
        %v4180 = vld [vmem:[#allocation3 + $0x40] sm:$0xff]
        %v4181 = vld [vmem:[#allocation3 + $0x60] sm:$0xff]
        %v4182 = vld [vmem:[#allocation3 + $0x80] sm:$0xff]
        %v4183 = vld [vmem:[#allocation3 + $0xa0] sm:$0xff]
        %v4184 = vld [vmem:[#allocation3 + $0xc0] sm:$0xff]
        %v4185 = vld [vmem:[#allocation3 + $0xe0] sm:$0xff]
        %v4186 = vld [vmem:[#allocation3 + $0x100] sm:$0xff]
        %v4187 = vld [vmem:[#allocation3 + $0x120] sm:$0xff]
        %v4188 = vld [vmem:[#allocation3 + $0x140] sm:$0xff]
        %v4189 = vld [vmem:[#allocation3 + $0x160] sm:$0xff]
        %v4190 = vld [vmem:[#allocation3 + $0x180] sm:$0xff]
        %v4191 = vld [vmem:[#allocation3 + $0x1a0] sm:$0xff]
        %v4192 = vld [vmem:[#allocation3 + $0x1c0] sm:$0xff]
        %v4193 = vld [vmem:[#allocation3 + $0x1e0] sm:$0xff]
        %v4194 = vld [vmem:[#allocation4] sm:$0xff]
        %v4195 = vld [vmem:[#allocation4 + $0x20] sm:$0xff]
        %v4196 = vld [vmem:[#allocation4 + $0x40] sm:$0xff]
        %v4197 = vld [vmem:[#allocation4 + $0x60] sm:$0xff]
        %v4198 = vld [vmem:[#allocation4 + $0x80] sm:$0xff]
        %v4199 = vld [vmem:[#allocation4 + $0xa0] sm:$0xff]
        %v4200 = vld [vmem:[#allocation4 + $0xc0] sm:$0xff]
        %v4201 = vld [vmem:[#allocation4 + $0xe0] sm:$0xff]
        %v4202 = vld [vmem:[#allocation4 + $0x100] sm:$0xff]
        %v4203 = vld [vmem:[#allocation4 + $0x120] sm:$0xff]
        %v4204 = vld [vmem:[#allocation4 + $0x140] sm:$0xff]
        %v4205 = vld [vmem:[#allocation4 + $0x160] sm:$0xff]
        %v4206 = vld [vmem:[#allocation4 + $0x180] sm:$0xff]
        %v4207 = vld [vmem:[#allocation4 + $0x1a0] sm:$0xff]
        %v4208 = vld [vmem:[#allocation4 + $0x1c0] sm:$0xff]
        %v4209 = vld [vmem:[#allocation4 + $0x1e0] sm:$0xff]
        %4226 = vrot.lane.b32.xlu0 %v4162, 64
        %v4227 = vpop.permute.xlu0 %4226
        %4228 = vrot.lane.b32.xlu0 %v4163, 64
        %v4229 = vpop.permute.xlu0 %4228
        %4230 = vrot.lane.b32.xlu0 %v4164, 64
        %v4231 = vpop.permute.xlu0 %4230
        %4232 = vrot.lane.b32.xlu0 %v4165, 64
        %v4233 = vpop.permute.xlu0 %4232
        %4234 = vrot.lane.b32.xlu0 %v4166, 64
        %v4235 = vpop.permute.xlu0 %4234
        %4236 = vrot.lane.b32.xlu0 %v4167, 64
        %v4237 = vpop.permute.xlu0 %4236
        %4238 = vrot.lane.b32.xlu0 %v4168, 64
        %v4239 = vpop.permute.xlu0 %4238
        %4240 = vrot.lane.b32.xlu0 %v4169, 64
        %v4241 = vpop.permute.xlu0 %4240
        %4242 = vrot.lane.b32.xlu0 %v4170, 64
        %v4243 = vpop.permute.xlu0 %4242
        %4244 = vrot.lane.b32.xlu0 %v4171, 64
        %v4245 = vpop.permute.xlu0 %4244
        %4246 = vrot.lane.b32.xlu0 %v4172, 64
        %v4247 = vpop.permute.xlu0 %4246
        %4248 = vrot.lane.b32.xlu0 %v4173, 64
        %v4249 = vpop.permute.xlu0 %4248
        %4250 = vrot.lane.b32.xlu0 %v4174, 64
        %v4251 = vpop.permute.xlu0 %4250
        %4252 = vrot.lane.b32.xlu0 %v4175, 64
        %v4253 = vpop.permute.xlu0 %4252
        %4254 = vrot.lane.b32.xlu0 %v4176, 64
        %v4255 = vpop.permute.xlu0 %4254
        %4256 = vrot.lane.b32.xlu0 %v4177, 64
        %v4257 = vpop.permute.xlu0 %4256
        %4274 = vrot.lane.b32.xlu0 %v4178, 64
        %v4275 = vpop.permute.xlu0 %4274
        %4276 = vrot.lane.b32.xlu0 %v4179, 64
        %v4277 = vpop.permute.xlu0 %4276
        %4278 = vrot.lane.b32.xlu0 %v4180, 64
        %v4279 = vpop.permute.xlu0 %4278
        %4280 = vrot.lane.b32.xlu0 %v4181, 64
        %v4281 = vpop.permute.xlu0 %4280
        %4282 = vrot.lane.b32.xlu0 %v4182, 64
        %v4283 = vpop.permute.xlu0 %4282
        %4284 = vrot.lane.b32.xlu0 %v4183, 64
        %v4285 = vpop.permute.xlu0 %4284
        %4286 = vrot.lane.b32.xlu0 %v4184, 64
        %v4287 = vpop.permute.xlu0 %4286
        %4288 = vrot.lane.b32.xlu0 %v4185, 64
        %v4289 = vpop.permute.xlu0 %4288
        %4290 = vrot.lane.b32.xlu0 %v4186, 64
        %v4291 = vpop.permute.xlu0 %4290
        %4292 = vrot.lane.b32.xlu0 %v4187, 64
        %v4293 = vpop.permute.xlu0 %4292
        %4294 = vrot.lane.b32.xlu0 %v4188, 64
        %v4295 = vpop.permute.xlu0 %4294
        %4296 = vrot.lane.b32.xlu0 %v4189, 64
        %v4297 = vpop.permute.xlu0 %4296
        %4298 = vrot.lane.b32.xlu0 %v4190, 64
        %v4299 = vpop.permute.xlu0 %4298
        %4300 = vrot.lane.b32.xlu0 %v4191, 64
        %v4301 = vpop.permute.xlu0 %4300
        %4302 = vrot.lane.b32.xlu0 %v4192, 64
        %v4303 = vpop.permute.xlu0 %4302
        %4304 = vrot.lane.b32.xlu0 %v4193, 64
        %v4305 = vpop.permute.xlu0 %4304
        %v4306 = vsel %vm3583, %v4227, 0
        %v4308 = vsel %vm3583, %v4229, 0
        %v4310 = vsel %vm3583, %v4231, 0
        %v4312 = vsel %vm3583, %v4233, 0
        %v4314 = vsel %vm3583, %v4235, 0
        %v4316 = vsel %vm3583, %v4237, 0
        %v4318 = vsel %vm3583, %v4239, 0
        %v4320 = vsel %vm3583, %v4241, 0
        %v4322 = vsel %vm3583, %v4243, 0
        %v4324 = vsel %vm3583, %v4245, 0
        %v4326 = vsel %vm3583, %v4247, 0
        %v4328 = vsel %vm3583, %v4249, 0
        %v4330 = vsel %vm3583, %v4251, 0
        %v4332 = vsel %vm3583, %v4253, 0
        %v4334 = vsel %vm3583, %v4255, 0
        %v4336 = vsel %vm3583, %v4257, 0
        %v4338 = vsel %vm3583, %v4275, 0
        %v4340 = vsel %vm3583, %v4277, 0
        %v4342 = vsel %vm3583, %v4279, 0
        %v4344 = vsel %vm3583, %v4281, 0
        %v4346 = vsel %vm3583, %v4283, 0
        %v4348 = vsel %vm3583, %v4285, 0
        %v4350 = vsel %vm3583, %v4287, 0
        %v4352 = vsel %vm3583, %v4289, 0
        %v4354 = vsel %vm3583, %v4291, 0
        %v4356 = vsel %vm3583, %v4293, 0
        %v4358 = vsel %vm3583, %v4295, 0
        %v4360 = vsel %vm3583, %v4297, 0
        %v4362 = vsel %vm3583, %v4299, 0
        %v4364 = vsel %vm3583, %v4301, 0
        %v4366 = vsel %vm3583, %v4303, 0
        %v4368 = vsel %vm3583, %v4305, 0
        %4370 = vmatprep.subr.mxu0 0.0
        %4371 = vmatpush1.xpose.msra.mxu0 %v4368
        %4372 = vmatprep.subr.mxu0 0.0
        %4373 = vmatpush1.xpose.msra.mxu0 %v4366
        %4374 = vmatprep.subr.mxu0 0.0
        %4375 = vmatpush1.xpose.msra.mxu0 %v4364
        %4376 = vmatprep.subr.mxu0 0.0
        %4377 = vmatpush1.xpose.msra.mxu0 %v4362
        %4378 = vmatprep.subr.mxu0 0.0
        %4379 = vmatpush1.xpose.msra.mxu0 %v4360
        %4380 = vmatprep.subr.mxu0 0.0
        %4381 = vmatpush1.xpose.msra.mxu0 %v4358
        %4382 = vmatprep.subr.mxu0 0.0
        %4383 = vmatpush1.xpose.msra.mxu0 %v4356
        %4384 = vmatprep.subr.mxu0 0.0
        %4385 = vmatpush1.xpose.msra.mxu0 %v4354
        %4386 = vmatprep.subr.mxu0 0.0
        %4387 = vmatpush1.xpose.msra.mxu0 %v4352
        %4388 = vmatprep.subr.mxu0 0.0
        %4389 = vmatpush1.xpose.msra.mxu0 %v4350
        %4390 = vmatprep.subr.mxu0 0.0
        %4391 = vmatpush1.xpose.msra.mxu0 %v4348
        %4392 = vmatprep.subr.mxu0 0.0
        %4393 = vmatpush1.xpose.msra.mxu0 %v4346
        %4394 = vmatprep.subr.mxu0 0.0
        %4395 = vmatpush1.xpose.msra.mxu0 %v4344
        %4396 = vmatprep.subr.mxu0 0.0
        %4397 = vmatpush1.xpose.msra.mxu0 %v4342
        %4398 = vmatprep.subr.mxu0 0.0
        %4399 = vmatpush1.xpose.msra.mxu0 %v4340
        %4400 = vmatprep.subr.mxu0 0.0
        %4401 = vmatpush1.xpose.msra.mxu0 %v4338
        %4402 = vmatprep.subr.mxu0 0.0
        %4403 = vmatpush2.xpose.msra.mxu0 0.0
        %4404 = vmatprep.subr.mxu0 0.0
        %4405 = vmatpush2.xpose.msra.mxu0 0.0
        %4406 = vmatprep.subr.mxu0 0.0
        %4407 = vmatpush2.xpose.msra.mxu0 0.0
        %4408 = vmatprep.subr.mxu0 0.0
        %4409 = vmatpush2.xpose.msra.mxu0 0.0
        %4410 = vmatprep.subr.mxu0 0.0
        %4411 = vmatpush2.xpose.msra.mxu0 0.0
        %4412 = vmatprep.subr.mxu0 0.0
        %4413 = vmatpush2.xpose.msra.mxu0 0.0
        %4414 = vmatprep.subr.mxu0 0.0
        %4415 = vmatpush2.xpose.msra.mxu0 0.0
        %4416 = vmatprep.subr.mxu0 0.0
        %4417 = vmatpush2.xpose.msra.mxu0 0.0
        %4418 = vmatprep.subr.mxu0 0.0
        %4419 = vmatpush2.xpose.msra.mxu0 0.0
        %4420 = vmatprep.subr.mxu0 0.0
        %4421 = vmatpush2.xpose.msra.mxu0 0.0
        %4422 = vmatprep.subr.mxu0 0.0
        %4423 = vmatpush2.xpose.msra.mxu0 0.0
        %4424 = vmatprep.subr.mxu0 0.0
        %4425 = vmatpush2.xpose.msra.mxu0 0.0
        %4426 = vmatprep.subr.mxu0 0.0
        %4427 = vmatpush2.xpose.msra.mxu0 0.0
        %4428 = vmatprep.subr.mxu0 0.0
        %4429 = vmatpush2.xpose.msra.mxu0 0.0
        %4430 = vmatprep.subr.mxu0 0.0
        %4431 = vmatpush2.xpose.msra.mxu0 0.0
        %4432 = vmatprep.subr.mxu0 0.0
        %4433 = vmatpush2.xpose.msra.mxu0 0.0
        %4434 = vmatprep.mubr.f32.mxu0 0.0
        %4435 = vmatmul.mubr.f32.gmra.mxu0 %v4306
        %v4436 = vpop.f32.mrf.mxu0
        %v4437 = vadd.f32 0.0, %v4436
        %v4438 = vpop.f32.mrf.mxu0
        %4439 = vmatprep.mubr.f32.mxu0 0.0
        %4440 = vmatmul.mubr.f32.gmra.mxu0 %v4308
        %v4441 = vpop.f32.mrf.mxu0
        %v4442 = vadd.f32 0.0, %v4441
        %v4443 = vpop.f32.mrf.mxu0
        %4444 = vmatprep.mubr.f32.mxu0 0.0
        %4445 = vmatmul.mubr.f32.gmra.mxu0 %v4310
        %v4446 = vpop.f32.mrf.mxu0
        %v4447 = vadd.f32 0.0, %v4446
        %v4448 = vpop.f32.mrf.mxu0
        %4449 = vmatprep.mubr.f32.mxu0 0.0
        %4450 = vmatmul.mubr.f32.gmra.mxu0 %v4312
        %v4451 = vpop.f32.mrf.mxu0
        %v4452 = vadd.f32 0.0, %v4451
        %v4453 = vpop.f32.mrf.mxu0
        %4454 = vmatprep.mubr.f32.mxu0 0.0
        %4455 = vmatmul.mubr.f32.gmra.mxu0 %v4314
        %v4456 = vpop.f32.mrf.mxu0
        %v4457 = vadd.f32 0.0, %v4456
        %v4458 = vpop.f32.mrf.mxu0
        %4459 = vmatprep.mubr.f32.mxu0 0.0
        %4460 = vmatmul.mubr.f32.gmra.mxu0 %v4316
        %v4461 = vpop.f32.mrf.mxu0
        %v4462 = vadd.f32 0.0, %v4461
        %v4463 = vpop.f32.mrf.mxu0
        %4464 = vmatprep.mubr.f32.mxu0 0.0
        %4465 = vmatmul.mubr.f32.gmra.mxu0 %v4318
        %v4466 = vpop.f32.mrf.mxu0
        %v4467 = vadd.f32 0.0, %v4466
        %v4468 = vpop.f32.mrf.mxu0
        %4469 = vmatprep.mubr.f32.mxu0 0.0
        %4470 = vmatmul.mubr.f32.gmra.mxu0 %v4320
        %v4471 = vpop.f32.mrf.mxu0
        %v4472 = vadd.f32 0.0, %v4471
        %v4473 = vpop.f32.mrf.mxu0
        %4474 = vmatprep.mubr.f32.mxu0 0.0
        %4475 = vmatmul.mubr.f32.gmra.mxu0 %v4322
        %v4476 = vpop.f32.mrf.mxu0
        %v4477 = vadd.f32 0.0, %v4476
        %v4478 = vpop.f32.mrf.mxu0
        %4479 = vmatprep.mubr.f32.mxu0 0.0
        %4480 = vmatmul.mubr.f32.gmra.mxu0 %v4324
        %v4481 = vpop.f32.mrf.mxu0
        %v4482 = vadd.f32 0.0, %v4481
        %v4483 = vpop.f32.mrf.mxu0
        %4484 = vmatprep.mubr.f32.mxu0 0.0
        %4485 = vmatmul.mubr.f32.gmra.mxu0 %v4326
        %v4486 = vpop.f32.mrf.mxu0
        %v4487 = vadd.f32 0.0, %v4486
        %v4488 = vpop.f32.mrf.mxu0
        %4489 = vmatprep.mubr.f32.mxu0 0.0
        %4490 = vmatmul.mubr.f32.gmra.mxu0 %v4328
        %v4491 = vpop.f32.mrf.mxu0
        %v4492 = vadd.f32 0.0, %v4491
        %v4493 = vpop.f32.mrf.mxu0
        %4494 = vmatprep.mubr.f32.mxu0 0.0
        %4495 = vmatmul.mubr.f32.gmra.mxu0 %v4330
        %v4496 = vpop.f32.mrf.mxu0
        %v4497 = vadd.f32 0.0, %v4496
        %v4498 = vpop.f32.mrf.mxu0
        %4499 = vmatprep.mubr.f32.mxu0 0.0
        %4500 = vmatmul.mubr.f32.gmra.mxu0 %v4332
        %v4501 = vpop.f32.mrf.mxu0
        %v4502 = vadd.f32 0.0, %v4501
        %v4503 = vpop.f32.mrf.mxu0
        %4504 = vmatprep.mubr.f32.mxu0 0.0
        %4505 = vmatmul.mubr.f32.gmra.mxu0 %v4334
        %v4506 = vpop.f32.mrf.mxu0
        %v4507 = vadd.f32 0.0, %v4506
        %v4508 = vpop.f32.mrf.mxu0
        %4509 = vmatprep.mubr.f32.mxu0 0.0
        %4510 = vmatmul.mubr.f32.gmra.mxu0 %v4336
        %v4511 = vpop.f32.mrf.mxu0
        %v4512 = vadd.f32 0.0, %v4511
        %v4513 = vpop.f32.mrf.mxu0
        %4514 = vdwg.mxu0
        %v4515 = vmul.f32 %v4437, 0.125
        %v4516 = vmul.f32 %v4442, 0.125
        %v4517 = vmul.f32 %v4447, 0.125
        %v4518 = vmul.f32 %v4452, 0.125
        %v4519 = vmul.f32 %v4457, 0.125
        %v4520 = vmul.f32 %v4462, 0.125
        %v4521 = vmul.f32 %v4467, 0.125
        %v4522 = vmul.f32 %v4472, 0.125
        %v4523 = vmul.f32 %v4477, 0.125
        %v4524 = vmul.f32 %v4482, 0.125
        %v4525 = vmul.f32 %v4487, 0.125
        %v4526 = vmul.f32 %v4492, 0.125
        %v4527 = vmul.f32 %v4497, 0.125
        %v4528 = vmul.f32 %v4502, 0.125
        %v4529 = vmul.f32 %v4507, 0.125
        %v4530 = vmul.f32 %v4512, 0.125
        %4531 = vmax.xlane.f32.xlu0 %v4515
        %v4532 = vpop.xlane.xlu0 %4531
        %4533 = vmax.xlane.f32.xlu0 %v4516
        %v4534 = vpop.xlane.xlu0 %4533
        %4535 = vmax.xlane.f32.xlu0 %v4517
        %v4536 = vpop.xlane.xlu0 %4535
        %4537 = vmax.xlane.f32.xlu0 %v4518
        %v4538 = vpop.xlane.xlu0 %4537
        %4539 = vmax.xlane.f32.xlu0 %v4519
        %v4540 = vpop.xlane.xlu0 %4539
        %4541 = vmax.xlane.f32.xlu0 %v4520
        %v4542 = vpop.xlane.xlu0 %4541
        %4543 = vmax.xlane.f32.xlu0 %v4521
        %v4544 = vpop.xlane.xlu0 %4543
        %4545 = vmax.xlane.f32.xlu0 %v4522
        %v4546 = vpop.xlane.xlu0 %4545
        %4547 = vmax.xlane.f32.xlu0 %v4523
        %v4548 = vpop.xlane.xlu0 %4547
        %4549 = vmax.xlane.f32.xlu0 %v4524
        %v4550 = vpop.xlane.xlu0 %4549
        %4551 = vmax.xlane.f32.xlu0 %v4525
        %v4552 = vpop.xlane.xlu0 %4551
        %4553 = vmax.xlane.f32.xlu0 %v4526
        %v4554 = vpop.xlane.xlu0 %4553
        %4555 = vmax.xlane.f32.xlu0 %v4527
        %v4556 = vpop.xlane.xlu0 %4555
        %4557 = vmax.xlane.f32.xlu0 %v4528
        %v4558 = vpop.xlane.xlu0 %4557
        %4559 = vmax.xlane.f32.xlu0 %v4529
        %v4560 = vpop.xlane.xlu0 %4559
        %4561 = vmax.xlane.f32.xlu0 %v4530
        %v4562 = vpop.xlane.xlu0 %4561
        %v4563 = vsub.f32 %v4515, %v4532
        %v4564 = vsub.f32 %v4516, %v4534
        %v4565 = vsub.f32 %v4517, %v4536
        %v4566 = vsub.f32 %v4518, %v4538
        %v4567 = vsub.f32 %v4519, %v4540
        %v4568 = vsub.f32 %v4520, %v4542
        %v4569 = vsub.f32 %v4521, %v4544
        %v4570 = vsub.f32 %v4522, %v4546
        %v4571 = vsub.f32 %v4523, %v4548
        %v4572 = vsub.f32 %v4524, %v4550
        %v4573 = vsub.f32 %v4525, %v4552
        %v4574 = vsub.f32 %v4526, %v4554
        %v4575 = vsub.f32 %v4527, %v4556
        %v4576 = vsub.f32 %v4528, %v4558
        %v4577 = vsub.f32 %v4529, %v4560
        %v4578 = vsub.f32 %v4530, %v4562
        %v4579 = vmul.f32 %v4563, 1.442695
        %v4580 = vpow.pop %v4579
        %v4581 = vmul.f32 %v4564, 1.442695
        %v4582 = vpow.pop %v4581
        %v4583 = vmul.f32 %v4565, 1.442695
        %v4584 = vpow.pop %v4583
        %v4585 = vmul.f32 %v4566, 1.442695
        %v4586 = vpow.pop %v4585
        %v4587 = vmul.f32 %v4567, 1.442695
        %v4588 = vpow.pop %v4587
        %v4589 = vmul.f32 %v4568, 1.442695
        %v4590 = vpow.pop %v4589
        %v4591 = vmul.f32 %v4569, 1.442695
        %v4592 = vpow.pop %v4591
        %v4593 = vmul.f32 %v4570, 1.442695
        %v4594 = vpow.pop %v4593
        %v4595 = vmul.f32 %v4571, 1.442695
        %v4596 = vpow.pop %v4595
        %v4597 = vmul.f32 %v4572, 1.442695
        %v4598 = vpow.pop %v4597
        %v4599 = vmul.f32 %v4573, 1.442695
        %v4600 = vpow.pop %v4599
        %v4601 = vmul.f32 %v4574, 1.442695
        %v4602 = vpow.pop %v4601
        %v4603 = vmul.f32 %v4575, 1.442695
        %v4604 = vpow.pop %v4603
        %v4605 = vmul.f32 %v4576, 1.442695
        %v4606 = vpow.pop %v4605
        %v4607 = vmul.f32 %v4577, 1.442695
        %v4608 = vpow.pop %v4607
        %v4609 = vmul.f32 %v4578, 1.442695
        %v4610 = vpow.pop %v4609
        %4611 = vadd.xlane.f32.xlu0 %v4580
        %v4612 = vpop.xlane.xlu0 %4611
        %4613 = vadd.xlane.f32.xlu0 %v4582
        %v4614 = vpop.xlane.xlu0 %4613
        %4615 = vadd.xlane.f32.xlu0 %v4584
        %v4616 = vpop.xlane.xlu0 %4615
        %4617 = vadd.xlane.f32.xlu0 %v4586
        %v4618 = vpop.xlane.xlu0 %4617
        %4619 = vadd.xlane.f32.xlu0 %v4588
        %v4620 = vpop.xlane.xlu0 %4619
        %4621 = vadd.xlane.f32.xlu0 %v4590
        %v4622 = vpop.xlane.xlu0 %4621
        %4623 = vadd.xlane.f32.xlu0 %v4592
        %v4624 = vpop.xlane.xlu0 %4623
        %4625 = vadd.xlane.f32.xlu0 %v4594
        %v4626 = vpop.xlane.xlu0 %4625
        %4627 = vadd.xlane.f32.xlu0 %v4596
        %v4628 = vpop.xlane.xlu0 %4627
        %4629 = vadd.xlane.f32.xlu0 %v4598
        %v4630 = vpop.xlane.xlu0 %4629
        %4631 = vadd.xlane.f32.xlu0 %v4600
        %v4632 = vpop.xlane.xlu0 %4631
        %4633 = vadd.xlane.f32.xlu0 %v4602
        %v4634 = vpop.xlane.xlu0 %4633
        %4635 = vadd.xlane.f32.xlu0 %v4604
        %v4636 = vpop.xlane.xlu0 %4635
        %4637 = vadd.xlane.f32.xlu0 %v4606
        %v4638 = vpop.xlane.xlu0 %4637
        %4639 = vadd.xlane.f32.xlu0 %v4608
        %v4640 = vpop.xlane.xlu0 %4639
        %4641 = vadd.xlane.f32.xlu0 %v4610
        %v4642 = vpop.xlane.xlu0 %4641
        %v4643 = vrcp.pop %v4612
        %v4644 = vrcp.pop %v4614
        %v4645 = vrcp.pop %v4616
        %v4646 = vrcp.pop %v4618
        %v4647 = vrcp.pop %v4620
        %v4648 = vrcp.pop %v4622
        %v4649 = vrcp.pop %v4624
        %v4650 = vrcp.pop %v4626
        %v4651 = vrcp.pop %v4628
        %v4652 = vrcp.pop %v4630
        %v4653 = vrcp.pop %v4632
        %v4654 = vrcp.pop %v4634
        %v4655 = vrcp.pop %v4636
        %v4656 = vrcp.pop %v4638
        %v4657 = vrcp.pop %v4640
        %v4658 = vrcp.pop %v4642
        %v4659 = vmul.f32 %v4580, %v4643
        %v4660 = vmul.f32 %v4582, %v4644
        %v4661 = vmul.f32 %v4584, %v4645
        %v4662 = vmul.f32 %v4586, %v4646
        %v4663 = vmul.f32 %v4588, %v4647
        %v4664 = vmul.f32 %v4590, %v4648
        %v4665 = vmul.f32 %v4592, %v4649
        %v4666 = vmul.f32 %v4594, %v4650
        %v4667 = vmul.f32 %v4596, %v4651
        %v4668 = vmul.f32 %v4598, %v4652
        %v4669 = vmul.f32 %v4600, %v4653
        %v4670 = vmul.f32 %v4602, %v4654
        %v4671 = vmul.f32 %v4604, %v4655
        %v4672 = vmul.f32 %v4606, %v4656
        %v4673 = vmul.f32 %v4608, %v4657
        %v4674 = vmul.f32 %v4610, %v4658
        %s4675 = scalar_lea.vmem %s384, 128 [#allocation15]
        %4676 = vst [vmem:[%s4675] sm:$0xff] %v4659
        %4677 = vst [vmem:[%s4675 + $0x8] sm:$0xff] %v4660
        %4678 = vst [vmem:[%s4675 + $0x10] sm:$0xff] %v4661
        %4679 = vst [vmem:[%s4675 + $0x18] sm:$0xff] %v4662
        %4680 = vst [vmem:[%s4675 + $0x20] sm:$0xff] %v4663
        %4681 = vst [vmem:[%s4675 + $0x28] sm:$0xff] %v4664
        %4682 = vst [vmem:[%s4675 + $0x30] sm:$0xff] %v4665
        %4683 = vst [vmem:[%s4675 + $0x38] sm:$0xff] %v4666
        %4684 = vst [vmem:[%s4675 + $0x40] sm:$0xff] %v4667
        %4685 = vst [vmem:[%s4675 + $0x48] sm:$0xff] %v4668
        %4686 = vst [vmem:[%s4675 + $0x50] sm:$0xff] %v4669
        %4687 = vst [vmem:[%s4675 + $0x58] sm:$0xff] %v4670
        %4688 = vst [vmem:[%s4675 + $0x60] sm:$0xff] %v4671
        %4689 = vst [vmem:[%s4675 + $0x68] sm:$0xff] %v4672
        %4690 = vst [vmem:[%s4675 + $0x70] sm:$0xff] %v4673
        %4691 = vst [vmem:[%s4675 + $0x78] sm:$0xff] %v4674
        %4708 = vrot.lane.b32.xlu0 %v4194, 64
        %v4709 = vpop.permute.xlu0 %4708
        %4710 = vrot.lane.b32.xlu0 %v4195, 64
        %v4711 = vpop.permute.xlu0 %4710
        %4712 = vrot.lane.b32.xlu0 %v4196, 64
        %v4713 = vpop.permute.xlu0 %4712
        %4714 = vrot.lane.b32.xlu0 %v4197, 64
        %v4715 = vpop.permute.xlu0 %4714
        %4716 = vrot.lane.b32.xlu0 %v4198, 64
        %v4717 = vpop.permute.xlu0 %4716
        %4718 = vrot.lane.b32.xlu0 %v4199, 64
        %v4719 = vpop.permute.xlu0 %4718
        %4720 = vrot.lane.b32.xlu0 %v4200, 64
        %v4721 = vpop.permute.xlu0 %4720
        %4722 = vrot.lane.b32.xlu0 %v4201, 64
        %v4723 = vpop.permute.xlu0 %4722
        %4724 = vrot.lane.b32.xlu0 %v4202, 64
        %v4725 = vpop.permute.xlu0 %4724
        %4726 = vrot.lane.b32.xlu0 %v4203, 64
        %v4727 = vpop.permute.xlu0 %4726
        %4728 = vrot.lane.b32.xlu0 %v4204, 64
        %v4729 = vpop.permute.xlu0 %4728
        %4730 = vrot.lane.b32.xlu0 %v4205, 64
        %v4731 = vpop.permute.xlu0 %4730
        %4732 = vrot.lane.b32.xlu0 %v4206, 64
        %v4733 = vpop.permute.xlu0 %4732
        %4734 = vrot.lane.b32.xlu0 %v4207, 64
        %v4735 = vpop.permute.xlu0 %4734
        %4736 = vrot.lane.b32.xlu0 %v4208, 64
        %v4737 = vpop.permute.xlu0 %4736
        %4738 = vrot.lane.b32.xlu0 %v4209, 64
        %v4739 = vpop.permute.xlu0 %4738
        %4756 = vmatprep.subr.mxu0 0.0
        %4757 = vmatpush1.msra.mxu0 %v4739
        %4758 = vmatprep.subr.mxu0 0.0
        %4759 = vmatpush1.msra.mxu0 %v4737
        %4760 = vmatprep.subr.mxu0 0.0
        %4761 = vmatpush1.msra.mxu0 %v4735
        %4762 = vmatprep.subr.mxu0 0.0
        %4763 = vmatpush1.msra.mxu0 %v4733
        %4764 = vmatprep.subr.mxu0 0.0
        %4765 = vmatpush1.msra.mxu0 %v4731
        %4766 = vmatprep.subr.mxu0 0.0
        %4767 = vmatpush1.msra.mxu0 %v4729
        %4768 = vmatprep.subr.mxu0 0.0
        %4769 = vmatpush1.msra.mxu0 %v4727
        %4770 = vmatprep.subr.mxu0 0.0
        %4771 = vmatpush1.msra.mxu0 %v4725
        %4772 = vmatprep.subr.mxu0 0.0
        %4773 = vmatpush1.msra.mxu0 %v4723
        %4774 = vmatprep.subr.mxu0 0.0
        %4775 = vmatpush1.msra.mxu0 %v4721
        %4776 = vmatprep.subr.mxu0 0.0
        %4777 = vmatpush1.msra.mxu0 %v4719
        %4778 = vmatprep.subr.mxu0 0.0
        %4779 = vmatpush1.msra.mxu0 %v4717
        %4780 = vmatprep.subr.mxu0 0.0
        %4781 = vmatpush1.msra.mxu0 %v4715
        %4782 = vmatprep.subr.mxu0 0.0
        %4783 = vmatpush1.msra.mxu0 %v4713
        %4784 = vmatprep.subr.mxu0 0.0
        %4785 = vmatpush1.msra.mxu0 %v4711
        %4786 = vmatprep.subr.mxu0 0.0
        %4787 = vmatpush1.msra.mxu0 %v4709
        %4788 = vmatprep.subr.mxu0 0.0
        %4789 = vmatpush2.msra.mxu0 0.0
        %4790 = vmatprep.subr.mxu0 0.0
        %4791 = vmatpush2.msra.mxu0 0.0
        %4792 = vmatprep.subr.mxu0 0.0
        %4793 = vmatpush2.msra.mxu0 0.0
        %4794 = vmatprep.subr.mxu0 0.0
        %4795 = vmatpush2.msra.mxu0 0.0
        %4796 = vmatprep.subr.mxu0 0.0
        %4797 = vmatpush2.msra.mxu0 0.0
        %4798 = vmatprep.subr.mxu0 0.0
        %4799 = vmatpush2.msra.mxu0 0.0
        %4800 = vmatprep.subr.mxu0 0.0
        %4801 = vmatpush2.msra.mxu0 0.0
        %4802 = vmatprep.subr.mxu0 0.0
        %4803 = vmatpush2.msra.mxu0 0.0
        %4804 = vmatprep.subr.mxu0 0.0
        %4805 = vmatpush2.msra.mxu0 0.0
        %4806 = vmatprep.subr.mxu0 0.0
        %4807 = vmatpush2.msra.mxu0 0.0
        %4808 = vmatprep.subr.mxu0 0.0
        %4809 = vmatpush2.msra.mxu0 0.0
        %4810 = vmatprep.subr.mxu0 0.0
        %4811 = vmatpush2.msra.mxu0 0.0
        %4812 = vmatprep.subr.mxu0 0.0
        %4813 = vmatpush2.msra.mxu0 0.0
        %4814 = vmatprep.subr.mxu0 0.0
        %4815 = vmatpush2.msra.mxu0 0.0
        %4816 = vmatprep.subr.mxu0 0.0
        %4817 = vmatpush2.msra.mxu0 0.0
        %4818 = vmatprep.subr.mxu0 0.0
        %4819 = vmatpush2.msra.mxu0 0.0
        %4820 = vmatprep.mubr.f32.mxu0 0.0
        %4821 = vmatmul.mubr.f32.gmra.mxu0 %v4659
        %v4822 = vpop.f32.mrf.mxu0
        %v4823 = vadd.f32 0.0, %v4822
        %v4824 = vpop.f32.mrf.mxu0
        %4825 = vmatprep.mubr.f32.mxu0 0.0
        %4826 = vmatmul.mubr.f32.gmra.mxu0 %v4660
        %v4827 = vpop.f32.mrf.mxu0
        %v4828 = vadd.f32 0.0, %v4827
        %v4829 = vpop.f32.mrf.mxu0
        %4830 = vmatprep.mubr.f32.mxu0 0.0
        %4831 = vmatmul.mubr.f32.gmra.mxu0 %v4661
        %v4832 = vpop.f32.mrf.mxu0
        %v4833 = vadd.f32 0.0, %v4832
        %v4834 = vpop.f32.mrf.mxu0
        %4835 = vmatprep.mubr.f32.mxu0 0.0
        %4836 = vmatmul.mubr.f32.gmra.mxu0 %v4662
        %v4837 = vpop.f32.mrf.mxu0
        %v4838 = vadd.f32 0.0, %v4837
        %v4839 = vpop.f32.mrf.mxu0
        %4840 = vmatprep.mubr.f32.mxu0 0.0
        %4841 = vmatmul.mubr.f32.gmra.mxu0 %v4663
        %v4842 = vpop.f32.mrf.mxu0
        %v4843 = vadd.f32 0.0, %v4842
        %v4844 = vpop.f32.mrf.mxu0
        %4845 = vmatprep.mubr.f32.mxu0 0.0
        %4846 = vmatmul.mubr.f32.gmra.mxu0 %v4664
        %v4847 = vpop.f32.mrf.mxu0
        %v4848 = vadd.f32 0.0, %v4847
        %v4849 = vpop.f32.mrf.mxu0
        %4850 = vmatprep.mubr.f32.mxu0 0.0
        %4851 = vmatmul.mubr.f32.gmra.mxu0 %v4665
        %v4852 = vpop.f32.mrf.mxu0
        %v4853 = vadd.f32 0.0, %v4852
        %v4854 = vpop.f32.mrf.mxu0
        %4855 = vmatprep.mubr.f32.mxu0 0.0
        %4856 = vmatmul.mubr.f32.gmra.mxu0 %v4666
        %v4857 = vpop.f32.mrf.mxu0
        %v4858 = vadd.f32 0.0, %v4857
        %v4859 = vpop.f32.mrf.mxu0
        %4860 = vmatprep.mubr.f32.mxu0 0.0
        %4861 = vmatmul.mubr.f32.gmra.mxu0 %v4667
        %v4862 = vpop.f32.mrf.mxu0
        %v4863 = vadd.f32 0.0, %v4862
        %v4864 = vpop.f32.mrf.mxu0
        %4865 = vmatprep.mubr.f32.mxu0 0.0
        %4866 = vmatmul.mubr.f32.gmra.mxu0 %v4668
        %v4867 = vpop.f32.mrf.mxu0
        %v4868 = vadd.f32 0.0, %v4867
        %v4869 = vpop.f32.mrf.mxu0
        %4870 = vmatprep.mubr.f32.mxu0 0.0
        %4871 = vmatmul.mubr.f32.gmra.mxu0 %v4669
        %v4872 = vpop.f32.mrf.mxu0
        %v4873 = vadd.f32 0.0, %v4872
        %v4874 = vpop.f32.mrf.mxu0
        %4875 = vmatprep.mubr.f32.mxu0 0.0
        %4876 = vmatmul.mubr.f32.gmra.mxu0 %v4670
        %v4877 = vpop.f32.mrf.mxu0
        %v4878 = vadd.f32 0.0, %v4877
        %v4879 = vpop.f32.mrf.mxu0
        %4880 = vmatprep.mubr.f32.mxu0 0.0
        %4881 = vmatmul.mubr.f32.gmra.mxu0 %v4671
        %v4882 = vpop.f32.mrf.mxu0
        %v4883 = vadd.f32 0.0, %v4882
        %v4884 = vpop.f32.mrf.mxu0
        %4885 = vmatprep.mubr.f32.mxu0 0.0
        %4886 = vmatmul.mubr.f32.gmra.mxu0 %v4672
        %v4887 = vpop.f32.mrf.mxu0
        %v4888 = vadd.f32 0.0, %v4887
        %v4889 = vpop.f32.mrf.mxu0
        %4890 = vmatprep.mubr.f32.mxu0 0.0
        %4891 = vmatmul.mubr.f32.gmra.mxu0 %v4673
        %v4892 = vpop.f32.mrf.mxu0
        %v4893 = vadd.f32 0.0, %v4892
        %v4894 = vpop.f32.mrf.mxu0
        %4895 = vmatprep.mubr.f32.mxu0 0.0
        %4896 = vmatmul.mubr.f32.gmra.mxu0 %v4674
        %v4897 = vpop.f32.mrf.mxu0
        %v4898 = vadd.f32 0.0, %v4897
        %v4899 = vpop.f32.mrf.mxu0
        %4900 = vdwg.mxu0
        %4917 = vrot.lane.b32.xlu0 %v4823, 64
        %v4918 = vpop.permute.xlu0 %4917
        %4919 = vrot.lane.b32.xlu0 %v4828, 64
        %v4920 = vpop.permute.xlu0 %4919
        %4921 = vrot.lane.b32.xlu0 %v4833, 64
        %v4922 = vpop.permute.xlu0 %4921
        %4923 = vrot.lane.b32.xlu0 %v4838, 64
        %v4924 = vpop.permute.xlu0 %4923
        %4925 = vrot.lane.b32.xlu0 %v4843, 64
        %v4926 = vpop.permute.xlu0 %4925
        %4927 = vrot.lane.b32.xlu0 %v4848, 64
        %v4928 = vpop.permute.xlu0 %4927
        %4929 = vrot.lane.b32.xlu0 %v4853, 64
        %v4930 = vpop.permute.xlu0 %4929
        %4931 = vrot.lane.b32.xlu0 %v4858, 64
        %v4932 = vpop.permute.xlu0 %4931
        %4933 = vrot.lane.b32.xlu0 %v4863, 64
        %v4934 = vpop.permute.xlu0 %4933
        %4935 = vrot.lane.b32.xlu0 %v4868, 64
        %v4936 = vpop.permute.xlu0 %4935
        %4937 = vrot.lane.b32.xlu0 %v4873, 64
        %v4938 = vpop.permute.xlu0 %4937
        %4939 = vrot.lane.b32.xlu0 %v4878, 64
        %v4940 = vpop.permute.xlu0 %4939
        %4941 = vrot.lane.b32.xlu0 %v4883, 64
        %v4942 = vpop.permute.xlu0 %4941
        %4943 = vrot.lane.b32.xlu0 %v4888, 64
        %v4944 = vpop.permute.xlu0 %4943
        %4945 = vrot.lane.b32.xlu0 %v4893, 64
        %v4946 = vpop.permute.xlu0 %4945
        %4947 = vrot.lane.b32.xlu0 %v4898, 64
        %v4948 = vpop.permute.xlu0 %4947
        %vm4965 = vcmask 1048064
        %4966 = vst.msk [vmem:[%s377] sm:$0xff] %vm4965, %v4918
        %4967 = vst.msk [vmem:[%s377 + $0x20] sm:$0xff] %vm4965, %v4920
        %4968 = vst.msk [vmem:[%s377 + $0x40] sm:$0xff] %vm4965, %v4922
        %4969 = vst.msk [vmem:[%s377 + $0x60] sm:$0xff] %vm4965, %v4924
        %4970 = vst.msk [vmem:[%s377 + $0x80] sm:$0xff] %vm4965, %v4926
        %4971 = vst.msk [vmem:[%s377 + $0xa0] sm:$0xff] %vm4965, %v4928
        %4972 = vst.msk [vmem:[%s377 + $0xc0] sm:$0xff] %vm4965, %v4930
        %4973 = vst.msk [vmem:[%s377 + $0xe0] sm:$0xff] %vm4965, %v4932
        %4974 = vst.msk [vmem:[%s377 + $0x100] sm:$0xff] %vm4965, %v4934
        %4975 = vst.msk [vmem:[%s377 + $0x120] sm:$0xff] %vm4965, %v4936
        %4976 = vst.msk [vmem:[%s377 + $0x140] sm:$0xff] %vm4965, %v4938
        %4977 = vst.msk [vmem:[%s377 + $0x160] sm:$0xff] %vm4965, %v4940
        %4978 = vst.msk [vmem:[%s377 + $0x180] sm:$0xff] %vm4965, %v4942
        %4979 = vst.msk [vmem:[%s377 + $0x1a0] sm:$0xff] %vm4965, %v4944
        %4980 = vst.msk [vmem:[%s377 + $0x1c0] sm:$0xff] %vm4965, %v4946
        %4981 = vst.msk [vmem:[%s377 + $0x1e0] sm:$0xff] %vm4965, %v4948
        %v4982 = vld [vmem:[#allocation2 + $0x8] sm:$0xff]
        %v4983 = vld [vmem:[#allocation2 + $0x28] sm:$0xff]
        %v4984 = vld [vmem:[#allocation2 + $0x48] sm:$0xff]
        %v4985 = vld [vmem:[#allocation2 + $0x68] sm:$0xff]
        %v4986 = vld [vmem:[#allocation2 + $0x88] sm:$0xff]
        %v4987 = vld [vmem:[#allocation2 + $0xa8] sm:$0xff]
        %v4988 = vld [vmem:[#allocation2 + $0xc8] sm:$0xff]
        %v4989 = vld [vmem:[#allocation2 + $0xe8] sm:$0xff]
        %v4990 = vld [vmem:[#allocation2 + $0x108] sm:$0xff]
        %v4991 = vld [vmem:[#allocation2 + $0x128] sm:$0xff]
        %v4992 = vld [vmem:[#allocation2 + $0x148] sm:$0xff]
        %v4993 = vld [vmem:[#allocation2 + $0x168] sm:$0xff]
        %v4994 = vld [vmem:[#allocation2 + $0x188] sm:$0xff]
        %v4995 = vld [vmem:[#allocation2 + $0x1a8] sm:$0xff]
        %v4996 = vld [vmem:[#allocation2 + $0x1c8] sm:$0xff]
        %v4997 = vld [vmem:[#allocation2 + $0x1e8] sm:$0xff]
        %v4998 = vld [vmem:[#allocation3 + $0x8] sm:$0xff]
        %v4999 = vld [vmem:[#allocation3 + $0x28] sm:$0xff]
        %v5000 = vld [vmem:[#allocation3 + $0x48] sm:$0xff]
        %v5001 = vld [vmem:[#allocation3 + $0x68] sm:$0xff]
        %v5002 = vld [vmem:[#allocation3 + $0x88] sm:$0xff]
        %v5003 = vld [vmem:[#allocation3 + $0xa8] sm:$0xff]
        %v5004 = vld [vmem:[#allocation3 + $0xc8] sm:$0xff]
        %v5005 = vld [vmem:[#allocation3 + $0xe8] sm:$0xff]
        %v5006 = vld [vmem:[#allocation3 + $0x108] sm:$0xff]
        %v5007 = vld [vmem:[#allocation3 + $0x128] sm:$0xff]
        %v5008 = vld [vmem:[#allocation3 + $0x148] sm:$0xff]
        %v5009 = vld [vmem:[#allocation3 + $0x168] sm:$0xff]
        %v5010 = vld [vmem:[#allocation3 + $0x188] sm:$0xff]
        %v5011 = vld [vmem:[#allocation3 + $0x1a8] sm:$0xff]
        %v5012 = vld [vmem:[#allocation3 + $0x1c8] sm:$0xff]
        %v5013 = vld [vmem:[#allocation3 + $0x1e8] sm:$0xff]
        %v5014 = vld [vmem:[#allocation4 + $0x8] sm:$0xff]
        %v5015 = vld [vmem:[#allocation4 + $0x28] sm:$0xff]
        %v5016 = vld [vmem:[#allocation4 + $0x48] sm:$0xff]
        %v5017 = vld [vmem:[#allocation4 + $0x68] sm:$0xff]
        %v5018 = vld [vmem:[#allocation4 + $0x88] sm:$0xff]
        %v5019 = vld [vmem:[#allocation4 + $0xa8] sm:$0xff]
        %v5020 = vld [vmem:[#allocation4 + $0xc8] sm:$0xff]
        %v5021 = vld [vmem:[#allocation4 + $0xe8] sm:$0xff]
        %v5022 = vld [vmem:[#allocation4 + $0x108] sm:$0xff]
        %v5023 = vld [vmem:[#allocation4 + $0x128] sm:$0xff]
        %v5024 = vld [vmem:[#allocation4 + $0x148] sm:$0xff]
        %v5025 = vld [vmem:[#allocation4 + $0x168] sm:$0xff]
        %v5026 = vld [vmem:[#allocation4 + $0x188] sm:$0xff]
        %v5027 = vld [vmem:[#allocation4 + $0x1a8] sm:$0xff]
        %v5028 = vld [vmem:[#allocation4 + $0x1c8] sm:$0xff]
        %v5029 = vld [vmem:[#allocation4 + $0x1e8] sm:$0xff]
        %v5031 = vsel %vm3583, %v4982, 0
        %v5034 = vsel %vm3583, %v4983, 0
        %v5037 = vsel %vm3583, %v4984, 0
        %v5040 = vsel %vm3583, %v4985, 0
        %v5043 = vsel %vm3583, %v4986, 0
        %v5046 = vsel %vm3583, %v4987, 0
        %v5049 = vsel %vm3583, %v4988, 0
        %v5052 = vsel %vm3583, %v4989, 0
        %v5055 = vsel %vm3583, %v4990, 0
        %v5058 = vsel %vm3583, %v4991, 0
        %v5061 = vsel %vm3583, %v4992, 0
        %v5064 = vsel %vm3583, %v4993, 0
        %v5067 = vsel %vm3583, %v4994, 0
        %v5070 = vsel %vm3583, %v4995, 0
        %v5073 = vsel %vm3583, %v4996, 0
        %v5076 = vsel %vm3583, %v4997, 0
        %v5079 = vsel %vm3583, %v4998, 0
        %v5082 = vsel %vm3583, %v4999, 0
        %v5085 = vsel %vm3583, %v5000, 0
        %v5088 = vsel %vm3583, %v5001, 0
        %v5091 = vsel %vm3583, %v5002, 0
        %v5094 = vsel %vm3583, %v5003, 0
        %v5097 = vsel %vm3583, %v5004, 0
        %v5100 = vsel %vm3583, %v5005, 0
        %v5103 = vsel %vm3583, %v5006, 0
        %v5106 = vsel %vm3583, %v5007, 0
        %v5109 = vsel %vm3583, %v5008, 0
        %v5112 = vsel %vm3583, %v5009, 0
        %v5115 = vsel %vm3583, %v5010, 0
        %v5118 = vsel %vm3583, %v5011, 0
        %v5121 = vsel %vm3583, %v5012, 0
        %v5124 = vsel %vm3583, %v5013, 0
        %5126 = vmatprep.subr.mxu0 0.0
        %5127 = vmatpush1.xpose.msra.mxu0 %v5124
        %5128 = vmatprep.subr.mxu0 0.0
        %5129 = vmatpush1.xpose.msra.mxu0 %v5121
        %5130 = vmatprep.subr.mxu0 0.0
        %5131 = vmatpush1.xpose.msra.mxu0 %v5118
        %5132 = vmatprep.subr.mxu0 0.0
        %5133 = vmatpush1.xpose.msra.mxu0 %v5115
        %5134 = vmatprep.subr.mxu0 0.0
        %5135 = vmatpush1.xpose.msra.mxu0 %v5112
        %5136 = vmatprep.subr.mxu0 0.0
        %5137 = vmatpush1.xpose.msra.mxu0 %v5109
        %5138 = vmatprep.subr.mxu0 0.0
        %5139 = vmatpush1.xpose.msra.mxu0 %v5106
        %5140 = vmatprep.subr.mxu0 0.0
        %5141 = vmatpush1.xpose.msra.mxu0 %v5103
        %5142 = vmatprep.subr.mxu0 0.0
        %5143 = vmatpush1.xpose.msra.mxu0 %v5100
        %5144 = vmatprep.subr.mxu0 0.0
        %5145 = vmatpush1.xpose.msra.mxu0 %v5097
        %5146 = vmatprep.subr.mxu0 0.0
        %5147 = vmatpush1.xpose.msra.mxu0 %v5094
        %5148 = vmatprep.subr.mxu0 0.0
        %5149 = vmatpush1.xpose.msra.mxu0 %v5091
        %5150 = vmatprep.subr.mxu0 0.0
        %5151 = vmatpush1.xpose.msra.mxu0 %v5088
        %5152 = vmatprep.subr.mxu0 0.0
        %5153 = vmatpush1.xpose.msra.mxu0 %v5085
        %5154 = vmatprep.subr.mxu0 0.0
        %5155 = vmatpush1.xpose.msra.mxu0 %v5082
        %5156 = vmatprep.subr.mxu0 0.0
        %5157 = vmatpush1.xpose.msra.mxu0 %v5079
        %5158 = vmatprep.subr.mxu0 0.0
        %5159 = vmatpush2.xpose.msra.mxu0 0.0
        %5160 = vmatprep.subr.mxu0 0.0
        %5161 = vmatpush2.xpose.msra.mxu0 0.0
        %5162 = vmatprep.subr.mxu0 0.0
        %5163 = vmatpush2.xpose.msra.mxu0 0.0
        %5164 = vmatprep.subr.mxu0 0.0
        %5165 = vmatpush2.xpose.msra.mxu0 0.0
        %5166 = vmatprep.subr.mxu0 0.0
        %5167 = vmatpush2.xpose.msra.mxu0 0.0
        %5168 = vmatprep.subr.mxu0 0.0
        %5169 = vmatpush2.xpose.msra.mxu0 0.0
        %5170 = vmatprep.subr.mxu0 0.0
        %5171 = vmatpush2.xpose.msra.mxu0 0.0
        %5172 = vmatprep.subr.mxu0 0.0
        %5173 = vmatpush2.xpose.msra.mxu0 0.0
        %5174 = vmatprep.subr.mxu0 0.0
        %5175 = vmatpush2.xpose.msra.mxu0 0.0
        %5176 = vmatprep.subr.mxu0 0.0
        %5177 = vmatpush2.xpose.msra.mxu0 0.0
        %5178 = vmatprep.subr.mxu0 0.0
        %5179 = vmatpush2.xpose.msra.mxu0 0.0
        %5180 = vmatprep.subr.mxu0 0.0
        %5181 = vmatpush2.xpose.msra.mxu0 0.0
        %5182 = vmatprep.subr.mxu0 0.0
        %5183 = vmatpush2.xpose.msra.mxu0 0.0
        %5184 = vmatprep.subr.mxu0 0.0
        %5185 = vmatpush2.xpose.msra.mxu0 0.0
        %5186 = vmatprep.subr.mxu0 0.0
        %5187 = vmatpush2.xpose.msra.mxu0 0.0
        %5188 = vmatprep.subr.mxu0 0.0
        %5189 = vmatpush2.xpose.msra.mxu0 0.0
        %5190 = vmatprep.mubr.f32.mxu0 0.0
        %5191 = vmatmul.mubr.f32.gmra.mxu0 %v5031
        %v5192 = vpop.f32.mrf.mxu0
        %v5193 = vadd.f32 0.0, %v5192
        %v5194 = vpop.f32.mrf.mxu0
        %5195 = vmatprep.mubr.f32.mxu0 0.0
        %5196 = vmatmul.mubr.f32.gmra.mxu0 %v5034
        %v5197 = vpop.f32.mrf.mxu0
        %v5198 = vadd.f32 0.0, %v5197
        %v5199 = vpop.f32.mrf.mxu0
        %5200 = vmatprep.mubr.f32.mxu0 0.0
        %5201 = vmatmul.mubr.f32.gmra.mxu0 %v5037
        %v5202 = vpop.f32.mrf.mxu0
        %v5203 = vadd.f32 0.0, %v5202
        %v5204 = vpop.f32.mrf.mxu0
        %5205 = vmatprep.mubr.f32.mxu0 0.0
        %5206 = vmatmul.mubr.f32.gmra.mxu0 %v5040
        %v5207 = vpop.f32.mrf.mxu0
        %v5208 = vadd.f32 0.0, %v5207
        %v5209 = vpop.f32.mrf.mxu0
        %5210 = vmatprep.mubr.f32.mxu0 0.0
        %5211 = vmatmul.mubr.f32.gmra.mxu0 %v5043
        %v5212 = vpop.f32.mrf.mxu0
        %v5213 = vadd.f32 0.0, %v5212
        %v5214 = vpop.f32.mrf.mxu0
        %5215 = vmatprep.mubr.f32.mxu0 0.0
        %5216 = vmatmul.mubr.f32.gmra.mxu0 %v5046
        %v5217 = vpop.f32.mrf.mxu0
        %v5218 = vadd.f32 0.0, %v5217
        %v5219 = vpop.f32.mrf.mxu0
        %5220 = vmatprep.mubr.f32.mxu0 0.0
        %5221 = vmatmul.mubr.f32.gmra.mxu0 %v5049
        %v5222 = vpop.f32.mrf.mxu0
        %v5223 = vadd.f32 0.0, %v5222
        %v5224 = vpop.f32.mrf.mxu0
        %5225 = vmatprep.mubr.f32.mxu0 0.0
        %5226 = vmatmul.mubr.f32.gmra.mxu0 %v5052
        %v5227 = vpop.f32.mrf.mxu0
        %v5228 = vadd.f32 0.0, %v5227
        %v5229 = vpop.f32.mrf.mxu0
        %5230 = vmatprep.mubr.f32.mxu0 0.0
        %5231 = vmatmul.mubr.f32.gmra.mxu0 %v5055
        %v5232 = vpop.f32.mrf.mxu0
        %v5233 = vadd.f32 0.0, %v5232
        %v5234 = vpop.f32.mrf.mxu0
        %5235 = vmatprep.mubr.f32.mxu0 0.0
        %5236 = vmatmul.mubr.f32.gmra.mxu0 %v5058
        %v5237 = vpop.f32.mrf.mxu0
        %v5238 = vadd.f32 0.0, %v5237
        %v5239 = vpop.f32.mrf.mxu0
        %5240 = vmatprep.mubr.f32.mxu0 0.0
        %5241 = vmatmul.mubr.f32.gmra.mxu0 %v5061
        %v5242 = vpop.f32.mrf.mxu0
        %v5243 = vadd.f32 0.0, %v5242
        %v5244 = vpop.f32.mrf.mxu0
        %5245 = vmatprep.mubr.f32.mxu0 0.0
        %5246 = vmatmul.mubr.f32.gmra.mxu0 %v5064
        %v5247 = vpop.f32.mrf.mxu0
        %v5248 = vadd.f32 0.0, %v5247
        %v5249 = vpop.f32.mrf.mxu0
        %5250 = vmatprep.mubr.f32.mxu0 0.0
        %5251 = vmatmul.mubr.f32.gmra.mxu0 %v5067
        %v5252 = vpop.f32.mrf.mxu0
        %v5253 = vadd.f32 0.0, %v5252
        %v5254 = vpop.f32.mrf.mxu0
        %5255 = vmatprep.mubr.f32.mxu0 0.0
        %5256 = vmatmul.mubr.f32.gmra.mxu0 %v5070
        %v5257 = vpop.f32.mrf.mxu0
        %v5258 = vadd.f32 0.0, %v5257
        %v5259 = vpop.f32.mrf.mxu0
        %5260 = vmatprep.mubr.f32.mxu0 0.0
        %5261 = vmatmul.mubr.f32.gmra.mxu0 %v5073
        %v5262 = vpop.f32.mrf.mxu0
        %v5263 = vadd.f32 0.0, %v5262
        %v5264 = vpop.f32.mrf.mxu0
        %5265 = vmatprep.mubr.f32.mxu0 0.0
        %5266 = vmatmul.mubr.f32.gmra.mxu0 %v5076
        %v5267 = vpop.f32.mrf.mxu0
        %v5268 = vadd.f32 0.0, %v5267
        %v5269 = vpop.f32.mrf.mxu0
        %5270 = vdwg.mxu0
        %v5271 = vmul.f32 %v5193, 0.125
        %v5272 = vmul.f32 %v5198, 0.125
        %v5273 = vmul.f32 %v5203, 0.125
        %v5274 = vmul.f32 %v5208, 0.125
        %v5275 = vmul.f32 %v5213, 0.125
        %v5276 = vmul.f32 %v5218, 0.125
        %v5277 = vmul.f32 %v5223, 0.125
        %v5278 = vmul.f32 %v5228, 0.125
        %v5279 = vmul.f32 %v5233, 0.125
        %v5280 = vmul.f32 %v5238, 0.125
        %v5281 = vmul.f32 %v5243, 0.125
        %v5282 = vmul.f32 %v5248, 0.125
        %v5283 = vmul.f32 %v5253, 0.125
        %v5284 = vmul.f32 %v5258, 0.125
        %v5285 = vmul.f32 %v5263, 0.125
        %v5286 = vmul.f32 %v5268, 0.125
        %5287 = vmax.xlane.f32.xlu0 %v5271
        %v5288 = vpop.xlane.xlu0 %5287
        %5289 = vmax.xlane.f32.xlu0 %v5272
        %v5290 = vpop.xlane.xlu0 %5289
        %5291 = vmax.xlane.f32.xlu0 %v5273
        %v5292 = vpop.xlane.xlu0 %5291
        %5293 = vmax.xlane.f32.xlu0 %v5274
        %v5294 = vpop.xlane.xlu0 %5293
        %5295 = vmax.xlane.f32.xlu0 %v5275
        %v5296 = vpop.xlane.xlu0 %5295
        %5297 = vmax.xlane.f32.xlu0 %v5276
        %v5298 = vpop.xlane.xlu0 %5297
        %5299 = vmax.xlane.f32.xlu0 %v5277
        %v5300 = vpop.xlane.xlu0 %5299
        %5301 = vmax.xlane.f32.xlu0 %v5278
        %v5302 = vpop.xlane.xlu0 %5301
        %5303 = vmax.xlane.f32.xlu0 %v5279
        %v5304 = vpop.xlane.xlu0 %5303
        %5305 = vmax.xlane.f32.xlu0 %v5280
        %v5306 = vpop.xlane.xlu0 %5305
        %5307 = vmax.xlane.f32.xlu0 %v5281
        %v5308 = vpop.xlane.xlu0 %5307
        %5309 = vmax.xlane.f32.xlu0 %v5282
        %v5310 = vpop.xlane.xlu0 %5309
        %5311 = vmax.xlane.f32.xlu0 %v5283
        %v5312 = vpop.xlane.xlu0 %5311
        %5313 = vmax.xlane.f32.xlu0 %v5284
        %v5314 = vpop.xlane.xlu0 %5313
        %5315 = vmax.xlane.f32.xlu0 %v5285
        %v5316 = vpop.xlane.xlu0 %5315
        %5317 = vmax.xlane.f32.xlu0 %v5286
        %v5318 = vpop.xlane.xlu0 %5317
        %v5319 = vsub.f32 %v5271, %v5288
        %v5320 = vsub.f32 %v5272, %v5290
        %v5321 = vsub.f32 %v5273, %v5292
        %v5322 = vsub.f32 %v5274, %v5294
        %v5323 = vsub.f32 %v5275, %v5296
        %v5324 = vsub.f32 %v5276, %v5298
        %v5325 = vsub.f32 %v5277, %v5300
        %v5326 = vsub.f32 %v5278, %v5302
        %v5327 = vsub.f32 %v5279, %v5304
        %v5328 = vsub.f32 %v5280, %v5306
        %v5329 = vsub.f32 %v5281, %v5308
        %v5330 = vsub.f32 %v5282, %v5310
        %v5331 = vsub.f32 %v5283, %v5312
        %v5332 = vsub.f32 %v5284, %v5314
        %v5333 = vsub.f32 %v5285, %v5316
        %v5334 = vsub.f32 %v5286, %v5318
        %v5335 = vmul.f32 %v5319, 1.442695
        %v5336 = vpow.pop %v5335
        %v5337 = vmul.f32 %v5320, 1.442695
        %v5338 = vpow.pop %v5337
        %v5339 = vmul.f32 %v5321, 1.442695
        %v5340 = vpow.pop %v5339
        %v5341 = vmul.f32 %v5322, 1.442695
        %v5342 = vpow.pop %v5341
        %v5343 = vmul.f32 %v5323, 1.442695
        %v5344 = vpow.pop %v5343
        %v5345 = vmul.f32 %v5324, 1.442695
        %v5346 = vpow.pop %v5345
        %v5347 = vmul.f32 %v5325, 1.442695
        %v5348 = vpow.pop %v5347
        %v5349 = vmul.f32 %v5326, 1.442695
        %v5350 = vpow.pop %v5349
        %v5351 = vmul.f32 %v5327, 1.442695
        %v5352 = vpow.pop %v5351
        %v5353 = vmul.f32 %v5328, 1.442695
        %v5354 = vpow.pop %v5353
        %v5355 = vmul.f32 %v5329, 1.442695
        %v5356 = vpow.pop %v5355
        %v5357 = vmul.f32 %v5330, 1.442695
        %v5358 = vpow.pop %v5357
        %v5359 = vmul.f32 %v5331, 1.442695
        %v5360 = vpow.pop %v5359
        %v5361 = vmul.f32 %v5332, 1.442695
        %v5362 = vpow.pop %v5361
        %v5363 = vmul.f32 %v5333, 1.442695
        %v5364 = vpow.pop %v5363
        %v5365 = vmul.f32 %v5334, 1.442695
        %v5366 = vpow.pop %v5365
        %5367 = vadd.xlane.f32.xlu0 %v5336
        %v5368 = vpop.xlane.xlu0 %5367
        %5369 = vadd.xlane.f32.xlu0 %v5338
        %v5370 = vpop.xlane.xlu0 %5369
        %5371 = vadd.xlane.f32.xlu0 %v5340
        %v5372 = vpop.xlane.xlu0 %5371
        %5373 = vadd.xlane.f32.xlu0 %v5342
        %v5374 = vpop.xlane.xlu0 %5373
        %5375 = vadd.xlane.f32.xlu0 %v5344
        %v5376 = vpop.xlane.xlu0 %5375
        %5377 = vadd.xlane.f32.xlu0 %v5346
        %v5378 = vpop.xlane.xlu0 %5377
        %5379 = vadd.xlane.f32.xlu0 %v5348
        %v5380 = vpop.xlane.xlu0 %5379
        %5381 = vadd.xlane.f32.xlu0 %v5350
        %v5382 = vpop.xlane.xlu0 %5381
        %5383 = vadd.xlane.f32.xlu0 %v5352
        %v5384 = vpop.xlane.xlu0 %5383
        %5385 = vadd.xlane.f32.xlu0 %v5354
        %v5386 = vpop.xlane.xlu0 %5385
        %5387 = vadd.xlane.f32.xlu0 %v5356
        %v5388 = vpop.xlane.xlu0 %5387
        %5389 = vadd.xlane.f32.xlu0 %v5358
        %v5390 = vpop.xlane.xlu0 %5389
        %5391 = vadd.xlane.f32.xlu0 %v5360
        %v5392 = vpop.xlane.xlu0 %5391
        %5393 = vadd.xlane.f32.xlu0 %v5362
        %v5394 = vpop.xlane.xlu0 %5393
        %5395 = vadd.xlane.f32.xlu0 %v5364
        %v5396 = vpop.xlane.xlu0 %5395
        %5397 = vadd.xlane.f32.xlu0 %v5366
        %v5398 = vpop.xlane.xlu0 %5397
        %v5399 = vrcp.pop %v5368
        %v5400 = vrcp.pop %v5370
        %v5401 = vrcp.pop %v5372
        %v5402 = vrcp.pop %v5374
        %v5403 = vrcp.pop %v5376
        %v5404 = vrcp.pop %v5378
        %v5405 = vrcp.pop %v5380
        %v5406 = vrcp.pop %v5382
        %v5407 = vrcp.pop %v5384
        %v5408 = vrcp.pop %v5386
        %v5409 = vrcp.pop %v5388
        %v5410 = vrcp.pop %v5390
        %v5411 = vrcp.pop %v5392
        %v5412 = vrcp.pop %v5394
        %v5413 = vrcp.pop %v5396
        %v5414 = vrcp.pop %v5398
        %v5415 = vmul.f32 %v5336, %v5399
        %v5416 = vmul.f32 %v5338, %v5400
        %v5417 = vmul.f32 %v5340, %v5401
        %v5418 = vmul.f32 %v5342, %v5402
        %v5419 = vmul.f32 %v5344, %v5403
        %v5420 = vmul.f32 %v5346, %v5404
        %v5421 = vmul.f32 %v5348, %v5405
        %v5422 = vmul.f32 %v5350, %v5406
        %v5423 = vmul.f32 %v5352, %v5407
        %v5424 = vmul.f32 %v5354, %v5408
        %v5425 = vmul.f32 %v5356, %v5409
        %v5426 = vmul.f32 %v5358, %v5410
        %v5427 = vmul.f32 %v5360, %v5411
        %v5428 = vmul.f32 %v5362, %v5412
        %v5429 = vmul.f32 %v5364, %v5413
        %v5430 = vmul.f32 %v5366, %v5414
        %s5431 = scalar_lea.vmem %s384, 256 [#allocation15]
        %5432 = vst [vmem:[%s5431] sm:$0xff] %v5415
        %5433 = vst [vmem:[%s5431 + $0x8] sm:$0xff] %v5416
        %5434 = vst [vmem:[%s5431 + $0x10] sm:$0xff] %v5417
        %5435 = vst [vmem:[%s5431 + $0x18] sm:$0xff] %v5418
        %5436 = vst [vmem:[%s5431 + $0x20] sm:$0xff] %v5419
        %5437 = vst [vmem:[%s5431 + $0x28] sm:$0xff] %v5420
        %5438 = vst [vmem:[%s5431 + $0x30] sm:$0xff] %v5421
        %5439 = vst [vmem:[%s5431 + $0x38] sm:$0xff] %v5422
        %5440 = vst [vmem:[%s5431 + $0x40] sm:$0xff] %v5423
        %5441 = vst [vmem:[%s5431 + $0x48] sm:$0xff] %v5424
        %5442 = vst [vmem:[%s5431 + $0x50] sm:$0xff] %v5425
        %5443 = vst [vmem:[%s5431 + $0x58] sm:$0xff] %v5426
        %5444 = vst [vmem:[%s5431 + $0x60] sm:$0xff] %v5427
        %5445 = vst [vmem:[%s5431 + $0x68] sm:$0xff] %v5428
        %5446 = vst [vmem:[%s5431 + $0x70] sm:$0xff] %v5429
        %5447 = vst [vmem:[%s5431 + $0x78] sm:$0xff] %v5430
        %5448 = vmatprep.subr.mxu0 0.0
        %5449 = vmatpush1.msra.mxu0 %v5029
        %5450 = vmatprep.subr.mxu0 0.0
        %5451 = vmatpush1.msra.mxu0 %v5028
        %5452 = vmatprep.subr.mxu0 0.0
        %5453 = vmatpush1.msra.mxu0 %v5027
        %5454 = vmatprep.subr.mxu0 0.0
        %5455 = vmatpush1.msra.mxu0 %v5026
        %5456 = vmatprep.subr.mxu0 0.0
        %5457 = vmatpush1.msra.mxu0 %v5025
        %5458 = vmatprep.subr.mxu0 0.0
        %5459 = vmatpush1.msra.mxu0 %v5024
        %5460 = vmatprep.subr.mxu0 0.0
        %5461 = vmatpush1.msra.mxu0 %v5023
        %5462 = vmatprep.subr.mxu0 0.0
        %5463 = vmatpush1.msra.mxu0 %v5022
        %5464 = vmatprep.subr.mxu0 0.0
        %5465 = vmatpush1.msra.mxu0 %v5021
        %5466 = vmatprep.subr.mxu0 0.0
        %5467 = vmatpush1.msra.mxu0 %v5020
        %5468 = vmatprep.subr.mxu0 0.0
        %5469 = vmatpush1.msra.mxu0 %v5019
        %5470 = vmatprep.subr.mxu0 0.0
        %5471 = vmatpush1.msra.mxu0 %v5018
        %5472 = vmatprep.subr.mxu0 0.0
        %5473 = vmatpush1.msra.mxu0 %v5017
        %5474 = vmatprep.subr.mxu0 0.0
        %5475 = vmatpush1.msra.mxu0 %v5016
        %5476 = vmatprep.subr.mxu0 0.0
        %5477 = vmatpush1.msra.mxu0 %v5015
        %5478 = vmatprep.subr.mxu0 0.0
        %5479 = vmatpush1.msra.mxu0 %v5014
        %5480 = vmatprep.subr.mxu0 0.0
        %5481 = vmatpush2.msra.mxu0 0.0
        %5482 = vmatprep.subr.mxu0 0.0
        %5483 = vmatpush2.msra.mxu0 0.0
        %5484 = vmatprep.subr.mxu0 0.0
        %5485 = vmatpush2.msra.mxu0 0.0
        %5486 = vmatprep.subr.mxu0 0.0
        %5487 = vmatpush2.msra.mxu0 0.0
        %5488 = vmatprep.subr.mxu0 0.0
        %5489 = vmatpush2.msra.mxu0 0.0
        %5490 = vmatprep.subr.mxu0 0.0
        %5491 = vmatpush2.msra.mxu0 0.0
        %5492 = vmatprep.subr.mxu0 0.0
        %5493 = vmatpush2.msra.mxu0 0.0
        %5494 = vmatprep.subr.mxu0 0.0
        %5495 = vmatpush2.msra.mxu0 0.0
        %5496 = vmatprep.subr.mxu0 0.0
        %5497 = vmatpush2.msra.mxu0 0.0
        %5498 = vmatprep.subr.mxu0 0.0
        %5499 = vmatpush2.msra.mxu0 0.0
        %5500 = vmatprep.subr.mxu0 0.0
        %5501 = vmatpush2.msra.mxu0 0.0
        %5502 = vmatprep.subr.mxu0 0.0
        %5503 = vmatpush2.msra.mxu0 0.0
        %5504 = vmatprep.subr.mxu0 0.0
        %5505 = vmatpush2.msra.mxu0 0.0
        %5506 = vmatprep.subr.mxu0 0.0
        %5507 = vmatpush2.msra.mxu0 0.0
        %5508 = vmatprep.subr.mxu0 0.0
        %5509 = vmatpush2.msra.mxu0 0.0
        %5510 = vmatprep.subr.mxu0 0.0
        %5511 = vmatpush2.msra.mxu0 0.0
        %5512 = vmatprep.mubr.f32.mxu0 0.0
        %5513 = vmatmul.mubr.f32.gmra.mxu0 %v5415
        %v5514 = vpop.f32.mrf.mxu0
        %v5515 = vadd.f32 0.0, %v5514
        %v5516 = vpop.f32.mrf.mxu0
        %5517 = vmatprep.mubr.f32.mxu0 0.0
        %5518 = vmatmul.mubr.f32.gmra.mxu0 %v5416
        %v5519 = vpop.f32.mrf.mxu0
        %v5520 = vadd.f32 0.0, %v5519
        %v5521 = vpop.f32.mrf.mxu0
        %5522 = vmatprep.mubr.f32.mxu0 0.0
        %5523 = vmatmul.mubr.f32.gmra.mxu0 %v5417
        %v5524 = vpop.f32.mrf.mxu0
        %v5525 = vadd.f32 0.0, %v5524
        %v5526 = vpop.f32.mrf.mxu0
        %5527 = vmatprep.mubr.f32.mxu0 0.0
        %5528 = vmatmul.mubr.f32.gmra.mxu0 %v5418
        %v5529 = vpop.f32.mrf.mxu0
        %v5530 = vadd.f32 0.0, %v5529
        %v5531 = vpop.f32.mrf.mxu0
        %5532 = vmatprep.mubr.f32.mxu0 0.0
        %5533 = vmatmul.mubr.f32.gmra.mxu0 %v5419
        %v5534 = vpop.f32.mrf.mxu0
        %v5535 = vadd.f32 0.0, %v5534
        %v5536 = vpop.f32.mrf.mxu0
        %5537 = vmatprep.mubr.f32.mxu0 0.0
        %5538 = vmatmul.mubr.f32.gmra.mxu0 %v5420
        %v5539 = vpop.f32.mrf.mxu0
        %v5540 = vadd.f32 0.0, %v5539
        %v5541 = vpop.f32.mrf.mxu0
        %5542 = vmatprep.mubr.f32.mxu0 0.0
        %5543 = vmatmul.mubr.f32.gmra.mxu0 %v5421
        %v5544 = vpop.f32.mrf.mxu0
        %v5545 = vadd.f32 0.0, %v5544
        %v5546 = vpop.f32.mrf.mxu0
        %5547 = vmatprep.mubr.f32.mxu0 0.0
        %5548 = vmatmul.mubr.f32.gmra.mxu0 %v5422
        %v5549 = vpop.f32.mrf.mxu0
        %v5550 = vadd.f32 0.0, %v5549
        %v5551 = vpop.f32.mrf.mxu0
        %5552 = vmatprep.mubr.f32.mxu0 0.0
        %5553 = vmatmul.mubr.f32.gmra.mxu0 %v5423
        %v5554 = vpop.f32.mrf.mxu0
        %v5555 = vadd.f32 0.0, %v5554
        %v5556 = vpop.f32.mrf.mxu0
        %5557 = vmatprep.mubr.f32.mxu0 0.0
        %5558 = vmatmul.mubr.f32.gmra.mxu0 %v5424
        %v5559 = vpop.f32.mrf.mxu0
        %v5560 = vadd.f32 0.0, %v5559
        %v5561 = vpop.f32.mrf.mxu0
        %5562 = vmatprep.mubr.f32.mxu0 0.0
        %5563 = vmatmul.mubr.f32.gmra.mxu0 %v5425
        %v5564 = vpop.f32.mrf.mxu0
        %v5565 = vadd.f32 0.0, %v5564
        %v5566 = vpop.f32.mrf.mxu0
        %5567 = vmatprep.mubr.f32.mxu0 0.0
        %5568 = vmatmul.mubr.f32.gmra.mxu0 %v5426
        %v5569 = vpop.f32.mrf.mxu0
        %v5570 = vadd.f32 0.0, %v5569
        %v5571 = vpop.f32.mrf.mxu0
        %5572 = vmatprep.mubr.f32.mxu0 0.0
        %5573 = vmatmul.mubr.f32.gmra.mxu0 %v5427
        %v5574 = vpop.f32.mrf.mxu0
        %v5575 = vadd.f32 0.0, %v5574
        %v5576 = vpop.f32.mrf.mxu0
        %5577 = vmatprep.mubr.f32.mxu0 0.0
        %5578 = vmatmul.mubr.f32.gmra.mxu0 %v5428
        %v5579 = vpop.f32.mrf.mxu0
        %v5580 = vadd.f32 0.0, %v5579
        %v5581 = vpop.f32.mrf.mxu0
        %5582 = vmatprep.mubr.f32.mxu0 0.0
        %5583 = vmatmul.mubr.f32.gmra.mxu0 %v5429
        %v5584 = vpop.f32.mrf.mxu0
        %v5585 = vadd.f32 0.0, %v5584
        %v5586 = vpop.f32.mrf.mxu0
        %5587 = vmatprep.mubr.f32.mxu0 0.0
        %5588 = vmatmul.mubr.f32.gmra.mxu0 %v5430
        %v5589 = vpop.f32.mrf.mxu0
        %v5590 = vadd.f32 0.0, %v5589
        %v5591 = vpop.f32.mrf.mxu0
        %5592 = vdwg.mxu0
        %5593 = vst.msk [vmem:[%s377 + $0x8] sm:$0xff] %vm3583, %v5515
        %5594 = vst.msk [vmem:[%s377 + $0x28] sm:$0xff] %vm3583, %v5520
        %5595 = vst.msk [vmem:[%s377 + $0x48] sm:$0xff] %vm3583, %v5525
        %5596 = vst.msk [vmem:[%s377 + $0x68] sm:$0xff] %vm3583, %v5530
        %5597 = vst.msk [vmem:[%s377 + $0x88] sm:$0xff] %vm3583, %v5535
        %5598 = vst.msk [vmem:[%s377 + $0xa8] sm:$0xff] %vm3583, %v5540
        %5599 = vst.msk [vmem:[%s377 + $0xc8] sm:$0xff] %vm3583, %v5545
        %5600 = vst.msk [vmem:[%s377 + $0xe8] sm:$0xff] %vm3583, %v5550
        %5601 = vst.msk [vmem:[%s377 + $0x108] sm:$0xff] %vm3583, %v5555
        %5602 = vst.msk [vmem:[%s377 + $0x128] sm:$0xff] %vm3583, %v5560
        %5603 = vst.msk [vmem:[%s377 + $0x148] sm:$0xff] %vm3583, %v5565
        %5604 = vst.msk [vmem:[%s377 + $0x168] sm:$0xff] %vm3583, %v5570
        %5605 = vst.msk [vmem:[%s377 + $0x188] sm:$0xff] %vm3583, %v5575
        %5606 = vst.msk [vmem:[%s377 + $0x1a8] sm:$0xff] %vm3583, %v5580
        %5607 = vst.msk [vmem:[%s377 + $0x1c8] sm:$0xff] %vm3583, %v5585
        %5608 = vst.msk [vmem:[%s377 + $0x1e8] sm:$0xff] %vm3583, %v5590
        %v5609 = vld [vmem:[#allocation2 + $0x8] sm:$0xff]
        %v5610 = vld [vmem:[#allocation2 + $0x28] sm:$0xff]
        %v5611 = vld [vmem:[#allocation2 + $0x48] sm:$0xff]
        %v5612 = vld [vmem:[#allocation2 + $0x68] sm:$0xff]
        %v5613 = vld [vmem:[#allocation2 + $0x88] sm:$0xff]
        %v5614 = vld [vmem:[#allocation2 + $0xa8] sm:$0xff]
        %v5615 = vld [vmem:[#allocation2 + $0xc8] sm:$0xff]
        %v5616 = vld [vmem:[#allocation2 + $0xe8] sm:$0xff]
        %v5617 = vld [vmem:[#allocation2 + $0x108] sm:$0xff]
        %v5618 = vld [vmem:[#allocation2 + $0x128] sm:$0xff]
        %v5619 = vld [vmem:[#allocation2 + $0x148] sm:$0xff]
        %v5620 = vld [vmem:[#allocation2 + $0x168] sm:$0xff]
        %v5621 = vld [vmem:[#allocation2 + $0x188] sm:$0xff]
        %v5622 = vld [vmem:[#allocation2 + $0x1a8] sm:$0xff]
        %v5623 = vld [vmem:[#allocation2 + $0x1c8] sm:$0xff]
        %v5624 = vld [vmem:[#allocation2 + $0x1e8] sm:$0xff]
        %v5625 = vld [vmem:[#allocation3 + $0x8] sm:$0xff]
        %v5626 = vld [vmem:[#allocation3 + $0x28] sm:$0xff]
        %v5627 = vld [vmem:[#allocation3 + $0x48] sm:$0xff]
        %v5628 = vld [vmem:[#allocation3 + $0x68] sm:$0xff]
        %v5629 = vld [vmem:[#allocation3 + $0x88] sm:$0xff]
        %v5630 = vld [vmem:[#allocation3 + $0xa8] sm:$0xff]
        %v5631 = vld [vmem:[#allocation3 + $0xc8] sm:$0xff]
        %v5632 = vld [vmem:[#allocation3 + $0xe8] sm:$0xff]
        %v5633 = vld [vmem:[#allocation3 + $0x108] sm:$0xff]
        %v5634 = vld [vmem:[#allocation3 + $0x128] sm:$0xff]
        %v5635 = vld [vmem:[#allocation3 + $0x148] sm:$0xff]
        %v5636 = vld [vmem:[#allocation3 + $0x168] sm:$0xff]
        %v5637 = vld [vmem:[#allocation3 + $0x188] sm:$0xff]
        %v5638 = vld [vmem:[#allocation3 + $0x1a8] sm:$0xff]
        %v5639 = vld [vmem:[#allocation3 + $0x1c8] sm:$0xff]
        %v5640 = vld [vmem:[#allocation3 + $0x1e8] sm:$0xff]
        %v5641 = vld [vmem:[#allocation4 + $0x8] sm:$0xff]
        %v5642 = vld [vmem:[#allocation4 + $0x28] sm:$0xff]
        %v5643 = vld [vmem:[#allocation4 + $0x48] sm:$0xff]
        %v5644 = vld [vmem:[#allocation4 + $0x68] sm:$0xff]
        %v5645 = vld [vmem:[#allocation4 + $0x88] sm:$0xff]
        %v5646 = vld [vmem:[#allocation4 + $0xa8] sm:$0xff]
        %v5647 = vld [vmem:[#allocation4 + $0xc8] sm:$0xff]
        %v5648 = vld [vmem:[#allocation4 + $0xe8] sm:$0xff]
        %v5649 = vld [vmem:[#allocation4 + $0x108] sm:$0xff]
        %v5650 = vld [vmem:[#allocation4 + $0x128] sm:$0xff]
        %v5651 = vld [vmem:[#allocation4 + $0x148] sm:$0xff]
        %v5652 = vld [vmem:[#allocation4 + $0x168] sm:$0xff]
        %v5653 = vld [vmem:[#allocation4 + $0x188] sm:$0xff]
        %v5654 = vld [vmem:[#allocation4 + $0x1a8] sm:$0xff]
        %v5655 = vld [vmem:[#allocation4 + $0x1c8] sm:$0xff]
        %v5656 = vld [vmem:[#allocation4 + $0x1e8] sm:$0xff]
        %5673 = vrot.lane.b32.xlu0 %v5609, 64
        %v5674 = vpop.permute.xlu0 %5673
        %5675 = vrot.lane.b32.xlu0 %v5610, 64
        %v5676 = vpop.permute.xlu0 %5675
        %5677 = vrot.lane.b32.xlu0 %v5611, 64
        %v5678 = vpop.permute.xlu0 %5677
        %5679 = vrot.lane.b32.xlu0 %v5612, 64
        %v5680 = vpop.permute.xlu0 %5679
        %5681 = vrot.lane.b32.xlu0 %v5613, 64
        %v5682 = vpop.permute.xlu0 %5681
        %5683 = vrot.lane.b32.xlu0 %v5614, 64
        %v5684 = vpop.permute.xlu0 %5683
        %5685 = vrot.lane.b32.xlu0 %v5615, 64
        %v5686 = vpop.permute.xlu0 %5685
        %5687 = vrot.lane.b32.xlu0 %v5616, 64
        %v5688 = vpop.permute.xlu0 %5687
        %5689 = vrot.lane.b32.xlu0 %v5617, 64
        %v5690 = vpop.permute.xlu0 %5689
        %5691 = vrot.lane.b32.xlu0 %v5618, 64
        %v5692 = vpop.permute.xlu0 %5691
        %5693 = vrot.lane.b32.xlu0 %v5619, 64
        %v5694 = vpop.permute.xlu0 %5693
        %5695 = vrot.lane.b32.xlu0 %v5620, 64
        %v5696 = vpop.permute.xlu0 %5695
        %5697 = vrot.lane.b32.xlu0 %v5621, 64
        %v5698 = vpop.permute.xlu0 %5697
        %5699 = vrot.lane.b32.xlu0 %v5622, 64
        %v5700 = vpop.permute.xlu0 %5699
        %5701 = vrot.lane.b32.xlu0 %v5623, 64
        %v5702 = vpop.permute.xlu0 %5701
        %5703 = vrot.lane.b32.xlu0 %v5624, 64
        %v5704 = vpop.permute.xlu0 %5703
        %5721 = vrot.lane.b32.xlu0 %v5625, 64
        %v5722 = vpop.permute.xlu0 %5721
        %5723 = vrot.lane.b32.xlu0 %v5626, 64
        %v5724 = vpop.permute.xlu0 %5723
        %5725 = vrot.lane.b32.xlu0 %v5627, 64
        %v5726 = vpop.permute.xlu0 %5725
        %5727 = vrot.lane.b32.xlu0 %v5628, 64
        %v5728 = vpop.permute.xlu0 %5727
        %5729 = vrot.lane.b32.xlu0 %v5629, 64
        %v5730 = vpop.permute.xlu0 %5729
        %5731 = vrot.lane.b32.xlu0 %v5630, 64
        %v5732 = vpop.permute.xlu0 %5731
        %5733 = vrot.lane.b32.xlu0 %v5631, 64
        %v5734 = vpop.permute.xlu0 %5733
        %5735 = vrot.lane.b32.xlu0 %v5632, 64
        %v5736 = vpop.permute.xlu0 %5735
        %5737 = vrot.lane.b32.xlu0 %v5633, 64
        %v5738 = vpop.permute.xlu0 %5737
        %5739 = vrot.lane.b32.xlu0 %v5634, 64
        %v5740 = vpop.permute.xlu0 %5739
        %5741 = vrot.lane.b32.xlu0 %v5635, 64
        %v5742 = vpop.permute.xlu0 %5741
        %5743 = vrot.lane.b32.xlu0 %v5636, 64
        %v5744 = vpop.permute.xlu0 %5743
        %5745 = vrot.lane.b32.xlu0 %v5637, 64
        %v5746 = vpop.permute.xlu0 %5745
        %5747 = vrot.lane.b32.xlu0 %v5638, 64
        %v5748 = vpop.permute.xlu0 %5747
        %5749 = vrot.lane.b32.xlu0 %v5639, 64
        %v5750 = vpop.permute.xlu0 %5749
        %5751 = vrot.lane.b32.xlu0 %v5640, 64
        %v5752 = vpop.permute.xlu0 %5751
        %v5753 = vsel %vm3583, %v5674, 0
        %v5755 = vsel %vm3583, %v5676, 0
        %v5757 = vsel %vm3583, %v5678, 0
        %v5759 = vsel %vm3583, %v5680, 0
        %v5761 = vsel %vm3583, %v5682, 0
        %v5763 = vsel %vm3583, %v5684, 0
        %v5765 = vsel %vm3583, %v5686, 0
        %v5767 = vsel %vm3583, %v5688, 0
        %v5769 = vsel %vm3583, %v5690, 0
        %v5771 = vsel %vm3583, %v5692, 0
        %v5773 = vsel %vm3583, %v5694, 0
        %v5775 = vsel %vm3583, %v5696, 0
        %v5777 = vsel %vm3583, %v5698, 0
        %v5779 = vsel %vm3583, %v5700, 0
        %v5781 = vsel %vm3583, %v5702, 0
        %v5783 = vsel %vm3583, %v5704, 0
        %v5785 = vsel %vm3583, %v5722, 0
        %v5787 = vsel %vm3583, %v5724, 0
        %v5789 = vsel %vm3583, %v5726, 0
        %v5791 = vsel %vm3583, %v5728, 0
        %v5793 = vsel %vm3583, %v5730, 0
        %v5795 = vsel %vm3583, %v5732, 0
        %v5797 = vsel %vm3583, %v5734, 0
        %v5799 = vsel %vm3583, %v5736, 0
        %v5801 = vsel %vm3583, %v5738, 0
        %v5803 = vsel %vm3583, %v5740, 0
        %v5805 = vsel %vm3583, %v5742, 0
        %v5807 = vsel %vm3583, %v5744, 0
        %v5809 = vsel %vm3583, %v5746, 0
        %v5811 = vsel %vm3583, %v5748, 0
        %v5813 = vsel %vm3583, %v5750, 0
        %v5815 = vsel %vm3583, %v5752, 0
        %5817 = vmatprep.subr.mxu0 0.0
        %5818 = vmatpush1.xpose.msra.mxu0 %v5815
        %5819 = vmatprep.subr.mxu0 0.0
        %5820 = vmatpush1.xpose.msra.mxu0 %v5813
        %5821 = vmatprep.subr.mxu0 0.0
        %5822 = vmatpush1.xpose.msra.mxu0 %v5811
        %5823 = vmatprep.subr.mxu0 0.0
        %5824 = vmatpush1.xpose.msra.mxu0 %v5809
        %5825 = vmatprep.subr.mxu0 0.0
        %5826 = vmatpush1.xpose.msra.mxu0 %v5807
        %5827 = vmatprep.subr.mxu0 0.0
        %5828 = vmatpush1.xpose.msra.mxu0 %v5805
        %5829 = vmatprep.subr.mxu0 0.0
        %5830 = vmatpush1.xpose.msra.mxu0 %v5803
        %5831 = vmatprep.subr.mxu0 0.0
        %5832 = vmatpush1.xpose.msra.mxu0 %v5801
        %5833 = vmatprep.subr.mxu0 0.0
        %5834 = vmatpush1.xpose.msra.mxu0 %v5799
        %5835 = vmatprep.subr.mxu0 0.0
        %5836 = vmatpush1.xpose.msra.mxu0 %v5797
        %5837 = vmatprep.subr.mxu0 0.0
        %5838 = vmatpush1.xpose.msra.mxu0 %v5795
        %5839 = vmatprep.subr.mxu0 0.0
        %5840 = vmatpush1.xpose.msra.mxu0 %v5793
        %5841 = vmatprep.subr.mxu0 0.0
        %5842 = vmatpush1.xpose.msra.mxu0 %v5791
        %5843 = vmatprep.subr.mxu0 0.0
        %5844 = vmatpush1.xpose.msra.mxu0 %v5789
        %5845 = vmatprep.subr.mxu0 0.0
        %5846 = vmatpush1.xpose.msra.mxu0 %v5787
        %5847 = vmatprep.subr.mxu0 0.0
        %5848 = vmatpush1.xpose.msra.mxu0 %v5785
        %5849 = vmatprep.subr.mxu0 0.0
        %5850 = vmatpush2.xpose.msra.mxu0 0.0
        %5851 = vmatprep.subr.mxu0 0.0
        %5852 = vmatpush2.xpose.msra.mxu0 0.0
        %5853 = vmatprep.subr.mxu0 0.0
        %5854 = vmatpush2.xpose.msra.mxu0 0.0
        %5855 = vmatprep.subr.mxu0 0.0
        %5856 = vmatpush2.xpose.msra.mxu0 0.0
        %5857 = vmatprep.subr.mxu0 0.0
        %5858 = vmatpush2.xpose.msra.mxu0 0.0
        %5859 = vmatprep.subr.mxu0 0.0
        %5860 = vmatpush2.xpose.msra.mxu0 0.0
        %5861 = vmatprep.subr.mxu0 0.0
        %5862 = vmatpush2.xpose.msra.mxu0 0.0
        %5863 = vmatprep.subr.mxu0 0.0
        %5864 = vmatpush2.xpose.msra.mxu0 0.0
        %5865 = vmatprep.subr.mxu0 0.0
        %5866 = vmatpush2.xpose.msra.mxu0 0.0
        %5867 = vmatprep.subr.mxu0 0.0
        %5868 = vmatpush2.xpose.msra.mxu0 0.0
        %5869 = vmatprep.subr.mxu0 0.0
        %5870 = vmatpush2.xpose.msra.mxu0 0.0
        %5871 = vmatprep.subr.mxu0 0.0
        %5872 = vmatpush2.xpose.msra.mxu0 0.0
        %5873 = vmatprep.subr.mxu0 0.0
        %5874 = vmatpush2.xpose.msra.mxu0 0.0
        %5875 = vmatprep.subr.mxu0 0.0
        %5876 = vmatpush2.xpose.msra.mxu0 0.0
        %5877 = vmatprep.subr.mxu0 0.0
        %5878 = vmatpush2.xpose.msra.mxu0 0.0
        %5879 = vmatprep.subr.mxu0 0.0
        %5880 = vmatpush2.xpose.msra.mxu0 0.0
        %5881 = vmatprep.mubr.f32.mxu0 0.0
        %5882 = vmatmul.mubr.f32.gmra.mxu0 %v5753
        %v5883 = vpop.f32.mrf.mxu0
        %v5884 = vadd.f32 0.0, %v5883
        %v5885 = vpop.f32.mrf.mxu0
        %5886 = vmatprep.mubr.f32.mxu0 0.0
        %5887 = vmatmul.mubr.f32.gmra.mxu0 %v5755
        %v5888 = vpop.f32.mrf.mxu0
        %v5889 = vadd.f32 0.0, %v5888
        %v5890 = vpop.f32.mrf.mxu0
        %5891 = vmatprep.mubr.f32.mxu0 0.0
        %5892 = vmatmul.mubr.f32.gmra.mxu0 %v5757
        %v5893 = vpop.f32.mrf.mxu0
        %v5894 = vadd.f32 0.0, %v5893
        %v5895 = vpop.f32.mrf.mxu0
        %5896 = vmatprep.mubr.f32.mxu0 0.0
        %5897 = vmatmul.mubr.f32.gmra.mxu0 %v5759
        %v5898 = vpop.f32.mrf.mxu0
        %v5899 = vadd.f32 0.0, %v5898
        %v5900 = vpop.f32.mrf.mxu0
        %5901 = vmatprep.mubr.f32.mxu0 0.0
        %5902 = vmatmul.mubr.f32.gmra.mxu0 %v5761
        %v5903 = vpop.f32.mrf.mxu0
        %v5904 = vadd.f32 0.0, %v5903
        %v5905 = vpop.f32.mrf.mxu0
        %5906 = vmatprep.mubr.f32.mxu0 0.0
        %5907 = vmatmul.mubr.f32.gmra.mxu0 %v5763
        %v5908 = vpop.f32.mrf.mxu0
        %v5909 = vadd.f32 0.0, %v5908
        %v5910 = vpop.f32.mrf.mxu0
        %5911 = vmatprep.mubr.f32.mxu0 0.0
        %5912 = vmatmul.mubr.f32.gmra.mxu0 %v5765
        %v5913 = vpop.f32.mrf.mxu0
        %v5914 = vadd.f32 0.0, %v5913
        %v5915 = vpop.f32.mrf.mxu0
        %5916 = vmatprep.mubr.f32.mxu0 0.0
        %5917 = vmatmul.mubr.f32.gmra.mxu0 %v5767
        %v5918 = vpop.f32.mrf.mxu0
        %v5919 = vadd.f32 0.0, %v5918
        %v5920 = vpop.f32.mrf.mxu0
        %5921 = vmatprep.mubr.f32.mxu0 0.0
        %5922 = vmatmul.mubr.f32.gmra.mxu0 %v5769
        %v5923 = vpop.f32.mrf.mxu0
        %v5924 = vadd.f32 0.0, %v5923
        %v5925 = vpop.f32.mrf.mxu0
        %5926 = vmatprep.mubr.f32.mxu0 0.0
        %5927 = vmatmul.mubr.f32.gmra.mxu0 %v5771
        %v5928 = vpop.f32.mrf.mxu0
        %v5929 = vadd.f32 0.0, %v5928
        %v5930 = vpop.f32.mrf.mxu0
        %5931 = vmatprep.mubr.f32.mxu0 0.0
        %5932 = vmatmul.mubr.f32.gmra.mxu0 %v5773
        %v5933 = vpop.f32.mrf.mxu0
        %v5934 = vadd.f32 0.0, %v5933
        %v5935 = vpop.f32.mrf.mxu0
        %5936 = vmatprep.mubr.f32.mxu0 0.0
        %5937 = vmatmul.mubr.f32.gmra.mxu0 %v5775
        %v5938 = vpop.f32.mrf.mxu0
        %v5939 = vadd.f32 0.0, %v5938
        %v5940 = vpop.f32.mrf.mxu0
        %5941 = vmatprep.mubr.f32.mxu0 0.0
        %5942 = vmatmul.mubr.f32.gmra.mxu0 %v5777
        %v5943 = vpop.f32.mrf.mxu0
        %v5944 = vadd.f32 0.0, %v5943
        %v5945 = vpop.f32.mrf.mxu0
        %5946 = vmatprep.mubr.f32.mxu0 0.0
        %5947 = vmatmul.mubr.f32.gmra.mxu0 %v5779
        %v5948 = vpop.f32.mrf.mxu0
        %v5949 = vadd.f32 0.0, %v5948
        %v5950 = vpop.f32.mrf.mxu0
        %5951 = vmatprep.mubr.f32.mxu0 0.0
        %5952 = vmatmul.mubr.f32.gmra.mxu0 %v5781
        %v5953 = vpop.f32.mrf.mxu0
        %v5954 = vadd.f32 0.0, %v5953
        %v5955 = vpop.f32.mrf.mxu0
        %5956 = vmatprep.mubr.f32.mxu0 0.0
        %5957 = vmatmul.mubr.f32.gmra.mxu0 %v5783
        %v5958 = vpop.f32.mrf.mxu0
        %v5959 = vadd.f32 0.0, %v5958
        %v5960 = vpop.f32.mrf.mxu0
        %5961 = vdwg.mxu0
        %v5962 = vmul.f32 %v5884, 0.125
        %v5963 = vmul.f32 %v5889, 0.125
        %v5964 = vmul.f32 %v5894, 0.125
        %v5965 = vmul.f32 %v5899, 0.125
        %v5966 = vmul.f32 %v5904, 0.125
        %v5967 = vmul.f32 %v5909, 0.125
        %v5968 = vmul.f32 %v5914, 0.125
        %v5969 = vmul.f32 %v5919, 0.125
        %v5970 = vmul.f32 %v5924, 0.125
        %v5971 = vmul.f32 %v5929, 0.125
        %v5972 = vmul.f32 %v5934, 0.125
        %v5973 = vmul.f32 %v5939, 0.125
        %v5974 = vmul.f32 %v5944, 0.125
        %v5975 = vmul.f32 %v5949, 0.125
        %v5976 = vmul.f32 %v5954, 0.125
        %v5977 = vmul.f32 %v5959, 0.125
        %5978 = vmax.xlane.f32.xlu0 %v5962
        %v5979 = vpop.xlane.xlu0 %5978
        %5980 = vmax.xlane.f32.xlu0 %v5963
        %v5981 = vpop.xlane.xlu0 %5980
        %5982 = vmax.xlane.f32.xlu0 %v5964
        %v5983 = vpop.xlane.xlu0 %5982
        %5984 = vmax.xlane.f32.xlu0 %v5965
        %v5985 = vpop.xlane.xlu0 %5984
        %5986 = vmax.xlane.f32.xlu0 %v5966
        %v5987 = vpop.xlane.xlu0 %5986
        %5988 = vmax.xlane.f32.xlu0 %v5967
        %v5989 = vpop.xlane.xlu0 %5988
        %5990 = vmax.xlane.f32.xlu0 %v5968
        %v5991 = vpop.xlane.xlu0 %5990
        %5992 = vmax.xlane.f32.xlu0 %v5969
        %v5993 = vpop.xlane.xlu0 %5992
        %5994 = vmax.xlane.f32.xlu0 %v5970
        %v5995 = vpop.xlane.xlu0 %5994
        %5996 = vmax.xlane.f32.xlu0 %v5971
        %v5997 = vpop.xlane.xlu0 %5996
        %5998 = vmax.xlane.f32.xlu0 %v5972
        %v5999 = vpop.xlane.xlu0 %5998
        %6000 = vmax.xlane.f32.xlu0 %v5973
        %v6001 = vpop.xlane.xlu0 %6000
        %6002 = vmax.xlane.f32.xlu0 %v5974
        %v6003 = vpop.xlane.xlu0 %6002
        %6004 = vmax.xlane.f32.xlu0 %v5975
        %v6005 = vpop.xlane.xlu0 %6004
        %6006 = vmax.xlane.f32.xlu0 %v5976
        %v6007 = vpop.xlane.xlu0 %6006
        %6008 = vmax.xlane.f32.xlu0 %v5977
        %v6009 = vpop.xlane.xlu0 %6008
        %v6010 = vsub.f32 %v5962, %v5979
        %v6011 = vsub.f32 %v5963, %v5981
        %v6012 = vsub.f32 %v5964, %v5983
        %v6013 = vsub.f32 %v5965, %v5985
        %v6014 = vsub.f32 %v5966, %v5987
        %v6015 = vsub.f32 %v5967, %v5989
        %v6016 = vsub.f32 %v5968, %v5991
        %v6017 = vsub.f32 %v5969, %v5993
        %v6018 = vsub.f32 %v5970, %v5995
        %v6019 = vsub.f32 %v5971, %v5997
        %v6020 = vsub.f32 %v5972, %v5999
        %v6021 = vsub.f32 %v5973, %v6001
        %v6022 = vsub.f32 %v5974, %v6003
        %v6023 = vsub.f32 %v5975, %v6005
        %v6024 = vsub.f32 %v5976, %v6007
        %v6025 = vsub.f32 %v5977, %v6009
        %v6026 = vmul.f32 %v6010, 1.442695
        %v6027 = vpow.pop %v6026
        %v6028 = vmul.f32 %v6011, 1.442695
        %v6029 = vpow.pop %v6028
        %v6030 = vmul.f32 %v6012, 1.442695
        %v6031 = vpow.pop %v6030
        %v6032 = vmul.f32 %v6013, 1.442695
        %v6033 = vpow.pop %v6032
        %v6034 = vmul.f32 %v6014, 1.442695
        %v6035 = vpow.pop %v6034
        %v6036 = vmul.f32 %v6015, 1.442695
        %v6037 = vpow.pop %v6036
        %v6038 = vmul.f32 %v6016, 1.442695
        %v6039 = vpow.pop %v6038
        %v6040 = vmul.f32 %v6017, 1.442695
        %v6041 = vpow.pop %v6040
        %v6042 = vmul.f32 %v6018, 1.442695
        %v6043 = vpow.pop %v6042
        %v6044 = vmul.f32 %v6019, 1.442695
        %v6045 = vpow.pop %v6044
        %v6046 = vmul.f32 %v6020, 1.442695
        %v6047 = vpow.pop %v6046
        %v6048 = vmul.f32 %v6021, 1.442695
        %v6049 = vpow.pop %v6048
        %v6050 = vmul.f32 %v6022, 1.442695
        %v6051 = vpow.pop %v6050
        %v6052 = vmul.f32 %v6023, 1.442695
        %v6053 = vpow.pop %v6052
        %v6054 = vmul.f32 %v6024, 1.442695
        %v6055 = vpow.pop %v6054
        %v6056 = vmul.f32 %v6025, 1.442695
        %v6057 = vpow.pop %v6056
        %6058 = vadd.xlane.f32.xlu0 %v6027
        %v6059 = vpop.xlane.xlu0 %6058
        %6060 = vadd.xlane.f32.xlu0 %v6029
        %v6061 = vpop.xlane.xlu0 %6060
        %6062 = vadd.xlane.f32.xlu0 %v6031
        %v6063 = vpop.xlane.xlu0 %6062
        %6064 = vadd.xlane.f32.xlu0 %v6033
        %v6065 = vpop.xlane.xlu0 %6064
        %6066 = vadd.xlane.f32.xlu0 %v6035
        %v6067 = vpop.xlane.xlu0 %6066
        %6068 = vadd.xlane.f32.xlu0 %v6037
        %v6069 = vpop.xlane.xlu0 %6068
        %6070 = vadd.xlane.f32.xlu0 %v6039
        %v6071 = vpop.xlane.xlu0 %6070
        %6072 = vadd.xlane.f32.xlu0 %v6041
        %v6073 = vpop.xlane.xlu0 %6072
        %6074 = vadd.xlane.f32.xlu0 %v6043
        %v6075 = vpop.xlane.xlu0 %6074
        %6076 = vadd.xlane.f32.xlu0 %v6045
        %v6077 = vpop.xlane.xlu0 %6076
        %6078 = vadd.xlane.f32.xlu0 %v6047
        %v6079 = vpop.xlane.xlu0 %6078
        %6080 = vadd.xlane.f32.xlu0 %v6049
        %v6081 = vpop.xlane.xlu0 %6080
        %6082 = vadd.xlane.f32.xlu0 %v6051
        %v6083 = vpop.xlane.xlu0 %6082
        %6084 = vadd.xlane.f32.xlu0 %v6053
        %v6085 = vpop.xlane.xlu0 %6084
        %6086 = vadd.xlane.f32.xlu0 %v6055
        %v6087 = vpop.xlane.xlu0 %6086
        %6088 = vadd.xlane.f32.xlu0 %v6057
        %v6089 = vpop.xlane.xlu0 %6088
        %v6090 = vrcp.pop %v6059
        %v6091 = vrcp.pop %v6061
        %v6092 = vrcp.pop %v6063
        %v6093 = vrcp.pop %v6065
        %v6094 = vrcp.pop %v6067
        %v6095 = vrcp.pop %v6069
        %v6096 = vrcp.pop %v6071
        %v6097 = vrcp.pop %v6073
        %v6098 = vrcp.pop %v6075
        %v6099 = vrcp.pop %v6077
        %v6100 = vrcp.pop %v6079
        %v6101 = vrcp.pop %v6081
        %v6102 = vrcp.pop %v6083
        %v6103 = vrcp.pop %v6085
        %v6104 = vrcp.pop %v6087
        %v6105 = vrcp.pop %v6089
        %v6106 = vmul.f32 %v6027, %v6090
        %v6107 = vmul.f32 %v6029, %v6091
        %v6108 = vmul.f32 %v6031, %v6092
        %v6109 = vmul.f32 %v6033, %v6093
        %v6110 = vmul.f32 %v6035, %v6094
        %v6111 = vmul.f32 %v6037, %v6095
        %v6112 = vmul.f32 %v6039, %v6096
        %v6113 = vmul.f32 %v6041, %v6097
        %v6114 = vmul.f32 %v6043, %v6098
        %v6115 = vmul.f32 %v6045, %v6099
        %v6116 = vmul.f32 %v6047, %v6100
        %v6117 = vmul.f32 %v6049, %v6101
        %v6118 = vmul.f32 %v6051, %v6102
        %v6119 = vmul.f32 %v6053, %v6103
        %v6120 = vmul.f32 %v6055, %v6104
        %v6121 = vmul.f32 %v6057, %v6105
        %s6122 = scalar_lea.vmem %s384, 384 [#allocation15]
        %6123 = vst [vmem:[%s6122] sm:$0xff] %v6106
        %6124 = vst [vmem:[%s6122 + $0x8] sm:$0xff] %v6107
        %6125 = vst [vmem:[%s6122 + $0x10] sm:$0xff] %v6108
        %6126 = vst [vmem:[%s6122 + $0x18] sm:$0xff] %v6109
        %6127 = vst [vmem:[%s6122 + $0x20] sm:$0xff] %v6110
        %6128 = vst [vmem:[%s6122 + $0x28] sm:$0xff] %v6111
        %6129 = vst [vmem:[%s6122 + $0x30] sm:$0xff] %v6112
        %6130 = vst [vmem:[%s6122 + $0x38] sm:$0xff] %v6113
        %6131 = vst [vmem:[%s6122 + $0x40] sm:$0xff] %v6114
        %6132 = vst [vmem:[%s6122 + $0x48] sm:$0xff] %v6115
        %6133 = vst [vmem:[%s6122 + $0x50] sm:$0xff] %v6116
        %6134 = vst [vmem:[%s6122 + $0x58] sm:$0xff] %v6117
        %6135 = vst [vmem:[%s6122 + $0x60] sm:$0xff] %v6118
        %6136 = vst [vmem:[%s6122 + $0x68] sm:$0xff] %v6119
        %6137 = vst [vmem:[%s6122 + $0x70] sm:$0xff] %v6120
        %6138 = vst [vmem:[%s6122 + $0x78] sm:$0xff] %v6121
        %6155 = vrot.lane.b32.xlu0 %v5641, 64
        %v6156 = vpop.permute.xlu0 %6155
        %6157 = vrot.lane.b32.xlu0 %v5642, 64
        %v6158 = vpop.permute.xlu0 %6157
        %6159 = vrot.lane.b32.xlu0 %v5643, 64
        %v6160 = vpop.permute.xlu0 %6159
        %6161 = vrot.lane.b32.xlu0 %v5644, 64
        %v6162 = vpop.permute.xlu0 %6161
        %6163 = vrot.lane.b32.xlu0 %v5645, 64
        %v6164 = vpop.permute.xlu0 %6163
        %6165 = vrot.lane.b32.xlu0 %v5646, 64
        %v6166 = vpop.permute.xlu0 %6165
        %6167 = vrot.lane.b32.xlu0 %v5647, 64
        %v6168 = vpop.permute.xlu0 %6167
        %6169 = vrot.lane.b32.xlu0 %v5648, 64
        %v6170 = vpop.permute.xlu0 %6169
        %6171 = vrot.lane.b32.xlu0 %v5649, 64
        %v6172 = vpop.permute.xlu0 %6171
        %6173 = vrot.lane.b32.xlu0 %v5650, 64
        %v6174 = vpop.permute.xlu0 %6173
        %6175 = vrot.lane.b32.xlu0 %v5651, 64
        %v6176 = vpop.permute.xlu0 %6175
        %6177 = vrot.lane.b32.xlu0 %v5652, 64
        %v6178 = vpop.permute.xlu0 %6177
        %6179 = vrot.lane.b32.xlu0 %v5653, 64
        %v6180 = vpop.permute.xlu0 %6179
        %6181 = vrot.lane.b32.xlu0 %v5654, 64
        %v6182 = vpop.permute.xlu0 %6181
        %6183 = vrot.lane.b32.xlu0 %v5655, 64
        %v6184 = vpop.permute.xlu0 %6183
        %6185 = vrot.lane.b32.xlu0 %v5656, 64
        %v6186 = vpop.permute.xlu0 %6185
        %6203 = vmatprep.subr.mxu0 0.0
        %6204 = vmatpush1.msra.mxu0 %v6186
        %6205 = vmatprep.subr.mxu0 0.0
        %6206 = vmatpush1.msra.mxu0 %v6184
        %6207 = vmatprep.subr.mxu0 0.0
        %6208 = vmatpush1.msra.mxu0 %v6182
        %6209 = vmatprep.subr.mxu0 0.0
        %6210 = vmatpush1.msra.mxu0 %v6180
        %6211 = vmatprep.subr.mxu0 0.0
        %6212 = vmatpush1.msra.mxu0 %v6178
        %6213 = vmatprep.subr.mxu0 0.0
        %6214 = vmatpush1.msra.mxu0 %v6176
        %6215 = vmatprep.subr.mxu0 0.0
        %6216 = vmatpush1.msra.mxu0 %v6174
        %6217 = vmatprep.subr.mxu0 0.0
        %6218 = vmatpush1.msra.mxu0 %v6172
        %6219 = vmatprep.subr.mxu0 0.0
        %6220 = vmatpush1.msra.mxu0 %v6170
        %6221 = vmatprep.subr.mxu0 0.0
        %6222 = vmatpush1.msra.mxu0 %v6168
        %6223 = vmatprep.subr.mxu0 0.0
        %6224 = vmatpush1.msra.mxu0 %v6166
        %6225 = vmatprep.subr.mxu0 0.0
        %6226 = vmatpush1.msra.mxu0 %v6164
        %6227 = vmatprep.subr.mxu0 0.0
        %6228 = vmatpush1.msra.mxu0 %v6162
        %6229 = vmatprep.subr.mxu0 0.0
        %6230 = vmatpush1.msra.mxu0 %v6160
        %6231 = vmatprep.subr.mxu0 0.0
        %6232 = vmatpush1.msra.mxu0 %v6158
        %6233 = vmatprep.subr.mxu0 0.0
        %6234 = vmatpush1.msra.mxu0 %v6156
        %6235 = vmatprep.subr.mxu0 0.0
        %6236 = vmatpush2.msra.mxu0 0.0
        %6237 = vmatprep.subr.mxu0 0.0
        %6238 = vmatpush2.msra.mxu0 0.0
        %6239 = vmatprep.subr.mxu0 0.0
        %6240 = vmatpush2.msra.mxu0 0.0
        %6241 = vmatprep.subr.mxu0 0.0
        %6242 = vmatpush2.msra.mxu0 0.0
        %6243 = vmatprep.subr.mxu0 0.0
        %6244 = vmatpush2.msra.mxu0 0.0
        %6245 = vmatprep.subr.mxu0 0.0
        %6246 = vmatpush2.msra.mxu0 0.0
        %6247 = vmatprep.subr.mxu0 0.0
        %6248 = vmatpush2.msra.mxu0 0.0
        %6249 = vmatprep.subr.mxu0 0.0
        %6250 = vmatpush2.msra.mxu0 0.0
        %6251 = vmatprep.subr.mxu0 0.0
        %6252 = vmatpush2.msra.mxu0 0.0
        %6253 = vmatprep.subr.mxu0 0.0
        %6254 = vmatpush2.msra.mxu0 0.0
        %6255 = vmatprep.subr.mxu0 0.0
        %6256 = vmatpush2.msra.mxu0 0.0
        %6257 = vmatprep.subr.mxu0 0.0
        %6258 = vmatpush2.msra.mxu0 0.0
        %6259 = vmatprep.subr.mxu0 0.0
        %6260 = vmatpush2.msra.mxu0 0.0
        %6261 = vmatprep.subr.mxu0 0.0
        %6262 = vmatpush2.msra.mxu0 0.0
        %6263 = vmatprep.subr.mxu0 0.0
        %6264 = vmatpush2.msra.mxu0 0.0
        %6265 = vmatprep.subr.mxu0 0.0
        %6266 = vmatpush2.msra.mxu0 0.0
        %6267 = vmatprep.mubr.f32.mxu0 0.0
        %6268 = vmatmul.mubr.f32.gmra.mxu0 %v6106
        %v6269 = vpop.f32.mrf.mxu0
        %v6270 = vadd.f32 0.0, %v6269
        %v6271 = vpop.f32.mrf.mxu0
        %6272 = vmatprep.mubr.f32.mxu0 0.0
        %6273 = vmatmul.mubr.f32.gmra.mxu0 %v6107
        %v6274 = vpop.f32.mrf.mxu0
        %v6275 = vadd.f32 0.0, %v6274
        %v6276 = vpop.f32.mrf.mxu0
        %6277 = vmatprep.mubr.f32.mxu0 0.0
        %6278 = vmatmul.mubr.f32.gmra.mxu0 %v6108
        %v6279 = vpop.f32.mrf.mxu0
        %v6280 = vadd.f32 0.0, %v6279
        %v6281 = vpop.f32.mrf.mxu0
        %6282 = vmatprep.mubr.f32.mxu0 0.0
        %6283 = vmatmul.mubr.f32.gmra.mxu0 %v6109
        %v6284 = vpop.f32.mrf.mxu0
        %v6285 = vadd.f32 0.0, %v6284
        %v6286 = vpop.f32.mrf.mxu0
        %6287 = vmatprep.mubr.f32.mxu0 0.0
        %6288 = vmatmul.mubr.f32.gmra.mxu0 %v6110
        %v6289 = vpop.f32.mrf.mxu0
        %v6290 = vadd.f32 0.0, %v6289
        %v6291 = vpop.f32.mrf.mxu0
        %6292 = vmatprep.mubr.f32.mxu0 0.0
        %6293 = vmatmul.mubr.f32.gmra.mxu0 %v6111
        %v6294 = vpop.f32.mrf.mxu0
        %v6295 = vadd.f32 0.0, %v6294
        %v6296 = vpop.f32.mrf.mxu0
        %6297 = vmatprep.mubr.f32.mxu0 0.0
        %6298 = vmatmul.mubr.f32.gmra.mxu0 %v6112
        %v6299 = vpop.f32.mrf.mxu0
        %v6300 = vadd.f32 0.0, %v6299
        %v6301 = vpop.f32.mrf.mxu0
        %6302 = vmatprep.mubr.f32.mxu0 0.0
        %6303 = vmatmul.mubr.f32.gmra.mxu0 %v6113
        %v6304 = vpop.f32.mrf.mxu0
        %v6305 = vadd.f32 0.0, %v6304
        %v6306 = vpop.f32.mrf.mxu0
        %6307 = vmatprep.mubr.f32.mxu0 0.0
        %6308 = vmatmul.mubr.f32.gmra.mxu0 %v6114
        %v6309 = vpop.f32.mrf.mxu0
        %v6310 = vadd.f32 0.0, %v6309
        %v6311 = vpop.f32.mrf.mxu0
        %6312 = vmatprep.mubr.f32.mxu0 0.0
        %6313 = vmatmul.mubr.f32.gmra.mxu0 %v6115
        %v6314 = vpop.f32.mrf.mxu0
        %v6315 = vadd.f32 0.0, %v6314
        %v6316 = vpop.f32.mrf.mxu0
        %6317 = vmatprep.mubr.f32.mxu0 0.0
        %6318 = vmatmul.mubr.f32.gmra.mxu0 %v6116
        %v6319 = vpop.f32.mrf.mxu0
        %v6320 = vadd.f32 0.0, %v6319
        %v6321 = vpop.f32.mrf.mxu0
        %6322 = vmatprep.mubr.f32.mxu0 0.0
        %6323 = vmatmul.mubr.f32.gmra.mxu0 %v6117
        %v6324 = vpop.f32.mrf.mxu0
        %v6325 = vadd.f32 0.0, %v6324
        %v6326 = vpop.f32.mrf.mxu0
        %6327 = vmatprep.mubr.f32.mxu0 0.0
        %6328 = vmatmul.mubr.f32.gmra.mxu0 %v6118
        %v6329 = vpop.f32.mrf.mxu0
        %v6330 = vadd.f32 0.0, %v6329
        %v6331 = vpop.f32.mrf.mxu0
        %6332 = vmatprep.mubr.f32.mxu0 0.0
        %6333 = vmatmul.mubr.f32.gmra.mxu0 %v6119
        %v6334 = vpop.f32.mrf.mxu0
        %v6335 = vadd.f32 0.0, %v6334
        %v6336 = vpop.f32.mrf.mxu0
        %6337 = vmatprep.mubr.f32.mxu0 0.0
        %6338 = vmatmul.mubr.f32.gmra.mxu0 %v6120
        %v6339 = vpop.f32.mrf.mxu0
        %v6340 = vadd.f32 0.0, %v6339
        %v6341 = vpop.f32.mrf.mxu0
        %6342 = vmatprep.mubr.f32.mxu0 0.0
        %6343 = vmatmul.mubr.f32.gmra.mxu0 %v6121
        %v6344 = vpop.f32.mrf.mxu0
        %v6345 = vadd.f32 0.0, %v6344
        %v6346 = vpop.f32.mrf.mxu0
        %6347 = vdwg.mxu0
        %6364 = vrot.lane.b32.xlu0 %v6270, 64
        %v6365 = vpop.permute.xlu0 %6364
        %6366 = vrot.lane.b32.xlu0 %v6275, 64
        %v6367 = vpop.permute.xlu0 %6366
        %6368 = vrot.lane.b32.xlu0 %v6280, 64
        %v6369 = vpop.permute.xlu0 %6368
        %6370 = vrot.lane.b32.xlu0 %v6285, 64
        %v6371 = vpop.permute.xlu0 %6370
        %6372 = vrot.lane.b32.xlu0 %v6290, 64
        %v6373 = vpop.permute.xlu0 %6372
        %6374 = vrot.lane.b32.xlu0 %v6295, 64
        %v6375 = vpop.permute.xlu0 %6374
        %6376 = vrot.lane.b32.xlu0 %v6300, 64
        %v6377 = vpop.permute.xlu0 %6376
        %6378 = vrot.lane.b32.xlu0 %v6305, 64
        %v6379 = vpop.permute.xlu0 %6378
        %6380 = vrot.lane.b32.xlu0 %v6310, 64
        %v6381 = vpop.permute.xlu0 %6380
        %6382 = vrot.lane.b32.xlu0 %v6315, 64
        %v6383 = vpop.permute.xlu0 %6382
        %6384 = vrot.lane.b32.xlu0 %v6320, 64
        %v6385 = vpop.permute.xlu0 %6384
        %6386 = vrot.lane.b32.xlu0 %v6325, 64
        %v6387 = vpop.permute.xlu0 %6386
        %6388 = vrot.lane.b32.xlu0 %v6330, 64
        %v6389 = vpop.permute.xlu0 %6388
        %6390 = vrot.lane.b32.xlu0 %v6335, 64
        %v6391 = vpop.permute.xlu0 %6390
        %6392 = vrot.lane.b32.xlu0 %v6340, 64
        %v6393 = vpop.permute.xlu0 %6392
        %6394 = vrot.lane.b32.xlu0 %v6345, 64
        %v6395 = vpop.permute.xlu0 %6394
        %6412 = vst.msk [vmem:[%s377 + $0x8] sm:$0xff] %vm4965, %v6365
        %6413 = vst.msk [vmem:[%s377 + $0x28] sm:$0xff] %vm4965, %v6367
        %6414 = vst.msk [vmem:[%s377 + $0x48] sm:$0xff] %vm4965, %v6369
        %6415 = vst.msk [vmem:[%s377 + $0x68] sm:$0xff] %vm4965, %v6371
        %6416 = vst.msk [vmem:[%s377 + $0x88] sm:$0xff] %vm4965, %v6373
        %6417 = vst.msk [vmem:[%s377 + $0xa8] sm:$0xff] %vm4965, %v6375
        %6418 = vst.msk [vmem:[%s377 + $0xc8] sm:$0xff] %vm4965, %v6377
        %6419 = vst.msk [vmem:[%s377 + $0xe8] sm:$0xff] %vm4965, %v6379
        %6420 = vst.msk [vmem:[%s377 + $0x108] sm:$0xff] %vm4965, %v6381
        %6421 = vst.msk [vmem:[%s377 + $0x128] sm:$0xff] %vm4965, %v6383
        %6422 = vst.msk [vmem:[%s377 + $0x148] sm:$0xff] %vm4965, %v6385
        %6423 = vst.msk [vmem:[%s377 + $0x168] sm:$0xff] %vm4965, %v6387
        %6424 = vst.msk [vmem:[%s377 + $0x188] sm:$0xff] %vm4965, %v6389
        %6425 = vst.msk [vmem:[%s377 + $0x1a8] sm:$0xff] %vm4965, %v6391
        %6426 = vst.msk [vmem:[%s377 + $0x1c8] sm:$0xff] %vm4965, %v6393
        %6427 = vst.msk [vmem:[%s377 + $0x1e8] sm:$0xff] %vm4965, %v6395
        %v6428 = vld [vmem:[#allocation2 + $0x10] sm:$0xff]
        %v6429 = vld [vmem:[#allocation2 + $0x30] sm:$0xff]
        %v6430 = vld [vmem:[#allocation2 + $0x50] sm:$0xff]
        %v6431 = vld [vmem:[#allocation2 + $0x70] sm:$0xff]
        %v6432 = vld [vmem:[#allocation2 + $0x90] sm:$0xff]
        %v6433 = vld [vmem:[#allocation2 + $0xb0] sm:$0xff]
        %v6434 = vld [vmem:[#allocation2 + $0xd0] sm:$0xff]
        %v6435 = vld [vmem:[#allocation2 + $0xf0] sm:$0xff]
        %v6436 = vld [vmem:[#allocation2 + $0x110] sm:$0xff]
        %v6437 = vld [vmem:[#allocation2 + $0x130] sm:$0xff]
        %v6438 = vld [vmem:[#allocation2 + $0x150] sm:$0xff]
        %v6439 = vld [vmem:[#allocation2 + $0x170] sm:$0xff]
        %v6440 = vld [vmem:[#allocation2 + $0x190] sm:$0xff]
        %v6441 = vld [vmem:[#allocation2 + $0x1b0] sm:$0xff]
        %v6442 = vld [vmem:[#allocation2 + $0x1d0] sm:$0xff]
        %v6443 = vld [vmem:[#allocation2 + $0x1f0] sm:$0xff]
        %v6444 = vld [vmem:[#allocation3 + $0x10] sm:$0xff]
        %v6445 = vld [vmem:[#allocation3 + $0x30] sm:$0xff]
        %v6446 = vld [vmem:[#allocation3 + $0x50] sm:$0xff]
        %v6447 = vld [vmem:[#allocation3 + $0x70] sm:$0xff]
        %v6448 = vld [vmem:[#allocation3 + $0x90] sm:$0xff]
        %v6449 = vld [vmem:[#allocation3 + $0xb0] sm:$0xff]
        %v6450 = vld [vmem:[#allocation3 + $0xd0] sm:$0xff]
        %v6451 = vld [vmem:[#allocation3 + $0xf0] sm:$0xff]
        %v6452 = vld [vmem:[#allocation3 + $0x110] sm:$0xff]
        %v6453 = vld [vmem:[#allocation3 + $0x130] sm:$0xff]
        %v6454 = vld [vmem:[#allocation3 + $0x150] sm:$0xff]
        %v6455 = vld [vmem:[#allocation3 + $0x170] sm:$0xff]
        %v6456 = vld [vmem:[#allocation3 + $0x190] sm:$0xff]
        %v6457 = vld [vmem:[#allocation3 + $0x1b0] sm:$0xff]
        %v6458 = vld [vmem:[#allocation3 + $0x1d0] sm:$0xff]
        %v6459 = vld [vmem:[#allocation3 + $0x1f0] sm:$0xff]
        %v6460 = vld [vmem:[#allocation4 + $0x10] sm:$0xff]
        %v6461 = vld [vmem:[#allocation4 + $0x30] sm:$0xff]
        %v6462 = vld [vmem:[#allocation4 + $0x50] sm:$0xff]
        %v6463 = vld [vmem:[#allocation4 + $0x70] sm:$0xff]
        %v6464 = vld [vmem:[#allocation4 + $0x90] sm:$0xff]
        %v6465 = vld [vmem:[#allocation4 + $0xb0] sm:$0xff]
        %v6466 = vld [vmem:[#allocation4 + $0xd0] sm:$0xff]
        %v6467 = vld [vmem:[#allocation4 + $0xf0] sm:$0xff]
        %v6468 = vld [vmem:[#allocation4 + $0x110] sm:$0xff]
        %v6469 = vld [vmem:[#allocation4 + $0x130] sm:$0xff]
        %v6470 = vld [vmem:[#allocation4 + $0x150] sm:$0xff]
        %v6471 = vld [vmem:[#allocation4 + $0x170] sm:$0xff]
        %v6472 = vld [vmem:[#allocation4 + $0x190] sm:$0xff]
        %v6473 = vld [vmem:[#allocation4 + $0x1b0] sm:$0xff]
        %v6474 = vld [vmem:[#allocation4 + $0x1d0] sm:$0xff]
        %v6475 = vld [vmem:[#allocation4 + $0x1f0] sm:$0xff]
        %v6477 = vsel %vm3583, %v6428, 0
        %v6480 = vsel %vm3583, %v6429, 0
        %v6483 = vsel %vm3583, %v6430, 0
        %v6486 = vsel %vm3583, %v6431, 0
        %v6489 = vsel %vm3583, %v6432, 0
        %v6492 = vsel %vm3583, %v6433, 0
        %v6495 = vsel %vm3583, %v6434, 0
        %v6498 = vsel %vm3583, %v6435, 0
        %v6501 = vsel %vm3583, %v6436, 0
        %v6504 = vsel %vm3583, %v6437, 0
        %v6507 = vsel %vm3583, %v6438, 0
        %v6510 = vsel %vm3583, %v6439, 0
        %v6513 = vsel %vm3583, %v6440, 0
        %v6516 = vsel %vm3583, %v6441, 0
        %v6519 = vsel %vm3583, %v6442, 0
        %v6522 = vsel %vm3583, %v6443, 0
        %v6525 = vsel %vm3583, %v6444, 0
        %v6528 = vsel %vm3583, %v6445, 0
        %v6531 = vsel %vm3583, %v6446, 0
        %v6534 = vsel %vm3583, %v6447, 0
        %v6537 = vsel %vm3583, %v6448, 0
        %v6540 = vsel %vm3583, %v6449, 0
        %v6543 = vsel %vm3583, %v6450, 0
        %v6546 = vsel %vm3583, %v6451, 0
        %v6549 = vsel %vm3583, %v6452, 0
        %v6552 = vsel %vm3583, %v6453, 0
        %v6555 = vsel %vm3583, %v6454, 0
        %v6558 = vsel %vm3583, %v6455, 0
        %v6561 = vsel %vm3583, %v6456, 0
        %v6564 = vsel %vm3583, %v6457, 0
        %v6567 = vsel %vm3583, %v6458, 0
        %v6570 = vsel %vm3583, %v6459, 0
        %6572 = vmatprep.subr.mxu0 0.0
        %6573 = vmatpush1.xpose.msra.mxu0 %v6570
        %6574 = vmatprep.subr.mxu0 0.0
        %6575 = vmatpush1.xpose.msra.mxu0 %v6567
        %6576 = vmatprep.subr.mxu0 0.0
        %6577 = vmatpush1.xpose.msra.mxu0 %v6564
        %6578 = vmatprep.subr.mxu0 0.0
        %6579 = vmatpush1.xpose.msra.mxu0 %v6561
        %6580 = vmatprep.subr.mxu0 0.0
        %6581 = vmatpush1.xpose.msra.mxu0 %v6558
        %6582 = vmatprep.subr.mxu0 0.0
        %6583 = vmatpush1.xpose.msra.mxu0 %v6555
        %6584 = vmatprep.subr.mxu0 0.0
        %6585 = vmatpush1.xpose.msra.mxu0 %v6552
        %6586 = vmatprep.subr.mxu0 0.0
        %6587 = vmatpush1.xpose.msra.mxu0 %v6549
        %6588 = vmatprep.subr.mxu0 0.0
        %6589 = vmatpush1.xpose.msra.mxu0 %v6546
        %6590 = vmatprep.subr.mxu0 0.0
        %6591 = vmatpush1.xpose.msra.mxu0 %v6543
        %6592 = vmatprep.subr.mxu0 0.0
        %6593 = vmatpush1.xpose.msra.mxu0 %v6540
        %6594 = vmatprep.subr.mxu0 0.0
        %6595 = vmatpush1.xpose.msra.mxu0 %v6537
        %6596 = vmatprep.subr.mxu0 0.0
        %6597 = vmatpush1.xpose.msra.mxu0 %v6534
        %6598 = vmatprep.subr.mxu0 0.0
        %6599 = vmatpush1.xpose.msra.mxu0 %v6531
        %6600 = vmatprep.subr.mxu0 0.0
        %6601 = vmatpush1.xpose.msra.mxu0 %v6528
        %6602 = vmatprep.subr.mxu0 0.0
        %6603 = vmatpush1.xpose.msra.mxu0 %v6525
        %6604 = vmatprep.subr.mxu0 0.0
        %6605 = vmatpush2.xpose.msra.mxu0 0.0
        %6606 = vmatprep.subr.mxu0 0.0
        %6607 = vmatpush2.xpose.msra.mxu0 0.0
        %6608 = vmatprep.subr.mxu0 0.0
        %6609 = vmatpush2.xpose.msra.mxu0 0.0
        %6610 = vmatprep.subr.mxu0 0.0
        %6611 = vmatpush2.xpose.msra.mxu0 0.0
        %6612 = vmatprep.subr.mxu0 0.0
        %6613 = vmatpush2.xpose.msra.mxu0 0.0
        %6614 = vmatprep.subr.mxu0 0.0
        %6615 = vmatpush2.xpose.msra.mxu0 0.0
        %6616 = vmatprep.subr.mxu0 0.0
        %6617 = vmatpush2.xpose.msra.mxu0 0.0
        %6618 = vmatprep.subr.mxu0 0.0
        %6619 = vmatpush2.xpose.msra.mxu0 0.0
        %6620 = vmatprep.subr.mxu0 0.0
        %6621 = vmatpush2.xpose.msra.mxu0 0.0
        %6622 = vmatprep.subr.mxu0 0.0
        %6623 = vmatpush2.xpose.msra.mxu0 0.0
        %6624 = vmatprep.subr.mxu0 0.0
        %6625 = vmatpush2.xpose.msra.mxu0 0.0
        %6626 = vmatprep.subr.mxu0 0.0
        %6627 = vmatpush2.xpose.msra.mxu0 0.0
        %6628 = vmatprep.subr.mxu0 0.0
        %6629 = vmatpush2.xpose.msra.mxu0 0.0
        %6630 = vmatprep.subr.mxu0 0.0
        %6631 = vmatpush2.xpose.msra.mxu0 0.0
        %6632 = vmatprep.subr.mxu0 0.0
        %6633 = vmatpush2.xpose.msra.mxu0 0.0
        %6634 = vmatprep.subr.mxu0 0.0
        %6635 = vmatpush2.xpose.msra.mxu0 0.0
        %6636 = vmatprep.mubr.f32.mxu0 0.0
        %6637 = vmatmul.mubr.f32.gmra.mxu0 %v6477
        %v6638 = vpop.f32.mrf.mxu0
        %v6639 = vadd.f32 0.0, %v6638
        %v6640 = vpop.f32.mrf.mxu0
        %6641 = vmatprep.mubr.f32.mxu0 0.0
        %6642 = vmatmul.mubr.f32.gmra.mxu0 %v6480
        %v6643 = vpop.f32.mrf.mxu0
        %v6644 = vadd.f32 0.0, %v6643
        %v6645 = vpop.f32.mrf.mxu0
        %6646 = vmatprep.mubr.f32.mxu0 0.0
        %6647 = vmatmul.mubr.f32.gmra.mxu0 %v6483
        %v6648 = vpop.f32.mrf.mxu0
        %v6649 = vadd.f32 0.0, %v6648
        %v6650 = vpop.f32.mrf.mxu0
        %6651 = vmatprep.mubr.f32.mxu0 0.0
        %6652 = vmatmul.mubr.f32.gmra.mxu0 %v6486
        %v6653 = vpop.f32.mrf.mxu0
        %v6654 = vadd.f32 0.0, %v6653
        %v6655 = vpop.f32.mrf.mxu0
        %6656 = vmatprep.mubr.f32.mxu0 0.0
        %6657 = vmatmul.mubr.f32.gmra.mxu0 %v6489
        %v6658 = vpop.f32.mrf.mxu0
        %v6659 = vadd.f32 0.0, %v6658
        %v6660 = vpop.f32.mrf.mxu0
        %6661 = vmatprep.mubr.f32.mxu0 0.0
        %6662 = vmatmul.mubr.f32.gmra.mxu0 %v6492
        %v6663 = vpop.f32.mrf.mxu0
        %v6664 = vadd.f32 0.0, %v6663
        %v6665 = vpop.f32.mrf.mxu0
        %6666 = vmatprep.mubr.f32.mxu0 0.0
        %6667 = vmatmul.mubr.f32.gmra.mxu0 %v6495
        %v6668 = vpop.f32.mrf.mxu0
        %v6669 = vadd.f32 0.0, %v6668
        %v6670 = vpop.f32.mrf.mxu0
        %6671 = vmatprep.mubr.f32.mxu0 0.0
        %6672 = vmatmul.mubr.f32.gmra.mxu0 %v6498
        %v6673 = vpop.f32.mrf.mxu0
        %v6674 = vadd.f32 0.0, %v6673
        %v6675 = vpop.f32.mrf.mxu0
        %6676 = vmatprep.mubr.f32.mxu0 0.0
        %6677 = vmatmul.mubr.f32.gmra.mxu0 %v6501
        %v6678 = vpop.f32.mrf.mxu0
        %v6679 = vadd.f32 0.0, %v6678
        %v6680 = vpop.f32.mrf.mxu0
        %6681 = vmatprep.mubr.f32.mxu0 0.0
        %6682 = vmatmul.mubr.f32.gmra.mxu0 %v6504
        %v6683 = vpop.f32.mrf.mxu0
        %v6684 = vadd.f32 0.0, %v6683
        %v6685 = vpop.f32.mrf.mxu0
        %6686 = vmatprep.mubr.f32.mxu0 0.0
        %6687 = vmatmul.mubr.f32.gmra.mxu0 %v6507
        %v6688 = vpop.f32.mrf.mxu0
        %v6689 = vadd.f32 0.0, %v6688
        %v6690 = vpop.f32.mrf.mxu0
        %6691 = vmatprep.mubr.f32.mxu0 0.0
        %6692 = vmatmul.mubr.f32.gmra.mxu0 %v6510
        %v6693 = vpop.f32.mrf.mxu0
        %v6694 = vadd.f32 0.0, %v6693
        %v6695 = vpop.f32.mrf.mxu0
        %6696 = vmatprep.mubr.f32.mxu0 0.0
        %6697 = vmatmul.mubr.f32.gmra.mxu0 %v6513
        %v6698 = vpop.f32.mrf.mxu0
        %v6699 = vadd.f32 0.0, %v6698
        %v6700 = vpop.f32.mrf.mxu0
        %6701 = vmatprep.mubr.f32.mxu0 0.0
        %6702 = vmatmul.mubr.f32.gmra.mxu0 %v6516
        %v6703 = vpop.f32.mrf.mxu0
        %v6704 = vadd.f32 0.0, %v6703
        %v6705 = vpop.f32.mrf.mxu0
        %6706 = vmatprep.mubr.f32.mxu0 0.0
        %6707 = vmatmul.mubr.f32.gmra.mxu0 %v6519
        %v6708 = vpop.f32.mrf.mxu0
        %v6709 = vadd.f32 0.0, %v6708
        %v6710 = vpop.f32.mrf.mxu0
        %6711 = vmatprep.mubr.f32.mxu0 0.0
        %6712 = vmatmul.mubr.f32.gmra.mxu0 %v6522
        %v6713 = vpop.f32.mrf.mxu0
        %v6714 = vadd.f32 0.0, %v6713
        %v6715 = vpop.f32.mrf.mxu0
        %6716 = vdwg.mxu0
        %v6717 = vmul.f32 %v6639, 0.125
        %v6718 = vmul.f32 %v6644, 0.125
        %v6719 = vmul.f32 %v6649, 0.125
        %v6720 = vmul.f32 %v6654, 0.125
        %v6721 = vmul.f32 %v6659, 0.125
        %v6722 = vmul.f32 %v6664, 0.125
        %v6723 = vmul.f32 %v6669, 0.125
        %v6724 = vmul.f32 %v6674, 0.125
        %v6725 = vmul.f32 %v6679, 0.125
        %v6726 = vmul.f32 %v6684, 0.125
        %v6727 = vmul.f32 %v6689, 0.125
        %v6728 = vmul.f32 %v6694, 0.125
        %v6729 = vmul.f32 %v6699, 0.125
        %v6730 = vmul.f32 %v6704, 0.125
        %v6731 = vmul.f32 %v6709, 0.125
        %v6732 = vmul.f32 %v6714, 0.125
        %6733 = vmax.xlane.f32.xlu0 %v6717
        %v6734 = vpop.xlane.xlu0 %6733
        %6735 = vmax.xlane.f32.xlu0 %v6718
        %v6736 = vpop.xlane.xlu0 %6735
        %6737 = vmax.xlane.f32.xlu0 %v6719
        %v6738 = vpop.xlane.xlu0 %6737
        %6739 = vmax.xlane.f32.xlu0 %v6720
        %v6740 = vpop.xlane.xlu0 %6739
        %6741 = vmax.xlane.f32.xlu0 %v6721
        %v6742 = vpop.xlane.xlu0 %6741
        %6743 = vmax.xlane.f32.xlu0 %v6722
        %v6744 = vpop.xlane.xlu0 %6743
        %6745 = vmax.xlane.f32.xlu0 %v6723
        %v6746 = vpop.xlane.xlu0 %6745
        %6747 = vmax.xlane.f32.xlu0 %v6724
        %v6748 = vpop.xlane.xlu0 %6747
        %6749 = vmax.xlane.f32.xlu0 %v6725
        %v6750 = vpop.xlane.xlu0 %6749
        %6751 = vmax.xlane.f32.xlu0 %v6726
        %v6752 = vpop.xlane.xlu0 %6751
        %6753 = vmax.xlane.f32.xlu0 %v6727
        %v6754 = vpop.xlane.xlu0 %6753
        %6755 = vmax.xlane.f32.xlu0 %v6728
        %v6756 = vpop.xlane.xlu0 %6755
        %6757 = vmax.xlane.f32.xlu0 %v6729
        %v6758 = vpop.xlane.xlu0 %6757
        %6759 = vmax.xlane.f32.xlu0 %v6730
        %v6760 = vpop.xlane.xlu0 %6759
        %6761 = vmax.xlane.f32.xlu0 %v6731
        %v6762 = vpop.xlane.xlu0 %6761
        %6763 = vmax.xlane.f32.xlu0 %v6732
        %v6764 = vpop.xlane.xlu0 %6763
        %v6765 = vsub.f32 %v6717, %v6734
        %v6766 = vsub.f32 %v6718, %v6736
        %v6767 = vsub.f32 %v6719, %v6738
        %v6768 = vsub.f32 %v6720, %v6740
        %v6769 = vsub.f32 %v6721, %v6742
        %v6770 = vsub.f32 %v6722, %v6744
        %v6771 = vsub.f32 %v6723, %v6746
        %v6772 = vsub.f32 %v6724, %v6748
        %v6773 = vsub.f32 %v6725, %v6750
        %v6774 = vsub.f32 %v6726, %v6752
        %v6775 = vsub.f32 %v6727, %v6754
        %v6776 = vsub.f32 %v6728, %v6756
        %v6777 = vsub.f32 %v6729, %v6758
        %v6778 = vsub.f32 %v6730, %v6760
        %v6779 = vsub.f32 %v6731, %v6762
        %v6780 = vsub.f32 %v6732, %v6764
        %v6781 = vmul.f32 %v6765, 1.442695
        %v6782 = vpow.pop %v6781
        %v6783 = vmul.f32 %v6766, 1.442695
        %v6784 = vpow.pop %v6783
        %v6785 = vmul.f32 %v6767, 1.442695
        %v6786 = vpow.pop %v6785
        %v6787 = vmul.f32 %v6768, 1.442695
        %v6788 = vpow.pop %v6787
        %v6789 = vmul.f32 %v6769, 1.442695
        %v6790 = vpow.pop %v6789
        %v6791 = vmul.f32 %v6770, 1.442695
        %v6792 = vpow.pop %v6791
        %v6793 = vmul.f32 %v6771, 1.442695
        %v6794 = vpow.pop %v6793
        %v6795 = vmul.f32 %v6772, 1.442695
        %v6796 = vpow.pop %v6795
        %v6797 = vmul.f32 %v6773, 1.442695
        %v6798 = vpow.pop %v6797
        %v6799 = vmul.f32 %v6774, 1.442695
        %v6800 = vpow.pop %v6799
        %v6801 = vmul.f32 %v6775, 1.442695
        %v6802 = vpow.pop %v6801
        %v6803 = vmul.f32 %v6776, 1.442695
        %v6804 = vpow.pop %v6803
        %v6805 = vmul.f32 %v6777, 1.442695
        %v6806 = vpow.pop %v6805
        %v6807 = vmul.f32 %v6778, 1.442695
        %v6808 = vpow.pop %v6807
        %v6809 = vmul.f32 %v6779, 1.442695
        %v6810 = vpow.pop %v6809
        %v6811 = vmul.f32 %v6780, 1.442695
        %v6812 = vpow.pop %v6811
        %6813 = vadd.xlane.f32.xlu0 %v6782
        %v6814 = vpop.xlane.xlu0 %6813
        %6815 = vadd.xlane.f32.xlu0 %v6784
        %v6816 = vpop.xlane.xlu0 %6815
        %6817 = vadd.xlane.f32.xlu0 %v6786
        %v6818 = vpop.xlane.xlu0 %6817
        %6819 = vadd.xlane.f32.xlu0 %v6788
        %v6820 = vpop.xlane.xlu0 %6819
        %6821 = vadd.xlane.f32.xlu0 %v6790
        %v6822 = vpop.xlane.xlu0 %6821
        %6823 = vadd.xlane.f32.xlu0 %v6792
        %v6824 = vpop.xlane.xlu0 %6823
        %6825 = vadd.xlane.f32.xlu0 %v6794
        %v6826 = vpop.xlane.xlu0 %6825
        %6827 = vadd.xlane.f32.xlu0 %v6796
        %v6828 = vpop.xlane.xlu0 %6827
        %6829 = vadd.xlane.f32.xlu0 %v6798
        %v6830 = vpop.xlane.xlu0 %6829
        %6831 = vadd.xlane.f32.xlu0 %v6800
        %v6832 = vpop.xlane.xlu0 %6831
        %6833 = vadd.xlane.f32.xlu0 %v6802
        %v6834 = vpop.xlane.xlu0 %6833
        %6835 = vadd.xlane.f32.xlu0 %v6804
        %v6836 = vpop.xlane.xlu0 %6835
        %6837 = vadd.xlane.f32.xlu0 %v6806
        %v6838 = vpop.xlane.xlu0 %6837
        %6839 = vadd.xlane.f32.xlu0 %v6808
        %v6840 = vpop.xlane.xlu0 %6839
        %6841 = vadd.xlane.f32.xlu0 %v6810
        %v6842 = vpop.xlane.xlu0 %6841
        %6843 = vadd.xlane.f32.xlu0 %v6812
        %v6844 = vpop.xlane.xlu0 %6843
        %v6845 = vrcp.pop %v6814
        %v6846 = vrcp.pop %v6816
        %v6847 = vrcp.pop %v6818
        %v6848 = vrcp.pop %v6820
        %v6849 = vrcp.pop %v6822
        %v6850 = vrcp.pop %v6824
        %v6851 = vrcp.pop %v6826
        %v6852 = vrcp.pop %v6828
        %v6853 = vrcp.pop %v6830
        %v6854 = vrcp.pop %v6832
        %v6855 = vrcp.pop %v6834
        %v6856 = vrcp.pop %v6836
        %v6857 = vrcp.pop %v6838
        %v6858 = vrcp.pop %v6840
        %v6859 = vrcp.pop %v6842
        %v6860 = vrcp.pop %v6844
        %v6861 = vmul.f32 %v6782, %v6845
        %v6862 = vmul.f32 %v6784, %v6846
        %v6863 = vmul.f32 %v6786, %v6847
        %v6864 = vmul.f32 %v6788, %v6848
        %v6865 = vmul.f32 %v6790, %v6849
        %v6866 = vmul.f32 %v6792, %v6850
        %v6867 = vmul.f32 %v6794, %v6851
        %v6868 = vmul.f32 %v6796, %v6852
        %v6869 = vmul.f32 %v6798, %v6853
        %v6870 = vmul.f32 %v6800, %v6854
        %v6871 = vmul.f32 %v6802, %v6855
        %v6872 = vmul.f32 %v6804, %v6856
        %v6873 = vmul.f32 %v6806, %v6857
        %v6874 = vmul.f32 %v6808, %v6858
        %v6875 = vmul.f32 %v6810, %v6859
        %v6876 = vmul.f32 %v6812, %v6860
        %s6877 = scalar_lea.vmem %s384, 512 [#allocation15]
        %6878 = vst [vmem:[%s6877] sm:$0xff] %v6861
        %6879 = vst [vmem:[%s6877 + $0x8] sm:$0xff] %v6862
        %6880 = vst [vmem:[%s6877 + $0x10] sm:$0xff] %v6863
        %6881 = vst [vmem:[%s6877 + $0x18] sm:$0xff] %v6864
        %6882 = vst [vmem:[%s6877 + $0x20] sm:$0xff] %v6865
        %6883 = vst [vmem:[%s6877 + $0x28] sm:$0xff] %v6866
        %6884 = vst [vmem:[%s6877 + $0x30] sm:$0xff] %v6867
        %6885 = vst [vmem:[%s6877 + $0x38] sm:$0xff] %v6868
        %6886 = vst [vmem:[%s6877 + $0x40] sm:$0xff] %v6869
        %6887 = vst [vmem:[%s6877 + $0x48] sm:$0xff] %v6870
        %6888 = vst [vmem:[%s6877 + $0x50] sm:$0xff] %v6871
        %6889 = vst [vmem:[%s6877 + $0x58] sm:$0xff] %v6872
        %6890 = vst [vmem:[%s6877 + $0x60] sm:$0xff] %v6873
        %6891 = vst [vmem:[%s6877 + $0x68] sm:$0xff] %v6874
        %6892 = vst [vmem:[%s6877 + $0x70] sm:$0xff] %v6875
        %6893 = vst [vmem:[%s6877 + $0x78] sm:$0xff] %v6876
        %6894 = vmatprep.subr.mxu0 0.0
        %6895 = vmatpush1.msra.mxu0 %v6475
        %6896 = vmatprep.subr.mxu0 0.0
        %6897 = vmatpush1.msra.mxu0 %v6474
        %6898 = vmatprep.subr.mxu0 0.0
        %6899 = vmatpush1.msra.mxu0 %v6473
        %6900 = vmatprep.subr.mxu0 0.0
        %6901 = vmatpush1.msra.mxu0 %v6472
        %6902 = vmatprep.subr.mxu0 0.0
        %6903 = vmatpush1.msra.mxu0 %v6471
        %6904 = vmatprep.subr.mxu0 0.0
        %6905 = vmatpush1.msra.mxu0 %v6470
        %6906 = vmatprep.subr.mxu0 0.0
        %6907 = vmatpush1.msra.mxu0 %v6469
        %6908 = vmatprep.subr.mxu0 0.0
        %6909 = vmatpush1.msra.mxu0 %v6468
        %6910 = vmatprep.subr.mxu0 0.0
        %6911 = vmatpush1.msra.mxu0 %v6467
        %6912 = vmatprep.subr.mxu0 0.0
        %6913 = vmatpush1.msra.mxu0 %v6466
        %6914 = vmatprep.subr.mxu0 0.0
        %6915 = vmatpush1.msra.mxu0 %v6465
        %6916 = vmatprep.subr.mxu0 0.0
        %6917 = vmatpush1.msra.mxu0 %v6464
        %6918 = vmatprep.subr.mxu0 0.0
        %6919 = vmatpush1.msra.mxu0 %v6463
        %6920 = vmatprep.subr.mxu0 0.0
        %6921 = vmatpush1.msra.mxu0 %v6462
        %6922 = vmatprep.subr.mxu0 0.0
        %6923 = vmatpush1.msra.mxu0 %v6461
        %6924 = vmatprep.subr.mxu0 0.0
        %6925 = vmatpush1.msra.mxu0 %v6460
        %6926 = vmatprep.subr.mxu0 0.0
        %6927 = vmatpush2.msra.mxu0 0.0
        %6928 = vmatprep.subr.mxu0 0.0
        %6929 = vmatpush2.msra.mxu0 0.0
        %6930 = vmatprep.subr.mxu0 0.0
        %6931 = vmatpush2.msra.mxu0 0.0
        %6932 = vmatprep.subr.mxu0 0.0
        %6933 = vmatpush2.msra.mxu0 0.0
        %6934 = vmatprep.subr.mxu0 0.0
        %6935 = vmatpush2.msra.mxu0 0.0
        %6936 = vmatprep.subr.mxu0 0.0
        %6937 = vmatpush2.msra.mxu0 0.0
        %6938 = vmatprep.subr.mxu0 0.0
        %6939 = vmatpush2.msra.mxu0 0.0
        %6940 = vmatprep.subr.mxu0 0.0
        %6941 = vmatpush2.msra.mxu0 0.0
        %6942 = vmatprep.subr.mxu0 0.0
        %6943 = vmatpush2.msra.mxu0 0.0
        %6944 = vmatprep.subr.mxu0 0.0
        %6945 = vmatpush2.msra.mxu0 0.0
        %6946 = vmatprep.subr.mxu0 0.0
        %6947 = vmatpush2.msra.mxu0 0.0
        %6948 = vmatprep.subr.mxu0 0.0
        %6949 = vmatpush2.msra.mxu0 0.0
        %6950 = vmatprep.subr.mxu0 0.0
        %6951 = vmatpush2.msra.mxu0 0.0
        %6952 = vmatprep.subr.mxu0 0.0
        %6953 = vmatpush2.msra.mxu0 0.0
        %6954 = vmatprep.subr.mxu0 0.0
        %6955 = vmatpush2.msra.mxu0 0.0
        %6956 = vmatprep.subr.mxu0 0.0
        %6957 = vmatpush2.msra.mxu0 0.0
        %6958 = vmatprep.mubr.f32.mxu0 0.0
        %6959 = vmatmul.mubr.f32.gmra.mxu0 %v6861
        %v6960 = vpop.f32.mrf.mxu0
        %v6961 = vadd.f32 0.0, %v6960
        %v6962 = vpop.f32.mrf.mxu0
        %6963 = vmatprep.mubr.f32.mxu0 0.0
        %6964 = vmatmul.mubr.f32.gmra.mxu0 %v6862
        %v6965 = vpop.f32.mrf.mxu0
        %v6966 = vadd.f32 0.0, %v6965
        %v6967 = vpop.f32.mrf.mxu0
        %6968 = vmatprep.mubr.f32.mxu0 0.0
        %6969 = vmatmul.mubr.f32.gmra.mxu0 %v6863
        %v6970 = vpop.f32.mrf.mxu0
        %v6971 = vadd.f32 0.0, %v6970
        %v6972 = vpop.f32.mrf.mxu0
        %6973 = vmatprep.mubr.f32.mxu0 0.0
        %6974 = vmatmul.mubr.f32.gmra.mxu0 %v6864
        %v6975 = vpop.f32.mrf.mxu0
        %v6976 = vadd.f32 0.0, %v6975
        %v6977 = vpop.f32.mrf.mxu0
        %6978 = vmatprep.mubr.f32.mxu0 0.0
        %6979 = vmatmul.mubr.f32.gmra.mxu0 %v6865
        %v6980 = vpop.f32.mrf.mxu0
        %v6981 = vadd.f32 0.0, %v6980
        %v6982 = vpop.f32.mrf.mxu0
        %6983 = vmatprep.mubr.f32.mxu0 0.0
        %6984 = vmatmul.mubr.f32.gmra.mxu0 %v6866
        %v6985 = vpop.f32.mrf.mxu0
        %v6986 = vadd.f32 0.0, %v6985
        %v6987 = vpop.f32.mrf.mxu0
        %6988 = vmatprep.mubr.f32.mxu0 0.0
        %6989 = vmatmul.mubr.f32.gmra.mxu0 %v6867
        %v6990 = vpop.f32.mrf.mxu0
        %v6991 = vadd.f32 0.0, %v6990
        %v6992 = vpop.f32.mrf.mxu0
        %6993 = vmatprep.mubr.f32.mxu0 0.0
        %6994 = vmatmul.mubr.f32.gmra.mxu0 %v6868
        %v6995 = vpop.f32.mrf.mxu0
        %v6996 = vadd.f32 0.0, %v6995
        %v6997 = vpop.f32.mrf.mxu0
        %6998 = vmatprep.mubr.f32.mxu0 0.0
        %6999 = vmatmul.mubr.f32.gmra.mxu0 %v6869
        %v7000 = vpop.f32.mrf.mxu0
        %v7001 = vadd.f32 0.0, %v7000
        %v7002 = vpop.f32.mrf.mxu0
        %7003 = vmatprep.mubr.f32.mxu0 0.0
        %7004 = vmatmul.mubr.f32.gmra.mxu0 %v6870
        %v7005 = vpop.f32.mrf.mxu0
        %v7006 = vadd.f32 0.0, %v7005
        %v7007 = vpop.f32.mrf.mxu0
        %7008 = vmatprep.mubr.f32.mxu0 0.0
        %7009 = vmatmul.mubr.f32.gmra.mxu0 %v6871
        %v7010 = vpop.f32.mrf.mxu0
        %v7011 = vadd.f32 0.0, %v7010
        %v7012 = vpop.f32.mrf.mxu0
        %7013 = vmatprep.mubr.f32.mxu0 0.0
        %7014 = vmatmul.mubr.f32.gmra.mxu0 %v6872
        %v7015 = vpop.f32.mrf.mxu0
        %v7016 = vadd.f32 0.0, %v7015
        %v7017 = vpop.f32.mrf.mxu0
        %7018 = vmatprep.mubr.f32.mxu0 0.0
        %7019 = vmatmul.mubr.f32.gmra.mxu0 %v6873
        %v7020 = vpop.f32.mrf.mxu0
        %v7021 = vadd.f32 0.0, %v7020
        %v7022 = vpop.f32.mrf.mxu0
        %7023 = vmatprep.mubr.f32.mxu0 0.0
        %7024 = vmatmul.mubr.f32.gmra.mxu0 %v6874
        %v7025 = vpop.f32.mrf.mxu0
        %v7026 = vadd.f32 0.0, %v7025
        %v7027 = vpop.f32.mrf.mxu0
        %7028 = vmatprep.mubr.f32.mxu0 0.0
        %7029 = vmatmul.mubr.f32.gmra.mxu0 %v6875
        %v7030 = vpop.f32.mrf.mxu0
        %v7031 = vadd.f32 0.0, %v7030
        %v7032 = vpop.f32.mrf.mxu0
        %7033 = vmatprep.mubr.f32.mxu0 0.0
        %7034 = vmatmul.mubr.f32.gmra.mxu0 %v6876
        %v7035 = vpop.f32.mrf.mxu0
        %v7036 = vadd.f32 0.0, %v7035
        %v7037 = vpop.f32.mrf.mxu0
        %7038 = vdwg.mxu0
        %7039 = vst.msk [vmem:[%s377 + $0x10] sm:$0xff] %vm3583, %v6961
        %7040 = vst.msk [vmem:[%s377 + $0x30] sm:$0xff] %vm3583, %v6966
        %7041 = vst.msk [vmem:[%s377 + $0x50] sm:$0xff] %vm3583, %v6971
        %7042 = vst.msk [vmem:[%s377 + $0x70] sm:$0xff] %vm3583, %v6976
        %7043 = vst.msk [vmem:[%s377 + $0x90] sm:$0xff] %vm3583, %v6981
        %7044 = vst.msk [vmem:[%s377 + $0xb0] sm:$0xff] %vm3583, %v6986
        %7045 = vst.msk [vmem:[%s377 + $0xd0] sm:$0xff] %vm3583, %v6991
        %7046 = vst.msk [vmem:[%s377 + $0xf0] sm:$0xff] %vm3583, %v6996
        %7047 = vst.msk [vmem:[%s377 + $0x110] sm:$0xff] %vm3583, %v7001
        %7048 = vst.msk [vmem:[%s377 + $0x130] sm:$0xff] %vm3583, %v7006
        %7049 = vst.msk [vmem:[%s377 + $0x150] sm:$0xff] %vm3583, %v7011
        %7050 = vst.msk [vmem:[%s377 + $0x170] sm:$0xff] %vm3583, %v7016
        %7051 = vst.msk [vmem:[%s377 + $0x190] sm:$0xff] %vm3583, %v7021
        %7052 = vst.msk [vmem:[%s377 + $0x1b0] sm:$0xff] %vm3583, %v7026
        %7053 = vst.msk [vmem:[%s377 + $0x1d0] sm:$0xff] %vm3583, %v7031
        %7054 = vst.msk [vmem:[%s377 + $0x1f0] sm:$0xff] %vm3583, %v7036
        %v7055 = vld [vmem:[#allocation2 + $0x10] sm:$0xff]
        %v7056 = vld [vmem:[#allocation2 + $0x30] sm:$0xff]
        %v7057 = vld [vmem:[#allocation2 + $0x50] sm:$0xff]
        %v7058 = vld [vmem:[#allocation2 + $0x70] sm:$0xff]
        %v7059 = vld [vmem:[#allocation2 + $0x90] sm:$0xff]
        %v7060 = vld [vmem:[#allocation2 + $0xb0] sm:$0xff]
        %v7061 = vld [vmem:[#allocation2 + $0xd0] sm:$0xff]
        %v7062 = vld [vmem:[#allocation2 + $0xf0] sm:$0xff]
        %v7063 = vld [vmem:[#allocation2 + $0x110] sm:$0xff]
        %v7064 = vld [vmem:[#allocation2 + $0x130] sm:$0xff]
        %v7065 = vld [vmem:[#allocation2 + $0x150] sm:$0xff]
        %v7066 = vld [vmem:[#allocation2 + $0x170] sm:$0xff]
        %v7067 = vld [vmem:[#allocation2 + $0x190] sm:$0xff]
        %v7068 = vld [vmem:[#allocation2 + $0x1b0] sm:$0xff]
        %v7069 = vld [vmem:[#allocation2 + $0x1d0] sm:$0xff]
        %v7070 = vld [vmem:[#allocation2 + $0x1f0] sm:$0xff]
        %v7071 = vld [vmem:[#allocation3 + $0x10] sm:$0xff]
        %v7072 = vld [vmem:[#allocation3 + $0x30] sm:$0xff]
        %v7073 = vld [vmem:[#allocation3 + $0x50] sm:$0xff]
        %v7074 = vld [vmem:[#allocation3 + $0x70] sm:$0xff]
        %v7075 = vld [vmem:[#allocation3 + $0x90] sm:$0xff]
        %v7076 = vld [vmem:[#allocation3 + $0xb0] sm:$0xff]
        %v7077 = vld [vmem:[#allocation3 + $0xd0] sm:$0xff]
        %v7078 = vld [vmem:[#allocation3 + $0xf0] sm:$0xff]
        %v7079 = vld [vmem:[#allocation3 + $0x110] sm:$0xff]
        %v7080 = vld [vmem:[#allocation3 + $0x130] sm:$0xff]
        %v7081 = vld [vmem:[#allocation3 + $0x150] sm:$0xff]
        %v7082 = vld [vmem:[#allocation3 + $0x170] sm:$0xff]
        %v7083 = vld [vmem:[#allocation3 + $0x190] sm:$0xff]
        %v7084 = vld [vmem:[#allocation3 + $0x1b0] sm:$0xff]
        %v7085 = vld [vmem:[#allocation3 + $0x1d0] sm:$0xff]
        %v7086 = vld [vmem:[#allocation3 + $0x1f0] sm:$0xff]
        %v7087 = vld [vmem:[#allocation4 + $0x10] sm:$0xff]
        %v7088 = vld [vmem:[#allocation4 + $0x30] sm:$0xff]
        %v7089 = vld [vmem:[#allocation4 + $0x50] sm:$0xff]
        %v7090 = vld [vmem:[#allocation4 + $0x70] sm:$0xff]
        %v7091 = vld [vmem:[#allocation4 + $0x90] sm:$0xff]
        %v7092 = vld [vmem:[#allocation4 + $0xb0] sm:$0xff]
        %v7093 = vld [vmem:[#allocation4 + $0xd0] sm:$0xff]
        %v7094 = vld [vmem:[#allocation4 + $0xf0] sm:$0xff]
        %v7095 = vld [vmem:[#allocation4 + $0x110] sm:$0xff]
        %v7096 = vld [vmem:[#allocation4 + $0x130] sm:$0xff]
        %v7097 = vld [vmem:[#allocation4 + $0x150] sm:$0xff]
        %v7098 = vld [vmem:[#allocation4 + $0x170] sm:$0xff]
        %v7099 = vld [vmem:[#allocation4 + $0x190] sm:$0xff]
        %v7100 = vld [vmem:[#allocation4 + $0x1b0] sm:$0xff]
        %v7101 = vld [vmem:[#allocation4 + $0x1d0] sm:$0xff]
        %v7102 = vld [vmem:[#allocation4 + $0x1f0] sm:$0xff]
        %7119 = vrot.lane.b32.xlu0 %v7055, 64
        %v7120 = vpop.permute.xlu0 %7119
        %7121 = vrot.lane.b32.xlu0 %v7056, 64
        %v7122 = vpop.permute.xlu0 %7121
        %7123 = vrot.lane.b32.xlu0 %v7057, 64
        %v7124 = vpop.permute.xlu0 %7123
        %7125 = vrot.lane.b32.xlu0 %v7058, 64
        %v7126 = vpop.permute.xlu0 %7125
        %7127 = vrot.lane.b32.xlu0 %v7059, 64
        %v7128 = vpop.permute.xlu0 %7127
        %7129 = vrot.lane.b32.xlu0 %v7060, 64
        %v7130 = vpop.permute.xlu0 %7129
        %7131 = vrot.lane.b32.xlu0 %v7061, 64
        %v7132 = vpop.permute.xlu0 %7131
        %7133 = vrot.lane.b32.xlu0 %v7062, 64
        %v7134 = vpop.permute.xlu0 %7133
        %7135 = vrot.lane.b32.xlu0 %v7063, 64
        %v7136 = vpop.permute.xlu0 %7135
        %7137 = vrot.lane.b32.xlu0 %v7064, 64
        %v7138 = vpop.permute.xlu0 %7137
        %7139 = vrot.lane.b32.xlu0 %v7065, 64
        %v7140 = vpop.permute.xlu0 %7139
        %7141 = vrot.lane.b32.xlu0 %v7066, 64
        %v7142 = vpop.permute.xlu0 %7141
        %7143 = vrot.lane.b32.xlu0 %v7067, 64
        %v7144 = vpop.permute.xlu0 %7143
        %7145 = vrot.lane.b32.xlu0 %v7068, 64
        %v7146 = vpop.permute.xlu0 %7145
        %7147 = vrot.lane.b32.xlu0 %v7069, 64
        %v7148 = vpop.permute.xlu0 %7147
        %7149 = vrot.lane.b32.xlu0 %v7070, 64
        %v7150 = vpop.permute.xlu0 %7149
        %7167 = vrot.lane.b32.xlu0 %v7071, 64
        %v7168 = vpop.permute.xlu0 %7167
        %7169 = vrot.lane.b32.xlu0 %v7072, 64
        %v7170 = vpop.permute.xlu0 %7169
        %7171 = vrot.lane.b32.xlu0 %v7073, 64
        %v7172 = vpop.permute.xlu0 %7171
        %7173 = vrot.lane.b32.xlu0 %v7074, 64
        %v7174 = vpop.permute.xlu0 %7173
        %7175 = vrot.lane.b32.xlu0 %v7075, 64
        %v7176 = vpop.permute.xlu0 %7175
        %7177 = vrot.lane.b32.xlu0 %v7076, 64
        %v7178 = vpop.permute.xlu0 %7177
        %7179 = vrot.lane.b32.xlu0 %v7077, 64
        %v7180 = vpop.permute.xlu0 %7179
        %7181 = vrot.lane.b32.xlu0 %v7078, 64
        %v7182 = vpop.permute.xlu0 %7181
        %7183 = vrot.lane.b32.xlu0 %v7079, 64
        %v7184 = vpop.permute.xlu0 %7183
        %7185 = vrot.lane.b32.xlu0 %v7080, 64
        %v7186 = vpop.permute.xlu0 %7185
        %7187 = vrot.lane.b32.xlu0 %v7081, 64
        %v7188 = vpop.permute.xlu0 %7187
        %7189 = vrot.lane.b32.xlu0 %v7082, 64
        %v7190 = vpop.permute.xlu0 %7189
        %7191 = vrot.lane.b32.xlu0 %v7083, 64
        %v7192 = vpop.permute.xlu0 %7191
        %7193 = vrot.lane.b32.xlu0 %v7084, 64
        %v7194 = vpop.permute.xlu0 %7193
        %7195 = vrot.lane.b32.xlu0 %v7085, 64
        %v7196 = vpop.permute.xlu0 %7195
        %7197 = vrot.lane.b32.xlu0 %v7086, 64
        %v7198 = vpop.permute.xlu0 %7197
        %v7199 = vsel %vm3583, %v7120, 0
        %v7201 = vsel %vm3583, %v7122, 0
        %v7203 = vsel %vm3583, %v7124, 0
        %v7205 = vsel %vm3583, %v7126, 0
        %v7207 = vsel %vm3583, %v7128, 0
        %v7209 = vsel %vm3583, %v7130, 0
        %v7211 = vsel %vm3583, %v7132, 0
        %v7213 = vsel %vm3583, %v7134, 0
        %v7215 = vsel %vm3583, %v7136, 0
        %v7217 = vsel %vm3583, %v7138, 0
        %v7219 = vsel %vm3583, %v7140, 0
        %v7221 = vsel %vm3583, %v7142, 0
        %v7223 = vsel %vm3583, %v7144, 0
        %v7225 = vsel %vm3583, %v7146, 0
        %v7227 = vsel %vm3583, %v7148, 0
        %v7229 = vsel %vm3583, %v7150, 0
        %v7231 = vsel %vm3583, %v7168, 0
        %v7233 = vsel %vm3583, %v7170, 0
        %v7235 = vsel %vm3583, %v7172, 0
        %v7237 = vsel %vm3583, %v7174, 0
        %v7239 = vsel %vm3583, %v7176, 0
        %v7241 = vsel %vm3583, %v7178, 0
        %v7243 = vsel %vm3583, %v7180, 0
        %v7245 = vsel %vm3583, %v7182, 0
        %v7247 = vsel %vm3583, %v7184, 0
        %v7249 = vsel %vm3583, %v7186, 0
        %v7251 = vsel %vm3583, %v7188, 0
        %v7253 = vsel %vm3583, %v7190, 0
        %v7255 = vsel %vm3583, %v7192, 0
        %v7257 = vsel %vm3583, %v7194, 0
        %v7259 = vsel %vm3583, %v7196, 0
        %v7261 = vsel %vm3583, %v7198, 0
        %7263 = vmatprep.subr.mxu0 0.0
        %7264 = vmatpush1.xpose.msra.mxu0 %v7261
        %7265 = vmatprep.subr.mxu0 0.0
        %7266 = vmatpush1.xpose.msra.mxu0 %v7259
        %7267 = vmatprep.subr.mxu0 0.0
        %7268 = vmatpush1.xpose.msra.mxu0 %v7257
        %7269 = vmatprep.subr.mxu0 0.0
        %7270 = vmatpush1.xpose.msra.mxu0 %v7255
        %7271 = vmatprep.subr.mxu0 0.0
        %7272 = vmatpush1.xpose.msra.mxu0 %v7253
        %7273 = vmatprep.subr.mxu0 0.0
        %7274 = vmatpush1.xpose.msra.mxu0 %v7251
        %7275 = vmatprep.subr.mxu0 0.0
        %7276 = vmatpush1.xpose.msra.mxu0 %v7249
        %7277 = vmatprep.subr.mxu0 0.0
        %7278 = vmatpush1.xpose.msra.mxu0 %v7247
        %7279 = vmatprep.subr.mxu0 0.0
        %7280 = vmatpush1.xpose.msra.mxu0 %v7245
        %7281 = vmatprep.subr.mxu0 0.0
        %7282 = vmatpush1.xpose.msra.mxu0 %v7243
        %7283 = vmatprep.subr.mxu0 0.0
        %7284 = vmatpush1.xpose.msra.mxu0 %v7241
        %7285 = vmatprep.subr.mxu0 0.0
        %7286 = vmatpush1.xpose.msra.mxu0 %v7239
        %7287 = vmatprep.subr.mxu0 0.0
        %7288 = vmatpush1.xpose.msra.mxu0 %v7237
        %7289 = vmatprep.subr.mxu0 0.0
        %7290 = vmatpush1.xpose.msra.mxu0 %v7235
        %7291 = vmatprep.subr.mxu0 0.0
        %7292 = vmatpush1.xpose.msra.mxu0 %v7233
        %7293 = vmatprep.subr.mxu0 0.0
        %7294 = vmatpush1.xpose.msra.mxu0 %v7231
        %7295 = vmatprep.subr.mxu0 0.0
        %7296 = vmatpush2.xpose.msra.mxu0 0.0
        %7297 = vmatprep.subr.mxu0 0.0
        %7298 = vmatpush2.xpose.msra.mxu0 0.0
        %7299 = vmatprep.subr.mxu0 0.0
        %7300 = vmatpush2.xpose.msra.mxu0 0.0
        %7301 = vmatprep.subr.mxu0 0.0
        %7302 = vmatpush2.xpose.msra.mxu0 0.0
        %7303 = vmatprep.subr.mxu0 0.0
        %7304 = vmatpush2.xpose.msra.mxu0 0.0
        %7305 = vmatprep.subr.mxu0 0.0
        %7306 = vmatpush2.xpose.msra.mxu0 0.0
        %7307 = vmatprep.subr.mxu0 0.0
        %7308 = vmatpush2.xpose.msra.mxu0 0.0
        %7309 = vmatprep.subr.mxu0 0.0
        %7310 = vmatpush2.xpose.msra.mxu0 0.0
        %7311 = vmatprep.subr.mxu0 0.0
        %7312 = vmatpush2.xpose.msra.mxu0 0.0
        %7313 = vmatprep.subr.mxu0 0.0
        %7314 = vmatpush2.xpose.msra.mxu0 0.0
        %7315 = vmatprep.subr.mxu0 0.0
        %7316 = vmatpush2.xpose.msra.mxu0 0.0
        %7317 = vmatprep.subr.mxu0 0.0
        %7318 = vmatpush2.xpose.msra.mxu0 0.0
        %7319 = vmatprep.subr.mxu0 0.0
        %7320 = vmatpush2.xpose.msra.mxu0 0.0
        %7321 = vmatprep.subr.mxu0 0.0
        %7322 = vmatpush2.xpose.msra.mxu0 0.0
        %7323 = vmatprep.subr.mxu0 0.0
        %7324 = vmatpush2.xpose.msra.mxu0 0.0
        %7325 = vmatprep.subr.mxu0 0.0
        %7326 = vmatpush2.xpose.msra.mxu0 0.0
        %7327 = vmatprep.mubr.f32.mxu0 0.0
        %7328 = vmatmul.mubr.f32.gmra.mxu0 %v7199
        %v7329 = vpop.f32.mrf.mxu0
        %v7330 = vadd.f32 0.0, %v7329
        %v7331 = vpop.f32.mrf.mxu0
        %7332 = vmatprep.mubr.f32.mxu0 0.0
        %7333 = vmatmul.mubr.f32.gmra.mxu0 %v7201
        %v7334 = vpop.f32.mrf.mxu0
        %v7335 = vadd.f32 0.0, %v7334
        %v7336 = vpop.f32.mrf.mxu0
        %7337 = vmatprep.mubr.f32.mxu0 0.0
        %7338 = vmatmul.mubr.f32.gmra.mxu0 %v7203
        %v7339 = vpop.f32.mrf.mxu0
        %v7340 = vadd.f32 0.0, %v7339
        %v7341 = vpop.f32.mrf.mxu0
        %7342 = vmatprep.mubr.f32.mxu0 0.0
        %7343 = vmatmul.mubr.f32.gmra.mxu0 %v7205
        %v7344 = vpop.f32.mrf.mxu0
        %v7345 = vadd.f32 0.0, %v7344
        %v7346 = vpop.f32.mrf.mxu0
        %7347 = vmatprep.mubr.f32.mxu0 0.0
        %7348 = vmatmul.mubr.f32.gmra.mxu0 %v7207
        %v7349 = vpop.f32.mrf.mxu0
        %v7350 = vadd.f32 0.0, %v7349
        %v7351 = vpop.f32.mrf.mxu0
        %7352 = vmatprep.mubr.f32.mxu0 0.0
        %7353 = vmatmul.mubr.f32.gmra.mxu0 %v7209
        %v7354 = vpop.f32.mrf.mxu0
        %v7355 = vadd.f32 0.0, %v7354
        %v7356 = vpop.f32.mrf.mxu0
        %7357 = vmatprep.mubr.f32.mxu0 0.0
        %7358 = vmatmul.mubr.f32.gmra.mxu0 %v7211
        %v7359 = vpop.f32.mrf.mxu0
        %v7360 = vadd.f32 0.0, %v7359
        %v7361 = vpop.f32.mrf.mxu0
        %7362 = vmatprep.mubr.f32.mxu0 0.0
        %7363 = vmatmul.mubr.f32.gmra.mxu0 %v7213
        %v7364 = vpop.f32.mrf.mxu0
        %v7365 = vadd.f32 0.0, %v7364
        %v7366 = vpop.f32.mrf.mxu0
        %7367 = vmatprep.mubr.f32.mxu0 0.0
        %7368 = vmatmul.mubr.f32.gmra.mxu0 %v7215
        %v7369 = vpop.f32.mrf.mxu0
        %v7370 = vadd.f32 0.0, %v7369
        %v7371 = vpop.f32.mrf.mxu0
        %7372 = vmatprep.mubr.f32.mxu0 0.0
        %7373 = vmatmul.mubr.f32.gmra.mxu0 %v7217
        %v7374 = vpop.f32.mrf.mxu0
        %v7375 = vadd.f32 0.0, %v7374
        %v7376 = vpop.f32.mrf.mxu0
        %7377 = vmatprep.mubr.f32.mxu0 0.0
        %7378 = vmatmul.mubr.f32.gmra.mxu0 %v7219
        %v7379 = vpop.f32.mrf.mxu0
        %v7380 = vadd.f32 0.0, %v7379
        %v7381 = vpop.f32.mrf.mxu0
        %7382 = vmatprep.mubr.f32.mxu0 0.0
        %7383 = vmatmul.mubr.f32.gmra.mxu0 %v7221
        %v7384 = vpop.f32.mrf.mxu0
        %v7385 = vadd.f32 0.0, %v7384
        %v7386 = vpop.f32.mrf.mxu0
        %7387 = vmatprep.mubr.f32.mxu0 0.0
        %7388 = vmatmul.mubr.f32.gmra.mxu0 %v7223
        %v7389 = vpop.f32.mrf.mxu0
        %v7390 = vadd.f32 0.0, %v7389
        %v7391 = vpop.f32.mrf.mxu0
        %7392 = vmatprep.mubr.f32.mxu0 0.0
        %7393 = vmatmul.mubr.f32.gmra.mxu0 %v7225
        %v7394 = vpop.f32.mrf.mxu0
        %v7395 = vadd.f32 0.0, %v7394
        %v7396 = vpop.f32.mrf.mxu0
        %7397 = vmatprep.mubr.f32.mxu0 0.0
        %7398 = vmatmul.mubr.f32.gmra.mxu0 %v7227
        %v7399 = vpop.f32.mrf.mxu0
        %v7400 = vadd.f32 0.0, %v7399
        %v7401 = vpop.f32.mrf.mxu0
        %7402 = vmatprep.mubr.f32.mxu0 0.0
        %7403 = vmatmul.mubr.f32.gmra.mxu0 %v7229
        %v7404 = vpop.f32.mrf.mxu0
        %v7405 = vadd.f32 0.0, %v7404
        %v7406 = vpop.f32.mrf.mxu0
        %7407 = vdwg.mxu0
        %v7408 = vmul.f32 %v7330, 0.125
        %v7409 = vmul.f32 %v7335, 0.125
        %v7410 = vmul.f32 %v7340, 0.125
        %v7411 = vmul.f32 %v7345, 0.125
        %v7412 = vmul.f32 %v7350, 0.125
        %v7413 = vmul.f32 %v7355, 0.125
        %v7414 = vmul.f32 %v7360, 0.125
        %v7415 = vmul.f32 %v7365, 0.125
        %v7416 = vmul.f32 %v7370, 0.125
        %v7417 = vmul.f32 %v7375, 0.125
        %v7418 = vmul.f32 %v7380, 0.125
        %v7419 = vmul.f32 %v7385, 0.125
        %v7420 = vmul.f32 %v7390, 0.125
        %v7421 = vmul.f32 %v7395, 0.125
        %v7422 = vmul.f32 %v7400, 0.125
        %v7423 = vmul.f32 %v7405, 0.125
        %7424 = vmax.xlane.f32.xlu0 %v7408
        %v7425 = vpop.xlane.xlu0 %7424
        %7426 = vmax.xlane.f32.xlu0 %v7409
        %v7427 = vpop.xlane.xlu0 %7426
        %7428 = vmax.xlane.f32.xlu0 %v7410
        %v7429 = vpop.xlane.xlu0 %7428
        %7430 = vmax.xlane.f32.xlu0 %v7411
        %v7431 = vpop.xlane.xlu0 %7430
        %7432 = vmax.xlane.f32.xlu0 %v7412
        %v7433 = vpop.xlane.xlu0 %7432
        %7434 = vmax.xlane.f32.xlu0 %v7413
        %v7435 = vpop.xlane.xlu0 %7434
        %7436 = vmax.xlane.f32.xlu0 %v7414
        %v7437 = vpop.xlane.xlu0 %7436
        %7438 = vmax.xlane.f32.xlu0 %v7415
        %v7439 = vpop.xlane.xlu0 %7438
        %7440 = vmax.xlane.f32.xlu0 %v7416
        %v7441 = vpop.xlane.xlu0 %7440
        %7442 = vmax.xlane.f32.xlu0 %v7417
        %v7443 = vpop.xlane.xlu0 %7442
        %7444 = vmax.xlane.f32.xlu0 %v7418
        %v7445 = vpop.xlane.xlu0 %7444
        %7446 = vmax.xlane.f32.xlu0 %v7419
        %v7447 = vpop.xlane.xlu0 %7446
        %7448 = vmax.xlane.f32.xlu0 %v7420
        %v7449 = vpop.xlane.xlu0 %7448
        %7450 = vmax.xlane.f32.xlu0 %v7421
        %v7451 = vpop.xlane.xlu0 %7450
        %7452 = vmax.xlane.f32.xlu0 %v7422
        %v7453 = vpop.xlane.xlu0 %7452
        %7454 = vmax.xlane.f32.xlu0 %v7423
        %v7455 = vpop.xlane.xlu0 %7454
        %v7456 = vsub.f32 %v7408, %v7425
        %v7457 = vsub.f32 %v7409, %v7427
        %v7458 = vsub.f32 %v7410, %v7429
        %v7459 = vsub.f32 %v7411, %v7431
        %v7460 = vsub.f32 %v7412, %v7433
        %v7461 = vsub.f32 %v7413, %v7435
        %v7462 = vsub.f32 %v7414, %v7437
        %v7463 = vsub.f32 %v7415, %v7439
        %v7464 = vsub.f32 %v7416, %v7441
        %v7465 = vsub.f32 %v7417, %v7443
        %v7466 = vsub.f32 %v7418, %v7445
        %v7467 = vsub.f32 %v7419, %v7447
        %v7468 = vsub.f32 %v7420, %v7449
        %v7469 = vsub.f32 %v7421, %v7451
        %v7470 = vsub.f32 %v7422, %v7453
        %v7471 = vsub.f32 %v7423, %v7455
        %v7472 = vmul.f32 %v7456, 1.442695
        %v7473 = vpow.pop %v7472
        %v7474 = vmul.f32 %v7457, 1.442695
        %v7475 = vpow.pop %v7474
        %v7476 = vmul.f32 %v7458, 1.442695
        %v7477 = vpow.pop %v7476
        %v7478 = vmul.f32 %v7459, 1.442695
        %v7479 = vpow.pop %v7478
        %v7480 = vmul.f32 %v7460, 1.442695
        %v7481 = vpow.pop %v7480
        %v7482 = vmul.f32 %v7461, 1.442695
        %v7483 = vpow.pop %v7482
        %v7484 = vmul.f32 %v7462, 1.442695
        %v7485 = vpow.pop %v7484
        %v7486 = vmul.f32 %v7463, 1.442695
        %v7487 = vpow.pop %v7486
        %v7488 = vmul.f32 %v7464, 1.442695
        %v7489 = vpow.pop %v7488
        %v7490 = vmul.f32 %v7465, 1.442695
        %v7491 = vpow.pop %v7490
        %v7492 = vmul.f32 %v7466, 1.442695
        %v7493 = vpow.pop %v7492
        %v7494 = vmul.f32 %v7467, 1.442695
        %v7495 = vpow.pop %v7494
        %v7496 = vmul.f32 %v7468, 1.442695
        %v7497 = vpow.pop %v7496
        %v7498 = vmul.f32 %v7469, 1.442695
        %v7499 = vpow.pop %v7498
        %v7500 = vmul.f32 %v7470, 1.442695
        %v7501 = vpow.pop %v7500
        %v7502 = vmul.f32 %v7471, 1.442695
        %v7503 = vpow.pop %v7502
        %7504 = vadd.xlane.f32.xlu0 %v7473
        %v7505 = vpop.xlane.xlu0 %7504
        %7506 = vadd.xlane.f32.xlu0 %v7475
        %v7507 = vpop.xlane.xlu0 %7506
        %7508 = vadd.xlane.f32.xlu0 %v7477
        %v7509 = vpop.xlane.xlu0 %7508
        %7510 = vadd.xlane.f32.xlu0 %v7479
        %v7511 = vpop.xlane.xlu0 %7510
        %7512 = vadd.xlane.f32.xlu0 %v7481
        %v7513 = vpop.xlane.xlu0 %7512
        %7514 = vadd.xlane.f32.xlu0 %v7483
        %v7515 = vpop.xlane.xlu0 %7514
        %7516 = vadd.xlane.f32.xlu0 %v7485
        %v7517 = vpop.xlane.xlu0 %7516
        %7518 = vadd.xlane.f32.xlu0 %v7487
        %v7519 = vpop.xlane.xlu0 %7518
        %7520 = vadd.xlane.f32.xlu0 %v7489
        %v7521 = vpop.xlane.xlu0 %7520
        %7522 = vadd.xlane.f32.xlu0 %v7491
        %v7523 = vpop.xlane.xlu0 %7522
        %7524 = vadd.xlane.f32.xlu0 %v7493
        %v7525 = vpop.xlane.xlu0 %7524
        %7526 = vadd.xlane.f32.xlu0 %v7495
        %v7527 = vpop.xlane.xlu0 %7526
        %7528 = vadd.xlane.f32.xlu0 %v7497
        %v7529 = vpop.xlane.xlu0 %7528
        %7530 = vadd.xlane.f32.xlu0 %v7499
        %v7531 = vpop.xlane.xlu0 %7530
        %7532 = vadd.xlane.f32.xlu0 %v7501
        %v7533 = vpop.xlane.xlu0 %7532
        %7534 = vadd.xlane.f32.xlu0 %v7503
        %v7535 = vpop.xlane.xlu0 %7534
        %v7536 = vrcp.pop %v7505
        %v7537 = vrcp.pop %v7507
        %v7538 = vrcp.pop %v7509
        %v7539 = vrcp.pop %v7511
        %v7540 = vrcp.pop %v7513
        %v7541 = vrcp.pop %v7515
        %v7542 = vrcp.pop %v7517
        %v7543 = vrcp.pop %v7519
        %v7544 = vrcp.pop %v7521
        %v7545 = vrcp.pop %v7523
        %v7546 = vrcp.pop %v7525
        %v7547 = vrcp.pop %v7527
        %v7548 = vrcp.pop %v7529
        %v7549 = vrcp.pop %v7531
        %v7550 = vrcp.pop %v7533
        %v7551 = vrcp.pop %v7535
        %v7552 = vmul.f32 %v7473, %v7536
        %v7553 = vmul.f32 %v7475, %v7537
        %v7554 = vmul.f32 %v7477, %v7538
        %v7555 = vmul.f32 %v7479, %v7539
        %v7556 = vmul.f32 %v7481, %v7540
        %v7557 = vmul.f32 %v7483, %v7541
        %v7558 = vmul.f32 %v7485, %v7542
        %v7559 = vmul.f32 %v7487, %v7543
        %v7560 = vmul.f32 %v7489, %v7544
        %v7561 = vmul.f32 %v7491, %v7545
        %v7562 = vmul.f32 %v7493, %v7546
        %v7563 = vmul.f32 %v7495, %v7547
        %v7564 = vmul.f32 %v7497, %v7548
        %v7565 = vmul.f32 %v7499, %v7549
        %v7566 = vmul.f32 %v7501, %v7550
        %v7567 = vmul.f32 %v7503, %v7551
        %s7568 = scalar_lea.vmem %s384, 640 [#allocation15]
        %7569 = vst [vmem:[%s7568] sm:$0xff] %v7552
        %7570 = vst [vmem:[%s7568 + $0x8] sm:$0xff] %v7553
        %7571 = vst [vmem:[%s7568 + $0x10] sm:$0xff] %v7554
        %7572 = vst [vmem:[%s7568 + $0x18] sm:$0xff] %v7555
        %7573 = vst [vmem:[%s7568 + $0x20] sm:$0xff] %v7556
        %7574 = vst [vmem:[%s7568 + $0x28] sm:$0xff] %v7557
        %7575 = vst [vmem:[%s7568 + $0x30] sm:$0xff] %v7558
        %7576 = vst [vmem:[%s7568 + $0x38] sm:$0xff] %v7559
        %7577 = vst [vmem:[%s7568 + $0x40] sm:$0xff] %v7560
        %7578 = vst [vmem:[%s7568 + $0x48] sm:$0xff] %v7561
        %7579 = vst [vmem:[%s7568 + $0x50] sm:$0xff] %v7562
        %7580 = vst [vmem:[%s7568 + $0x58] sm:$0xff] %v7563
        %7581 = vst [vmem:[%s7568 + $0x60] sm:$0xff] %v7564
        %7582 = vst [vmem:[%s7568 + $0x68] sm:$0xff] %v7565
        %7583 = vst [vmem:[%s7568 + $0x70] sm:$0xff] %v7566
        %7584 = vst [vmem:[%s7568 + $0x78] sm:$0xff] %v7567
        %7601 = vrot.lane.b32.xlu0 %v7087, 64
        %v7602 = vpop.permute.xlu0 %7601
        %7603 = vrot.lane.b32.xlu0 %v7088, 64
        %v7604 = vpop.permute.xlu0 %7603
        %7605 = vrot.lane.b32.xlu0 %v7089, 64
        %v7606 = vpop.permute.xlu0 %7605
        %7607 = vrot.lane.b32.xlu0 %v7090, 64
        %v7608 = vpop.permute.xlu0 %7607
        %7609 = vrot.lane.b32.xlu0 %v7091, 64
        %v7610 = vpop.permute.xlu0 %7609
        %7611 = vrot.lane.b32.xlu0 %v7092, 64
        %v7612 = vpop.permute.xlu0 %7611
        %7613 = vrot.lane.b32.xlu0 %v7093, 64
        %v7614 = vpop.permute.xlu0 %7613
        %7615 = vrot.lane.b32.xlu0 %v7094, 64
        %v7616 = vpop.permute.xlu0 %7615
        %7617 = vrot.lane.b32.xlu0 %v7095, 64
        %v7618 = vpop.permute.xlu0 %7617
        %7619 = vrot.lane.b32.xlu0 %v7096, 64
        %v7620 = vpop.permute.xlu0 %7619
        %7621 = vrot.lane.b32.xlu0 %v7097, 64
        %v7622 = vpop.permute.xlu0 %7621
        %7623 = vrot.lane.b32.xlu0 %v7098, 64
        %v7624 = vpop.permute.xlu0 %7623
        %7625 = vrot.lane.b32.xlu0 %v7099, 64
        %v7626 = vpop.permute.xlu0 %7625
        %7627 = vrot.lane.b32.xlu0 %v7100, 64
        %v7628 = vpop.permute.xlu0 %7627
        %7629 = vrot.lane.b32.xlu0 %v7101, 64
        %v7630 = vpop.permute.xlu0 %7629
        %7631 = vrot.lane.b32.xlu0 %v7102, 64
        %v7632 = vpop.permute.xlu0 %7631
        %7649 = vmatprep.subr.mxu0 0.0
        %7650 = vmatpush1.msra.mxu0 %v7632
        %7651 = vmatprep.subr.mxu0 0.0
        %7652 = vmatpush1.msra.mxu0 %v7630
        %7653 = vmatprep.subr.mxu0 0.0
        %7654 = vmatpush1.msra.mxu0 %v7628
        %7655 = vmatprep.subr.mxu0 0.0
        %7656 = vmatpush1.msra.mxu0 %v7626
        %7657 = vmatprep.subr.mxu0 0.0
        %7658 = vmatpush1.msra.mxu0 %v7624
        %7659 = vmatprep.subr.mxu0 0.0
        %7660 = vmatpush1.msra.mxu0 %v7622
        %7661 = vmatprep.subr.mxu0 0.0
        %7662 = vmatpush1.msra.mxu0 %v7620
        %7663 = vmatprep.subr.mxu0 0.0
        %7664 = vmatpush1.msra.mxu0 %v7618
        %7665 = vmatprep.subr.mxu0 0.0
        %7666 = vmatpush1.msra.mxu0 %v7616
        %7667 = vmatprep.subr.mxu0 0.0
        %7668 = vmatpush1.msra.mxu0 %v7614
        %7669 = vmatprep.subr.mxu0 0.0
        %7670 = vmatpush1.msra.mxu0 %v7612
        %7671 = vmatprep.subr.mxu0 0.0
        %7672 = vmatpush1.msra.mxu0 %v7610
        %7673 = vmatprep.subr.mxu0 0.0
        %7674 = vmatpush1.msra.mxu0 %v7608
        %7675 = vmatprep.subr.mxu0 0.0
        %7676 = vmatpush1.msra.mxu0 %v7606
        %7677 = vmatprep.subr.mxu0 0.0
        %7678 = vmatpush1.msra.mxu0 %v7604
        %7679 = vmatprep.subr.mxu0 0.0
        %7680 = vmatpush1.msra.mxu0 %v7602
        %7681 = vmatprep.subr.mxu0 0.0
        %7682 = vmatpush2.msra.mxu0 0.0
        %7683 = vmatprep.subr.mxu0 0.0
        %7684 = vmatpush2.msra.mxu0 0.0
        %7685 = vmatprep.subr.mxu0 0.0
        %7686 = vmatpush2.msra.mxu0 0.0
        %7687 = vmatprep.subr.mxu0 0.0
        %7688 = vmatpush2.msra.mxu0 0.0
        %7689 = vmatprep.subr.mxu0 0.0
        %7690 = vmatpush2.msra.mxu0 0.0
        %7691 = vmatprep.subr.mxu0 0.0
        %7692 = vmatpush2.msra.mxu0 0.0
        %7693 = vmatprep.subr.mxu0 0.0
        %7694 = vmatpush2.msra.mxu0 0.0
        %7695 = vmatprep.subr.mxu0 0.0
        %7696 = vmatpush2.msra.mxu0 0.0
        %7697 = vmatprep.subr.mxu0 0.0
        %7698 = vmatpush2.msra.mxu0 0.0
        %7699 = vmatprep.subr.mxu0 0.0
        %7700 = vmatpush2.msra.mxu0 0.0
        %7701 = vmatprep.subr.mxu0 0.0
        %7702 = vmatpush2.msra.mxu0 0.0
        %7703 = vmatprep.subr.mxu0 0.0
        %7704 = vmatpush2.msra.mxu0 0.0
        %7705 = vmatprep.subr.mxu0 0.0
        %7706 = vmatpush2.msra.mxu0 0.0
        %7707 = vmatprep.subr.mxu0 0.0
        %7708 = vmatpush2.msra.mxu0 0.0
        %7709 = vmatprep.subr.mxu0 0.0
        %7710 = vmatpush2.msra.mxu0 0.0
        %7711 = vmatprep.subr.mxu0 0.0
        %7712 = vmatpush2.msra.mxu0 0.0
        %7713 = vmatprep.mubr.f32.mxu0 0.0
        %7714 = vmatmul.mubr.f32.gmra.mxu0 %v7552
        %v7715 = vpop.f32.mrf.mxu0
        %v7716 = vadd.f32 0.0, %v7715
        %v7717 = vpop.f32.mrf.mxu0
        %7718 = vmatprep.mubr.f32.mxu0 0.0
        %7719 = vmatmul.mubr.f32.gmra.mxu0 %v7553
        %v7720 = vpop.f32.mrf.mxu0
        %v7721 = vadd.f32 0.0, %v7720
        %v7722 = vpop.f32.mrf.mxu0
        %7723 = vmatprep.mubr.f32.mxu0 0.0
        %7724 = vmatmul.mubr.f32.gmra.mxu0 %v7554
        %v7725 = vpop.f32.mrf.mxu0
        %v7726 = vadd.f32 0.0, %v7725
        %v7727 = vpop.f32.mrf.mxu0
        %7728 = vmatprep.mubr.f32.mxu0 0.0
        %7729 = vmatmul.mubr.f32.gmra.mxu0 %v7555
        %v7730 = vpop.f32.mrf.mxu0
        %v7731 = vadd.f32 0.0, %v7730
        %v7732 = vpop.f32.mrf.mxu0
        %7733 = vmatprep.mubr.f32.mxu0 0.0
        %7734 = vmatmul.mubr.f32.gmra.mxu0 %v7556
        %v7735 = vpop.f32.mrf.mxu0
        %v7736 = vadd.f32 0.0, %v7735
        %v7737 = vpop.f32.mrf.mxu0
        %7738 = vmatprep.mubr.f32.mxu0 0.0
        %7739 = vmatmul.mubr.f32.gmra.mxu0 %v7557
        %v7740 = vpop.f32.mrf.mxu0
        %v7741 = vadd.f32 0.0, %v7740
        %v7742 = vpop.f32.mrf.mxu0
        %7743 = vmatprep.mubr.f32.mxu0 0.0
        %7744 = vmatmul.mubr.f32.gmra.mxu0 %v7558
        %v7745 = vpop.f32.mrf.mxu0
        %v7746 = vadd.f32 0.0, %v7745
        %v7747 = vpop.f32.mrf.mxu0
        %7748 = vmatprep.mubr.f32.mxu0 0.0
        %7749 = vmatmul.mubr.f32.gmra.mxu0 %v7559
        %v7750 = vpop.f32.mrf.mxu0
        %v7751 = vadd.f32 0.0, %v7750
        %v7752 = vpop.f32.mrf.mxu0
        %7753 = vmatprep.mubr.f32.mxu0 0.0
        %7754 = vmatmul.mubr.f32.gmra.mxu0 %v7560
        %v7755 = vpop.f32.mrf.mxu0
        %v7756 = vadd.f32 0.0, %v7755
        %v7757 = vpop.f32.mrf.mxu0
        %7758 = vmatprep.mubr.f32.mxu0 0.0
        %7759 = vmatmul.mubr.f32.gmra.mxu0 %v7561
        %v7760 = vpop.f32.mrf.mxu0
        %v7761 = vadd.f32 0.0, %v7760
        %v7762 = vpop.f32.mrf.mxu0
        %7763 = vmatprep.mubr.f32.mxu0 0.0
        %7764 = vmatmul.mubr.f32.gmra.mxu0 %v7562
        %v7765 = vpop.f32.mrf.mxu0
        %v7766 = vadd.f32 0.0, %v7765
        %v7767 = vpop.f32.mrf.mxu0
        %7768 = vmatprep.mubr.f32.mxu0 0.0
        %7769 = vmatmul.mubr.f32.gmra.mxu0 %v7563
        %v7770 = vpop.f32.mrf.mxu0
        %v7771 = vadd.f32 0.0, %v7770
        %v7772 = vpop.f32.mrf.mxu0
        %7773 = vmatprep.mubr.f32.mxu0 0.0
        %7774 = vmatmul.mubr.f32.gmra.mxu0 %v7564
        %v7775 = vpop.f32.mrf.mxu0
        %v7776 = vadd.f32 0.0, %v7775
        %v7777 = vpop.f32.mrf.mxu0
        %7778 = vmatprep.mubr.f32.mxu0 0.0
        %7779 = vmatmul.mubr.f32.gmra.mxu0 %v7565
        %v7780 = vpop.f32.mrf.mxu0
        %v7781 = vadd.f32 0.0, %v7780
        %v7782 = vpop.f32.mrf.mxu0
        %7783 = vmatprep.mubr.f32.mxu0 0.0
        %7784 = vmatmul.mubr.f32.gmra.mxu0 %v7566
        %v7785 = vpop.f32.mrf.mxu0
        %v7786 = vadd.f32 0.0, %v7785
        %v7787 = vpop.f32.mrf.mxu0
        %7788 = vmatprep.mubr.f32.mxu0 0.0
        %7789 = vmatmul.mubr.f32.gmra.mxu0 %v7567
        %v7790 = vpop.f32.mrf.mxu0
        %v7791 = vadd.f32 0.0, %v7790
        %v7792 = vpop.f32.mrf.mxu0
        %7793 = vdwg.mxu0
        %7810 = vrot.lane.b32.xlu0 %v7716, 64
        %v7811 = vpop.permute.xlu0 %7810
        %7812 = vrot.lane.b32.xlu0 %v7721, 64
        %v7813 = vpop.permute.xlu0 %7812
        %7814 = vrot.lane.b32.xlu0 %v7726, 64
        %v7815 = vpop.permute.xlu0 %7814
        %7816 = vrot.lane.b32.xlu0 %v7731, 64
        %v7817 = vpop.permute.xlu0 %7816
        %7818 = vrot.lane.b32.xlu0 %v7736, 64
        %v7819 = vpop.permute.xlu0 %7818
        %7820 = vrot.lane.b32.xlu0 %v7741, 64
        %v7821 = vpop.permute.xlu0 %7820
        %7822 = vrot.lane.b32.xlu0 %v7746, 64
        %v7823 = vpop.permute.xlu0 %7822
        %7824 = vrot.lane.b32.xlu0 %v7751, 64
        %v7825 = vpop.permute.xlu0 %7824
        %7826 = vrot.lane.b32.xlu0 %v7756, 64
        %v7827 = vpop.permute.xlu0 %7826
        %7828 = vrot.lane.b32.xlu0 %v7761, 64
        %v7829 = vpop.permute.xlu0 %7828
        %7830 = vrot.lane.b32.xlu0 %v7766, 64
        %v7831 = vpop.permute.xlu0 %7830
        %7832 = vrot.lane.b32.xlu0 %v7771, 64
        %v7833 = vpop.permute.xlu0 %7832
        %7834 = vrot.lane.b32.xlu0 %v7776, 64
        %v7835 = vpop.permute.xlu0 %7834
        %7836 = vrot.lane.b32.xlu0 %v7781, 64
        %v7837 = vpop.permute.xlu0 %7836
        %7838 = vrot.lane.b32.xlu0 %v7786, 64
        %v7839 = vpop.permute.xlu0 %7838
        %7840 = vrot.lane.b32.xlu0 %v7791, 64
        %v7841 = vpop.permute.xlu0 %7840
        %7858 = vst.msk [vmem:[%s377 + $0x10] sm:$0xff] %vm4965, %v7811
        %7859 = vst.msk [vmem:[%s377 + $0x30] sm:$0xff] %vm4965, %v7813
        %7860 = vst.msk [vmem:[%s377 + $0x50] sm:$0xff] %vm4965, %v7815
        %7861 = vst.msk [vmem:[%s377 + $0x70] sm:$0xff] %vm4965, %v7817
        %7862 = vst.msk [vmem:[%s377 + $0x90] sm:$0xff] %vm4965, %v7819
        %7863 = vst.msk [vmem:[%s377 + $0xb0] sm:$0xff] %vm4965, %v7821
        %7864 = vst.msk [vmem:[%s377 + $0xd0] sm:$0xff] %vm4965, %v7823
        %7865 = vst.msk [vmem:[%s377 + $0xf0] sm:$0xff] %vm4965, %v7825
        %7866 = vst.msk [vmem:[%s377 + $0x110] sm:$0xff] %vm4965, %v7827
        %7867 = vst.msk [vmem:[%s377 + $0x130] sm:$0xff] %vm4965, %v7829
        %7868 = vst.msk [vmem:[%s377 + $0x150] sm:$0xff] %vm4965, %v7831
        %7869 = vst.msk [vmem:[%s377 + $0x170] sm:$0xff] %vm4965, %v7833
        %7870 = vst.msk [vmem:[%s377 + $0x190] sm:$0xff] %vm4965, %v7835
        %7871 = vst.msk [vmem:[%s377 + $0x1b0] sm:$0xff] %vm4965, %v7837
        %7872 = vst.msk [vmem:[%s377 + $0x1d0] sm:$0xff] %vm4965, %v7839
        %7873 = vst.msk [vmem:[%s377 + $0x1f0] sm:$0xff] %vm4965, %v7841
        %v7874 = vld [vmem:[#allocation2 + $0x18] sm:$0xff]
        %v7875 = vld [vmem:[#allocation2 + $0x38] sm:$0xff]
        %v7876 = vld [vmem:[#allocation2 + $0x58] sm:$0xff]
        %v7877 = vld [vmem:[#allocation2 + $0x78] sm:$0xff]
        %v7878 = vld [vmem:[#allocation2 + $0x98] sm:$0xff]
        %v7879 = vld [vmem:[#allocation2 + $0xb8] sm:$0xff]
        %v7880 = vld [vmem:[#allocation2 + $0xd8] sm:$0xff]
        %v7881 = vld [vmem:[#allocation2 + $0xf8] sm:$0xff]
        %v7882 = vld [vmem:[#allocation2 + $0x118] sm:$0xff]
        %v7883 = vld [vmem:[#allocation2 + $0x138] sm:$0xff]
        %v7884 = vld [vmem:[#allocation2 + $0x158] sm:$0xff]
        %v7885 = vld [vmem:[#allocation2 + $0x178] sm:$0xff]
        %v7886 = vld [vmem:[#allocation2 + $0x198] sm:$0xff]
        %v7887 = vld [vmem:[#allocation2 + $0x1b8] sm:$0xff]
        %v7888 = vld [vmem:[#allocation2 + $0x1d8] sm:$0xff]
        %v7889 = vld [vmem:[#allocation2 + $0x1f8] sm:$0xff]
        %v7890 = vld [vmem:[#allocation3 + $0x18] sm:$0xff]
        %v7891 = vld [vmem:[#allocation3 + $0x38] sm:$0xff]
        %v7892 = vld [vmem:[#allocation3 + $0x58] sm:$0xff]
        %v7893 = vld [vmem:[#allocation3 + $0x78] sm:$0xff]
        %v7894 = vld [vmem:[#allocation3 + $0x98] sm:$0xff]
        %v7895 = vld [vmem:[#allocation3 + $0xb8] sm:$0xff]
        %v7896 = vld [vmem:[#allocation3 + $0xd8] sm:$0xff]
        %v7897 = vld [vmem:[#allocation3 + $0xf8] sm:$0xff]
        %v7898 = vld [vmem:[#allocation3 + $0x118] sm:$0xff]
        %v7899 = vld [vmem:[#allocation3 + $0x138] sm:$0xff]
        %v7900 = vld [vmem:[#allocation3 + $0x158] sm:$0xff]
        %v7901 = vld [vmem:[#allocation3 + $0x178] sm:$0xff]
        %v7902 = vld [vmem:[#allocation3 + $0x198] sm:$0xff]
        %v7903 = vld [vmem:[#allocation3 + $0x1b8] sm:$0xff]
        %v7904 = vld [vmem:[#allocation3 + $0x1d8] sm:$0xff]
        %v7905 = vld [vmem:[#allocation3 + $0x1f8] sm:$0xff]
        %v7906 = vld [vmem:[#allocation4 + $0x18] sm:$0xff]
        %v7907 = vld [vmem:[#allocation4 + $0x38] sm:$0xff]
        %v7908 = vld [vmem:[#allocation4 + $0x58] sm:$0xff]
        %v7909 = vld [vmem:[#allocation4 + $0x78] sm:$0xff]
        %v7910 = vld [vmem:[#allocation4 + $0x98] sm:$0xff]
        %v7911 = vld [vmem:[#allocation4 + $0xb8] sm:$0xff]
        %v7912 = vld [vmem:[#allocation4 + $0xd8] sm:$0xff]
        %v7913 = vld [vmem:[#allocation4 + $0xf8] sm:$0xff]
        %v7914 = vld [vmem:[#allocation4 + $0x118] sm:$0xff]
        %v7915 = vld [vmem:[#allocation4 + $0x138] sm:$0xff]
        %v7916 = vld [vmem:[#allocation4 + $0x158] sm:$0xff]
        %v7917 = vld [vmem:[#allocation4 + $0x178] sm:$0xff]
        %v7918 = vld [vmem:[#allocation4 + $0x198] sm:$0xff]
        %v7919 = vld [vmem:[#allocation4 + $0x1b8] sm:$0xff]
        %v7920 = vld [vmem:[#allocation4 + $0x1d8] sm:$0xff]
        %v7921 = vld [vmem:[#allocation4 + $0x1f8] sm:$0xff]
        %v7923 = vsel %vm3583, %v7874, 0
        %v7926 = vsel %vm3583, %v7875, 0
        %v7929 = vsel %vm3583, %v7876, 0
        %v7932 = vsel %vm3583, %v7877, 0
        %v7935 = vsel %vm3583, %v7878, 0
        %v7938 = vsel %vm3583, %v7879, 0
        %v7941 = vsel %vm3583, %v7880, 0
        %v7944 = vsel %vm3583, %v7881, 0
        %v7947 = vsel %vm3583, %v7882, 0
        %v7950 = vsel %vm3583, %v7883, 0
        %v7953 = vsel %vm3583, %v7884, 0
        %v7956 = vsel %vm3583, %v7885, 0
        %v7959 = vsel %vm3583, %v7886, 0
        %v7962 = vsel %vm3583, %v7887, 0
        %v7965 = vsel %vm3583, %v7888, 0
        %v7968 = vsel %vm3583, %v7889, 0
        %v7971 = vsel %vm3583, %v7890, 0
        %v7974 = vsel %vm3583, %v7891, 0
        %v7977 = vsel %vm3583, %v7892, 0
        %v7980 = vsel %vm3583, %v7893, 0
        %v7983 = vsel %vm3583, %v7894, 0
        %v7986 = vsel %vm3583, %v7895, 0
        %v7989 = vsel %vm3583, %v7896, 0
        %v7992 = vsel %vm3583, %v7897, 0
        %v7995 = vsel %vm3583, %v7898, 0
        %v7998 = vsel %vm3583, %v7899, 0
        %v8001 = vsel %vm3583, %v7900, 0
        %v8004 = vsel %vm3583, %v7901, 0
        %v8007 = vsel %vm3583, %v7902, 0
        %v8010 = vsel %vm3583, %v7903, 0
        %v8013 = vsel %vm3583, %v7904, 0
        %v8016 = vsel %vm3583, %v7905, 0
        %8018 = vmatprep.subr.mxu0 0.0
        %8019 = vmatpush1.xpose.msra.mxu0 %v8016
        %8020 = vmatprep.subr.mxu0 0.0
        %8021 = vmatpush1.xpose.msra.mxu0 %v8013
        %8022 = vmatprep.subr.mxu0 0.0
        %8023 = vmatpush1.xpose.msra.mxu0 %v8010
        %8024 = vmatprep.subr.mxu0 0.0
        %8025 = vmatpush1.xpose.msra.mxu0 %v8007
        %8026 = vmatprep.subr.mxu0 0.0
        %8027 = vmatpush1.xpose.msra.mxu0 %v8004
        %8028 = vmatprep.subr.mxu0 0.0
        %8029 = vmatpush1.xpose.msra.mxu0 %v8001
        %8030 = vmatprep.subr.mxu0 0.0
        %8031 = vmatpush1.xpose.msra.mxu0 %v7998
        %8032 = vmatprep.subr.mxu0 0.0
        %8033 = vmatpush1.xpose.msra.mxu0 %v7995
        %8034 = vmatprep.subr.mxu0 0.0
        %8035 = vmatpush1.xpose.msra.mxu0 %v7992
        %8036 = vmatprep.subr.mxu0 0.0
        %8037 = vmatpush1.xpose.msra.mxu0 %v7989
        %8038 = vmatprep.subr.mxu0 0.0
        %8039 = vmatpush1.xpose.msra.mxu0 %v7986
        %8040 = vmatprep.subr.mxu0 0.0
        %8041 = vmatpush1.xpose.msra.mxu0 %v7983
        %8042 = vmatprep.subr.mxu0 0.0
        %8043 = vmatpush1.xpose.msra.mxu0 %v7980
        %8044 = vmatprep.subr.mxu0 0.0
        %8045 = vmatpush1.xpose.msra.mxu0 %v7977
        %8046 = vmatprep.subr.mxu0 0.0
        %8047 = vmatpush1.xpose.msra.mxu0 %v7974
        %8048 = vmatprep.subr.mxu0 0.0
        %8049 = vmatpush1.xpose.msra.mxu0 %v7971
        %8050 = vmatprep.subr.mxu0 0.0
        %8051 = vmatpush2.xpose.msra.mxu0 0.0
        %8052 = vmatprep.subr.mxu0 0.0
        %8053 = vmatpush2.xpose.msra.mxu0 0.0
        %8054 = vmatprep.subr.mxu0 0.0
        %8055 = vmatpush2.xpose.msra.mxu0 0.0
        %8056 = vmatprep.subr.mxu0 0.0
        %8057 = vmatpush2.xpose.msra.mxu0 0.0
        %8058 = vmatprep.subr.mxu0 0.0
        %8059 = vmatpush2.xpose.msra.mxu0 0.0
        %8060 = vmatprep.subr.mxu0 0.0
        %8061 = vmatpush2.xpose.msra.mxu0 0.0
        %8062 = vmatprep.subr.mxu0 0.0
        %8063 = vmatpush2.xpose.msra.mxu0 0.0
        %8064 = vmatprep.subr.mxu0 0.0
        %8065 = vmatpush2.xpose.msra.mxu0 0.0
        %8066 = vmatprep.subr.mxu0 0.0
        %8067 = vmatpush2.xpose.msra.mxu0 0.0
        %8068 = vmatprep.subr.mxu0 0.0
        %8069 = vmatpush2.xpose.msra.mxu0 0.0
        %8070 = vmatprep.subr.mxu0 0.0
        %8071 = vmatpush2.xpose.msra.mxu0 0.0
        %8072 = vmatprep.subr.mxu0 0.0
        %8073 = vmatpush2.xpose.msra.mxu0 0.0
        %8074 = vmatprep.subr.mxu0 0.0
        %8075 = vmatpush2.xpose.msra.mxu0 0.0
        %8076 = vmatprep.subr.mxu0 0.0
        %8077 = vmatpush2.xpose.msra.mxu0 0.0
        %8078 = vmatprep.subr.mxu0 0.0
        %8079 = vmatpush2.xpose.msra.mxu0 0.0
        %8080 = vmatprep.subr.mxu0 0.0
        %8081 = vmatpush2.xpose.msra.mxu0 0.0
        %8082 = vmatprep.mubr.f32.mxu0 0.0
        %8083 = vmatmul.mubr.f32.gmra.mxu0 %v7923
        %v8084 = vpop.f32.mrf.mxu0
        %v8085 = vadd.f32 0.0, %v8084
        %v8086 = vpop.f32.mrf.mxu0
        %8087 = vmatprep.mubr.f32.mxu0 0.0
        %8088 = vmatmul.mubr.f32.gmra.mxu0 %v7926
        %v8089 = vpop.f32.mrf.mxu0
        %v8090 = vadd.f32 0.0, %v8089
        %v8091 = vpop.f32.mrf.mxu0
        %8092 = vmatprep.mubr.f32.mxu0 0.0
        %8093 = vmatmul.mubr.f32.gmra.mxu0 %v7929
        %v8094 = vpop.f32.mrf.mxu0
        %v8095 = vadd.f32 0.0, %v8094
        %v8096 = vpop.f32.mrf.mxu0
        %8097 = vmatprep.mubr.f32.mxu0 0.0
        %8098 = vmatmul.mubr.f32.gmra.mxu0 %v7932
        %v8099 = vpop.f32.mrf.mxu0
        %v8100 = vadd.f32 0.0, %v8099
        %v8101 = vpop.f32.mrf.mxu0
        %8102 = vmatprep.mubr.f32.mxu0 0.0
        %8103 = vmatmul.mubr.f32.gmra.mxu0 %v7935
        %v8104 = vpop.f32.mrf.mxu0
        %v8105 = vadd.f32 0.0, %v8104
        %v8106 = vpop.f32.mrf.mxu0
        %8107 = vmatprep.mubr.f32.mxu0 0.0
        %8108 = vmatmul.mubr.f32.gmra.mxu0 %v7938
        %v8109 = vpop.f32.mrf.mxu0
        %v8110 = vadd.f32 0.0, %v8109
        %v8111 = vpop.f32.mrf.mxu0
        %8112 = vmatprep.mubr.f32.mxu0 0.0
        %8113 = vmatmul.mubr.f32.gmra.mxu0 %v7941
        %v8114 = vpop.f32.mrf.mxu0
        %v8115 = vadd.f32 0.0, %v8114
        %v8116 = vpop.f32.mrf.mxu0
        %8117 = vmatprep.mubr.f32.mxu0 0.0
        %8118 = vmatmul.mubr.f32.gmra.mxu0 %v7944
        %v8119 = vpop.f32.mrf.mxu0
        %v8120 = vadd.f32 0.0, %v8119
        %v8121 = vpop.f32.mrf.mxu0
        %8122 = vmatprep.mubr.f32.mxu0 0.0
        %8123 = vmatmul.mubr.f32.gmra.mxu0 %v7947
        %v8124 = vpop.f32.mrf.mxu0
        %v8125 = vadd.f32 0.0, %v8124
        %v8126 = vpop.f32.mrf.mxu0
        %8127 = vmatprep.mubr.f32.mxu0 0.0
        %8128 = vmatmul.mubr.f32.gmra.mxu0 %v7950
        %v8129 = vpop.f32.mrf.mxu0
        %v8130 = vadd.f32 0.0, %v8129
        %v8131 = vpop.f32.mrf.mxu0
        %8132 = vmatprep.mubr.f32.mxu0 0.0
        %8133 = vmatmul.mubr.f32.gmra.mxu0 %v7953
        %v8134 = vpop.f32.mrf.mxu0
        %v8135 = vadd.f32 0.0, %v8134
        %v8136 = vpop.f32.mrf.mxu0
        %8137 = vmatprep.mubr.f32.mxu0 0.0
        %8138 = vmatmul.mubr.f32.gmra.mxu0 %v7956
        %v8139 = vpop.f32.mrf.mxu0
        %v8140 = vadd.f32 0.0, %v8139
        %v8141 = vpop.f32.mrf.mxu0
        %8142 = vmatprep.mubr.f32.mxu0 0.0
        %8143 = vmatmul.mubr.f32.gmra.mxu0 %v7959
        %v8144 = vpop.f32.mrf.mxu0
        %v8145 = vadd.f32 0.0, %v8144
        %v8146 = vpop.f32.mrf.mxu0
        %8147 = vmatprep.mubr.f32.mxu0 0.0
        %8148 = vmatmul.mubr.f32.gmra.mxu0 %v7962
        %v8149 = vpop.f32.mrf.mxu0
        %v8150 = vadd.f32 0.0, %v8149
        %v8151 = vpop.f32.mrf.mxu0
        %8152 = vmatprep.mubr.f32.mxu0 0.0
        %8153 = vmatmul.mubr.f32.gmra.mxu0 %v7965
        %v8154 = vpop.f32.mrf.mxu0
        %v8155 = vadd.f32 0.0, %v8154
        %v8156 = vpop.f32.mrf.mxu0
        %8157 = vmatprep.mubr.f32.mxu0 0.0
        %8158 = vmatmul.mubr.f32.gmra.mxu0 %v7968
        %v8159 = vpop.f32.mrf.mxu0
        %v8160 = vadd.f32 0.0, %v8159
        %v8161 = vpop.f32.mrf.mxu0
        %8162 = vdwg.mxu0
        %v8163 = vmul.f32 %v8085, 0.125
        %v8164 = vmul.f32 %v8090, 0.125
        %v8165 = vmul.f32 %v8095, 0.125
        %v8166 = vmul.f32 %v8100, 0.125
        %v8167 = vmul.f32 %v8105, 0.125
        %v8168 = vmul.f32 %v8110, 0.125
        %v8169 = vmul.f32 %v8115, 0.125
        %v8170 = vmul.f32 %v8120, 0.125
        %v8171 = vmul.f32 %v8125, 0.125
        %v8172 = vmul.f32 %v8130, 0.125
        %v8173 = vmul.f32 %v8135, 0.125
        %v8174 = vmul.f32 %v8140, 0.125
        %v8175 = vmul.f32 %v8145, 0.125
        %v8176 = vmul.f32 %v8150, 0.125
        %v8177 = vmul.f32 %v8155, 0.125
        %v8178 = vmul.f32 %v8160, 0.125
        %8179 = vmax.xlane.f32.xlu0 %v8163
        %v8180 = vpop.xlane.xlu0 %8179
        %8181 = vmax.xlane.f32.xlu0 %v8164
        %v8182 = vpop.xlane.xlu0 %8181
        %8183 = vmax.xlane.f32.xlu0 %v8165
        %v8184 = vpop.xlane.xlu0 %8183
        %8185 = vmax.xlane.f32.xlu0 %v8166
        %v8186 = vpop.xlane.xlu0 %8185
        %8187 = vmax.xlane.f32.xlu0 %v8167
        %v8188 = vpop.xlane.xlu0 %8187
        %8189 = vmax.xlane.f32.xlu0 %v8168
        %v8190 = vpop.xlane.xlu0 %8189
        %8191 = vmax.xlane.f32.xlu0 %v8169
        %v8192 = vpop.xlane.xlu0 %8191
        %8193 = vmax.xlane.f32.xlu0 %v8170
        %v8194 = vpop.xlane.xlu0 %8193
        %8195 = vmax.xlane.f32.xlu0 %v8171
        %v8196 = vpop.xlane.xlu0 %8195
        %8197 = vmax.xlane.f32.xlu0 %v8172
        %v8198 = vpop.xlane.xlu0 %8197
        %8199 = vmax.xlane.f32.xlu0 %v8173
        %v8200 = vpop.xlane.xlu0 %8199
        %8201 = vmax.xlane.f32.xlu0 %v8174
        %v8202 = vpop.xlane.xlu0 %8201
        %8203 = vmax.xlane.f32.xlu0 %v8175
        %v8204 = vpop.xlane.xlu0 %8203
        %8205 = vmax.xlane.f32.xlu0 %v8176
        %v8206 = vpop.xlane.xlu0 %8205
        %8207 = vmax.xlane.f32.xlu0 %v8177
        %v8208 = vpop.xlane.xlu0 %8207
        %8209 = vmax.xlane.f32.xlu0 %v8178
        %v8210 = vpop.xlane.xlu0 %8209
        %v8211 = vsub.f32 %v8163, %v8180
        %v8212 = vsub.f32 %v8164, %v8182
        %v8213 = vsub.f32 %v8165, %v8184
        %v8214 = vsub.f32 %v8166, %v8186
        %v8215 = vsub.f32 %v8167, %v8188
        %v8216 = vsub.f32 %v8168, %v8190
        %v8217 = vsub.f32 %v8169, %v8192
        %v8218 = vsub.f32 %v8170, %v8194
        %v8219 = vsub.f32 %v8171, %v8196
        %v8220 = vsub.f32 %v8172, %v8198
        %v8221 = vsub.f32 %v8173, %v8200
        %v8222 = vsub.f32 %v8174, %v8202
        %v8223 = vsub.f32 %v8175, %v8204
        %v8224 = vsub.f32 %v8176, %v8206
        %v8225 = vsub.f32 %v8177, %v8208
        %v8226 = vsub.f32 %v8178, %v8210
        %v8227 = vmul.f32 %v8211, 1.442695
        %v8228 = vpow.pop %v8227
        %v8229 = vmul.f32 %v8212, 1.442695
        %v8230 = vpow.pop %v8229
        %v8231 = vmul.f32 %v8213, 1.442695
        %v8232 = vpow.pop %v8231
        %v8233 = vmul.f32 %v8214, 1.442695
        %v8234 = vpow.pop %v8233
        %v8235 = vmul.f32 %v8215, 1.442695
        %v8236 = vpow.pop %v8235
        %v8237 = vmul.f32 %v8216, 1.442695
        %v8238 = vpow.pop %v8237
        %v8239 = vmul.f32 %v8217, 1.442695
        %v8240 = vpow.pop %v8239
        %v8241 = vmul.f32 %v8218, 1.442695
        %v8242 = vpow.pop %v8241
        %v8243 = vmul.f32 %v8219, 1.442695
        %v8244 = vpow.pop %v8243
        %v8245 = vmul.f32 %v8220, 1.442695
        %v8246 = vpow.pop %v8245
        %v8247 = vmul.f32 %v8221, 1.442695
        %v8248 = vpow.pop %v8247
        %v8249 = vmul.f32 %v8222, 1.442695
        %v8250 = vpow.pop %v8249
        %v8251 = vmul.f32 %v8223, 1.442695
        %v8252 = vpow.pop %v8251
        %v8253 = vmul.f32 %v8224, 1.442695
        %v8254 = vpow.pop %v8253
        %v8255 = vmul.f32 %v8225, 1.442695
        %v8256 = vpow.pop %v8255
        %v8257 = vmul.f32 %v8226, 1.442695
        %v8258 = vpow.pop %v8257
        %8259 = vadd.xlane.f32.xlu0 %v8228
        %v8260 = vpop.xlane.xlu0 %8259
        %8261 = vadd.xlane.f32.xlu0 %v8230
        %v8262 = vpop.xlane.xlu0 %8261
        %8263 = vadd.xlane.f32.xlu0 %v8232
        %v8264 = vpop.xlane.xlu0 %8263
        %8265 = vadd.xlane.f32.xlu0 %v8234
        %v8266 = vpop.xlane.xlu0 %8265
        %8267 = vadd.xlane.f32.xlu0 %v8236
        %v8268 = vpop.xlane.xlu0 %8267
        %8269 = vadd.xlane.f32.xlu0 %v8238
        %v8270 = vpop.xlane.xlu0 %8269
        %8271 = vadd.xlane.f32.xlu0 %v8240
        %v8272 = vpop.xlane.xlu0 %8271
        %8273 = vadd.xlane.f32.xlu0 %v8242
        %v8274 = vpop.xlane.xlu0 %8273
        %8275 = vadd.xlane.f32.xlu0 %v8244
        %v8276 = vpop.xlane.xlu0 %8275
        %8277 = vadd.xlane.f32.xlu0 %v8246
        %v8278 = vpop.xlane.xlu0 %8277
        %8279 = vadd.xlane.f32.xlu0 %v8248
        %v8280 = vpop.xlane.xlu0 %8279
        %8281 = vadd.xlane.f32.xlu0 %v8250
        %v8282 = vpop.xlane.xlu0 %8281
        %8283 = vadd.xlane.f32.xlu0 %v8252
        %v8284 = vpop.xlane.xlu0 %8283
        %8285 = vadd.xlane.f32.xlu0 %v8254
        %v8286 = vpop.xlane.xlu0 %8285
        %8287 = vadd.xlane.f32.xlu0 %v8256
        %v8288 = vpop.xlane.xlu0 %8287
        %8289 = vadd.xlane.f32.xlu0 %v8258
        %v8290 = vpop.xlane.xlu0 %8289
        %v8291 = vrcp.pop %v8260
        %v8292 = vrcp.pop %v8262
        %v8293 = vrcp.pop %v8264
        %v8294 = vrcp.pop %v8266
        %v8295 = vrcp.pop %v8268
        %v8296 = vrcp.pop %v8270
        %v8297 = vrcp.pop %v8272
        %v8298 = vrcp.pop %v8274
        %v8299 = vrcp.pop %v8276
        %v8300 = vrcp.pop %v8278
        %v8301 = vrcp.pop %v8280
        %v8302 = vrcp.pop %v8282
        %v8303 = vrcp.pop %v8284
        %v8304 = vrcp.pop %v8286
        %v8305 = vrcp.pop %v8288
        %v8306 = vrcp.pop %v8290
        %v8307 = vmul.f32 %v8228, %v8291
        %v8308 = vmul.f32 %v8230, %v8292
        %v8309 = vmul.f32 %v8232, %v8293
        %v8310 = vmul.f32 %v8234, %v8294
        %v8311 = vmul.f32 %v8236, %v8295
        %v8312 = vmul.f32 %v8238, %v8296
        %v8313 = vmul.f32 %v8240, %v8297
        %v8314 = vmul.f32 %v8242, %v8298
        %v8315 = vmul.f32 %v8244, %v8299
        %v8316 = vmul.f32 %v8246, %v8300
        %v8317 = vmul.f32 %v8248, %v8301
        %v8318 = vmul.f32 %v8250, %v8302
        %v8319 = vmul.f32 %v8252, %v8303
        %v8320 = vmul.f32 %v8254, %v8304
        %v8321 = vmul.f32 %v8256, %v8305
        %v8322 = vmul.f32 %v8258, %v8306
        %s8323 = scalar_lea.vmem %s384, 768 [#allocation15]
        %8324 = vst [vmem:[%s8323] sm:$0xff] %v8307
        %8325 = vst [vmem:[%s8323 + $0x8] sm:$0xff] %v8308
        %8326 = vst [vmem:[%s8323 + $0x10] sm:$0xff] %v8309
        %8327 = vst [vmem:[%s8323 + $0x18] sm:$0xff] %v8310
        %8328 = vst [vmem:[%s8323 + $0x20] sm:$0xff] %v8311
        %8329 = vst [vmem:[%s8323 + $0x28] sm:$0xff] %v8312
        %8330 = vst [vmem:[%s8323 + $0x30] sm:$0xff] %v8313
        %8331 = vst [vmem:[%s8323 + $0x38] sm:$0xff] %v8314
        %8332 = vst [vmem:[%s8323 + $0x40] sm:$0xff] %v8315
        %8333 = vst [vmem:[%s8323 + $0x48] sm:$0xff] %v8316
        %8334 = vst [vmem:[%s8323 + $0x50] sm:$0xff] %v8317
        %8335 = vst [vmem:[%s8323 + $0x58] sm:$0xff] %v8318
        %8336 = vst [vmem:[%s8323 + $0x60] sm:$0xff] %v8319
        %8337 = vst [vmem:[%s8323 + $0x68] sm:$0xff] %v8320
        %8338 = vst [vmem:[%s8323 + $0x70] sm:$0xff] %v8321
        %8339 = vst [vmem:[%s8323 + $0x78] sm:$0xff] %v8322
        %8340 = vmatprep.subr.mxu0 0.0
        %8341 = vmatpush1.msra.mxu0 %v7921
        %8342 = vmatprep.subr.mxu0 0.0
        %8343 = vmatpush1.msra.mxu0 %v7920
        %8344 = vmatprep.subr.mxu0 0.0
        %8345 = vmatpush1.msra.mxu0 %v7919
        %8346 = vmatprep.subr.mxu0 0.0
        %8347 = vmatpush1.msra.mxu0 %v7918
        %8348 = vmatprep.subr.mxu0 0.0
        %8349 = vmatpush1.msra.mxu0 %v7917
        %8350 = vmatprep.subr.mxu0 0.0
        %8351 = vmatpush1.msra.mxu0 %v7916
        %8352 = vmatprep.subr.mxu0 0.0
        %8353 = vmatpush1.msra.mxu0 %v7915
        %8354 = vmatprep.subr.mxu0 0.0
        %8355 = vmatpush1.msra.mxu0 %v7914
        %8356 = vmatprep.subr.mxu0 0.0
        %8357 = vmatpush1.msra.mxu0 %v7913
        %8358 = vmatprep.subr.mxu0 0.0
        %8359 = vmatpush1.msra.mxu0 %v7912
        %8360 = vmatprep.subr.mxu0 0.0
        %8361 = vmatpush1.msra.mxu0 %v7911
        %8362 = vmatprep.subr.mxu0 0.0
        %8363 = vmatpush1.msra.mxu0 %v7910
        %8364 = vmatprep.subr.mxu0 0.0
        %8365 = vmatpush1.msra.mxu0 %v7909
        %8366 = vmatprep.subr.mxu0 0.0
        %8367 = vmatpush1.msra.mxu0 %v7908
        %8368 = vmatprep.subr.mxu0 0.0
        %8369 = vmatpush1.msra.mxu0 %v7907
        %8370 = vmatprep.subr.mxu0 0.0
        %8371 = vmatpush1.msra.mxu0 %v7906
        %8372 = vmatprep.subr.mxu0 0.0
        %8373 = vmatpush2.msra.mxu0 0.0
        %8374 = vmatprep.subr.mxu0 0.0
        %8375 = vmatpush2.msra.mxu0 0.0
        %8376 = vmatprep.subr.mxu0 0.0
        %8377 = vmatpush2.msra.mxu0 0.0
        %8378 = vmatprep.subr.mxu0 0.0
        %8379 = vmatpush2.msra.mxu0 0.0
        %8380 = vmatprep.subr.mxu0 0.0
        %8381 = vmatpush2.msra.mxu0 0.0
        %8382 = vmatprep.subr.mxu0 0.0
        %8383 = vmatpush2.msra.mxu0 0.0
        %8384 = vmatprep.subr.mxu0 0.0
        %8385 = vmatpush2.msra.mxu0 0.0
        %8386 = vmatprep.subr.mxu0 0.0
        %8387 = vmatpush2.msra.mxu0 0.0
        %8388 = vmatprep.subr.mxu0 0.0
        %8389 = vmatpush2.msra.mxu0 0.0
        %8390 = vmatprep.subr.mxu0 0.0
        %8391 = vmatpush2.msra.mxu0 0.0
        %8392 = vmatprep.subr.mxu0 0.0
        %8393 = vmatpush2.msra.mxu0 0.0
        %8394 = vmatprep.subr.mxu0 0.0
        %8395 = vmatpush2.msra.mxu0 0.0
        %8396 = vmatprep.subr.mxu0 0.0
        %8397 = vmatpush2.msra.mxu0 0.0
        %8398 = vmatprep.subr.mxu0 0.0
        %8399 = vmatpush2.msra.mxu0 0.0
        %8400 = vmatprep.subr.mxu0 0.0
        %8401 = vmatpush2.msra.mxu0 0.0
        %8402 = vmatprep.subr.mxu0 0.0
        %8403 = vmatpush2.msra.mxu0 0.0
        %8404 = vmatprep.mubr.f32.mxu0 0.0
        %8405 = vmatmul.mubr.f32.gmra.mxu0 %v8307
        %v8406 = vpop.f32.mrf.mxu0
        %v8407 = vadd.f32 0.0, %v8406
        %v8408 = vpop.f32.mrf.mxu0
        %8409 = vmatprep.mubr.f32.mxu0 0.0
        %8410 = vmatmul.mubr.f32.gmra.mxu0 %v8308
        %v8411 = vpop.f32.mrf.mxu0
        %v8412 = vadd.f32 0.0, %v8411
        %v8413 = vpop.f32.mrf.mxu0
        %8414 = vmatprep.mubr.f32.mxu0 0.0
        %8415 = vmatmul.mubr.f32.gmra.mxu0 %v8309
        %v8416 = vpop.f32.mrf.mxu0
        %v8417 = vadd.f32 0.0, %v8416
        %v8418 = vpop.f32.mrf.mxu0
        %8419 = vmatprep.mubr.f32.mxu0 0.0
        %8420 = vmatmul.mubr.f32.gmra.mxu0 %v8310
        %v8421 = vpop.f32.mrf.mxu0
        %v8422 = vadd.f32 0.0, %v8421
        %v8423 = vpop.f32.mrf.mxu0
        %8424 = vmatprep.mubr.f32.mxu0 0.0
        %8425 = vmatmul.mubr.f32.gmra.mxu0 %v8311
        %v8426 = vpop.f32.mrf.mxu0
        %v8427 = vadd.f32 0.0, %v8426
        %v8428 = vpop.f32.mrf.mxu0
        %8429 = vmatprep.mubr.f32.mxu0 0.0
        %8430 = vmatmul.mubr.f32.gmra.mxu0 %v8312
        %v8431 = vpop.f32.mrf.mxu0
        %v8432 = vadd.f32 0.0, %v8431
        %v8433 = vpop.f32.mrf.mxu0
        %8434 = vmatprep.mubr.f32.mxu0 0.0
        %8435 = vmatmul.mubr.f32.gmra.mxu0 %v8313
        %v8436 = vpop.f32.mrf.mxu0
        %v8437 = vadd.f32 0.0, %v8436
        %v8438 = vpop.f32.mrf.mxu0
        %8439 = vmatprep.mubr.f32.mxu0 0.0
        %8440 = vmatmul.mubr.f32.gmra.mxu0 %v8314
        %v8441 = vpop.f32.mrf.mxu0
        %v8442 = vadd.f32 0.0, %v8441
        %v8443 = vpop.f32.mrf.mxu0
        %8444 = vmatprep.mubr.f32.mxu0 0.0
        %8445 = vmatmul.mubr.f32.gmra.mxu0 %v8315
        %v8446 = vpop.f32.mrf.mxu0
        %v8447 = vadd.f32 0.0, %v8446
        %v8448 = vpop.f32.mrf.mxu0
        %8449 = vmatprep.mubr.f32.mxu0 0.0
        %8450 = vmatmul.mubr.f32.gmra.mxu0 %v8316
        %v8451 = vpop.f32.mrf.mxu0
        %v8452 = vadd.f32 0.0, %v8451
        %v8453 = vpop.f32.mrf.mxu0
        %8454 = vmatprep.mubr.f32.mxu0 0.0
        %8455 = vmatmul.mubr.f32.gmra.mxu0 %v8317
        %v8456 = vpop.f32.mrf.mxu0
        %v8457 = vadd.f32 0.0, %v8456
        %v8458 = vpop.f32.mrf.mxu0
        %8459 = vmatprep.mubr.f32.mxu0 0.0
        %8460 = vmatmul.mubr.f32.gmra.mxu0 %v8318
        %v8461 = vpop.f32.mrf.mxu0
        %v8462 = vadd.f32 0.0, %v8461
        %v8463 = vpop.f32.mrf.mxu0
        %8464 = vmatprep.mubr.f32.mxu0 0.0
        %8465 = vmatmul.mubr.f32.gmra.mxu0 %v8319
        %v8466 = vpop.f32.mrf.mxu0
        %v8467 = vadd.f32 0.0, %v8466
        %v8468 = vpop.f32.mrf.mxu0
        %8469 = vmatprep.mubr.f32.mxu0 0.0
        %8470 = vmatmul.mubr.f32.gmra.mxu0 %v8320
        %v8471 = vpop.f32.mrf.mxu0
        %v8472 = vadd.f32 0.0, %v8471
        %v8473 = vpop.f32.mrf.mxu0
        %8474 = vmatprep.mubr.f32.mxu0 0.0
        %8475 = vmatmul.mubr.f32.gmra.mxu0 %v8321
        %v8476 = vpop.f32.mrf.mxu0
        %v8477 = vadd.f32 0.0, %v8476
        %v8478 = vpop.f32.mrf.mxu0
        %8479 = vmatprep.mubr.f32.mxu0 0.0
        %8480 = vmatmul.mubr.f32.gmra.mxu0 %v8322
        %v8481 = vpop.f32.mrf.mxu0
        %v8482 = vadd.f32 0.0, %v8481
        %v8483 = vpop.f32.mrf.mxu0
        %8484 = vdwg.mxu0
        %8485 = vst.msk [vmem:[%s377 + $0x18] sm:$0xff] %vm3583, %v8407
        %8486 = vst.msk [vmem:[%s377 + $0x38] sm:$0xff] %vm3583, %v8412
        %8487 = vst.msk [vmem:[%s377 + $0x58] sm:$0xff] %vm3583, %v8417
        %8488 = vst.msk [vmem:[%s377 + $0x78] sm:$0xff] %vm3583, %v8422
        %8489 = vst.msk [vmem:[%s377 + $0x98] sm:$0xff] %vm3583, %v8427
        %8490 = vst.msk [vmem:[%s377 + $0xb8] sm:$0xff] %vm3583, %v8432
        %8491 = vst.msk [vmem:[%s377 + $0xd8] sm:$0xff] %vm3583, %v8437
        %8492 = vst.msk [vmem:[%s377 + $0xf8] sm:$0xff] %vm3583, %v8442
        %8493 = vst.msk [vmem:[%s377 + $0x118] sm:$0xff] %vm3583, %v8447
        %8494 = vst.msk [vmem:[%s377 + $0x138] sm:$0xff] %vm3583, %v8452
        %8495 = vst.msk [vmem:[%s377 + $0x158] sm:$0xff] %vm3583, %v8457
        %8496 = vst.msk [vmem:[%s377 + $0x178] sm:$0xff] %vm3583, %v8462
        %8497 = vst.msk [vmem:[%s377 + $0x198] sm:$0xff] %vm3583, %v8467
        %8498 = vst.msk [vmem:[%s377 + $0x1b8] sm:$0xff] %vm3583, %v8472
        %8499 = vst.msk [vmem:[%s377 + $0x1d8] sm:$0xff] %vm3583, %v8477
        %8500 = vst.msk [vmem:[%s377 + $0x1f8] sm:$0xff] %vm3583, %v8482
        %v8501 = vld [vmem:[#allocation2 + $0x18] sm:$0xff]
        %v8502 = vld [vmem:[#allocation2 + $0x38] sm:$0xff]
        %v8503 = vld [vmem:[#allocation2 + $0x58] sm:$0xff]
        %v8504 = vld [vmem:[#allocation2 + $0x78] sm:$0xff]
        %v8505 = vld [vmem:[#allocation2 + $0x98] sm:$0xff]
        %v8506 = vld [vmem:[#allocation2 + $0xb8] sm:$0xff]
        %v8507 = vld [vmem:[#allocation2 + $0xd8] sm:$0xff]
        %v8508 = vld [vmem:[#allocation2 + $0xf8] sm:$0xff]
        %v8509 = vld [vmem:[#allocation2 + $0x118] sm:$0xff]
        %v8510 = vld [vmem:[#allocation2 + $0x138] sm:$0xff]
        %v8511 = vld [vmem:[#allocation2 + $0x158] sm:$0xff]
        %v8512 = vld [vmem:[#allocation2 + $0x178] sm:$0xff]
        %v8513 = vld [vmem:[#allocation2 + $0x198] sm:$0xff]
        %v8514 = vld [vmem:[#allocation2 + $0x1b8] sm:$0xff]
        %v8515 = vld [vmem:[#allocation2 + $0x1d8] sm:$0xff]
        %v8516 = vld [vmem:[#allocation2 + $0x1f8] sm:$0xff]
        %v8517 = vld [vmem:[#allocation3 + $0x18] sm:$0xff]
        %v8518 = vld [vmem:[#allocation3 + $0x38] sm:$0xff]
        %v8519 = vld [vmem:[#allocation3 + $0x58] sm:$0xff]
        %v8520 = vld [vmem:[#allocation3 + $0x78] sm:$0xff]
        %v8521 = vld [vmem:[#allocation3 + $0x98] sm:$0xff]
        %v8522 = vld [vmem:[#allocation3 + $0xb8] sm:$0xff]
        %v8523 = vld [vmem:[#allocation3 + $0xd8] sm:$0xff]
        %v8524 = vld [vmem:[#allocation3 + $0xf8] sm:$0xff]
        %v8525 = vld [vmem:[#allocation3 + $0x118] sm:$0xff]
        %v8526 = vld [vmem:[#allocation3 + $0x138] sm:$0xff]
        %v8527 = vld [vmem:[#allocation3 + $0x158] sm:$0xff]
        %v8528 = vld [vmem:[#allocation3 + $0x178] sm:$0xff]
        %v8529 = vld [vmem:[#allocation3 + $0x198] sm:$0xff]
        %v8530 = vld [vmem:[#allocation3 + $0x1b8] sm:$0xff]
        %v8531 = vld [vmem:[#allocation3 + $0x1d8] sm:$0xff]
        %v8532 = vld [vmem:[#allocation3 + $0x1f8] sm:$0xff]
        %v8533 = vld [vmem:[#allocation4 + $0x18] sm:$0xff]
        %v8534 = vld [vmem:[#allocation4 + $0x38] sm:$0xff]
        %v8535 = vld [vmem:[#allocation4 + $0x58] sm:$0xff]
        %v8536 = vld [vmem:[#allocation4 + $0x78] sm:$0xff]
        %v8537 = vld [vmem:[#allocation4 + $0x98] sm:$0xff]
        %v8538 = vld [vmem:[#allocation4 + $0xb8] sm:$0xff]
        %v8539 = vld [vmem:[#allocation4 + $0xd8] sm:$0xff]
        %v8540 = vld [vmem:[#allocation4 + $0xf8] sm:$0xff]
        %v8541 = vld [vmem:[#allocation4 + $0x118] sm:$0xff]
        %v8542 = vld [vmem:[#allocation4 + $0x138] sm:$0xff]
        %v8543 = vld [vmem:[#allocation4 + $0x158] sm:$0xff]
        %v8544 = vld [vmem:[#allocation4 + $0x178] sm:$0xff]
        %v8545 = vld [vmem:[#allocation4 + $0x198] sm:$0xff]
        %v8546 = vld [vmem:[#allocation4 + $0x1b8] sm:$0xff]
        %v8547 = vld [vmem:[#allocation4 + $0x1d8] sm:$0xff]
        %v8548 = vld [vmem:[#allocation4 + $0x1f8] sm:$0xff]
        %8565 = vrot.lane.b32.xlu0 %v8501, 64
        %v8566 = vpop.permute.xlu0 %8565
        %8567 = vrot.lane.b32.xlu0 %v8502, 64
        %v8568 = vpop.permute.xlu0 %8567
        %8569 = vrot.lane.b32.xlu0 %v8503, 64
        %v8570 = vpop.permute.xlu0 %8569
        %8571 = vrot.lane.b32.xlu0 %v8504, 64
        %v8572 = vpop.permute.xlu0 %8571
        %8573 = vrot.lane.b32.xlu0 %v8505, 64
        %v8574 = vpop.permute.xlu0 %8573
        %8575 = vrot.lane.b32.xlu0 %v8506, 64
        %v8576 = vpop.permute.xlu0 %8575
        %8577 = vrot.lane.b32.xlu0 %v8507, 64
        %v8578 = vpop.permute.xlu0 %8577
        %8579 = vrot.lane.b32.xlu0 %v8508, 64
        %v8580 = vpop.permute.xlu0 %8579
        %8581 = vrot.lane.b32.xlu0 %v8509, 64
        %v8582 = vpop.permute.xlu0 %8581
        %8583 = vrot.lane.b32.xlu0 %v8510, 64
        %v8584 = vpop.permute.xlu0 %8583
        %8585 = vrot.lane.b32.xlu0 %v8511, 64
        %v8586 = vpop.permute.xlu0 %8585
        %8587 = vrot.lane.b32.xlu0 %v8512, 64
        %v8588 = vpop.permute.xlu0 %8587
        %8589 = vrot.lane.b32.xlu0 %v8513, 64
        %v8590 = vpop.permute.xlu0 %8589
        %8591 = vrot.lane.b32.xlu0 %v8514, 64
        %v8592 = vpop.permute.xlu0 %8591
        %8593 = vrot.lane.b32.xlu0 %v8515, 64
        %v8594 = vpop.permute.xlu0 %8593
        %8595 = vrot.lane.b32.xlu0 %v8516, 64
        %v8596 = vpop.permute.xlu0 %8595
        %8613 = vrot.lane.b32.xlu0 %v8517, 64
        %v8614 = vpop.permute.xlu0 %8613
        %8615 = vrot.lane.b32.xlu0 %v8518, 64
        %v8616 = vpop.permute.xlu0 %8615
        %8617 = vrot.lane.b32.xlu0 %v8519, 64
        %v8618 = vpop.permute.xlu0 %8617
        %8619 = vrot.lane.b32.xlu0 %v8520, 64
        %v8620 = vpop.permute.xlu0 %8619
        %8621 = vrot.lane.b32.xlu0 %v8521, 64
        %v8622 = vpop.permute.xlu0 %8621
        %8623 = vrot.lane.b32.xlu0 %v8522, 64
        %v8624 = vpop.permute.xlu0 %8623
        %8625 = vrot.lane.b32.xlu0 %v8523, 64
        %v8626 = vpop.permute.xlu0 %8625
        %8627 = vrot.lane.b32.xlu0 %v8524, 64
        %v8628 = vpop.permute.xlu0 %8627
        %8629 = vrot.lane.b32.xlu0 %v8525, 64
        %v8630 = vpop.permute.xlu0 %8629
        %8631 = vrot.lane.b32.xlu0 %v8526, 64
        %v8632 = vpop.permute.xlu0 %8631
        %8633 = vrot.lane.b32.xlu0 %v8527, 64
        %v8634 = vpop.permute.xlu0 %8633
        %8635 = vrot.lane.b32.xlu0 %v8528, 64
        %v8636 = vpop.permute.xlu0 %8635
        %8637 = vrot.lane.b32.xlu0 %v8529, 64
        %v8638 = vpop.permute.xlu0 %8637
        %8639 = vrot.lane.b32.xlu0 %v8530, 64
        %v8640 = vpop.permute.xlu0 %8639
        %8641 = vrot.lane.b32.xlu0 %v8531, 64
        %v8642 = vpop.permute.xlu0 %8641
        %8643 = vrot.lane.b32.xlu0 %v8532, 64
        %v8644 = vpop.permute.xlu0 %8643
        %v8645 = vsel %vm3583, %v8566, 0
        %v8647 = vsel %vm3583, %v8568, 0
        %v8649 = vsel %vm3583, %v8570, 0
        %v8651 = vsel %vm3583, %v8572, 0
        %v8653 = vsel %vm3583, %v8574, 0
        %v8655 = vsel %vm3583, %v8576, 0
        %v8657 = vsel %vm3583, %v8578, 0
        %v8659 = vsel %vm3583, %v8580, 0
        %v8661 = vsel %vm3583, %v8582, 0
        %v8663 = vsel %vm3583, %v8584, 0
        %v8665 = vsel %vm3583, %v8586, 0
        %v8667 = vsel %vm3583, %v8588, 0
        %v8669 = vsel %vm3583, %v8590, 0
        %v8671 = vsel %vm3583, %v8592, 0
        %v8673 = vsel %vm3583, %v8594, 0
        %v8675 = vsel %vm3583, %v8596, 0
        %v8677 = vsel %vm3583, %v8614, 0
        %v8679 = vsel %vm3583, %v8616, 0
        %v8681 = vsel %vm3583, %v8618, 0
        %v8683 = vsel %vm3583, %v8620, 0
        %v8685 = vsel %vm3583, %v8622, 0
        %v8687 = vsel %vm3583, %v8624, 0
        %v8689 = vsel %vm3583, %v8626, 0
        %v8691 = vsel %vm3583, %v8628, 0
        %v8693 = vsel %vm3583, %v8630, 0
        %v8695 = vsel %vm3583, %v8632, 0
        %v8697 = vsel %vm3583, %v8634, 0
        %v8699 = vsel %vm3583, %v8636, 0
        %v8701 = vsel %vm3583, %v8638, 0
        %v8703 = vsel %vm3583, %v8640, 0
        %v8705 = vsel %vm3583, %v8642, 0
        %v8707 = vsel %vm3583, %v8644, 0
        %8709 = vmatprep.subr.mxu0 0.0
        %8710 = vmatpush1.xpose.msra.mxu0 %v8707
        %8711 = vmatprep.subr.mxu0 0.0
        %8712 = vmatpush1.xpose.msra.mxu0 %v8705
        %8713 = vmatprep.subr.mxu0 0.0
        %8714 = vmatpush1.xpose.msra.mxu0 %v8703
        %8715 = vmatprep.subr.mxu0 0.0
        %8716 = vmatpush1.xpose.msra.mxu0 %v8701
        %8717 = vmatprep.subr.mxu0 0.0
        %8718 = vmatpush1.xpose.msra.mxu0 %v8699
        %8719 = vmatprep.subr.mxu0 0.0
        %8720 = vmatpush1.xpose.msra.mxu0 %v8697
        %8721 = vmatprep.subr.mxu0 0.0
        %8722 = vmatpush1.xpose.msra.mxu0 %v8695
        %8723 = vmatprep.subr.mxu0 0.0
        %8724 = vmatpush1.xpose.msra.mxu0 %v8693
        %8725 = vmatprep.subr.mxu0 0.0
        %8726 = vmatpush1.xpose.msra.mxu0 %v8691
        %8727 = vmatprep.subr.mxu0 0.0
        %8728 = vmatpush1.xpose.msra.mxu0 %v8689
        %8729 = vmatprep.subr.mxu0 0.0
        %8730 = vmatpush1.xpose.msra.mxu0 %v8687
        %8731 = vmatprep.subr.mxu0 0.0
        %8732 = vmatpush1.xpose.msra.mxu0 %v8685
        %8733 = vmatprep.subr.mxu0 0.0
        %8734 = vmatpush1.xpose.msra.mxu0 %v8683
        %8735 = vmatprep.subr.mxu0 0.0
        %8736 = vmatpush1.xpose.msra.mxu0 %v8681
        %8737 = vmatprep.subr.mxu0 0.0
        %8738 = vmatpush1.xpose.msra.mxu0 %v8679
        %8739 = vmatprep.subr.mxu0 0.0
        %8740 = vmatpush1.xpose.msra.mxu0 %v8677
        %8741 = vmatprep.subr.mxu0 0.0
        %8742 = vmatpush2.xpose.msra.mxu0 0.0
        %8743 = vmatprep.subr.mxu0 0.0
        %8744 = vmatpush2.xpose.msra.mxu0 0.0
        %8745 = vmatprep.subr.mxu0 0.0
        %8746 = vmatpush2.xpose.msra.mxu0 0.0
        %8747 = vmatprep.subr.mxu0 0.0
        %8748 = vmatpush2.xpose.msra.mxu0 0.0
        %8749 = vmatprep.subr.mxu0 0.0
        %8750 = vmatpush2.xpose.msra.mxu0 0.0
        %8751 = vmatprep.subr.mxu0 0.0
        %8752 = vmatpush2.xpose.msra.mxu0 0.0
        %8753 = vmatprep.subr.mxu0 0.0
        %8754 = vmatpush2.xpose.msra.mxu0 0.0
        %8755 = vmatprep.subr.mxu0 0.0
        %8756 = vmatpush2.xpose.msra.mxu0 0.0
        %8757 = vmatprep.subr.mxu0 0.0
        %8758 = vmatpush2.xpose.msra.mxu0 0.0
        %8759 = vmatprep.subr.mxu0 0.0
        %8760 = vmatpush2.xpose.msra.mxu0 0.0
        %8761 = vmatprep.subr.mxu0 0.0
        %8762 = vmatpush2.xpose.msra.mxu0 0.0
        %8763 = vmatprep.subr.mxu0 0.0
        %8764 = vmatpush2.xpose.msra.mxu0 0.0
        %8765 = vmatprep.subr.mxu0 0.0
        %8766 = vmatpush2.xpose.msra.mxu0 0.0
        %8767 = vmatprep.subr.mxu0 0.0
        %8768 = vmatpush2.xpose.msra.mxu0 0.0
        %8769 = vmatprep.subr.mxu0 0.0
        %8770 = vmatpush2.xpose.msra.mxu0 0.0
        %8771 = vmatprep.subr.mxu0 0.0
        %8772 = vmatpush2.xpose.msra.mxu0 0.0
        %8773 = vmatprep.mubr.f32.mxu0 0.0
        %8774 = vmatmul.mubr.f32.gmra.mxu0 %v8645
        %v8775 = vpop.f32.mrf.mxu0
        %v8776 = vadd.f32 0.0, %v8775
        %v8777 = vpop.f32.mrf.mxu0
        %8778 = vmatprep.mubr.f32.mxu0 0.0
        %8779 = vmatmul.mubr.f32.gmra.mxu0 %v8647
        %v8780 = vpop.f32.mrf.mxu0
        %v8781 = vadd.f32 0.0, %v8780
        %v8782 = vpop.f32.mrf.mxu0
        %8783 = vmatprep.mubr.f32.mxu0 0.0
        %8784 = vmatmul.mubr.f32.gmra.mxu0 %v8649
        %v8785 = vpop.f32.mrf.mxu0
        %v8786 = vadd.f32 0.0, %v8785
        %v8787 = vpop.f32.mrf.mxu0
        %8788 = vmatprep.mubr.f32.mxu0 0.0
        %8789 = vmatmul.mubr.f32.gmra.mxu0 %v8651
        %v8790 = vpop.f32.mrf.mxu0
        %v8791 = vadd.f32 0.0, %v8790
        %v8792 = vpop.f32.mrf.mxu0
        %8793 = vmatprep.mubr.f32.mxu0 0.0
        %8794 = vmatmul.mubr.f32.gmra.mxu0 %v8653
        %v8795 = vpop.f32.mrf.mxu0
        %v8796 = vadd.f32 0.0, %v8795
        %v8797 = vpop.f32.mrf.mxu0
        %8798 = vmatprep.mubr.f32.mxu0 0.0
        %8799 = vmatmul.mubr.f32.gmra.mxu0 %v8655
        %v8800 = vpop.f32.mrf.mxu0
        %v8801 = vadd.f32 0.0, %v8800
        %v8802 = vpop.f32.mrf.mxu0
        %8803 = vmatprep.mubr.f32.mxu0 0.0
        %8804 = vmatmul.mubr.f32.gmra.mxu0 %v8657
        %v8805 = vpop.f32.mrf.mxu0
        %v8806 = vadd.f32 0.0, %v8805
        %v8807 = vpop.f32.mrf.mxu0
        %8808 = vmatprep.mubr.f32.mxu0 0.0
        %8809 = vmatmul.mubr.f32.gmra.mxu0 %v8659
        %v8810 = vpop.f32.mrf.mxu0
        %v8811 = vadd.f32 0.0, %v8810
        %v8812 = vpop.f32.mrf.mxu0
        %8813 = vmatprep.mubr.f32.mxu0 0.0
        %8814 = vmatmul.mubr.f32.gmra.mxu0 %v8661
        %v8815 = vpop.f32.mrf.mxu0
        %v8816 = vadd.f32 0.0, %v8815
        %v8817 = vpop.f32.mrf.mxu0
        %8818 = vmatprep.mubr.f32.mxu0 0.0
        %8819 = vmatmul.mubr.f32.gmra.mxu0 %v8663
        %v8820 = vpop.f32.mrf.mxu0
        %v8821 = vadd.f32 0.0, %v8820
        %v8822 = vpop.f32.mrf.mxu0
        %8823 = vmatprep.mubr.f32.mxu0 0.0
        %8824 = vmatmul.mubr.f32.gmra.mxu0 %v8665
        %v8825 = vpop.f32.mrf.mxu0
        %v8826 = vadd.f32 0.0, %v8825
        %v8827 = vpop.f32.mrf.mxu0
        %8828 = vmatprep.mubr.f32.mxu0 0.0
        %8829 = vmatmul.mubr.f32.gmra.mxu0 %v8667
        %v8830 = vpop.f32.mrf.mxu0
        %v8831 = vadd.f32 0.0, %v8830
        %v8832 = vpop.f32.mrf.mxu0
        %8833 = vmatprep.mubr.f32.mxu0 0.0
        %8834 = vmatmul.mubr.f32.gmra.mxu0 %v8669
        %v8835 = vpop.f32.mrf.mxu0
        %v8836 = vadd.f32 0.0, %v8835
        %v8837 = vpop.f32.mrf.mxu0
        %8838 = vmatprep.mubr.f32.mxu0 0.0
        %8839 = vmatmul.mubr.f32.gmra.mxu0 %v8671
        %v8840 = vpop.f32.mrf.mxu0
        %v8841 = vadd.f32 0.0, %v8840
        %v8842 = vpop.f32.mrf.mxu0
        %8843 = vmatprep.mubr.f32.mxu0 0.0
        %8844 = vmatmul.mubr.f32.gmra.mxu0 %v8673
        %v8845 = vpop.f32.mrf.mxu0
        %v8846 = vadd.f32 0.0, %v8845
        %v8847 = vpop.f32.mrf.mxu0
        %8848 = vmatprep.mubr.f32.mxu0 0.0
        %8849 = vmatmul.mubr.f32.gmra.mxu0 %v8675
        %v8850 = vpop.f32.mrf.mxu0
        %v8851 = vadd.f32 0.0, %v8850
        %v8852 = vpop.f32.mrf.mxu0
        %8853 = vdwg.mxu0
        %v8854 = vmul.f32 %v8776, 0.125
        %v8855 = vmul.f32 %v8781, 0.125
        %v8856 = vmul.f32 %v8786, 0.125
        %v8857 = vmul.f32 %v8791, 0.125
        %v8858 = vmul.f32 %v8796, 0.125
        %v8859 = vmul.f32 %v8801, 0.125
        %v8860 = vmul.f32 %v8806, 0.125
        %v8861 = vmul.f32 %v8811, 0.125
        %v8862 = vmul.f32 %v8816, 0.125
        %v8863 = vmul.f32 %v8821, 0.125
        %v8864 = vmul.f32 %v8826, 0.125
        %v8865 = vmul.f32 %v8831, 0.125
        %v8866 = vmul.f32 %v8836, 0.125
        %v8867 = vmul.f32 %v8841, 0.125
        %v8868 = vmul.f32 %v8846, 0.125
        %v8869 = vmul.f32 %v8851, 0.125
        %8870 = vmax.xlane.f32.xlu0 %v8854
        %v8871 = vpop.xlane.xlu0 %8870
        %8872 = vmax.xlane.f32.xlu0 %v8855
        %v8873 = vpop.xlane.xlu0 %8872
        %8874 = vmax.xlane.f32.xlu0 %v8856
        %v8875 = vpop.xlane.xlu0 %8874
        %8876 = vmax.xlane.f32.xlu0 %v8857
        %v8877 = vpop.xlane.xlu0 %8876
        %8878 = vmax.xlane.f32.xlu0 %v8858
        %v8879 = vpop.xlane.xlu0 %8878
        %8880 = vmax.xlane.f32.xlu0 %v8859
        %v8881 = vpop.xlane.xlu0 %8880
        %8882 = vmax.xlane.f32.xlu0 %v8860
        %v8883 = vpop.xlane.xlu0 %8882
        %8884 = vmax.xlane.f32.xlu0 %v8861
        %v8885 = vpop.xlane.xlu0 %8884
        %8886 = vmax.xlane.f32.xlu0 %v8862
        %v8887 = vpop.xlane.xlu0 %8886
        %8888 = vmax.xlane.f32.xlu0 %v8863
        %v8889 = vpop.xlane.xlu0 %8888
        %8890 = vmax.xlane.f32.xlu0 %v8864
        %v8891 = vpop.xlane.xlu0 %8890
        %8892 = vmax.xlane.f32.xlu0 %v8865
        %v8893 = vpop.xlane.xlu0 %8892
        %8894 = vmax.xlane.f32.xlu0 %v8866
        %v8895 = vpop.xlane.xlu0 %8894
        %8896 = vmax.xlane.f32.xlu0 %v8867
        %v8897 = vpop.xlane.xlu0 %8896
        %8898 = vmax.xlane.f32.xlu0 %v8868
        %v8899 = vpop.xlane.xlu0 %8898
        %8900 = vmax.xlane.f32.xlu0 %v8869
        %v8901 = vpop.xlane.xlu0 %8900
        %v8902 = vsub.f32 %v8854, %v8871
        %v8903 = vsub.f32 %v8855, %v8873
        %v8904 = vsub.f32 %v8856, %v8875
        %v8905 = vsub.f32 %v8857, %v8877
        %v8906 = vsub.f32 %v8858, %v8879
        %v8907 = vsub.f32 %v8859, %v8881
        %v8908 = vsub.f32 %v8860, %v8883
        %v8909 = vsub.f32 %v8861, %v8885
        %v8910 = vsub.f32 %v8862, %v8887
        %v8911 = vsub.f32 %v8863, %v8889
        %v8912 = vsub.f32 %v8864, %v8891
        %v8913 = vsub.f32 %v8865, %v8893
        %v8914 = vsub.f32 %v8866, %v8895
        %v8915 = vsub.f32 %v8867, %v8897
        %v8916 = vsub.f32 %v8868, %v8899
        %v8917 = vsub.f32 %v8869, %v8901
        %v8918 = vmul.f32 %v8902, 1.442695
        %v8919 = vpow.pop %v8918
        %v8920 = vmul.f32 %v8903, 1.442695
        %v8921 = vpow.pop %v8920
        %v8922 = vmul.f32 %v8904, 1.442695
        %v8923 = vpow.pop %v8922
        %v8924 = vmul.f32 %v8905, 1.442695
        %v8925 = vpow.pop %v8924
        %v8926 = vmul.f32 %v8906, 1.442695
        %v8927 = vpow.pop %v8926
        %v8928 = vmul.f32 %v8907, 1.442695
        %v8929 = vpow.pop %v8928
        %v8930 = vmul.f32 %v8908, 1.442695
        %v8931 = vpow.pop %v8930
        %v8932 = vmul.f32 %v8909, 1.442695
        %v8933 = vpow.pop %v8932
        %v8934 = vmul.f32 %v8910, 1.442695
        %v8935 = vpow.pop %v8934
        %v8936 = vmul.f32 %v8911, 1.442695
        %v8937 = vpow.pop %v8936
        %v8938 = vmul.f32 %v8912, 1.442695
        %v8939 = vpow.pop %v8938
        %v8940 = vmul.f32 %v8913, 1.442695
        %v8941 = vpow.pop %v8940
        %v8942 = vmul.f32 %v8914, 1.442695
        %v8943 = vpow.pop %v8942
        %v8944 = vmul.f32 %v8915, 1.442695
        %v8945 = vpow.pop %v8944
        %v8946 = vmul.f32 %v8916, 1.442695
        %v8947 = vpow.pop %v8946
        %v8948 = vmul.f32 %v8917, 1.442695
        %v8949 = vpow.pop %v8948
        %8950 = vadd.xlane.f32.xlu0 %v8919
        %v8951 = vpop.xlane.xlu0 %8950
        %8952 = vadd.xlane.f32.xlu0 %v8921
        %v8953 = vpop.xlane.xlu0 %8952
        %8954 = vadd.xlane.f32.xlu0 %v8923
        %v8955 = vpop.xlane.xlu0 %8954
        %8956 = vadd.xlane.f32.xlu0 %v8925
        %v8957 = vpop.xlane.xlu0 %8956
        %8958 = vadd.xlane.f32.xlu0 %v8927
        %v8959 = vpop.xlane.xlu0 %8958
        %8960 = vadd.xlane.f32.xlu0 %v8929
        %v8961 = vpop.xlane.xlu0 %8960
        %8962 = vadd.xlane.f32.xlu0 %v8931
        %v8963 = vpop.xlane.xlu0 %8962
        %8964 = vadd.xlane.f32.xlu0 %v8933
        %v8965 = vpop.xlane.xlu0 %8964
        %8966 = vadd.xlane.f32.xlu0 %v8935
        %v8967 = vpop.xlane.xlu0 %8966
        %8968 = vadd.xlane.f32.xlu0 %v8937
        %v8969 = vpop.xlane.xlu0 %8968
        %8970 = vadd.xlane.f32.xlu0 %v8939
        %v8971 = vpop.xlane.xlu0 %8970
        %8972 = vadd.xlane.f32.xlu0 %v8941
        %v8973 = vpop.xlane.xlu0 %8972
        %8974 = vadd.xlane.f32.xlu0 %v8943
        %v8975 = vpop.xlane.xlu0 %8974
        %8976 = vadd.xlane.f32.xlu0 %v8945
        %v8977 = vpop.xlane.xlu0 %8976
        %8978 = vadd.xlane.f32.xlu0 %v8947
        %v8979 = vpop.xlane.xlu0 %8978
        %8980 = vadd.xlane.f32.xlu0 %v8949
        %v8981 = vpop.xlane.xlu0 %8980
        %v8982 = vrcp.pop %v8951
        %v8983 = vrcp.pop %v8953
        %v8984 = vrcp.pop %v8955
        %v8985 = vrcp.pop %v8957
        %v8986 = vrcp.pop %v8959
        %v8987 = vrcp.pop %v8961
        %v8988 = vrcp.pop %v8963
        %v8989 = vrcp.pop %v8965
        %v8990 = vrcp.pop %v8967
        %v8991 = vrcp.pop %v8969
        %v8992 = vrcp.pop %v8971
        %v8993 = vrcp.pop %v8973
        %v8994 = vrcp.pop %v8975
        %v8995 = vrcp.pop %v8977
        %v8996 = vrcp.pop %v8979
        %v8997 = vrcp.pop %v8981
        %v8998 = vmul.f32 %v8919, %v8982
        %v8999 = vmul.f32 %v8921, %v8983
        %v9000 = vmul.f32 %v8923, %v8984
        %v9001 = vmul.f32 %v8925, %v8985
        %v9002 = vmul.f32 %v8927, %v8986
        %v9003 = vmul.f32 %v8929, %v8987
        %v9004 = vmul.f32 %v8931, %v8988
        %v9005 = vmul.f32 %v8933, %v8989
        %v9006 = vmul.f32 %v8935, %v8990
        %v9007 = vmul.f32 %v8937, %v8991
        %v9008 = vmul.f32 %v8939, %v8992
        %v9009 = vmul.f32 %v8941, %v8993
        %v9010 = vmul.f32 %v8943, %v8994
        %v9011 = vmul.f32 %v8945, %v8995
        %v9012 = vmul.f32 %v8947, %v8996
        %v9013 = vmul.f32 %v8949, %v8997
        %s9014 = scalar_lea.vmem %s384, 896 [#allocation15]
        %9015 = vst [vmem:[%s9014] sm:$0xff] %v8998
        %9016 = vst [vmem:[%s9014 + $0x8] sm:$0xff] %v8999
        %9017 = vst [vmem:[%s9014 + $0x10] sm:$0xff] %v9000
        %9018 = vst [vmem:[%s9014 + $0x18] sm:$0xff] %v9001
        %9019 = vst [vmem:[%s9014 + $0x20] sm:$0xff] %v9002
        %9020 = vst [vmem:[%s9014 + $0x28] sm:$0xff] %v9003
        %9021 = vst [vmem:[%s9014 + $0x30] sm:$0xff] %v9004
        %9022 = vst [vmem:[%s9014 + $0x38] sm:$0xff] %v9005
        %9023 = vst [vmem:[%s9014 + $0x40] sm:$0xff] %v9006
        %9024 = vst [vmem:[%s9014 + $0x48] sm:$0xff] %v9007
        %9025 = vst [vmem:[%s9014 + $0x50] sm:$0xff] %v9008
        %9026 = vst [vmem:[%s9014 + $0x58] sm:$0xff] %v9009
        %9027 = vst [vmem:[%s9014 + $0x60] sm:$0xff] %v9010
        %9028 = vst [vmem:[%s9014 + $0x68] sm:$0xff] %v9011
        %9029 = vst [vmem:[%s9014 + $0x70] sm:$0xff] %v9012
        %9030 = vst [vmem:[%s9014 + $0x78] sm:$0xff] %v9013
        %9047 = vrot.lane.b32.xlu0 %v8533, 64
        %v9048 = vpop.permute.xlu0 %9047
        %9049 = vrot.lane.b32.xlu0 %v8534, 64
        %v9050 = vpop.permute.xlu0 %9049
        %9051 = vrot.lane.b32.xlu0 %v8535, 64
        %v9052 = vpop.permute.xlu0 %9051
        %9053 = vrot.lane.b32.xlu0 %v8536, 64
        %v9054 = vpop.permute.xlu0 %9053
        %9055 = vrot.lane.b32.xlu0 %v8537, 64
        %v9056 = vpop.permute.xlu0 %9055
        %9057 = vrot.lane.b32.xlu0 %v8538, 64
        %v9058 = vpop.permute.xlu0 %9057
        %9059 = vrot.lane.b32.xlu0 %v8539, 64
        %v9060 = vpop.permute.xlu0 %9059
        %9061 = vrot.lane.b32.xlu0 %v8540, 64
        %v9062 = vpop.permute.xlu0 %9061
        %9063 = vrot.lane.b32.xlu0 %v8541, 64
        %v9064 = vpop.permute.xlu0 %9063
        %9065 = vrot.lane.b32.xlu0 %v8542, 64
        %v9066 = vpop.permute.xlu0 %9065
        %9067 = vrot.lane.b32.xlu0 %v8543, 64
        %v9068 = vpop.permute.xlu0 %9067
        %9069 = vrot.lane.b32.xlu0 %v8544, 64
        %v9070 = vpop.permute.xlu0 %9069
        %9071 = vrot.lane.b32.xlu0 %v8545, 64
        %v9072 = vpop.permute.xlu0 %9071
        %9073 = vrot.lane.b32.xlu0 %v8546, 64
        %v9074 = vpop.permute.xlu0 %9073
        %9075 = vrot.lane.b32.xlu0 %v8547, 64
        %v9076 = vpop.permute.xlu0 %9075
        %9077 = vrot.lane.b32.xlu0 %v8548, 64
        %v9078 = vpop.permute.xlu0 %9077
        %9095 = vmatprep.subr.mxu0 0.0
        %9096 = vmatpush1.msra.mxu0 %v9078
        %9097 = vmatprep.subr.mxu0 0.0
        %9098 = vmatpush1.msra.mxu0 %v9076
        %9099 = vmatprep.subr.mxu0 0.0
        %9100 = vmatpush1.msra.mxu0 %v9074
        %9101 = vmatprep.subr.mxu0 0.0
        %9102 = vmatpush1.msra.mxu0 %v9072
        %9103 = vmatprep.subr.mxu0 0.0
        %9104 = vmatpush1.msra.mxu0 %v9070
        %9105 = vmatprep.subr.mxu0 0.0
        %9106 = vmatpush1.msra.mxu0 %v9068
        %9107 = vmatprep.subr.mxu0 0.0
        %9108 = vmatpush1.msra.mxu0 %v9066
        %9109 = vmatprep.subr.mxu0 0.0
        %9110 = vmatpush1.msra.mxu0 %v9064
        %9111 = vmatprep.subr.mxu0 0.0
        %9112 = vmatpush1.msra.mxu0 %v9062
        %9113 = vmatprep.subr.mxu0 0.0
        %9114 = vmatpush1.msra.mxu0 %v9060
        %9115 = vmatprep.subr.mxu0 0.0
        %9116 = vmatpush1.msra.mxu0 %v9058
        %9117 = vmatprep.subr.mxu0 0.0
        %9118 = vmatpush1.msra.mxu0 %v9056
        %9119 = vmatprep.subr.mxu0 0.0
        %9120 = vmatpush1.msra.mxu0 %v9054
        %9121 = vmatprep.subr.mxu0 0.0
        %9122 = vmatpush1.msra.mxu0 %v9052
        %9123 = vmatprep.subr.mxu0 0.0
        %9124 = vmatpush1.msra.mxu0 %v9050
        %9125 = vmatprep.subr.mxu0 0.0
        %9126 = vmatpush1.msra.mxu0 %v9048
        %9127 = vmatprep.subr.mxu0 0.0
        %9128 = vmatpush2.msra.mxu0 0.0
        %9129 = vmatprep.subr.mxu0 0.0
        %9130 = vmatpush2.msra.mxu0 0.0
        %9131 = vmatprep.subr.mxu0 0.0
        %9132 = vmatpush2.msra.mxu0 0.0
        %9133 = vmatprep.subr.mxu0 0.0
        %9134 = vmatpush2.msra.mxu0 0.0
        %9135 = vmatprep.subr.mxu0 0.0
        %9136 = vmatpush2.msra.mxu0 0.0
        %9137 = vmatprep.subr.mxu0 0.0
        %9138 = vmatpush2.msra.mxu0 0.0
        %9139 = vmatprep.subr.mxu0 0.0
        %9140 = vmatpush2.msra.mxu0 0.0
        %9141 = vmatprep.subr.mxu0 0.0
        %9142 = vmatpush2.msra.mxu0 0.0
        %9143 = vmatprep.subr.mxu0 0.0
        %9144 = vmatpush2.msra.mxu0 0.0
        %9145 = vmatprep.subr.mxu0 0.0
        %9146 = vmatpush2.msra.mxu0 0.0
        %9147 = vmatprep.subr.mxu0 0.0
        %9148 = vmatpush2.msra.mxu0 0.0
        %9149 = vmatprep.subr.mxu0 0.0
        %9150 = vmatpush2.msra.mxu0 0.0
        %9151 = vmatprep.subr.mxu0 0.0
        %9152 = vmatpush2.msra.mxu0 0.0
        %9153 = vmatprep.subr.mxu0 0.0
        %9154 = vmatpush2.msra.mxu0 0.0
        %9155 = vmatprep.subr.mxu0 0.0
        %9156 = vmatpush2.msra.mxu0 0.0
        %9157 = vmatprep.subr.mxu0 0.0
        %9158 = vmatpush2.msra.mxu0 0.0
        %9159 = vmatprep.mubr.f32.mxu0 0.0
        %9160 = vmatmul.mubr.f32.gmra.mxu0 %v8998
        %v9161 = vpop.f32.mrf.mxu0
        %v9162 = vadd.f32 0.0, %v9161
        %v9163 = vpop.f32.mrf.mxu0
        %9164 = vmatprep.mubr.f32.mxu0 0.0
        %9165 = vmatmul.mubr.f32.gmra.mxu0 %v8999
        %v9166 = vpop.f32.mrf.mxu0
        %v9167 = vadd.f32 0.0, %v9166
        %v9168 = vpop.f32.mrf.mxu0
        %9169 = vmatprep.mubr.f32.mxu0 0.0
        %9170 = vmatmul.mubr.f32.gmra.mxu0 %v9000
        %v9171 = vpop.f32.mrf.mxu0
        %v9172 = vadd.f32 0.0, %v9171
        %v9173 = vpop.f32.mrf.mxu0
        %9174 = vmatprep.mubr.f32.mxu0 0.0
        %9175 = vmatmul.mubr.f32.gmra.mxu0 %v9001
        %v9176 = vpop.f32.mrf.mxu0
        %v9177 = vadd.f32 0.0, %v9176
        %v9178 = vpop.f32.mrf.mxu0
        %9179 = vmatprep.mubr.f32.mxu0 0.0
        %9180 = vmatmul.mubr.f32.gmra.mxu0 %v9002
        %v9181 = vpop.f32.mrf.mxu0
        %v9182 = vadd.f32 0.0, %v9181
        %v9183 = vpop.f32.mrf.mxu0
        %9184 = vmatprep.mubr.f32.mxu0 0.0
        %9185 = vmatmul.mubr.f32.gmra.mxu0 %v9003
        %v9186 = vpop.f32.mrf.mxu0
        %v9187 = vadd.f32 0.0, %v9186
        %v9188 = vpop.f32.mrf.mxu0
        %9189 = vmatprep.mubr.f32.mxu0 0.0
        %9190 = vmatmul.mubr.f32.gmra.mxu0 %v9004
        %v9191 = vpop.f32.mrf.mxu0
        %v9192 = vadd.f32 0.0, %v9191
        %v9193 = vpop.f32.mrf.mxu0
        %9194 = vmatprep.mubr.f32.mxu0 0.0
        %9195 = vmatmul.mubr.f32.gmra.mxu0 %v9005
        %v9196 = vpop.f32.mrf.mxu0
        %v9197 = vadd.f32 0.0, %v9196
        %v9198 = vpop.f32.mrf.mxu0
        %9199 = vmatprep.mubr.f32.mxu0 0.0
        %9200 = vmatmul.mubr.f32.gmra.mxu0 %v9006
        %v9201 = vpop.f32.mrf.mxu0
        %v9202 = vadd.f32 0.0, %v9201
        %v9203 = vpop.f32.mrf.mxu0
        %9204 = vmatprep.mubr.f32.mxu0 0.0
        %9205 = vmatmul.mubr.f32.gmra.mxu0 %v9007
        %v9206 = vpop.f32.mrf.mxu0
        %v9207 = vadd.f32 0.0, %v9206
        %v9208 = vpop.f32.mrf.mxu0
        %9209 = vmatprep.mubr.f32.mxu0 0.0
        %9210 = vmatmul.mubr.f32.gmra.mxu0 %v9008
        %v9211 = vpop.f32.mrf.mxu0
        %v9212 = vadd.f32 0.0, %v9211
        %v9213 = vpop.f32.mrf.mxu0
        %9214 = vmatprep.mubr.f32.mxu0 0.0
        %9215 = vmatmul.mubr.f32.gmra.mxu0 %v9009
        %v9216 = vpop.f32.mrf.mxu0
        %v9217 = vadd.f32 0.0, %v9216
        %v9218 = vpop.f32.mrf.mxu0
        %9219 = vmatprep.mubr.f32.mxu0 0.0
        %9220 = vmatmul.mubr.f32.gmra.mxu0 %v9010
        %v9221 = vpop.f32.mrf.mxu0
        %v9222 = vadd.f32 0.0, %v9221
        %v9223 = vpop.f32.mrf.mxu0
        %9224 = vmatprep.mubr.f32.mxu0 0.0
        %9225 = vmatmul.mubr.f32.gmra.mxu0 %v9011
        %v9226 = vpop.f32.mrf.mxu0
        %v9227 = vadd.f32 0.0, %v9226
        %v9228 = vpop.f32.mrf.mxu0
        %9229 = vmatprep.mubr.f32.mxu0 0.0
        %9230 = vmatmul.mubr.f32.gmra.mxu0 %v9012
        %v9231 = vpop.f32.mrf.mxu0
        %v9232 = vadd.f32 0.0, %v9231
        %v9233 = vpop.f32.mrf.mxu0
        %9234 = vmatprep.mubr.f32.mxu0 0.0
        %9235 = vmatmul.mubr.f32.gmra.mxu0 %v9013
        %v9236 = vpop.f32.mrf.mxu0
        %v9237 = vadd.f32 0.0, %v9236
        %v9238 = vpop.f32.mrf.mxu0
        %9239 = vdwg.mxu0
        %9256 = vrot.lane.b32.xlu0 %v9162, 64
        %v9257 = vpop.permute.xlu0 %9256
        %9258 = vrot.lane.b32.xlu0 %v9167, 64
        %v9259 = vpop.permute.xlu0 %9258
        %9260 = vrot.lane.b32.xlu0 %v9172, 64
        %v9261 = vpop.permute.xlu0 %9260
        %9262 = vrot.lane.b32.xlu0 %v9177, 64
        %v9263 = vpop.permute.xlu0 %9262
        %9264 = vrot.lane.b32.xlu0 %v9182, 64
        %v9265 = vpop.permute.xlu0 %9264
        %9266 = vrot.lane.b32.xlu0 %v9187, 64
        %v9267 = vpop.permute.xlu0 %9266
        %9268 = vrot.lane.b32.xlu0 %v9192, 64
        %v9269 = vpop.permute.xlu0 %9268
        %9270 = vrot.lane.b32.xlu0 %v9197, 64
        %v9271 = vpop.permute.xlu0 %9270
        %9272 = vrot.lane.b32.xlu0 %v9202, 64
        %v9273 = vpop.permute.xlu0 %9272
        %9274 = vrot.lane.b32.xlu0 %v9207, 64
        %v9275 = vpop.permute.xlu0 %9274
        %9276 = vrot.lane.b32.xlu0 %v9212, 64
        %v9277 = vpop.permute.xlu0 %9276
        %9278 = vrot.lane.b32.xlu0 %v9217, 64
        %v9279 = vpop.permute.xlu0 %9278
        %9280 = vrot.lane.b32.xlu0 %v9222, 64
        %v9281 = vpop.permute.xlu0 %9280
        %9282 = vrot.lane.b32.xlu0 %v9227, 64
        %v9283 = vpop.permute.xlu0 %9282
        %9284 = vrot.lane.b32.xlu0 %v9232, 64
        %v9285 = vpop.permute.xlu0 %9284
        %9286 = vrot.lane.b32.xlu0 %v9237, 64
        %v9287 = vpop.permute.xlu0 %9286
        %9304 = vst.msk [vmem:[%s377 + $0x18] sm:$0xff] %vm4965, %v9257
        %9305 = vst.msk [vmem:[%s377 + $0x38] sm:$0xff] %vm4965, %v9259
        %9306 = vst.msk [vmem:[%s377 + $0x58] sm:$0xff] %vm4965, %v9261
        %9307 = vst.msk [vmem:[%s377 + $0x78] sm:$0xff] %vm4965, %v9263
        %9308 = vst.msk [vmem:[%s377 + $0x98] sm:$0xff] %vm4965, %v9265
        %9309 = vst.msk [vmem:[%s377 + $0xb8] sm:$0xff] %vm4965, %v9267
        %9310 = vst.msk [vmem:[%s377 + $0xd8] sm:$0xff] %vm4965, %v9269
        %9311 = vst.msk [vmem:[%s377 + $0xf8] sm:$0xff] %vm4965, %v9271
        %9312 = vst.msk [vmem:[%s377 + $0x118] sm:$0xff] %vm4965, %v9273
        %9313 = vst.msk [vmem:[%s377 + $0x138] sm:$0xff] %vm4965, %v9275
        %9314 = vst.msk [vmem:[%s377 + $0x158] sm:$0xff] %vm4965, %v9277
        %9315 = vst.msk [vmem:[%s377 + $0x178] sm:$0xff] %vm4965, %v9279
        %9316 = vst.msk [vmem:[%s377 + $0x198] sm:$0xff] %vm4965, %v9281
        %9317 = vst.msk [vmem:[%s377 + $0x1b8] sm:$0xff] %vm4965, %v9283
        %9318 = vst.msk [vmem:[%s377 + $0x1d8] sm:$0xff] %vm4965, %v9285
        %9319 = vst.msk [vmem:[%s377 + $0x1f8] sm:$0xff] %vm4965, %v9287
        %s9320 = sand.u32 %s159, 1
        %s9321 = scalar_lea.sflag [#allocation7], %s9320
        %s9322 = sand.u32 %s159, 1
        %s9323 = smul.addr %s9322, 512
        %s9324 = scalar_lea.vmem [#allocation14], %s9323
        %s9325 = sand.u32 %s185, 1
        %s9326 = scalar_lea.sflag [#allocation16], %s9325
        %s9327 = sand.u32 %s185, 1
        %s9328 = smul.addr %s9327, 1024
        %s9329 = scalar_lea.vmem [#allocation15], %s9328
        // Predicated region
        $region61: #{tpu_custom_call.1} parent=39 // pred_check
          %p9330 = pneg %p169
        $region62: #{tpu_custom_call.1} parent=39 // pred_check_branch
          %9332 = sbr.rel (%p9330) target = $region64
        $region63: #{tpu_custom_call.1} parent=39 // pred_region
          %s9334 = ssub.s32 8192, 8192
          %9335 = vsyncadd %s9321, %s9334
          %s9336 = smul.addr %s31, 64
          %s9337 = smul.addr %s9336, 128
          %s9338 = scalar_lea.hbm %s5, %s9337
          %s9339 = sshll.u32 %s9324, 4
          %s9340 = int_to_ptr.vmem [resolvable:$true] %s9339
          %9345 = dma.vmem_to_hbm [thread:$0]  %s9340, 8192, %s9338, %s9321, 512, 512, 32
        $region64: #{tpu_custom_call.1} parent=39 // pred_fallthru
          _
        // Predicated region
        $region65: #{tpu_custom_call.1} parent=39 // pred_check
          %p9346 = pneg %p195
        $region66: #{tpu_custom_call.1} parent=39 // pred_check_branch
          %9348 = sbr.rel (%p9346) target = $region68
        $region67: #{tpu_custom_call.1} parent=39 // pred_region
          #allocation18 [shape = 'u32[6]{0}', space=smem, size = 0x18, scoped, tag = 'DMA stride descriptor']
          %s9350 = ssub.s32 16384, 16384
          %9351 = vsyncadd %s9326, %s9350
          %s9352 = smul.addr %s31, 16
          %s9353 = smul.addr %s9352, 128
          %s9354 = scalar_lea.hbm %s6, %s9353
          %s9356 = sshll.u32 1, 14
          %s9357 = sxor.u32 4294967295, %s9356
          %s9360 = sshll.u32 7, 18
          %s9361 = sxor.u32 4294967295, %s9360
          %s9362 = sand.u32 0, %s9361
          %s9364 = sor.u32 %s9362, 0
          %s9365 = sshll.u32 %s9329, 4
          %s9366 = int_to_ptr.vmem [resolvable:$true] %s9365
          %9372 = sst [smem:[#allocation18]] 2048
          %s9373 = scalar_lea.smem [#allocation18], 1
          %9374 = sst [smem:[%s9373]] 4096
          %s9375 = scalar_lea.smem [#allocation18], 2
          %9376 = sst [smem:[%s9375]] 16
          %s9377 = scalar_lea.smem [#allocation18], 3
          %9378 = sst [smem:[%s9377]] 128
          %s9379 = scalar_lea.smem [#allocation18], 4
          %9380 = sst [smem:[%s9379]] 128
          %s9381 = scalar_lea.smem [#allocation18], 5
          %9382 = sst [smem:[%s9381]] 8
          %9384 = dma.general %s9366, 16384, %s9354, %s9326, 131072, [#allocation18], %s9364, 0
        $region68: #{tpu_custom_call.1} parent=39 // pred_fallthru
          _
      $region40: #{tpu_custom_call.1} parent=5 // pred_fallthru
        _
      %p9385 = scmp.le.s32.totalorder 2, %s26
      // Predicated region
      $region69: #{tpu_custom_call.1} parent=5 // pred_check
        %p9386 = pneg %p9385
      $region70: #{tpu_custom_call.1} parent=5 // pred_check_branch
        %9388 = sbr.rel (%p9386) target = $region72
      $region71: #{tpu_custom_call.1} parent=5 // pred_region
        %s9389 = ssub.s32 %s26, 2
        // Predicated region
        $region73: #{tpu_custom_call.1} parent=71 // pred_check
          %p9390 = pneg %p175
        $region74: #{tpu_custom_call.1} parent=71 // pred_check_branch
          %9392 = sbr.rel (%p9390) target = $region76
        $region75: #{tpu_custom_call.1} parent=71 // pred_region
          %s9393 = sand.u32 %s160, 1
          %s9394 = scalar_lea.sflag [#allocation7], %s9393
          %s9395 = sand.u32 %s160, 1
          %s9396 = smul.addr %s9395, 512
          %s9397 = scalar_lea.vmem [#allocation14], %s9396
          %9398 = dma.done %s9394, 8192
        $region76: #{tpu_custom_call.1} parent=71 // pred_fallthru
          _
        // Predicated region
        $region77: #{tpu_custom_call.1} parent=71 // pred_check
          %p9399 = pneg %p201
        $region78: #{tpu_custom_call.1} parent=71 // pred_check_branch
          %9401 = sbr.rel (%p9399) target = $region80
        $region79: #{tpu_custom_call.1} parent=71 // pred_region
          %s9402 = sand.u32 %s186, 1
          %s9403 = scalar_lea.sflag [#allocation16], %s9402
          %s9404 = sand.u32 %s186, 1
          %s9405 = smul.addr %s9404, 1024
          %s9406 = scalar_lea.vmem [#allocation15], %s9405
          %9407 = dma.done %s9403, 16384
        $region80: #{tpu_custom_call.1} parent=71 // pred_fallthru
          _
      $region72: #{tpu_custom_call.1} parent=5 // pred_fallthru
        _
    $region6: #{tpu_custom_call.1} parent=1 // loop_footer
      %s30 = sadd.s32 1, %s26
    $region7: #{tpu_custom_call.1} parent=1 // loop_footer_branch
      %25 = sbr.rel target = $region3
    $region8: #{tpu_custom_call.1} parent=1 // loop_exit
      _
    %9408 = vsyncpa [#allocation6], 1
    %s9409 = scalar_lea.sflag [#allocation6], 1
    %9410 = vsyncpa %s9409, 1
    %9411 = vsyncpa [#allocation9], 1
    %s9412 = scalar_lea.sflag [#allocation9], 1
    %9413 = vsyncpa %s9412, 1
    %9414 = vsyncpa [#allocation12], 1
    %9415 = vsyncpa [#allocation7], 1
    %s9416 = scalar_lea.sflag [#allocation7], 1
    %9417 = vsyncpa %s9416, 1
    %9418 = vsyncpa [#allocation16], 1
    %s9419 = scalar_lea.sflag [#allocation16], 1
    %9420 = vsyncpa %s9419, 1

</llo_original>
